<compile_context>
chip_gen: v6e
topology: v6e:2x2x1
jax: 0.10.0
libtpu: 0.0.40
codegen_flags: <defaults>
</compile_context>

<pallas_src>
import functools

import jax
import jax.numpy as jnp
from jax import lax
from jax.experimental import pallas as pl
from jax.experimental.pallas import tpu as pltpu


def _round_up(x, m):
    return ((x + m - 1) // m) * m


# --------------------------------------------------------------------------
# Tiled bias-free matmul:  y = x @ w_t   (x: (M,K), w_t: (K,N))
# Inputs are zero-padded to (8, 128, 128) alignment so tiles never silently
# become full-dimension (the old _pick_tile fallback hazard).
# --------------------------------------------------------------------------
def _matmul_kernel(x_ref, w_ref, o_ref, acc_ref):
    @pl.when(pl.program_id(2) == 0)
    def _():
        acc_ref[...] = jnp.zeros_like(acc_ref)

    acc_ref[...] += jnp.dot(x_ref[...], w_ref[...],
                            preferred_element_type=jnp.float32)

    @pl.when(pl.program_id(2) == pl.num_programs(2) - 1)
    def _():
        o_ref[...] = acc_ref[...]


def _pick_tile(dim, target, align):
    """Largest tile <= target that divides dim and is a multiple of align.
    Callers pass dims already padded to a multiple of `align`, so this always
    succeeds with a bounded tile."""
    if dim <= target:
        return dim
    t = (target // align) * align
    while t >= align:
        if dim % t == 0:
            return t
        t -= align
    return dim


def matmul_nobias(x, w_t, *, tm=256, tn=256, tk=512):
    M, K = x.shape
    Kw, N = w_t.shape
    assert K == Kw
    Mp, Kp, Np = _round_up(M, 8), _round_up(K, 128), _round_up(N, 128)
    xp = x if (Mp == M and Kp == K) else jnp.pad(x, ((0, Mp - M), (0, Kp - K)))
    wp = (w_t if (Kp == K and Np == N)
          else jnp.pad(w_t, ((0, Kp - K), (0, Np - N))))
    tm = _pick_tile(Mp, tm, 8)
    tn = _pick_tile(Np, tn, 128)
    tk = _pick_tile(Kp, tk, 128)
    grid = (Mp // tm, Np // tn, Kp // tk)
    out = pl.pallas_call(
        _matmul_kernel,
        out_shape=jax.ShapeDtypeStruct((Mp, Np), jnp.float32),
        grid_spec=pltpu.PrefetchScalarGridSpec(
            num_scalar_prefetch=0,
            grid=grid,
            in_specs=[pl.BlockSpec((tm, tk), lambda i, j, k: (i, k)),
                      pl.BlockSpec((tk, tn), lambda i, j, k: (k, j))],
            out_specs=pl.BlockSpec((tm, tn), lambda i, j, k: (i, j)),
            scratch_shapes=[pltpu.VMEM((tm, tn), jnp.float32)]),
        compiler_params=pltpu.CompilerParams(
            dimension_semantics=("parallel", "parallel", "arbitrary"),
            vmem_limit_bytes=32 << 20),
    )(xp, wp)
    if Mp != M or Np != N:
        out = out[:M, :N]
    return out


# --------------------------------------------------------------------------
# Fused bidirectional LSTM layer kernel (whole sequence, time loop inside),
# gridded over the batch.
#   non-final layer:  out block = (T, Bt, 2H)  zero-padded like pad_packed
#   final layer:      out block = (Bt, 2*latent) = Linear([h_fwd_last, h_bwd_0])
# --------------------------------------------------------------------------
def _bilstm_kernel(x_ref, wif_ref, whf_ref, bf_ref,
                   wib_ref, whb_ref, bb_ref, len_ref,
                   *rest, hidden, final, unroll):
    if final:
        latw_ref, latb_ref, out_ref, gxf_ref, gxb_ref = rest
    else:
        out_ref, gxf_ref, gxb_ref = rest

    H = hidden
    T, Bt, Din = x_ref.shape

    # ---- prologue: input projection for all timesteps, both directions ----
    # TODO(synk): optionally keep matmul operands in bf16 (f32 accumulate) on
    # v6e/v7x to halve VMEM and double MXU throughput; kept f32 for bit-level
    # parity with the reference.
    x2 = x_ref[...].reshape(T * Bt, Din)
    gxf_ref[...] = (jnp.dot(x2, wif_ref[...],
                            preferred_element_type=jnp.float32)
                    + bf_ref[...]).reshape(T, Bt, 4 * H)
    gxb_ref[...] = (jnp.dot(x2, wib_ref[...],
                            preferred_element_type=jnp.float32)
                    + bb_ref[...]).reshape(T, Bt, 4 * H)

    # ---- hoisted loads / constants ----
    whf = whf_ref[...]                      # (H, 4H)
    whb = whb_ref[...]
    lens = len_ref[...]                     # (Bt, 1) int32
    if H % 128 != 0:
        lane = lax.broadcasted_iota(jnp.int32, (Bt, 4 * H), 1)
        is_g = (lane >= 2 * H) & (lane < 3 * H)   # tanh block (PyTorch i,f,g,o)

    def cell(gx, h, c, whh):
        gates = gx + jnp.dot(h, whh, preferred_element_type=jnp.float32)
        if H % 128 == 0:
            # lane-aligned gate blocks: split activations (less EUP work)
            i = jax.nn.sigmoid(gates[:, 0:H])
            f = jax.nn.sigmoid(gates[:, H:2 * H])
            g = jnp.tanh(gates[:, 2 * H:3 * H])
            o = jax.nn.sigmoid(gates[:, 3 * H:4 * H])
        else:
            # full-width activations with a lane mask (avoids sub-vreg slices)
            act = jnp.where(is_g, jnp.tanh(gates), jax.nn.sigmoid(gates))
            i = act[:, 0:H]
            f = act[:, H:2 * H]
            g = act[:, 2 * H:3 * H]
            o = act[:, 3 * H:4 * H]
        c_new = f * c + i * g
        h_new = o * jnp.tanh(c_new)
        return h_new, c_new

    zeros = jnp.zeros((Bt, H), jnp.float32)

    def step(s, carry):
        hf, cf, hb, cb = carry
        tf = s
        tb = T - 1 - s
        # forward direction
        hf_new, cf_new = cell(gxf_ref[tf], hf, cf, whf)
        vf = tf < lens                       # (Bt, 1) packed-sequence mask
        hf2 = jnp.where(vf, hf_new, hf)
        cf2 = jnp.where(vf, cf_new, cf)
        # backward direction (recurrence effectively starts at t = len-1)
        hb_new, cb_new = cell(gxb_ref[tb], hb, cb, whb)
        vb = tb < lens
        hb2 = jnp.where(vb, hb_new, hb)
        cb2 = jnp.where(vb, cb_new, cb)
        if not final:
            # pad_packed_sequence zero-pads outputs past each length
            out_ref[tf, :, 0:H] = jnp.where(vf, hf_new, jnp.zeros_like(hf_new))
            out_ref[tb, :, H:2 * H] = jnp.where(vb, hb_new,
                                                jnp.zeros_like(hb_new))
        return hf2, cf2, hb2, cb2

    hf, cf, hb, cb = lax.fori_loop(0, T, step, (zeros, zeros, zeros, zeros),
                                   unroll=unroll)

    if final:
        # hf == output[b, len-1, :H], hb == output[b, 0, H:]
        # split matmul avoids a lane concatenate of (Bt, H) halves
        out = jnp.dot(hf, latw_ref[0:H, :], preferred_element_type=jnp.float32)
        out = out + jnp.dot(hb, latw_ref[H:2 * H, :],
                            preferred_element_type=jnp.float32)
        out_ref[...] = out + latb_ref[...]


# ---- VMEM sizing / batch-tile selection -----------------------------------
def _vmem3(t, b, c):                       # padded f32 bytes, 3-D block
    return t * _round_up(b, 8) * _round_up(c, 128) * 4


def _vmem2(r, c):                          # padded f32 bytes, 2-D block
    return _round_up(r, 8) * _round_up(c, 128) * 4


def _bilstm_vmem_bytes(T, Bt, Din, H, final, L2):
    n = 2 * _vmem3(T, Bt, Din)                               # x (dbl-buffered)
    n += 2 * _vmem3(T, Bt, 4 * H)                            # gates_x scratch
    n += 2 * 2 * (_vmem2(Din, 4 * H) + _vmem2(H, 4 * H)      # weights + bias
                  + _vmem2(1, 4 * H))
    n += 2 * _vmem2(Bt, 1)                                   # lengths
    if final:
        n += 2 * _vmem2(Bt, L2)                              # output
        n += 2 * (_vmem2(2 * H, L2) + _vmem2(1, L2))         # latent linear
    else:
        n += 2 * _vmem3(T, Bt, 2 * H)                        # output
    return n


def _pick_batch_tile(B, T, Din, H, final, L2, budget=40 << 20):
    """Largest multiple-of-8 batch tile dividing B that keeps the per-tile
    VMEM footprint under `budget` (headroom for v7x's 64 MiB VMEM)."""
    if B % 8 == 0:
        cands = [bt for bt in range(min(B, 128), 7, -8) if B % bt == 0]
    else:
        cands = [B]
    for bt in cands:
        if _bilstm_vmem_bytes(T, bt, Din, H, final, L2) <= budget:
            return bt
    return cands[-1]


def bilstm_layer(x_tbd, layer, lengths2, *, lat_w=None, lat_b=None,
                 final=False):
    # x_tbd: (T, B, D_in) time-major f32, B a multiple of 8 (padded upstream)
    T, B, Din = x_tbd.shape
    H = layer["w_hh_f"].shape[1]
    f32 = jnp.float32

    wif_t = jnp.asarray(layer["w_ih_f"], f32).T                 # (D_in, 4H)
    whf_t = jnp.asarray(layer["w_hh_f"], f32).T                 # (H, 4H)
    bf = (layer["b_ih_f"] + layer["b_hh_f"]).reshape(1, 4 * H).astype(f32)
    wib_t = jnp.asarray(layer["w_ih_b"], f32).T
    whb_t = jnp.asarray(layer["w_hh_b"], f32).T
    bb = (layer["b_ih_b"] + layer["b_hh_b"]).reshape(1, 4 * H).astype(f32)

    L2 = lat_w.shape[0] if final else 0                         # 2*latent_dim
    Bt = _pick_batch_tile(B, T, Din, H, final, L2)
    grid = (B // Bt,)
    est = _bilstm_vmem_bytes(T, Bt, Din, H, final, L2)
    vmem_limit = min(2 * est + (4 << 20), 128 << 20)

    inputs = [x_tbd.astype(f32), wif_t, whf_t, bf, wib_t, whb_t, bb,
              lengths2.astype(jnp.int32)]
    in_specs = [
        pl.BlockSpec((T, Bt, Din), lambda b: (0, b, 0)),        # x (batch tiled)
        pl.BlockSpec((Din, 4 * H), lambda b: (0, 0)),
        pl.BlockSpec((H, 4 * H), lambda b: (0, 0)),
        pl.BlockSpec((1, 4 * H), lambda b: (0, 0)),
        pl.BlockSpec((Din, 4 * H), lambda b: (0, 0)),
        pl.BlockSpec((H, 4 * H), lambda b: (0, 0)),
        pl.BlockSpec((1, 4 * H), lambda b: (0, 0)),
        pl.BlockSpec((Bt, 1), lambda b: (b, 0)),                # lengths
    ]
    if final:
        inputs += [jnp.asarray(lat_w, f32).T,                   # (2H, 2L)
                   jnp.asarray(lat_b, f32).reshape(1, L2)]
        in_specs += [pl.BlockSpec((2 * H, L2), lambda b: (0, 0)),
                     pl.BlockSpec((1, L2), lambda b: (0, 0))]
        out_shape = jax.ShapeDtypeStruct((B, L2), f32)
        out_spec = pl.BlockSpec((Bt, L2), lambda b: (b, 0))
    else:
        out_shape = jax.ShapeDtypeStruct((T, B, 2 * H), f32)
        out_spec = pl.BlockSpec((T, Bt, 2 * H), lambda b: (0, b, 0))

    kern = functools.partial(_bilstm_kernel, hidden=H, final=final,
                             unroll=min(8, T))
    return pl.pallas_call(
        kern,
        out_shape=out_shape,
        grid_spec=pltpu.PrefetchScalarGridSpec(
            num_scalar_prefetch=0,
            grid=grid,
            in_specs=in_specs,
            out_specs=out_spec,
            scratch_shapes=[pltpu.VMEM((T, Bt, 4 * H), f32),    # gates_x fwd
                            pltpu.VMEM((T, Bt, 4 * H), f32)]),  # gates_x bwd
        compiler_params=pltpu.CompilerParams(
            dimension_semantics=("parallel",),
            vmem_limit_bytes=int(vmem_limit)),
    )(*inputs)


# --------------------------------------------------------------------------
# Full Encoder forward
# --------------------------------------------------------------------------
def encoder_forward(params, x, lengths, *, fold_embedding=None):
    B, T, V = x.shape
    E = params["emb_w"].shape[0]
    if fold_embedding is None:
        # Folding the bias-free embedding Linear into the layer-0 input
        # projection removes one kernel launch and a (B,T,E) HBM round trip,
        # but costs ~(4H/E)x the embedding FLOPs -> only for modest vocab.
        fold_embedding = V <= 8 * E

    f32 = jnp.float32
    Bp = _round_up(B, 8)                                        # sublane occupancy
    x_t = jnp.transpose(x.astype(f32), (1, 0, 2))               # (T, B, V) time-major
    lengths2 = lengths.astype(jnp.int32).reshape(B, 1)
    if Bp != B:
        x_t = jnp.pad(x_t, ((0, 0), (0, Bp - B), (0, 0)))
        lengths2 = jnp.pad(lengths2, ((0, Bp - B), (0, 0)))     # length-0 pad rows

    if fold_embedding:
        h = x_t                                                 # layer 0 eats raw x
    else:
        emb = matmul_nobias(x_t.reshape(T * Bp, V),
                            params["emb_w"].T.astype(f32))      # (T*Bp, E)
        h = emb.reshape(T, Bp, E)                               # already time-major

    layers = params["lstm"]
    n_layers = len(layers)
    for li, layer in enumerate(layers):
        is_final = (li == n_layers - 1)
        if li == 0 and fold_embedding:
            emb_w = params["emb_w"].astype(f32)                 # (E, V)
            layer = dict(layer)
            layer["w_ih_f"] = jnp.dot(jnp.asarray(layer["w_ih_f"], f32), emb_w)
            layer["w_ih_b"] = jnp.dot(jnp.asarray(layer["w_ih_b"], f32), emb_w)
        h = bilstm_layer(
            h, layer, lengths2,
            lat_w=params["lat_w"] if is_final else None,
            lat_b=params["lat_b"] if is_final else None,
            final=is_final)
    # TODO(synk): fuse consecutive BiLSTM layers into one kernel so the
    # (T, B, 2H) inter-layer activation stays in VMEM instead of HBM.
    return h[:B]                                                # (B, 2*latent)


# --------------------------------------------------------------------------
# Deterministic parameter init (shapes follow the PyTorch module __init__)
# --------------------------------------------------------------------------
def init_params(key, emb_size, latent_dim, n_rnn_layer, total_vocab_size):
    ks = jax.random.split(key, 4 + 8 * n_rnn_layer)
    scale = 0.1
    params = {
        "emb_w": scale * jax.random.normal(ks[0], (emb_size, total_vocab_size)),
        "lat_w": scale * jax.random.normal(ks[1], (2 * latent_dim, 2 * emb_size)),
        "lat_b": scale * jax.random.normal(ks[2], (2 * latent_dim,)),
        "lstm": [],
    }
    kidx = 4
    for layer in range(n_rnn_layer):
        d_in = emb_size if layer == 0 else 2 * emb_size
        layer_p = {}
        for tag in ("f", "b"):
            layer_p[f"w_ih_{tag}"] = scale * jax.random.normal(
                ks[kidx + 0], (4 * emb_size, d_in))
            layer_p[f"w_hh_{tag}"] = scale * jax.random.normal(
                ks[kidx + 1], (4 * emb_size, emb_size))
            layer_p[f"b_ih_{tag}"] = scale * jax.random.normal(
                ks[kidx + 2], (4 * emb_size,))
            layer_p[f"b_hh_{tag}"] = scale * jax.random.normal(
                ks[kidx + 3], (4 * emb_size,))
            kidx += 4
        params["lstm"].append(layer_p)
    return params


if __name__ == "__main__":
    B, T = 2, 8
    total_vocab_size = 64
    emb_size = 32
    latent_dim = 16
    n_rnn_layer = 2

    key = jax.random.PRNGKey(0)
    k_param, k_x = jax.random.split(key)

    params = init_params(k_param, emb_size, latent_dim, n_rnn_layer,
                         total_vocab_size)

    # Multi-hot visit codes, float32, batch_first: (B, T, V)
    x = (jax.random.uniform(k_x, (B, T, total_vocab_size)) < 0.1).astype(
        jnp.float32)
    lengths = jnp.array([8, 5], dtype=jnp.int32)   # variable-length sequences

    fwd_fold = jax.jit(lambda p, a, l: encoder_forward(p, a, l,
                                                       fold_embedding=True))
    fwd_sep = jax.jit(lambda p, a, l: encoder_forward(p, a, l,
                                                      fold_embedding=False))

    mean_logvar = jax.block_until_ready(fwd_fold(params, x, lengths))
    mean_logvar2 = jax.block_until_ready(fwd_sep(params, x, lengths))

    assert mean_logvar.shape == (B, 2 * latent_dim)
    assert bool(jnp.all(jnp.isfinite(mean_logvar)))
    # folded-embedding path and separate-embedding-matmul path must agree
    assert bool(jnp.allclose(mean_logvar, mean_logvar2, atol=1e-3, rtol=1e-3))
    print("KERNEL_OK")
</pallas_src>

<mosaic_0001>
module attributes {stable_mosaic.version = 11 : i64} {
  func.func @_bilstm_kernel(%arg0: i32, %arg1: memref<8x8x64xf32, #tpu.memory_space<vmem>>, %arg2: memref<64x128xf32, #tpu.memory_space<vmem>>, %arg3: memref<32x128xf32, #tpu.memory_space<vmem>>, %arg4: memref<1x128xf32, #tpu.memory_space<vmem>>, %arg5: memref<64x128xf32, #tpu.memory_space<vmem>>, %arg6: memref<32x128xf32, #tpu.memory_space<vmem>>, %arg7: memref<1x128xf32, #tpu.memory_space<vmem>>, %arg8: memref<8x1xi32, #tpu.memory_space<vmem>>, %arg9: memref<64x32xf32, #tpu.memory_space<vmem>>, %arg10: memref<1x32xf32, #tpu.memory_space<vmem>>, %arg11: memref<8x32xf32, #tpu.memory_space<vmem>>, %arg12: memref<8x8x128xf32, #tpu.memory_space<vmem>>, %arg13: memref<8x8x128xf32, #tpu.memory_space<vmem>>) attributes {dimension_semantics = [#tpu.dimension_semantics<parallel>], iteration_bounds = array<i64: 1>, scalar_prefetch = 0 : i64, scratch_operands = 2 : i64, tpu.core_type = #tpu.core_type<tc>, window_params = [{transform_indices = @transform_0, window_bounds = array<i64: 8, 8, 64>}, {pipeline_mode = #tpu.pipeline_mode<synchronous>, transform_indices = @transform_1, window_bounds = array<i64: 64, 128>}, {pipeline_mode = #tpu.pipeline_mode<synchronous>, transform_indices = @transform_2, window_bounds = array<i64: 32, 128>}, {pipeline_mode = #tpu.pipeline_mode<synchronous>, transform_indices = @transform_3, window_bounds = array<i64: 1, 128>}, {pipeline_mode = #tpu.pipeline_mode<synchronous>, transform_indices = @transform_4, window_bounds = array<i64: 64, 128>}, {pipeline_mode = #tpu.pipeline_mode<synchronous>, transform_indices = @transform_5, window_bounds = array<i64: 32, 128>}, {pipeline_mode = #tpu.pipeline_mode<synchronous>, transform_indices = @transform_6, window_bounds = array<i64: 1, 128>}, {transform_indices = @transform_7, window_bounds = array<i64: 8, 1>}, {pipeline_mode = #tpu.pipeline_mode<synchronous>, transform_indices = @transform_8, window_bounds = array<i64: 64, 32>}, {pipeline_mode = #tpu.pipeline_mode<synchronous>, transform_indices = @transform_9, window_bounds = array<i64: 1, 32>}, {transform_indices = @transform_10, window_bounds = array<i64: 8, 32>}]} {
    %c0 = arith.constant 0 : index
    %c0_0 = arith.constant 0 : index
    %c0_1 = arith.constant 0 : index
    %0 = vector.load %arg1[%c0, %c0_0, %c0_1] : memref<8x8x64xf32, #tpu.memory_space<vmem>>, vector<8x8x64xf32>
    %1 = vector.shape_cast %0 : vector<8x8x64xf32> to vector<64x64xf32>
    %c0_2 = arith.constant 0 : index
    %c0_3 = arith.constant 0 : index
    %2 = vector.load %arg2[%c0_2, %c0_3] : memref<64x128xf32, #tpu.memory_space<vmem>>, vector<64x128xf32>
    %cst = arith.constant dense<0.000000e+00> : vector<64x128xf32>
    %3 = tpu.matmul %1, %2, %cst {dimension_numbers = #tpu.dot_dimension_numbers<[1], [0], [0], [1], [0, 0, 1, 1], [], []>} : vector<64x64xf32>, vector<64x128xf32>, vector<64x128xf32> -> vector<64x128xf32>
    %c0_4 = arith.constant 0 : index
    %c0_5 = arith.constant 0 : index
    %4 = vector.load %arg4[%c0_4, %c0_5] : memref<1x128xf32, #tpu.memory_space<vmem>>, vector<1x128xf32>
    %5 = vector.broadcast %4 : vector<1x128xf32> to vector<64x128xf32>
    %6 = arith.addf %3, %5 : vector<64x128xf32>
    %7 = vector.shape_cast %6 : vector<64x128xf32> to vector<8x8x128xf32>
    %c0_6 = arith.constant 0 : index
    %c0_7 = arith.constant 0 : index
    %c0_8 = arith.constant 0 : index
    %8 = vector.load %arg12[%c0_6, %c0_7, %c0_8] : memref<8x8x128xf32, #tpu.memory_space<vmem>>, vector<8x8x128xf32>
    tpu.vector_store %arg12[%c0_6, %c0_7, %c0_8], %7 {strides = array<i32>} : memref<8x8x128xf32, #tpu.memory_space<vmem>>, vector<8x8x128xf32>,
    %c0_9 = arith.constant 0 : index
    %c0_10 = arith.constant 0 : index
    %9 = vector.load %arg5[%c0_9, %c0_10] : memref<64x128xf32, #tpu.memory_space<vmem>>, vector<64x128xf32>
    %cst_11 = arith.constant dense<0.000000e+00> : vector<64x128xf32>
    %10 = tpu.matmul %1, %9, %cst_11 {dimension_numbers = #tpu.dot_dimension_numbers<[1], [0], [0], [1], [0, 0, 1, 1], [], []>} : vector<64x64xf32>, vector<64x128xf32>, vector<64x128xf32> -> vector<64x128xf32>
    %c0_12 = arith.constant 0 : index
    %c0_13 = arith.constant 0 : index
    %11 = vector.load %arg7[%c0_12, %c0_13] : memref<1x128xf32, #tpu.memory_space<vmem>>, vector<1x128xf32>
    %12 = vector.broadcast %11 : vector<1x128xf32> to vector<64x128xf32>
    %13 = arith.addf %10, %12 : vector<64x128xf32>
    %14 = vector.shape_cast %13 : vector<64x128xf32> to vector<8x8x128xf32>
    %c0_14 = arith.constant 0 : index
    %c0_15 = arith.constant 0 : index
    %c0_16 = arith.constant 0 : index
    %15 = vector.load %arg13[%c0_14, %c0_15, %c0_16] : memref<8x8x128xf32, #tpu.memory_space<vmem>>, vector<8x8x128xf32>
    tpu.vector_store %arg13[%c0_14, %c0_15, %c0_16], %14 {strides = array<i32>} : memref<8x8x128xf32, #tpu.memory_space<vmem>>, vector<8x8x128xf32>,
    %c0_17 = arith.constant 0 : index
    %c0_18 = arith.constant 0 : index
    %16 = vector.load %arg3[%c0_17, %c0_18] : memref<32x128xf32, #tpu.memory_space<vmem>>, vector<32x128xf32>
    %c0_19 = arith.constant 0 : index
    %c0_20 = arith.constant 0 : index
    %17 = vector.load %arg6[%c0_19, %c0_20] : memref<32x128xf32, #tpu.memory_space<vmem>>, vector<32x128xf32>
    %c0_21 = arith.constant 0 : index
    %c0_22 = arith.constant 0 : index
    %18 = vector.load %arg8[%c0_21, %c0_22] : memref<8x1xi32, #tpu.memory_space<vmem>>, vector<8x1xi32>
    %19 = tpu.iota {dimensions = array<i32: 1>} : vector<8x128xi32>
    %c64_i32 = arith.constant 64 : i32
    %20 = vector.broadcast %c64_i32 : i32 to vector<8x128xi32>
    %21 = arith.cmpi sge, %19, %20 : vector<8x128xi32>
    %c96_i32 = arith.constant 96 : i32
    %22 = vector.broadcast %c96_i32 : i32 to vector<8x128xi32>
    %23 = arith.cmpi slt, %19, %22 : vector<8x128xi32>
    %24 = arith.andi %21, %23 : vector<8x128xi1>
    %cst_23 = arith.constant 0.000000e+00 : f32
    %25 = vector.broadcast %cst_23 : f32 to vector<8x32xf32>
    %c0_i32 = arith.constant 0 : i32
    %c7_i32 = arith.constant 7 : i32
    %26 = arith.subi %c7_i32, %c0_i32 : i32
    %27 = arith.index_cast %c0_i32 : i32 to index
    %c0_24 = arith.constant 0 : index
    %c0_25 = arith.constant 0 : index
    %28 = vector.load %arg12[%27, %c0_24, %c0_25] : memref<8x8x128xf32, #tpu.memory_space<vmem>>, vector<1x8x128xf32>
    %29 = vector.shape_cast %28 : vector<1x8x128xf32> to vector<8x128xf32>
    %cst_26 = arith.constant dense<0.000000e+00> : vector<8x128xf32>
    %30 = tpu.matmul %25, %16, %cst_26 {dimension_numbers = #tpu.dot_dimension_numbers<[1], [0], [0], [1], [0, 0, 1, 1], [], []>} : vector<8x32xf32>, vector<32x128xf32>, vector<8x128xf32> -> vector<8x128xf32>
    %31 = arith.addf %29, %30 : vector<8x128xf32>
    %32 = math.tanh %31 : vector<8x128xf32>
    %33 = arith.negf %31 : vector<8x128xf32>
    %34 = math.exp %33 : vector<8x128xf32>
    %cst_27 = arith.constant 1.000000e+00 : f32
    %35 = vector.broadcast %cst_27 : f32 to vector<8x128xf32>
    %36 = arith.addf %35, %34 : vector<8x128xf32>
    %37 = arith.divf %35, %36 : vector<8x128xf32>
    %38 = arith.select %24, %32, %37 : vector<8x128xi1>, vector<8x128xf32>
    %39 = vector.extract_strided_slice %38 {offsets = [0, 0], sizes = [8, 32], strides = [1, 1]} : vector<8x128xf32> to vector<8x32xf32>
    %40 = vector.extract_strided_slice %38 {offsets = [0, 32], sizes = [8, 32], strides = [1, 1]} : vector<8x128xf32> to vector<8x32xf32>
    %41 = vector.extract_strided_slice %38 {offsets = [0, 64], sizes = [8, 32], strides = [1, 1]} : vector<8x128xf32> to vector<8x32xf32>
    %42 = vector.extract_strided_slice %38 {offsets = [0, 96], sizes = [8, 32], strides = [1, 1]} : vector<8x128xf32> to vector<8x32xf32>
    %43 = arith.mulf %40, %25 : vector<8x32xf32>
    %44 = arith.mulf %39, %41 : vector<8x32xf32>
    %45 = arith.addf %43, %44 : vector<8x32xf32>
    %46 = math.tanh %45 : vector<8x32xf32>
    %47 = arith.mulf %42, %46 : vector<8x32xf32>
    %48 = vector.broadcast %c0_i32 : i32 to vector<8x1xi32>
    %49 = arith.cmpi slt, %48, %18 : vector<8x1xi32>
    %50 = vector.shape_cast %49 : vector<8x1xi1> to vector<8x1xi1>
    %51 = vector.broadcast %50 : vector<8x1xi1> to vector<8x32xi1>
    %52 = arith.select %51, %47, %25 : vector<8x32xi1>, vector<8x32xf32>
    %53 = vector.shape_cast %49 : vector<8x1xi1> to vector<8x1xi1>
    %54 = vector.broadcast %53 : vector<8x1xi1> to vector<8x32xi1>
    %55 = arith.select %54, %45, %25 : vector<8x32xi1>, vector<8x32xf32>
    %56 = arith.index_cast %26 : i32 to index
    %c0_28 = arith.constant 0 : index
    %c0_29 = arith.constant 0 : index
    %57 = vector.load %arg13[%56, %c0_28, %c0_29] : memref<8x8x128xf32, #tpu.memory_space<vmem>>, vector<1x8x128xf32>
    %58 = vector.shape_cast %57 : vector<1x8x128xf32> to vector<8x128xf32>
    %cst_30 = arith.constant dense<0.000000e+00> : vector<8x128xf32>
    %59 = tpu.matmul %25, %17, %cst_30 {dimension_numbers = #tpu.dot_dimension_numbers<[1], [0], [0], [1], [0, 0, 1, 1], [], []>} : vector<8x32xf32>, vector<32x128xf32>, vector<8x128xf32> -> vector<8x128xf32>
    %60 = arith.addf %58, %59 : vector<8x128xf32>
    %61 = math.tanh %60 : vector<8x128xf32>
    %62 = arith.negf %60 : vector<8x128xf32>
    %63 = math.exp %62 : vector<8x128xf32>
    %cst_31 = arith.constant 1.000000e+00 : f32
    %64 = vector.broadcast %cst_31 : f32 to vector<8x128xf32>
    %65 = arith.addf %64, %63 : vector<8x128xf32>
    %66 = arith.divf %64, %65 : vector<8x128xf32>
    %67 = arith.select %24, %61, %66 : vector<8x128xi1>, vector<8x128xf32>
    %68 = vector.extract_strided_slice %67 {offsets = [0, 0], sizes = [8, 32], strides = [1, 1]} : vector<8x128xf32> to vector<8x32xf32>
    %69 = vector.extract_strided_slice %67 {offsets = [0, 32], sizes = [8, 32], strides = [1, 1]} : vector<8x128xf32> to vector<8x32xf32>
    %70 = vector.extract_strided_slice %67 {offsets = [0, 64], sizes = [8, 32], strides = [1, 1]} : vector<8x128xf32> to vector<8x32xf32>
    %71 = vector.extract_strided_slice %67 {offsets = [0, 96], sizes = [8, 32], strides = [1, 1]} : vector<8x128xf32> to vector<8x32xf32>
    %72 = arith.mulf %69, %25 : vector<8x32xf32>
    %73 = arith.mulf %68, %70 : vector<8x32xf32>
    %74 = arith.addf %72, %73 : vector<8x32xf32>
    %75 = math.tanh %74 : vector<8x32xf32>
    %76 = arith.mulf %71, %75 : vector<8x32xf32>
    %77 = vector.broadcast %26 : i32 to vector<8x1xi32>
    %78 = arith.cmpi slt, %77, %18 : vector<8x1xi32>
    %79 = vector.shape_cast %78 : vector<8x1xi1> to vector<8x1xi1>
    %80 = vector.broadcast %79 : vector<8x1xi1> to vector<8x32xi1>
    %81 = arith.select %80, %76, %25 : vector<8x32xi1>, vector<8x32xf32>
    %82 = vector.shape_cast %78 : vector<8x1xi1> to vector<8x1xi1>
    %83 = vector.broadcast %82 : vector<8x1xi1> to vector<8x32xi1>
    %84 = arith.select %83, %74, %25 : vector<8x32xi1>, vector<8x32xf32>
    %c1_i32 = arith.constant 1 : i32
    %c7_i32_32 = arith.constant 7 : i32
    %85 = arith.subi %c7_i32_32, %c1_i32 : i32
    %86 = arith.index_cast %c1_i32 : i32 to index
    %c0_33 = arith.constant 0 : index
    %c0_34 = arith.constant 0 : index
    %87 = vector.load %arg12[%86, %c0_33, %c0_34] : memref<8x8x128xf32, #tpu.memory_space<vmem>>, vector<1x8x128xf32>
    %88 = vector.shape_cast %87 : vector<1x8x128xf32> to vector<8x128xf32>
    %cst_35 = arith.constant dense<0.000000e+00> : vector<8x128xf32>
    %89 = tpu.matmul %52, %16, %cst_35 {dimension_numbers = #tpu.dot_dimension_numbers<[1], [0], [0], [1], [0, 0, 1, 1], [], []>} : vector<8x32xf32>, vector<32x128xf32>, vector<8x128xf32> -> vector<8x128xf32>
    %90 = arith.addf %88, %89 : vector<8x128xf32>
    %91 = math.tanh %90 : vector<8x128xf32>
    %92 = arith.negf %90 : vector<8x128xf32>
    %93 = math.exp %92 : vector<8x128xf32>
    %cst_36 = arith.constant 1.000000e+00 : f32
    %94 = vector.broadcast %cst_36 : f32 to vector<8x128xf32>
    %95 = arith.addf %94, %93 : vector<8x128xf32>
    %96 = arith.divf %94, %95 : vector<8x128xf32>
    %97 = arith.select %24, %91, %96 : vector<8x128xi1>, vector<8x128xf32>
    %98 = vector.extract_strided_slice %97 {offsets = [0, 0], sizes = [8, 32], strides = [1, 1]} : vector<8x128xf32> to vector<8x32xf32>
    %99 = vector.extract_strided_slice %97 {offsets = [0, 32], sizes = [8, 32], strides = [1, 1]} : vector<8x128xf32> to vector<8x32xf32>
    %100 = vector.extract_strided_slice %97 {offsets = [0, 64], sizes = [8, 32], strides = [1, 1]} : vector<8x128xf32> to vector<8x32xf32>
    %101 = vector.extract_strided_slice %97 {offsets = [0, 96], sizes = [8, 32], strides = [1, 1]} : vector<8x128xf32> to vector<8x32xf32>
    %102 = arith.mulf %99, %55 : vector<8x32xf32>
    %103 = arith.mulf %98, %100 : vector<8x32xf32>
    %104 = arith.addf %102, %103 : vector<8x32xf32>
    %105 = math.tanh %104 : vector<8x32xf32>
    %106 = arith.mulf %101, %105 : vector<8x32xf32>
    %107 = vector.broadcast %c1_i32 : i32 to vector<8x1xi32>
    %108 = arith.cmpi slt, %107, %18 : vector<8x1xi32>
    %109 = vector.shape_cast %108 : vector<8x1xi1> to vector<8x1xi1>
    %110 = vector.broadcast %109 : vector<8x1xi1> to vector<8x32xi1>
    %111 = arith.select %110, %106, %52 : vector<8x32xi1>, vector<8x32xf32>
    %112 = vector.shape_cast %108 : vector<8x1xi1> to vector<8x1xi1>
    %113 = vector.broadcast %112 : vector<8x1xi1> to vector<8x32xi1>
    %114 = arith.select %113, %104, %55 : vector<8x32xi1>, vector<8x32xf32>
    %115 = arith.index_cast %85 : i32 to index
    %c0_37 = arith.constant 0 : index
    %c0_38 = arith.constant 0 : index
    %116 = vector.load %arg13[%115, %c0_37, %c0_38] : memref<8x8x128xf32, #tpu.memory_space<vmem>>, vector<1x8x128xf32>
    %117 = vector.shape_cast %116 : vector<1x8x128xf32> to vector<8x128xf32>
    %cst_39 = arith.constant dense<0.000000e+00> : vector<8x128xf32>
    %118 = tpu.matmul %81, %17, %cst_39 {dimension_numbers = #tpu.dot_dimension_numbers<[1], [0], [0], [1], [0, 0, 1, 1], [], []>} : vector<8x32xf32>, vector<32x128xf32>, vector<8x128xf32> -> vector<8x128xf32>
    %119 = arith.addf %117, %118 : vector<8x128xf32>
    %120 = math.tanh %119 : vector<8x128xf32>
    %121 = arith.negf %119 : vector<8x128xf32>
    %122 = math.exp %121 : vector<8x128xf32>
    %cst_40 = arith.constant 1.000000e+00 : f32
    %123 = vector.broadcast %cst_40 : f32 to vector<8x128xf32>
    %124 = arith.addf %123, %122 : vector<8x128xf32>
    %125 = arith.divf %123, %124 : vector<8x128xf32>
    %126 = arith.select %24, %120, %125 : vector<8x128xi1>, vector<8x128xf32>
    %127 = vector.extract_strided_slice %126 {offsets = [0, 0], sizes = [8, 32], strides = [1, 1]} : vector<8x128xf32> to vector<8x32xf32>
    %128 = vector.extract_strided_slice %126 {offsets = [0, 32], sizes = [8, 32], strides = [1, 1]} : vector<8x128xf32> to vector<8x32xf32>
    %129 = vector.extract_strided_slice %126 {offsets = [0, 64], sizes = [8, 32], strides = [1, 1]} : vector<8x128xf32> to vector<8x32xf32>
    %130 = vector.extract_strided_slice %126 {offsets = [0, 96], sizes = [8, 32], strides = [1, 1]} : vector<8x128xf32> to vector<8x32xf32>
    %131 = arith.mulf %128, %84 : vector<8x32xf32>
    %132 = arith.mulf %127, %129 : vector<8x32xf32>
    %133 = arith.addf %131, %132 : vector<8x32xf32>
    %134 = math.tanh %133 : vector<8x32xf32>
    %135 = arith.mulf %130, %134 : vector<8x32xf32>
    %136 = vector.broadcast %85 : i32 to vector<8x1xi32>
    %137 = arith.cmpi slt, %136, %18 : vector<8x1xi32>
    %138 = vector.shape_cast %137 : vector<8x1xi1> to vector<8x1xi1>
    %139 = vector.broadcast %138 : vector<8x1xi1> to vector<8x32xi1>
    %140 = arith.select %139, %135, %81 : vector<8x32xi1>, vector<8x32xf32>
    %141 = vector.shape_cast %137 : vector<8x1xi1> to vector<8x1xi1>
    %142 = vector.broadcast %141 : vector<8x1xi1> to vector<8x32xi1>
    %143 = arith.select %142, %133, %84 : vector<8x32xi1>, vector<8x32xf32>
    %c2_i32 = arith.constant 2 : i32
    %c7_i32_41 = arith.constant 7 : i32
    %144 = arith.subi %c7_i32_41, %c2_i32 : i32
    %145 = arith.index_cast %c2_i32 : i32 to index
    %c0_42 = arith.constant 0 : index
    %c0_43 = arith.constant 0 : index
    %146 = vector.load %arg12[%145, %c0_42, %c0_43] : memref<8x8x128xf32, #tpu.memory_space<vmem>>, vector<1x8x128xf32>
    %147 = vector.shape_cast %146 : vector<1x8x128xf32> to vector<8x128xf32>
    %cst_44 = arith.constant dense<0.000000e+00> : vector<8x128xf32>
    %148 = tpu.matmul %111, %16, %cst_44 {dimension_numbers = #tpu.dot_dimension_numbers<[1], [0], [0], [1], [0, 0, 1, 1], [], []>} : vector<8x32xf32>, vector<32x128xf32>, vector<8x128xf32> -> vector<8x128xf32>
    %149 = arith.addf %147, %148 : vector<8x128xf32>
    %150 = math.tanh %149 : vector<8x128xf32>
    %151 = arith.negf %149 : vector<8x128xf32>
    %152 = math.exp %151 : vector<8x128xf32>
    %cst_45 = arith.constant 1.000000e+00 : f32
    %153 = vector.broadcast %cst_45 : f32 to vector<8x128xf32>
    %154 = arith.addf %153, %152 : vector<8x128xf32>
    %155 = arith.divf %153, %154 : vector<8x128xf32>
    %156 = arith.select %24, %150, %155 : vector<8x128xi1>, vector<8x128xf32>
    %157 = vector.extract_strided_slice %156 {offsets = [0, 0], sizes = [8, 32], strides = [1, 1]} : vector<8x128xf32> to vector<8x32xf32>
    %158 = vector.extract_strided_slice %156 {offsets = [0, 32], sizes = [8, 32], strides = [1, 1]} : vector<8x128xf32> to vector<8x32xf32>
    %159 = vector.extract_strided_slice %156 {offsets = [0, 64], sizes = [8, 32], strides = [1, 1]} : vector<8x128xf32> to vector<8x32xf32>
    %160 = vector.extract_strided_slice %156 {offsets = [0, 96], sizes = [8, 32], strides = [1, 1]} : vector<8x128xf32> to vector<8x32xf32>
    %161 = arith.mulf %158, %114 : vector<8x32xf32>
    %162 = arith.mulf %157, %159 : vector<8x32xf32>
    %163 = arith.addf %161, %162 : vector<8x32xf32>
    %164 = math.tanh %163 : vector<8x32xf32>
    %165 = arith.mulf %160, %164 : vector<8x32xf32>
    %166 = vector.broadcast %c2_i32 : i32 to vector<8x1xi32>
    %167 = arith.cmpi slt, %166, %18 : vector<8x1xi32>
    %168 = vector.shape_cast %167 : vector<8x1xi1> to vector<8x1xi1>
    %169 = vector.broadcast %168 : vector<8x1xi1> to vector<8x32xi1>
    %170 = arith.select %169, %165, %111 : vector<8x32xi1>, vector<8x32xf32>
    %171 = vector.shape_cast %167 : vector<8x1xi1> to vector<8x1xi1>
    %172 = vector.broadcast %171 : vector<8x1xi1> to vector<8x32xi1>
    %173 = arith.select %172, %163, %114 : vector<8x32xi1>, vector<8x32xf32>
    %174 = arith.index_cast %144 : i32 to index
    %c0_46 = arith.constant 0 : index
    %c0_47 = arith.constant 0 : index
    %175 = vector.load %arg13[%174, %c0_46, %c0_47] : memref<8x8x128xf32, #tpu.memory_space<vmem>>, vector<1x8x128xf32>
    %176 = vector.shape_cast %175 : vector<1x8x128xf32> to vector<8x128xf32>
    %cst_48 = arith.constant dense<0.000000e+00> : vector<8x128xf32>
    %177 = tpu.matmul %140, %17, %cst_48 {dimension_numbers = #tpu.dot_dimension_numbers<[1], [0], [0], [1], [0, 0, 1, 1], [], []>} : vector<8x32xf32>, vector<32x128xf32>, vector<8x128xf32> -> vector<8x128xf32>
    %178 = arith.addf %176, %177 : vector<8x128xf32>
    %179 = math.tanh %178 : vector<8x128xf32>
    %180 = arith.negf %178 : vector<8x128xf32>
    %181 = math.exp %180 : vector<8x128xf32>
    %cst_49 = arith.constant 1.000000e+00 : f32
    %182 = vector.broadcast %cst_49 : f32 to vector<8x128xf32>
    %183 = arith.addf %182, %181 : vector<8x128xf32>
    %184 = arith.divf %182, %183 : vector<8x128xf32>
    %185 = arith.select %24, %179, %184 : vector<8x128xi1>, vector<8x128xf32>
    %186 = vector.extract_strided_slice %185 {offsets = [0, 0], sizes = [8, 32], strides = [1, 1]} : vector<8x128xf32> to vector<8x32xf32>
    %187 = vector.extract_strided_slice %185 {offsets = [0, 32], sizes = [8, 32], strides = [1, 1]} : vector<8x128xf32> to vector<8x32xf32>
    %188 = vector.extract_strided_slice %185 {offsets = [0, 64], sizes = [8, 32], strides = [1, 1]} : vector<8x128xf32> to vector<8x32xf32>
    %189 = vector.extract_strided_slice %185 {offsets = [0, 96], sizes = [8, 32], strides = [1, 1]} : vector<8x128xf32> to vector<8x32xf32>
    %190 = arith.mulf %187, %143 : vector<8x32xf32>
    %191 = arith.mulf %186, %188 : vector<8x32xf32>
    %192 = arith.addf %190, %191 : vector<8x32xf32>
    %193 = math.tanh %192 : vector<8x32xf32>
    %194 = arith.mulf %189, %193 : vector<8x32xf32>
    %195 = vector.broadcast %144 : i32 to vector<8x1xi32>
    %196 = arith.cmpi slt, %195, %18 : vector<8x1xi32>
    %197 = vector.shape_cast %196 : vector<8x1xi1> to vector<8x1xi1>
    %198 = vector.broadcast %197 : vector<8x1xi1> to vector<8x32xi1>
    %199 = arith.select %198, %194, %140 : vector<8x32xi1>, vector<8x32xf32>
    %200 = vector.shape_cast %196 : vector<8x1xi1> to vector<8x1xi1>
    %201 = vector.broadcast %200 : vector<8x1xi1> to vector<8x32xi1>
    %202 = arith.select %201, %192, %143 : vector<8x32xi1>, vector<8x32xf32>
    %c3_i32 = arith.constant 3 : i32
    %c7_i32_50 = arith.constant 7 : i32
    %203 = arith.subi %c7_i32_50, %c3_i32 : i32
    %204 = arith.index_cast %c3_i32 : i32 to index
    %c0_51 = arith.constant 0 : index
    %c0_52 = arith.constant 0 : index
    %205 = vector.load %arg12[%204, %c0_51, %c0_52] : memref<8x8x128xf32, #tpu.memory_space<vmem>>, vector<1x8x128xf32>
    %206 = vector.shape_cast %205 : vector<1x8x128xf32> to vector<8x128xf32>
    %cst_53 = arith.constant dense<0.000000e+00> : vector<8x128xf32>
    %207 = tpu.matmul %170, %16, %cst_53 {dimension_numbers = #tpu.dot_dimension_numbers<[1], [0], [0], [1], [0, 0, 1, 1], [], []>} : vector<8x32xf32>, vector<32x128xf32>, vector<8x128xf32> -> vector<8x128xf32>
    %208 = arith.addf %206, %207 : vector<8x128xf32>
    %209 = math.tanh %208 : vector<8x128xf32>
    %210 = arith.negf %208 : vector<8x128xf32>
    %211 = math.exp %210 : vector<8x128xf32>
    %cst_54 = arith.constant 1.000000e+00 : f32
    %212 = vector.broadcast %cst_54 : f32 to vector<8x128xf32>
    %213 = arith.addf %212, %211 : vector<8x128xf32>
    %214 = arith.divf %212, %213 : vector<8x128xf32>
    %215 = arith.select %24, %209, %214 : vector<8x128xi1>, vector<8x128xf32>
    %216 = vector.extract_strided_slice %215 {offsets = [0, 0], sizes = [8, 32], strides = [1, 1]} : vector<8x128xf32> to vector<8x32xf32>
    %217 = vector.extract_strided_slice %215 {offsets = [0, 32], sizes = [8, 32], strides = [1, 1]} : vector<8x128xf32> to vector<8x32xf32>
    %218 = vector.extract_strided_slice %215 {offsets = [0, 64], sizes = [8, 32], strides = [1, 1]} : vector<8x128xf32> to vector<8x32xf32>
    %219 = vector.extract_strided_slice %215 {offsets = [0, 96], sizes = [8, 32], strides = [1, 1]} : vector<8x128xf32> to vector<8x32xf32>
    %220 = arith.mulf %217, %173 : vector<8x32xf32>
    %221 = arith.mulf %216, %218 : vector<8x32xf32>
    %222 = arith.addf %220, %221 : vector<8x32xf32>
    %223 = math.tanh %222 : vector<8x32xf32>
    %224 = arith.mulf %219, %223 : vector<8x32xf32>
    %225 = vector.broadcast %c3_i32 : i32 to vector<8x1xi32>
    %226 = arith.cmpi slt, %225, %18 : vector<8x1xi32>
    %227 = vector.shape_cast %226 : vector<8x1xi1> to vector<8x1xi1>
    %228 = vector.broadcast %227 : vector<8x1xi1> to vector<8x32xi1>
    %229 = arith.select %228, %224, %170 : vector<8x32xi1>, vector<8x32xf32>
    %230 = vector.shape_cast %226 : vector<8x1xi1> to vector<8x1xi1>
    %231 = vector.broadcast %230 : vector<8x1xi1> to vector<8x32xi1>
    %232 = arith.select %231, %222, %173 : vector<8x32xi1>, vector<8x32xf32>
    %233 = arith.index_cast %203 : i32 to index
    %c0_55 = arith.constant 0 : index
    %c0_56 = arith.constant 0 : index
    %234 = vector.load %arg13[%233, %c0_55, %c0_56] : memref<8x8x128xf32, #tpu.memory_space<vmem>>, vector<1x8x128xf32>
    %235 = vector.shape_cast %234 : vector<1x8x128xf32> to vector<8x128xf32>
    %cst_57 = arith.constant dense<0.000000e+00> : vector<8x128xf32>
    %236 = tpu.matmul %199, %17, %cst_57 {dimension_numbers = #tpu.dot_dimension_numbers<[1], [0], [0], [1], [0, 0, 1, 1], [], []>} : vector<8x32xf32>, vector<32x128xf32>, vector<8x128xf32> -> vector<8x128xf32>
    %237 = arith.addf %235, %236 : vector<8x128xf32>
    %238 = math.tanh %237 : vector<8x128xf32>
    %239 = arith.negf %237 : vector<8x128xf32>
    %240 = math.exp %239 : vector<8x128xf32>
    %cst_58 = arith.constant 1.000000e+00 : f32
    %241 = vector.broadcast %cst_58 : f32 to vector<8x128xf32>
    %242 = arith.addf %241, %240 : vector<8x128xf32>
    %243 = arith.divf %241, %242 : vector<8x128xf32>
    %244 = arith.select %24, %238, %243 : vector<8x128xi1>, vector<8x128xf32>
    %245 = vector.extract_strided_slice %244 {offsets = [0, 0], sizes = [8, 32], strides = [1, 1]} : vector<8x128xf32> to vector<8x32xf32>
    %246 = vector.extract_strided_slice %244 {offsets = [0, 32], sizes = [8, 32], strides = [1, 1]} : vector<8x128xf32> to vector<8x32xf32>
    %247 = vector.extract_strided_slice %244 {offsets = [0, 64], sizes = [8, 32], strides = [1, 1]} : vector<8x128xf32> to vector<8x32xf32>
    %248 = vector.extract_strided_slice %244 {offsets = [0, 96], sizes = [8, 32], strides = [1, 1]} : vector<8x128xf32> to vector<8x32xf32>
    %249 = arith.mulf %246, %202 : vector<8x32xf32>
    %250 = arith.mulf %245, %247 : vector<8x32xf32>
    %251 = arith.addf %249, %250 : vector<8x32xf32>
    %252 = math.tanh %251 : vector<8x32xf32>
    %253 = arith.mulf %248, %252 : vector<8x32xf32>
    %254 = vector.broadcast %203 : i32 to vector<8x1xi32>
    %255 = arith.cmpi slt, %254, %18 : vector<8x1xi32>
    %256 = vector.shape_cast %255 : vector<8x1xi1> to vector<8x1xi1>
    %257 = vector.broadcast %256 : vector<8x1xi1> to vector<8x32xi1>
    %258 = arith.select %257, %253, %199 : vector<8x32xi1>, vector<8x32xf32>
    %259 = vector.shape_cast %255 : vector<8x1xi1> to vector<8x1xi1>
    %260 = vector.broadcast %259 : vector<8x1xi1> to vector<8x32xi1>
    %261 = arith.select %260, %251, %202 : vector<8x32xi1>, vector<8x32xf32>
    %c4_i32 = arith.constant 4 : i32
    %c7_i32_59 = arith.constant 7 : i32
    %262 = arith.subi %c7_i32_59, %c4_i32 : i32
    %263 = arith.index_cast %c4_i32 : i32 to index
    %c0_60 = arith.constant 0 : index
    %c0_61 = arith.constant 0 : index
    %264 = vector.load %arg12[%263, %c0_60, %c0_61] : memref<8x8x128xf32, #tpu.memory_space<vmem>>, vector<1x8x128xf32>
    %265 = vector.shape_cast %264 : vector<1x8x128xf32> to vector<8x128xf32>
    %cst_62 = arith.constant dense<0.000000e+00> : vector<8x128xf32>
    %266 = tpu.matmul %229, %16, %cst_62 {dimension_numbers = #tpu.dot_dimension_numbers<[1], [0], [0], [1], [0, 0, 1, 1], [], []>} : vector<8x32xf32>, vector<32x128xf32>, vector<8x128xf32> -> vector<8x128xf32>
    %267 = arith.addf %265, %266 : vector<8x128xf32>
    %268 = math.tanh %267 : vector<8x128xf32>
    %269 = arith.negf %267 : vector<8x128xf32>
    %270 = math.exp %269 : vector<8x128xf32>
    %cst_63 = arith.constant 1.000000e+00 : f32
    %271 = vector.broadcast %cst_63 : f32 to vector<8x128xf32>
    %272 = arith.addf %271, %270 : vector<8x128xf32>
    %273 = arith.divf %271, %272 : vector<8x128xf32>
    %274 = arith.select %24, %268, %273 : vector<8x128xi1>, vector<8x128xf32>
    %275 = vector.extract_strided_slice %274 {offsets = [0, 0], sizes = [8, 32], strides = [1, 1]} : vector<8x128xf32> to vector<8x32xf32>
    %276 = vector.extract_strided_slice %274 {offsets = [0, 32], sizes = [8, 32], strides = [1, 1]} : vector<8x128xf32> to vector<8x32xf32>
    %277 = vector.extract_strided_slice %274 {offsets = [0, 64], sizes = [8, 32], strides = [1, 1]} : vector<8x128xf32> to vector<8x32xf32>
    %278 = vector.extract_strided_slice %274 {offsets = [0, 96], sizes = [8, 32], strides = [1, 1]} : vector<8x128xf32> to vector<8x32xf32>
    %279 = arith.mulf %276, %232 : vector<8x32xf32>
    %280 = arith.mulf %275, %277 : vector<8x32xf32>
    %281 = arith.addf %279, %280 : vector<8x32xf32>
    %282 = math.tanh %281 : vector<8x32xf32>
    %283 = arith.mulf %278, %282 : vector<8x32xf32>
    %284 = vector.broadcast %c4_i32 : i32 to vector<8x1xi32>
    %285 = arith.cmpi slt, %284, %18 : vector<8x1xi32>
    %286 = vector.shape_cast %285 : vector<8x1xi1> to vector<8x1xi1>
    %287 = vector.broadcast %286 : vector<8x1xi1> to vector<8x32xi1>
    %288 = arith.select %287, %283, %229 : vector<8x32xi1>, vector<8x32xf32>
    %289 = vector.shape_cast %285 : vector<8x1xi1> to vector<8x1xi1>
    %290 = vector.broadcast %289 : vector<8x1xi1> to vector<8x32xi1>
    %291 = arith.select %290, %281, %232 : vector<8x32xi1>, vector<8x32xf32>
    %292 = arith.index_cast %262 : i32 to index
    %c0_64 = arith.constant 0 : index
    %c0_65 = arith.constant 0 : index
    %293 = vector.load %arg13[%292, %c0_64, %c0_65] : memref<8x8x128xf32, #tpu.memory_space<vmem>>, vector<1x8x128xf32>
    %294 = vector.shape_cast %293 : vector<1x8x128xf32> to vector<8x128xf32>
    %cst_66 = arith.constant dense<0.000000e+00> : vector<8x128xf32>
    %295 = tpu.matmul %258, %17, %cst_66 {dimension_numbers = #tpu.dot_dimension_numbers<[1], [0], [0], [1], [0, 0, 1, 1], [], []>} : vector<8x32xf32>, vector<32x128xf32>, vector<8x128xf32> -> vector<8x128xf32>
    %296 = arith.addf %294, %295 : vector<8x128xf32>
    %297 = math.tanh %296 : vector<8x128xf32>
    %298 = arith.negf %296 : vector<8x128xf32>
    %299 = math.exp %298 : vector<8x128xf32>
    %cst_67 = arith.constant 1.000000e+00 : f32
    %300 = vector.broadcast %cst_67 : f32 to vector<8x128xf32>
    %301 = arith.addf %300, %299 : vector<8x128xf32>
    %302 = arith.divf %300, %301 : vector<8x128xf32>
    %303 = arith.select %24, %297, %302 : vector<8x128xi1>, vector<8x128xf32>
    %304 = vector.extract_strided_slice %303 {offsets = [0, 0], sizes = [8, 32], strides = [1, 1]} : vector<8x128xf32> to vector<8x32xf32>
    %305 = vector.extract_strided_slice %303 {offsets = [0, 32], sizes = [8, 32], strides = [1, 1]} : vector<8x128xf32> to vector<8x32xf32>
    %306 = vector.extract_strided_slice %303 {offsets = [0, 64], sizes = [8, 32], strides = [1, 1]} : vector<8x128xf32> to vector<8x32xf32>
    %307 = vector.extract_strided_slice %303 {offsets = [0, 96], sizes = [8, 32], strides = [1, 1]} : vector<8x128xf32> to vector<8x32xf32>
    %308 = arith.mulf %305, %261 : vector<8x32xf32>
    %309 = arith.mulf %304, %306 : vector<8x32xf32>
    %310 = arith.addf %308, %309 : vector<8x32xf32>
    %311 = math.tanh %310 : vector<8x32xf32>
    %312 = arith.mulf %307, %311 : vector<8x32xf32>
    %313 = vector.broadcast %262 : i32 to vector<8x1xi32>
    %314 = arith.cmpi slt, %313, %18 : vector<8x1xi32>
    %315 = vector.shape_cast %314 : vector<8x1xi1> to vector<8x1xi1>
    %316 = vector.broadcast %315 : vector<8x1xi1> to vector<8x32xi1>
    %317 = arith.select %316, %312, %258 : vector<8x32xi1>, vector<8x32xf32>
    %318 = vector.shape_cast %314 : vector<8x1xi1> to vector<8x1xi1>
    %319 = vector.broadcast %318 : vector<8x1xi1> to vector<8x32xi1>
    %320 = arith.select %319, %310, %261 : vector<8x32xi1>, vector<8x32xf32>
    %c5_i32 = arith.constant 5 : i32
    %c7_i32_68 = arith.constant 7 : i32
    %321 = arith.subi %c7_i32_68, %c5_i32 : i32
    %322 = arith.index_cast %c5_i32 : i32 to index
    %c0_69 = arith.constant 0 : index
    %c0_70 = arith.constant 0 : index
    %323 = vector.load %arg12[%322, %c0_69, %c0_70] : memref<8x8x128xf32, #tpu.memory_space<vmem>>, vector<1x8x128xf32>
    %324 = vector.shape_cast %323 : vector<1x8x128xf32> to vector<8x128xf32>
    %cst_71 = arith.constant dense<0.000000e+00> : vector<8x128xf32>
    %325 = tpu.matmul %288, %16, %cst_71 {dimension_numbers = #tpu.dot_dimension_numbers<[1], [0], [0], [1], [0, 0, 1, 1], [], []>} : vector<8x32xf32>, vector<32x128xf32>, vector<8x128xf32> -> vector<8x128xf32>
    %326 = arith.addf %324, %325 : vector<8x128xf32>
    %327 = math.tanh %326 : vector<8x128xf32>
    %328 = arith.negf %326 : vector<8x128xf32>
    %329 = math.exp %328 : vector<8x128xf32>
    %cst_72 = arith.constant 1.000000e+00 : f32
    %330 = vector.broadcast %cst_72 : f32 to vector<8x128xf32>
    %331 = arith.addf %330, %329 : vector<8x128xf32>
    %332 = arith.divf %330, %331 : vector<8x128xf32>
    %333 = arith.select %24, %327, %332 : vector<8x128xi1>, vector<8x128xf32>
    %334 = vector.extract_strided_slice %333 {offsets = [0, 0], sizes = [8, 32], strides = [1, 1]} : vector<8x128xf32> to vector<8x32xf32>
    %335 = vector.extract_strided_slice %333 {offsets = [0, 32], sizes = [8, 32], strides = [1, 1]} : vector<8x128xf32> to vector<8x32xf32>
    %336 = vector.extract_strided_slice %333 {offsets = [0, 64], sizes = [8, 32], strides = [1, 1]} : vector<8x128xf32> to vector<8x32xf32>
    %337 = vector.extract_strided_slice %333 {offsets = [0, 96], sizes = [8, 32], strides = [1, 1]} : vector<8x128xf32> to vector<8x32xf32>
    %338 = arith.mulf %335, %291 : vector<8x32xf32>
    %339 = arith.mulf %334, %336 : vector<8x32xf32>
    %340 = arith.addf %338, %339 : vector<8x32xf32>
    %341 = math.tanh %340 : vector<8x32xf32>
    %342 = arith.mulf %337, %341 : vector<8x32xf32>
    %343 = vector.broadcast %c5_i32 : i32 to vector<8x1xi32>
    %344 = arith.cmpi slt, %343, %18 : vector<8x1xi32>
    %345 = vector.shape_cast %344 : vector<8x1xi1> to vector<8x1xi1>
    %346 = vector.broadcast %345 : vector<8x1xi1> to vector<8x32xi1>
    %347 = arith.select %346, %342, %288 : vector<8x32xi1>, vector<8x32xf32>
    %348 = vector.shape_cast %344 : vector<8x1xi1> to vector<8x1xi1>
    %349 = vector.broadcast %348 : vector<8x1xi1> to vector<8x32xi1>
    %350 = arith.select %349, %340, %291 : vector<8x32xi1>, vector<8x32xf32>
    %351 = arith.index_cast %321 : i32 to index
    %c0_73 = arith.constant 0 : index
    %c0_74 = arith.constant 0 : index
    %352 = vector.load %arg13[%351, %c0_73, %c0_74] : memref<8x8x128xf32, #tpu.memory_space<vmem>>, vector<1x8x128xf32>
    %353 = vector.shape_cast %352 : vector<1x8x128xf32> to vector<8x128xf32>
    %cst_75 = arith.constant dense<0.000000e+00> : vector<8x128xf32>
    %354 = tpu.matmul %317, %17, %cst_75 {dimension_numbers = #tpu.dot_dimension_numbers<[1], [0], [0], [1], [0, 0, 1, 1], [], []>} : vector<8x32xf32>, vector<32x128xf32>, vector<8x128xf32> -> vector<8x128xf32>
    %355 = arith.addf %353, %354 : vector<8x128xf32>
    %356 = math.tanh %355 : vector<8x128xf32>
    %357 = arith.negf %355 : vector<8x128xf32>
    %358 = math.exp %357 : vector<8x128xf32>
    %cst_76 = arith.constant 1.000000e+00 : f32
    %359 = vector.broadcast %cst_76 : f32 to vector<8x128xf32>
    %360 = arith.addf %359, %358 : vector<8x128xf32>
    %361 = arith.divf %359, %360 : vector<8x128xf32>
    %362 = arith.select %24, %356, %361 : vector<8x128xi1>, vector<8x128xf32>
    %363 = vector.extract_strided_slice %362 {offsets = [0, 0], sizes = [8, 32], strides = [1, 1]} : vector<8x128xf32> to vector<8x32xf32>
    %364 = vector.extract_strided_slice %362 {offsets = [0, 32], sizes = [8, 32], strides = [1, 1]} : vector<8x128xf32> to vector<8x32xf32>
    %365 = vector.extract_strided_slice %362 {offsets = [0, 64], sizes = [8, 32], strides = [1, 1]} : vector<8x128xf32> to vector<8x32xf32>
    %366 = vector.extract_strided_slice %362 {offsets = [0, 96], sizes = [8, 32], strides = [1, 1]} : vector<8x128xf32> to vector<8x32xf32>
    %367 = arith.mulf %364, %320 : vector<8x32xf32>
    %368 = arith.mulf %363, %365 : vector<8x32xf32>
    %369 = arith.addf %367, %368 : vector<8x32xf32>
    %370 = math.tanh %369 : vector<8x32xf32>
    %371 = arith.mulf %366, %370 : vector<8x32xf32>
    %372 = vector.broadcast %321 : i32 to vector<8x1xi32>
    %373 = arith.cmpi slt, %372, %18 : vector<8x1xi32>
    %374 = vector.shape_cast %373 : vector<8x1xi1> to vector<8x1xi1>
    %375 = vector.broadcast %374 : vector<8x1xi1> to vector<8x32xi1>
    %376 = arith.select %375, %371, %317 : vector<8x32xi1>, vector<8x32xf32>
    %377 = vector.shape_cast %373 : vector<8x1xi1> to vector<8x1xi1>
    %378 = vector.broadcast %377 : vector<8x1xi1> to vector<8x32xi1>
    %379 = arith.select %378, %369, %320 : vector<8x32xi1>, vector<8x32xf32>
    %c6_i32 = arith.constant 6 : i32
    %c7_i32_77 = arith.constant 7 : i32
    %380 = arith.subi %c7_i32_77, %c6_i32 : i32
    %381 = arith.index_cast %c6_i32 : i32 to index
    %c0_78 = arith.constant 0 : index
    %c0_79 = arith.constant 0 : index
    %382 = vector.load %arg12[%381, %c0_78, %c0_79] : memref<8x8x128xf32, #tpu.memory_space<vmem>>, vector<1x8x128xf32>
    %383 = vector.shape_cast %382 : vector<1x8x128xf32> to vector<8x128xf32>
    %cst_80 = arith.constant dense<0.000000e+00> : vector<8x128xf32>
    %384 = tpu.matmul %347, %16, %cst_80 {dimension_numbers = #tpu.dot_dimension_numbers<[1], [0], [0], [1], [0, 0, 1, 1], [], []>} : vector<8x32xf32>, vector<32x128xf32>, vector<8x128xf32> -> vector<8x128xf32>
    %385 = arith.addf %383, %384 : vector<8x128xf32>
    %386 = math.tanh %385 : vector<8x128xf32>
    %387 = arith.negf %385 : vector<8x128xf32>
    %388 = math.exp %387 : vector<8x128xf32>
    %cst_81 = arith.constant 1.000000e+00 : f32
    %389 = vector.broadcast %cst_81 : f32 to vector<8x128xf32>
    %390 = arith.addf %389, %388 : vector<8x128xf32>
    %391 = arith.divf %389, %390 : vector<8x128xf32>
    %392 = arith.select %24, %386, %391 : vector<8x128xi1>, vector<8x128xf32>
    %393 = vector.extract_strided_slice %392 {offsets = [0, 0], sizes = [8, 32], strides = [1, 1]} : vector<8x128xf32> to vector<8x32xf32>
    %394 = vector.extract_strided_slice %392 {offsets = [0, 32], sizes = [8, 32], strides = [1, 1]} : vector<8x128xf32> to vector<8x32xf32>
    %395 = vector.extract_strided_slice %392 {offsets = [0, 64], sizes = [8, 32], strides = [1, 1]} : vector<8x128xf32> to vector<8x32xf32>
    %396 = vector.extract_strided_slice %392 {offsets = [0, 96], sizes = [8, 32], strides = [1, 1]} : vector<8x128xf32> to vector<8x32xf32>
    %397 = arith.mulf %394, %350 : vector<8x32xf32>
    %398 = arith.mulf %393, %395 : vector<8x32xf32>
    %399 = arith.addf %397, %398 : vector<8x32xf32>
    %400 = math.tanh %399 : vector<8x32xf32>
    %401 = arith.mulf %396, %400 : vector<8x32xf32>
    %402 = vector.broadcast %c6_i32 : i32 to vector<8x1xi32>
    %403 = arith.cmpi slt, %402, %18 : vector<8x1xi32>
    %404 = vector.shape_cast %403 : vector<8x1xi1> to vector<8x1xi1>
    %405 = vector.broadcast %404 : vector<8x1xi1> to vector<8x32xi1>
    %406 = arith.select %405, %401, %347 : vector<8x32xi1>, vector<8x32xf32>
    %407 = vector.shape_cast %403 : vector<8x1xi1> to vector<8x1xi1>
    %408 = vector.broadcast %407 : vector<8x1xi1> to vector<8x32xi1>
    %409 = arith.select %408, %399, %350 : vector<8x32xi1>, vector<8x32xf32>
    %410 = arith.index_cast %380 : i32 to index
    %c0_82 = arith.constant 0 : index
    %c0_83 = arith.constant 0 : index
    %411 = vector.load %arg13[%410, %c0_82, %c0_83] : memref<8x8x128xf32, #tpu.memory_space<vmem>>, vector<1x8x128xf32>
    %412 = vector.shape_cast %411 : vector<1x8x128xf32> to vector<8x128xf32>
    %cst_84 = arith.constant dense<0.000000e+00> : vector<8x128xf32>
    %413 = tpu.matmul %376, %17, %cst_84 {dimension_numbers = #tpu.dot_dimension_numbers<[1], [0], [0], [1], [0, 0, 1, 1], [], []>} : vector<8x32xf32>, vector<32x128xf32>, vector<8x128xf32> -> vector<8x128xf32>
    %414 = arith.addf %412, %413 : vector<8x128xf32>
    %415 = math.tanh %414 : vector<8x128xf32>
    %416 = arith.negf %414 : vector<8x128xf32>
    %417 = math.exp %416 : vector<8x128xf32>
    %cst_85 = arith.constant 1.000000e+00 : f32
    %418 = vector.broadcast %cst_85 : f32 to vector<8x128xf32>
    %419 = arith.addf %418, %417 : vector<8x128xf32>
    %420 = arith.divf %418, %419 : vector<8x128xf32>
    %421 = arith.select %24, %415, %420 : vector<8x128xi1>, vector<8x128xf32>
    %422 = vector.extract_strided_slice %421 {offsets = [0, 0], sizes = [8, 32], strides = [1, 1]} : vector<8x128xf32> to vector<8x32xf32>
    %423 = vector.extract_strided_slice %421 {offsets = [0, 32], sizes = [8, 32], strides = [1, 1]} : vector<8x128xf32> to vector<8x32xf32>
    %424 = vector.extract_strided_slice %421 {offsets = [0, 64], sizes = [8, 32], strides = [1, 1]} : vector<8x128xf32> to vector<8x32xf32>
    %425 = vector.extract_strided_slice %421 {offsets = [0, 96], sizes = [8, 32], strides = [1, 1]} : vector<8x128xf32> to vector<8x32xf32>
    %426 = arith.mulf %423, %379 : vector<8x32xf32>
    %427 = arith.mulf %422, %424 : vector<8x32xf32>
    %428 = arith.addf %426, %427 : vector<8x32xf32>
    %429 = math.tanh %428 : vector<8x32xf32>
    %430 = arith.mulf %425, %429 : vector<8x32xf32>
    %431 = vector.broadcast %380 : i32 to vector<8x1xi32>
    %432 = arith.cmpi slt, %431, %18 : vector<8x1xi32>
    %433 = vector.shape_cast %432 : vector<8x1xi1> to vector<8x1xi1>
    %434 = vector.broadcast %433 : vector<8x1xi1> to vector<8x32xi1>
    %435 = arith.select %434, %430, %376 : vector<8x32xi1>, vector<8x32xf32>
    %436 = vector.shape_cast %432 : vector<8x1xi1> to vector<8x1xi1>
    %437 = vector.broadcast %436 : vector<8x1xi1> to vector<8x32xi1>
    %438 = arith.select %437, %428, %379 : vector<8x32xi1>, vector<8x32xf32>
    %c7_i32_86 = arith.constant 7 : i32
    %c7_i32_87 = arith.constant 7 : i32
    %439 = arith.subi %c7_i32_87, %c7_i32_86 : i32
    %440 = arith.index_cast %c7_i32_86 : i32 to index
    %c0_88 = arith.constant 0 : index
    %c0_89 = arith.constant 0 : index
    %441 = vector.load %arg12[%440, %c0_88, %c0_89] : memref<8x8x128xf32, #tpu.memory_space<vmem>>, vector<1x8x128xf32>
    %442 = vector.shape_cast %441 : vector<1x8x128xf32> to vector<8x128xf32>
    %cst_90 = arith.constant dense<0.000000e+00> : vector<8x128xf32>
    %443 = tpu.matmul %406, %16, %cst_90 {dimension_numbers = #tpu.dot_dimension_numbers<[1], [0], [0], [1], [0, 0, 1, 1], [], []>} : vector<8x32xf32>, vector<32x128xf32>, vector<8x128xf32> -> vector<8x128xf32>
    %444 = arith.addf %442, %443 : vector<8x128xf32>
    %445 = math.tanh %444 : vector<8x128xf32>
    %446 = arith.negf %444 : vector<8x128xf32>
    %447 = math.exp %446 : vector<8x128xf32>
    %cst_91 = arith.constant 1.000000e+00 : f32
    %448 = vector.broadcast %cst_91 : f32 to vector<8x128xf32>
    %449 = arith.addf %448, %447 : vector<8x128xf32>
    %450 = arith.divf %448, %449 : vector<8x128xf32>
    %451 = arith.select %24, %445, %450 : vector<8x128xi1>, vector<8x128xf32>
    %452 = vector.extract_strided_slice %451 {offsets = [0, 0], sizes = [8, 32], strides = [1, 1]} : vector<8x128xf32> to vector<8x32xf32>
    %453 = vector.extract_strided_slice %451 {offsets = [0, 32], sizes = [8, 32], strides = [1, 1]} : vector<8x128xf32> to vector<8x32xf32>
    %454 = vector.extract_strided_slice %451 {offsets = [0, 64], sizes = [8, 32], strides = [1, 1]} : vector<8x128xf32> to vector<8x32xf32>
    %455 = vector.extract_strided_slice %451 {offsets = [0, 96], sizes = [8, 32], strides = [1, 1]} : vector<8x128xf32> to vector<8x32xf32>
    %456 = arith.mulf %453, %409 : vector<8x32xf32>
    %457 = arith.mulf %452, %454 : vector<8x32xf32>
    %458 = arith.addf %456, %457 : vector<8x32xf32>
    %459 = math.tanh %458 : vector<8x32xf32>
    %460 = arith.mulf %455, %459 : vector<8x32xf32>
    %461 = vector.broadcast %c7_i32_86 : i32 to vector<8x1xi32>
    %462 = arith.cmpi slt, %461, %18 : vector<8x1xi32>
    %463 = vector.shape_cast %462 : vector<8x1xi1> to vector<8x1xi1>
    %464 = vector.broadcast %463 : vector<8x1xi1> to vector<8x32xi1>
    %465 = arith.select %464, %460, %406 : vector<8x32xi1>, vector<8x32xf32>
    %466 = vector.shape_cast %462 : vector<8x1xi1> to vector<8x1xi1>
    %467 = vector.broadcast %466 : vector<8x1xi1> to vector<8x32xi1>
    %468 = arith.select %467, %458, %409 : vector<8x32xi1>, vector<8x32xf32>
    %469 = arith.index_cast %439 : i32 to index
    %c0_92 = arith.constant 0 : index
    %c0_93 = arith.constant 0 : index
    %470 = vector.load %arg13[%469, %c0_92, %c0_93] : memref<8x8x128xf32, #tpu.memory_space<vmem>>, vector<1x8x128xf32>
    %471 = vector.shape_cast %470 : vector<1x8x128xf32> to vector<8x128xf32>
    %cst_94 = arith.constant dense<0.000000e+00> : vector<8x128xf32>
    %472 = tpu.matmul %435, %17, %cst_94 {dimension_numbers = #tpu.dot_dimension_numbers<[1], [0], [0], [1], [0, 0, 1, 1], [], []>} : vector<8x32xf32>, vector<32x128xf32>, vector<8x128xf32> -> vector<8x128xf32>
    %473 = arith.addf %471, %472 : vector<8x128xf32>
    %474 = math.tanh %473 : vector<8x128xf32>
    %475 = arith.negf %473 : vector<8x128xf32>
    %476 = math.exp %475 : vector<8x128xf32>
    %cst_95 = arith.constant 1.000000e+00 : f32
    %477 = vector.broadcast %cst_95 : f32 to vector<8x128xf32>
    %478 = arith.addf %477, %476 : vector<8x128xf32>
    %479 = arith.divf %477, %478 : vector<8x128xf32>
    %480 = arith.select %24, %474, %479 : vector<8x128xi1>, vector<8x128xf32>
    %481 = vector.extract_strided_slice %480 {offsets = [0, 0], sizes = [8, 32], strides = [1, 1]} : vector<8x128xf32> to vector<8x32xf32>
    %482 = vector.extract_strided_slice %480 {offsets = [0, 32], sizes = [8, 32], strides = [1, 1]} : vector<8x128xf32> to vector<8x32xf32>
    %483 = vector.extract_strided_slice %480 {offsets = [0, 64], sizes = [8, 32], strides = [1, 1]} : vector<8x128xf32> to vector<8x32xf32>
    %484 = vector.extract_strided_slice %480 {offsets = [0, 96], sizes = [8, 32], strides = [1, 1]} : vector<8x128xf32> to vector<8x32xf32>
    %485 = arith.mulf %482, %438 : vector<8x32xf32>
    %486 = arith.mulf %481, %483 : vector<8x32xf32>
    %487 = arith.addf %485, %486 : vector<8x32xf32>
    %488 = math.tanh %487 : vector<8x32xf32>
    %489 = arith.mulf %484, %488 : vector<8x32xf32>
    %490 = vector.broadcast %439 : i32 to vector<8x1xi32>
    %491 = arith.cmpi slt, %490, %18 : vector<8x1xi32>
    %492 = vector.shape_cast %491 : vector<8x1xi1> to vector<8x1xi1>
    %493 = vector.broadcast %492 : vector<8x1xi1> to vector<8x32xi1>
    %494 = arith.select %493, %489, %435 : vector<8x32xi1>, vector<8x32xf32>
    %495 = vector.shape_cast %491 : vector<8x1xi1> to vector<8x1xi1>
    %496 = vector.broadcast %495 : vector<8x1xi1> to vector<8x32xi1>
    %497 = arith.select %496, %487, %438 : vector<8x32xi1>, vector<8x32xf32>
    %c8_i32 = arith.constant 8 : i32
    %c0_96 = arith.constant 0 : index
    %c0_97 = arith.constant 0 : index
    %498 = vector.load %arg9[%c0_96, %c0_97] : memref<64x32xf32, #tpu.memory_space<vmem>>, vector<32x32xf32>
    %cst_98 = arith.constant dense<0.000000e+00> : vector<8x32xf32>
    %499 = tpu.matmul %465, %498, %cst_98 {dimension_numbers = #tpu.dot_dimension_numbers<[1], [0], [0], [1], [0, 0, 1, 1], [], []>} : vector<8x32xf32>, vector<32x32xf32>, vector<8x32xf32> -> vector<8x32xf32>
    %c32 = arith.constant 32 : index
    %c0_99 = arith.constant 0 : index
    %500 = vector.load %arg9[%c32, %c0_99] : memref<64x32xf32, #tpu.memory_space<vmem>>, vector<32x32xf32>
    %cst_100 = arith.constant dense<0.000000e+00> : vector<8x32xf32>
    %501 = tpu.matmul %494, %500, %cst_100 {dimension_numbers = #tpu.dot_dimension_numbers<[1], [0], [0], [1], [0, 0, 1, 1], [], []>} : vector<8x32xf32>, vector<32x32xf32>, vector<8x32xf32> -> vector<8x32xf32>
    %502 = arith.addf %499, %501 : vector<8x32xf32>
    %c0_101 = arith.constant 0 : index
    %c0_102 = arith.constant 0 : index
    %503 = vector.load %arg10[%c0_101, %c0_102] : memref<1x32xf32, #tpu.memory_space<vmem>>, vector<1x32xf32>
    %504 = vector.broadcast %503 : vector<1x32xf32> to vector<8x32xf32>
    %505 = arith.addf %502, %504 : vector<8x32xf32>
    %c0_103 = arith.constant 0 : index
    %c0_104 = arith.constant 0 : index
    %506 = vector.load %arg11[%c0_103, %c0_104] : memref<8x32xf32, #tpu.memory_space<vmem>>, vector<8x32xf32>
    tpu.vector_store %arg11[%c0_103, %c0_104], %505 {strides = array<i32>} : memref<8x32xf32, #tpu.memory_space<vmem>>, vector<8x32xf32>,
    return
  }
  func.func @transform_0(%arg0: i32) -> (i32, i32, i32) {
    %c0_i32 = arith.constant 0 : i32
    %c0_i32_0 = arith.constant 0 : i32
    %c0_i32_1 = arith.constant 0 : i32
    return %c0_i32, %arg0, %c0_i32_0 : i32, i32, i32
  }
  func.func @transform_1(%arg0: i32) -> (i32, i32) {
    %c0_i32 = arith.constant 0 : i32
    %c0_i32_0 = arith.constant 0 : i32
    %c0_i32_1 = arith.constant 0 : i32
    return %c0_i32, %c0_i32_0 : i32, i32
  }
  func.func @transform_2(%arg0: i32) -> (i32, i32) {
    %c0_i32 = arith.constant 0 : i32
    %c0_i32_0 = arith.constant 0 : i32
    %c0_i32_1 = arith.constant 0 : i32
    return %c0_i32, %c0_i32_0 : i32, i32
  }
  func.func @transform_3(%arg0: i32) -> (i32, i32) {
    %c0_i32 = arith.constant 0 : i32
    %c0_i32_0 = arith.constant 0 : i32
    %c0_i32_1 = arith.constant 0 : i32
    return %c0_i32, %c0_i32_0 : i32, i32
  }
  func.func @transform_4(%arg0: i32) -> (i32, i32) {
    %c0_i32 = arith.constant 0 : i32
    %c0_i32_0 = arith.constant 0 : i32
    %c0_i32_1 = arith.constant 0 : i32
    return %c0_i32, %c0_i32_0 : i32, i32
  }
  func.func @transform_5(%arg0: i32) -> (i32, i32) {
    %c0_i32 = arith.constant 0 : i32
    %c0_i32_0 = arith.constant 0 : i32
    %c0_i32_1 = arith.constant 0 : i32
    return %c0_i32, %c0_i32_0 : i32, i32
  }
  func.func @transform_6(%arg0: i32) -> (i32, i32) {
    %c0_i32 = arith.constant 0 : i32
    %c0_i32_0 = arith.constant 0 : i32
    %c0_i32_1 = arith.constant 0 : i32
    return %c0_i32, %c0_i32_0 : i32, i32
  }
  func.func @transform_7(%arg0: i32) -> (i32, i32) {
    %c0_i32 = arith.constant 0 : i32
    %c0_i32_0 = arith.constant 0 : i32
    return %arg0, %c0_i32 : i32, i32
  }
  func.func @transform_8(%arg0: i32) -> (i32, i32) {
    %c0_i32 = arith.constant 0 : i32
    %c0_i32_0 = arith.constant 0 : i32
    %c0_i32_1 = arith.constant 0 : i32
    return %c0_i32, %c0_i32_0 : i32, i32
  }
  func.func @transform_9(%arg0: i32) -> (i32, i32) {
    %c0_i32 = arith.constant 0 : i32
    %c0_i32_0 = arith.constant 0 : i32
    %c0_i32_1 = arith.constant 0 : i32
    return %c0_i32, %c0_i32_0 : i32, i32
  }
  func.func @transform_10(%arg0: i32) -> (i32, i32) {
    %c0_i32 = arith.constant 0 : i32
    %c0_i32_0 = arith.constant 0 : i32
    return %arg0, %c0_i32 : i32, i32
  }
}

module attributes {stable_mosaic.version = 11 : i64} {
  func.func @_bilstm_kernel(%arg0: i32, %arg1: memref<8x8x64xf32, #tpu.memory_space<vmem>>, %arg2: memref<64x128xf32, #tpu.memory_space<vmem>>, %arg3: memref<32x128xf32, #tpu.memory_space<vmem>>, %arg4: memref<1x128xf32, #tpu.memory_space<vmem>>, %arg5: memref<64x128xf32, #tpu.memory_space<vmem>>, %arg6: memref<32x128xf32, #tpu.memory_space<vmem>>, %arg7: memref<1x128xf32, #tpu.memory_space<vmem>>, %arg8: memref<8x1xi32, #tpu.memory_space<vmem>>, %arg9: memref<8x8x64xf32, #tpu.memory_space<vmem>>, %arg10: memref<8x8x128xf32, #tpu.memory_space<vmem>>, %arg11: memref<8x8x128xf32, #tpu.memory_space<vmem>>) attributes {dimension_semantics = [#tpu.dimension_semantics<parallel>], iteration_bounds = array<i64: 1>, scalar_prefetch = 0 : i64, scratch_operands = 2 : i64, tpu.core_type = #tpu.core_type<tc>, window_params = [{transform_indices = @transform_0, window_bounds = array<i64: 8, 8, 64>}, {pipeline_mode = #tpu.pipeline_mode<synchronous>, transform_indices = @transform_1, window_bounds = array<i64: 64, 128>}, {pipeline_mode = #tpu.pipeline_mode<synchronous>, transform_indices = @transform_2, window_bounds = array<i64: 32, 128>}, {pipeline_mode = #tpu.pipeline_mode<synchronous>, transform_indices = @transform_3, window_bounds = array<i64: 1, 128>}, {pipeline_mode = #tpu.pipeline_mode<synchronous>, transform_indices = @transform_4, window_bounds = array<i64: 64, 128>}, {pipeline_mode = #tpu.pipeline_mode<synchronous>, transform_indices = @transform_5, window_bounds = array<i64: 32, 128>}, {pipeline_mode = #tpu.pipeline_mode<synchronous>, transform_indices = @transform_6, window_bounds = array<i64: 1, 128>}, {transform_indices = @transform_7, window_bounds = array<i64: 8, 1>}, {transform_indices = @transform_8, window_bounds = array<i64: 8, 8, 64>}]} {
    %c0 = arith.constant 0 : index
    %c0_0 = arith.constant 0 : index
    %c0_1 = arith.constant 0 : index
    %0 = vector.load %arg1[%c0, %c0_0, %c0_1] : memref<8x8x64xf32, #tpu.memory_space<vmem>>, vector<8x8x64xf32>
    %1 = vector.shape_cast %0 : vector<8x8x64xf32> to vector<64x64xf32>
    %c0_2 = arith.constant 0 : index
    %c0_3 = arith.constant 0 : index
    %2 = vector.load %arg2[%c0_2, %c0_3] : memref<64x128xf32, #tpu.memory_space<vmem>>, vector<64x128xf32>
    %cst = arith.constant dense<0.000000e+00> : vector<64x128xf32>
    %3 = tpu.matmul %1, %2, %cst {dimension_numbers = #tpu.dot_dimension_numbers<[1], [0], [0], [1], [0, 0, 1, 1], [], []>} : vector<64x64xf32>, vector<64x128xf32>, vector<64x128xf32> -> vector<64x128xf32>
    %c0_4 = arith.constant 0 : index
    %c0_5 = arith.constant 0 : index
    %4 = vector.load %arg4[%c0_4, %c0_5] : memref<1x128xf32, #tpu.memory_space<vmem>>, vector<1x128xf32>
    %5 = vector.broadcast %4 : vector<1x128xf32> to vector<64x128xf32>
    %6 = arith.addf %3, %5 : vector<64x128xf32>
    %7 = vector.shape_cast %6 : vector<64x128xf32> to vector<8x8x128xf32>
    %c0_6 = arith.constant 0 : index
    %c0_7 = arith.constant 0 : index
    %c0_8 = arith.constant 0 : index
    %8 = vector.load %arg10[%c0_6, %c0_7, %c0_8] : memref<8x8x128xf32, #tpu.memory_space<vmem>>, vector<8x8x128xf32>
    tpu.vector_store %arg10[%c0_6, %c0_7, %c0_8], %7 {strides = array<i32>} : memref<8x8x128xf32, #tpu.memory_space<vmem>>, vector<8x8x128xf32>,
    %c0_9 = arith.constant 0 : index
    %c0_10 = arith.constant 0 : index
    %9 = vector.load %arg5[%c0_9, %c0_10] : memref<64x128xf32, #tpu.memory_space<vmem>>, vector<64x128xf32>
    %cst_11 = arith.constant dense<0.000000e+00> : vector<64x128xf32>
    %10 = tpu.matmul %1, %9, %cst_11 {dimension_numbers = #tpu.dot_dimension_numbers<[1], [0], [0], [1], [0, 0, 1, 1], [], []>} : vector<64x64xf32>, vector<64x128xf32>, vector<64x128xf32> -> vector<64x128xf32>
    %c0_12 = arith.constant 0 : index
    %c0_13 = arith.constant 0 : index
    %11 = vector.load %arg7[%c0_12, %c0_13] : memref<1x128xf32, #tpu.memory_space<vmem>>, vector<1x128xf32>
    %12 = vector.broadcast %11 : vector<1x128xf32> to vector<64x128xf32>
    %13 = arith.addf %10, %12 : vector<64x128xf32>
    %14 = vector.shape_cast %13 : vector<64x128xf32> to vector<8x8x128xf32>
    %c0_14 = arith.constant 0 : index
    %c0_15 = arith.constant 0 : index
    %c0_16 = arith.constant 0 : index
    %15 = vector.load %arg11[%c0_14, %c0_15, %c0_16] : memref<8x8x128xf32, #tpu.memory_space<vmem>>, vector<8x8x128xf32>
    tpu.vector_store %arg11[%c0_14, %c0_15, %c0_16], %14 {strides = array<i32>} : memref<8x8x128xf32, #tpu.memory_space<vmem>>, vector<8x8x128xf32>,
    %c0_17 = arith.constant 0 : index
    %c0_18 = arith.constant 0 : index
    %16 = vector.load %arg3[%c0_17, %c0_18] : memref<32x128xf32, #tpu.memory_space<vmem>>, vector<32x128xf32>
    %c0_19 = arith.constant 0 : index
    %c0_20 = arith.constant 0 : index
    %17 = vector.load %arg6[%c0_19, %c0_20] : memref<32x128xf32, #tpu.memory_space<vmem>>, vector<32x128xf32>
    %c0_21 = arith.constant 0 : index
    %c0_22 = arith.constant 0 : index
    %18 = vector.load %arg8[%c0_21, %c0_22] : memref<8x1xi32, #tpu.memory_space<vmem>>, vector<8x1xi32>
    %19 = tpu.iota {dimensions = array<i32: 1>} : vector<8x128xi32>
    %c64_i32 = arith.constant 64 : i32
    %20 = vector.broadcast %c64_i32 : i32 to vector<8x128xi32>
    %21 = arith.cmpi sge, %19, %20 : vector<8x128xi32>
    %c96_i32 = arith.constant 96 : i32
    %22 = vector.broadcast %c96_i32 : i32 to vector<8x128xi32>
    %23 = arith.cmpi slt, %19, %22 : vector<8x128xi32>
    %24 = arith.andi %21, %23 : vector<8x128xi1>
    %cst_23 = arith.constant 0.000000e+00 : f32
    %25 = vector.broadcast %cst_23 : f32 to vector<8x32xf32>
    %c0_i32 = arith.constant 0 : i32
    %c7_i32 = arith.constant 7 : i32
    %26 = arith.subi %c7_i32, %c0_i32 : i32
    %27 = arith.index_cast %c0_i32 : i32 to index
    %c0_24 = arith.constant 0 : index
    %c0_25 = arith.constant 0 : index
    %28 = vector.load %arg10[%27, %c0_24, %c0_25] : memref<8x8x128xf32, #tpu.memory_space<vmem>>, vector<1x8x128xf32>
    %29 = vector.shape_cast %28 : vector<1x8x128xf32> to vector<8x128xf32>
    %cst_26 = arith.constant dense<0.000000e+00> : vector<8x128xf32>
    %30 = tpu.matmul %25, %16, %cst_26 {dimension_numbers = #tpu.dot_dimension_numbers<[1], [0], [0], [1], [0, 0, 1, 1], [], []>} : vector<8x32xf32>, vector<32x128xf32>, vector<8x128xf32> -> vector<8x128xf32>
    %31 = arith.addf %29, %30 : vector<8x128xf32>
    %32 = math.tanh %31 : vector<8x128xf32>
    %33 = arith.negf %31 : vector<8x128xf32>
    %34 = math.exp %33 : vector<8x128xf32>
    %cst_27 = arith.constant 1.000000e+00 : f32
    %35 = vector.broadcast %cst_27 : f32 to vector<8x128xf32>
    %36 = arith.addf %35, %34 : vector<8x128xf32>
    %37 = arith.divf %35, %36 : vector<8x128xf32>
    %38 = arith.select %24, %32, %37 : vector<8x128xi1>, vector<8x128xf32>
    %39 = vector.extract_strided_slice %38 {offsets = [0, 0], sizes = [8, 32], strides = [1, 1]} : vector<8x128xf32> to vector<8x32xf32>
    %40 = vector.extract_strided_slice %38 {offsets = [0, 32], sizes = [8, 32], strides = [1, 1]} : vector<8x128xf32> to vector<8x32xf32>
    %41 = vector.extract_strided_slice %38 {offsets = [0, 64], sizes = [8, 32], strides = [1, 1]} : vector<8x128xf32> to vector<8x32xf32>
    %42 = vector.extract_strided_slice %38 {offsets = [0, 96], sizes = [8, 32], strides = [1, 1]} : vector<8x128xf32> to vector<8x32xf32>
    %43 = arith.mulf %40, %25 : vector<8x32xf32>
    %44 = arith.mulf %39, %41 : vector<8x32xf32>
    %45 = arith.addf %43, %44 : vector<8x32xf32>
    %46 = math.tanh %45 : vector<8x32xf32>
    %47 = arith.mulf %42, %46 : vector<8x32xf32>
    %48 = vector.broadcast %c0_i32 : i32 to vector<8x1xi32>
    %49 = arith.cmpi slt, %48, %18 : vector<8x1xi32>
    %50 = vector.shape_cast %49 : vector<8x1xi1> to vector<8x1xi1>
    %51 = vector.broadcast %50 : vector<8x1xi1> to vector<8x32xi1>
    %52 = arith.select %51, %47, %25 : vector<8x32xi1>, vector<8x32xf32>
    %53 = vector.shape_cast %49 : vector<8x1xi1> to vector<8x1xi1>
    %54 = vector.broadcast %53 : vector<8x1xi1> to vector<8x32xi1>
    %55 = arith.select %54, %45, %25 : vector<8x32xi1>, vector<8x32xf32>
    %56 = arith.index_cast %26 : i32 to index
    %c0_28 = arith.constant 0 : index
    %c0_29 = arith.constant 0 : index
    %57 = vector.load %arg11[%56, %c0_28, %c0_29] : memref<8x8x128xf32, #tpu.memory_space<vmem>>, vector<1x8x128xf32>
    %58 = vector.shape_cast %57 : vector<1x8x128xf32> to vector<8x128xf32>
    %cst_30 = arith.constant dense<0.000000e+00> : vector<8x128xf32>
    %59 = tpu.matmul %25, %17, %cst_30 {dimension_numbers = #tpu.dot_dimension_numbers<[1], [0], [0], [1], [0, 0, 1, 1], [], []>} : vector<8x32xf32>, vector<32x128xf32>, vector<8x128xf32> -> vector<8x128xf32>
    %60 = arith.addf %58, %59 : vector<8x128xf32>
    %61 = math.tanh %60 : vector<8x128xf32>
    %62 = arith.negf %60 : vector<8x128xf32>
    %63 = math.exp %62 : vector<8x128xf32>
    %cst_31 = arith.constant 1.000000e+00 : f32
    %64 = vector.broadcast %cst_31 : f32 to vector<8x128xf32>
    %65 = arith.addf %64, %63 : vector<8x128xf32>
    %66 = arith.divf %64, %65 : vector<8x128xf32>
    %67 = arith.select %24, %61, %66 : vector<8x128xi1>, vector<8x128xf32>
    %68 = vector.extract_strided_slice %67 {offsets = [0, 0], sizes = [8, 32], strides = [1, 1]} : vector<8x128xf32> to vector<8x32xf32>
    %69 = vector.extract_strided_slice %67 {offsets = [0, 32], sizes = [8, 32], strides = [1, 1]} : vector<8x128xf32> to vector<8x32xf32>
    %70 = vector.extract_strided_slice %67 {offsets = [0, 64], sizes = [8, 32], strides = [1, 1]} : vector<8x128xf32> to vector<8x32xf32>
    %71 = vector.extract_strided_slice %67 {offsets = [0, 96], sizes = [8, 32], strides = [1, 1]} : vector<8x128xf32> to vector<8x32xf32>
    %72 = arith.mulf %69, %25 : vector<8x32xf32>
    %73 = arith.mulf %68, %70 : vector<8x32xf32>
    %74 = arith.addf %72, %73 : vector<8x32xf32>
    %75 = math.tanh %74 : vector<8x32xf32>
    %76 = arith.mulf %71, %75 : vector<8x32xf32>
    %77 = vector.broadcast %26 : i32 to vector<8x1xi32>
    %78 = arith.cmpi slt, %77, %18 : vector<8x1xi32>
    %79 = vector.shape_cast %78 : vector<8x1xi1> to vector<8x1xi1>
    %80 = vector.broadcast %79 : vector<8x1xi1> to vector<8x32xi1>
    %81 = arith.select %80, %76, %25 : vector<8x32xi1>, vector<8x32xf32>
    %82 = vector.shape_cast %78 : vector<8x1xi1> to vector<8x1xi1>
    %83 = vector.broadcast %82 : vector<8x1xi1> to vector<8x32xi1>
    %84 = arith.select %83, %74, %25 : vector<8x32xi1>, vector<8x32xf32>
    %cst_32 = arith.constant 0.000000e+00 : f32
    %85 = vector.broadcast %cst_32 : f32 to vector<8x32xf32>
    %86 = vector.shape_cast %49 : vector<8x1xi1> to vector<8x1xi1>
    %87 = vector.broadcast %86 : vector<8x1xi1> to vector<8x32xi1>
    %88 = arith.select %87, %47, %85 : vector<8x32xi1>, vector<8x32xf32>
    %89 = arith.index_cast %c0_i32 : i32 to index
    %c0_33 = arith.constant 0 : index
    %c0_34 = arith.constant 0 : index
    %90 = vector.load %arg9[%89, %c0_33, %c0_34] : memref<8x8x64xf32, #tpu.memory_space<vmem>>, vector<1x8x32xf32>
    %91 = vector.shape_cast %90 : vector<1x8x32xf32> to vector<8x32xf32>
    %92 = vector.shape_cast %88 : vector<8x32xf32> to vector<1x8x32xf32>
    tpu.vector_store %arg9[%89, %c0_33, %c0_34], %92 {strides = array<i32>} : memref<8x8x64xf32, #tpu.memory_space<vmem>>, vector<1x8x32xf32>,
    %cst_35 = arith.constant 0.000000e+00 : f32
    %93 = vector.broadcast %cst_35 : f32 to vector<8x32xf32>
    %94 = vector.shape_cast %78 : vector<8x1xi1> to vector<8x1xi1>
    %95 = vector.broadcast %94 : vector<8x1xi1> to vector<8x32xi1>
    %96 = arith.select %95, %76, %93 : vector<8x32xi1>, vector<8x32xf32>
    %97 = arith.index_cast %26 : i32 to index
    %c0_36 = arith.constant 0 : index
    %c32 = arith.constant 32 : index
    %98 = vector.load %arg9[%97, %c0_36, %c32] : memref<8x8x64xf32, #tpu.memory_space<vmem>>, vector<1x8x32xf32>
    %99 = vector.shape_cast %98 : vector<1x8x32xf32> to vector<8x32xf32>
    %100 = vector.shape_cast %96 : vector<8x32xf32> to vector<1x8x32xf32>
    tpu.vector_store %arg9[%97, %c0_36, %c32], %100 {strides = array<i32>} : memref<8x8x64xf32, #tpu.memory_space<vmem>>, vector<1x8x32xf32>,
    %c1_i32 = arith.constant 1 : i32
    %c7_i32_37 = arith.constant 7 : i32
    %101 = arith.subi %c7_i32_37, %c1_i32 : i32
    %102 = arith.index_cast %c1_i32 : i32 to index
    %c0_38 = arith.constant 0 : index
    %c0_39 = arith.constant 0 : index
    %103 = vector.load %arg10[%102, %c0_38, %c0_39] : memref<8x8x128xf32, #tpu.memory_space<vmem>>, vector<1x8x128xf32>
    %104 = vector.shape_cast %103 : vector<1x8x128xf32> to vector<8x128xf32>
    %cst_40 = arith.constant dense<0.000000e+00> : vector<8x128xf32>
    %105 = tpu.matmul %52, %16, %cst_40 {dimension_numbers = #tpu.dot_dimension_numbers<[1], [0], [0], [1], [0, 0, 1, 1], [], []>} : vector<8x32xf32>, vector<32x128xf32>, vector<8x128xf32> -> vector<8x128xf32>
    %106 = arith.addf %104, %105 : vector<8x128xf32>
    %107 = math.tanh %106 : vector<8x128xf32>
    %108 = arith.negf %106 : vector<8x128xf32>
    %109 = math.exp %108 : vector<8x128xf32>
    %cst_41 = arith.constant 1.000000e+00 : f32
    %110 = vector.broadcast %cst_41 : f32 to vector<8x128xf32>
    %111 = arith.addf %110, %109 : vector<8x128xf32>
    %112 = arith.divf %110, %111 : vector<8x128xf32>
    %113 = arith.select %24, %107, %112 : vector<8x128xi1>, vector<8x128xf32>
    %114 = vector.extract_strided_slice %113 {offsets = [0, 0], sizes = [8, 32], strides = [1, 1]} : vector<8x128xf32> to vector<8x32xf32>
    %115 = vector.extract_strided_slice %113 {offsets = [0, 32], sizes = [8, 32], strides = [1, 1]} : vector<8x128xf32> to vector<8x32xf32>
    %116 = vector.extract_strided_slice %113 {offsets = [0, 64], sizes = [8, 32], strides = [1, 1]} : vector<8x128xf32> to vector<8x32xf32>
    %117 = vector.extract_strided_slice %113 {offsets = [0, 96], sizes = [8, 32], strides = [1, 1]} : vector<8x128xf32> to vector<8x32xf32>
    %118 = arith.mulf %115, %55 : vector<8x32xf32>
    %119 = arith.mulf %114, %116 : vector<8x32xf32>
    %120 = arith.addf %118, %119 : vector<8x32xf32>
    %121 = math.tanh %120 : vector<8x32xf32>
    %122 = arith.mulf %117, %121 : vector<8x32xf32>
    %123 = vector.broadcast %c1_i32 : i32 to vector<8x1xi32>
    %124 = arith.cmpi slt, %123, %18 : vector<8x1xi32>
    %125 = vector.shape_cast %124 : vector<8x1xi1> to vector<8x1xi1>
    %126 = vector.broadcast %125 : vector<8x1xi1> to vector<8x32xi1>
    %127 = arith.select %126, %122, %52 : vector<8x32xi1>, vector<8x32xf32>
    %128 = vector.shape_cast %124 : vector<8x1xi1> to vector<8x1xi1>
    %129 = vector.broadcast %128 : vector<8x1xi1> to vector<8x32xi1>
    %130 = arith.select %129, %120, %55 : vector<8x32xi1>, vector<8x32xf32>
    %131 = arith.index_cast %101 : i32 to index
    %c0_42 = arith.constant 0 : index
    %c0_43 = arith.constant 0 : index
    %132 = vector.load %arg11[%131, %c0_42, %c0_43] : memref<8x8x128xf32, #tpu.memory_space<vmem>>, vector<1x8x128xf32>
    %133 = vector.shape_cast %132 : vector<1x8x128xf32> to vector<8x128xf32>
    %cst_44 = arith.constant dense<0.000000e+00> : vector<8x128xf32>
    %134 = tpu.matmul %81, %17, %cst_44 {dimension_numbers = #tpu.dot_dimension_numbers<[1], [0], [0], [1], [0, 0, 1, 1], [], []>} : vector<8x32xf32>, vector<32x128xf32>, vector<8x128xf32> -> vector<8x128xf32>
    %135 = arith.addf %133, %134 : vector<8x128xf32>
    %136 = math.tanh %135 : vector<8x128xf32>
    %137 = arith.negf %135 : vector<8x128xf32>
    %138 = math.exp %137 : vector<8x128xf32>
    %cst_45 = arith.constant 1.000000e+00 : f32
    %139 = vector.broadcast %cst_45 : f32 to vector<8x128xf32>
    %140 = arith.addf %139, %138 : vector<8x128xf32>
    %141 = arith.divf %139, %140 : vector<8x128xf32>
    %142 = arith.select %24, %136, %141 : vector<8x128xi1>, vector<8x128xf32>
    %143 = vector.extract_strided_slice %142 {offsets = [0, 0], sizes = [8, 32], strides = [1, 1]} : vector<8x128xf32> to vector<8x32xf32>
    %144 = vector.extract_strided_slice %142 {offsets = [0, 32], sizes = [8, 32], strides = [1, 1]} : vector<8x128xf32> to vector<8x32xf32>
    %145 = vector.extract_strided_slice %142 {offsets = [0, 64], sizes = [8, 32], strides = [1, 1]} : vector<8x128xf32> to vector<8x32xf32>
    %146 = vector.extract_strided_slice %142 {offsets = [0, 96], sizes = [8, 32], strides = [1, 1]} : vector<8x128xf32> to vector<8x32xf32>
    %147 = arith.mulf %144, %84 : vector<8x32xf32>
    %148 = arith.mulf %143, %145 : vector<8x32xf32>
    %149 = arith.addf %147, %148 : vector<8x32xf32>
    %150 = math.tanh %149 : vector<8x32xf32>
    %151 = arith.mulf %146, %150 : vector<8x32xf32>
    %152 = vector.broadcast %101 : i32 to vector<8x1xi32>
    %153 = arith.cmpi slt, %152, %18 : vector<8x1xi32>
    %154 = vector.shape_cast %153 : vector<8x1xi1> to vector<8x1xi1>
    %155 = vector.broadcast %154 : vector<8x1xi1> to vector<8x32xi1>
    %156 = arith.select %155, %151, %81 : vector<8x32xi1>, vector<8x32xf32>
    %157 = vector.shape_cast %153 : vector<8x1xi1> to vector<8x1xi1>
    %158 = vector.broadcast %157 : vector<8x1xi1> to vector<8x32xi1>
    %159 = arith.select %158, %149, %84 : vector<8x32xi1>, vector<8x32xf32>
    %cst_46 = arith.constant 0.000000e+00 : f32
    %160 = vector.broadcast %cst_46 : f32 to vector<8x32xf32>
    %161 = vector.shape_cast %124 : vector<8x1xi1> to vector<8x1xi1>
    %162 = vector.broadcast %161 : vector<8x1xi1> to vector<8x32xi1>
    %163 = arith.select %162, %122, %160 : vector<8x32xi1>, vector<8x32xf32>
    %164 = arith.index_cast %c1_i32 : i32 to index
    %c0_47 = arith.constant 0 : index
    %c0_48 = arith.constant 0 : index
    %165 = vector.load %arg9[%164, %c0_47, %c0_48] : memref<8x8x64xf32, #tpu.memory_space<vmem>>, vector<1x8x32xf32>
    %166 = vector.shape_cast %165 : vector<1x8x32xf32> to vector<8x32xf32>
    %167 = vector.shape_cast %163 : vector<8x32xf32> to vector<1x8x32xf32>
    tpu.vector_store %arg9[%164, %c0_47, %c0_48], %167 {strides = array<i32>} : memref<8x8x64xf32, #tpu.memory_space<vmem>>, vector<1x8x32xf32>,
    %cst_49 = arith.constant 0.000000e+00 : f32
    %168 = vector.broadcast %cst_49 : f32 to vector<8x32xf32>
    %169 = vector.shape_cast %153 : vector<8x1xi1> to vector<8x1xi1>
    %170 = vector.broadcast %169 : vector<8x1xi1> to vector<8x32xi1>
    %171 = arith.select %170, %151, %168 : vector<8x32xi1>, vector<8x32xf32>
    %172 = arith.index_cast %101 : i32 to index
    %c0_50 = arith.constant 0 : index
    %c32_51 = arith.constant 32 : index
    %173 = vector.load %arg9[%172, %c0_50, %c32_51] : memref<8x8x64xf32, #tpu.memory_space<vmem>>, vector<1x8x32xf32>
    %174 = vector.shape_cast %173 : vector<1x8x32xf32> to vector<8x32xf32>
    %175 = vector.shape_cast %171 : vector<8x32xf32> to vector<1x8x32xf32>
    tpu.vector_store %arg9[%172, %c0_50, %c32_51], %175 {strides = array<i32>} : memref<8x8x64xf32, #tpu.memory_space<vmem>>, vector<1x8x32xf32>,
    %c2_i32 = arith.constant 2 : i32
    %c7_i32_52 = arith.constant 7 : i32
    %176 = arith.subi %c7_i32_52, %c2_i32 : i32
    %177 = arith.index_cast %c2_i32 : i32 to index
    %c0_53 = arith.constant 0 : index
    %c0_54 = arith.constant 0 : index
    %178 = vector.load %arg10[%177, %c0_53, %c0_54] : memref<8x8x128xf32, #tpu.memory_space<vmem>>, vector<1x8x128xf32>
    %179 = vector.shape_cast %178 : vector<1x8x128xf32> to vector<8x128xf32>
    %cst_55 = arith.constant dense<0.000000e+00> : vector<8x128xf32>
    %180 = tpu.matmul %127, %16, %cst_55 {dimension_numbers = #tpu.dot_dimension_numbers<[1], [0], [0], [1], [0, 0, 1, 1], [], []>} : vector<8x32xf32>, vector<32x128xf32>, vector<8x128xf32> -> vector<8x128xf32>
    %181 = arith.addf %179, %180 : vector<8x128xf32>
    %182 = math.tanh %181 : vector<8x128xf32>
    %183 = arith.negf %181 : vector<8x128xf32>
    %184 = math.exp %183 : vector<8x128xf32>
    %cst_56 = arith.constant 1.000000e+00 : f32
    %185 = vector.broadcast %cst_56 : f32 to vector<8x128xf32>
    %186 = arith.addf %185, %184 : vector<8x128xf32>
    %187 = arith.divf %185, %186 : vector<8x128xf32>
    %188 = arith.select %24, %182, %187 : vector<8x128xi1>, vector<8x128xf32>
    %189 = vector.extract_strided_slice %188 {offsets = [0, 0], sizes = [8, 32], strides = [1, 1]} : vector<8x128xf32> to vector<8x32xf32>
    %190 = vector.extract_strided_slice %188 {offsets = [0, 32], sizes = [8, 32], strides = [1, 1]} : vector<8x128xf32> to vector<8x32xf32>
    %191 = vector.extract_strided_slice %188 {offsets = [0, 64], sizes = [8, 32], strides = [1, 1]} : vector<8x128xf32> to vector<8x32xf32>
    %192 = vector.extract_strided_slice %188 {offsets = [0, 96], sizes = [8, 32], strides = [1, 1]} : vector<8x128xf32> to vector<8x32xf32>
    %193 = arith.mulf %190, %130 : vector<8x32xf32>
    %194 = arith.mulf %189, %191 : vector<8x32xf32>
    %195 = arith.addf %193, %194 : vector<8x32xf32>
    %196 = math.tanh %195 : vector<8x32xf32>
    %197 = arith.mulf %192, %196 : vector<8x32xf32>
    %198 = vector.broadcast %c2_i32 : i32 to vector<8x1xi32>
    %199 = arith.cmpi slt, %198, %18 : vector<8x1xi32>
    %200 = vector.shape_cast %199 : vector<8x1xi1> to vector<8x1xi1>
    %201 = vector.broadcast %200 : vector<8x1xi1> to vector<8x32xi1>
    %202 = arith.select %201, %197, %127 : vector<8x32xi1>, vector<8x32xf32>
    %203 = vector.shape_cast %199 : vector<8x1xi1> to vector<8x1xi1>
    %204 = vector.broadcast %203 : vector<8x1xi1> to vector<8x32xi1>
    %205 = arith.select %204, %195, %130 : vector<8x32xi1>, vector<8x32xf32>
    %206 = arith.index_cast %176 : i32 to index
    %c0_57 = arith.constant 0 : index
    %c0_58 = arith.constant 0 : index
    %207 = vector.load %arg11[%206, %c0_57, %c0_58] : memref<8x8x128xf32, #tpu.memory_space<vmem>>, vector<1x8x128xf32>
    %208 = vector.shape_cast %207 : vector<1x8x128xf32> to vector<8x128xf32>
    %cst_59 = arith.constant dense<0.000000e+00> : vector<8x128xf32>
    %209 = tpu.matmul %156, %17, %cst_59 {dimension_numbers = #tpu.dot_dimension_numbers<[1], [0], [0], [1], [0, 0, 1, 1], [], []>} : vector<8x32xf32>, vector<32x128xf32>, vector<8x128xf32> -> vector<8x128xf32>
    %210 = arith.addf %208, %209 : vector<8x128xf32>
    %211 = math.tanh %210 : vector<8x128xf32>
    %212 = arith.negf %210 : vector<8x128xf32>
    %213 = math.exp %212 : vector<8x128xf32>
    %cst_60 = arith.constant 1.000000e+00 : f32
    %214 = vector.broadcast %cst_60 : f32 to vector<8x128xf32>
    %215 = arith.addf %214, %213 : vector<8x128xf32>
    %216 = arith.divf %214, %215 : vector<8x128xf32>
    %217 = arith.select %24, %211, %216 : vector<8x128xi1>, vector<8x128xf32>
    %218 = vector.extract_strided_slice %217 {offsets = [0, 0], sizes = [8, 32], strides = [1, 1]} : vector<8x128xf32> to vector<8x32xf32>
    %219 = vector.extract_strided_slice %217 {offsets = [0, 32], sizes = [8, 32], strides = [1, 1]} : vector<8x128xf32> to vector<8x32xf32>
    %220 = vector.extract_strided_slice %217 {offsets = [0, 64], sizes = [8, 32], strides = [1, 1]} : vector<8x128xf32> to vector<8x32xf32>
    %221 = vector.extract_strided_slice %217 {offsets = [0, 96], sizes = [8, 32], strides = [1, 1]} : vector<8x128xf32> to vector<8x32xf32>
    %222 = arith.mulf %219, %159 : vector<8x32xf32>
    %223 = arith.mulf %218, %220 : vector<8x32xf32>
    %224 = arith.addf %222, %223 : vector<8x32xf32>
    %225 = math.tanh %224 : vector<8x32xf32>
    %226 = arith.mulf %221, %225 : vector<8x32xf32>
    %227 = vector.broadcast %176 : i32 to vector<8x1xi32>
    %228 = arith.cmpi slt, %227, %18 : vector<8x1xi32>
    %229 = vector.shape_cast %228 : vector<8x1xi1> to vector<8x1xi1>
    %230 = vector.broadcast %229 : vector<8x1xi1> to vector<8x32xi1>
    %231 = arith.select %230, %226, %156 : vector<8x32xi1>, vector<8x32xf32>
    %232 = vector.shape_cast %228 : vector<8x1xi1> to vector<8x1xi1>
    %233 = vector.broadcast %232 : vector<8x1xi1> to vector<8x32xi1>
    %234 = arith.select %233, %224, %159 : vector<8x32xi1>, vector<8x32xf32>
    %cst_61 = arith.constant 0.000000e+00 : f32
    %235 = vector.broadcast %cst_61 : f32 to vector<8x32xf32>
    %236 = vector.shape_cast %199 : vector<8x1xi1> to vector<8x1xi1>
    %237 = vector.broadcast %236 : vector<8x1xi1> to vector<8x32xi1>
    %238 = arith.select %237, %197, %235 : vector<8x32xi1>, vector<8x32xf32>
    %239 = arith.index_cast %c2_i32 : i32 to index
    %c0_62 = arith.constant 0 : index
    %c0_63 = arith.constant 0 : index
    %240 = vector.load %arg9[%239, %c0_62, %c0_63] : memref<8x8x64xf32, #tpu.memory_space<vmem>>, vector<1x8x32xf32>
    %241 = vector.shape_cast %240 : vector<1x8x32xf32> to vector<8x32xf32>
    %242 = vector.shape_cast %238 : vector<8x32xf32> to vector<1x8x32xf32>
    tpu.vector_store %arg9[%239, %c0_62, %c0_63], %242 {strides = array<i32>} : memref<8x8x64xf32, #tpu.memory_space<vmem>>, vector<1x8x32xf32>,
    %cst_64 = arith.constant 0.000000e+00 : f32
    %243 = vector.broadcast %cst_64 : f32 to vector<8x32xf32>
    %244 = vector.shape_cast %228 : vector<8x1xi1> to vector<8x1xi1>
    %245 = vector.broadcast %244 : vector<8x1xi1> to vector<8x32xi1>
    %246 = arith.select %245, %226, %243 : vector<8x32xi1>, vector<8x32xf32>
    %247 = arith.index_cast %176 : i32 to index
    %c0_65 = arith.constant 0 : index
    %c32_66 = arith.constant 32 : index
    %248 = vector.load %arg9[%247, %c0_65, %c32_66] : memref<8x8x64xf32, #tpu.memory_space<vmem>>, vector<1x8x32xf32>
    %249 = vector.shape_cast %248 : vector<1x8x32xf32> to vector<8x32xf32>
    %250 = vector.shape_cast %246 : vector<8x32xf32> to vector<1x8x32xf32>
    tpu.vector_store %arg9[%247, %c0_65, %c32_66], %250 {strides = array<i32>} : memref<8x8x64xf32, #tpu.memory_space<vmem>>, vector<1x8x32xf32>,
    %c3_i32 = arith.constant 3 : i32
    %c7_i32_67 = arith.constant 7 : i32
    %251 = arith.subi %c7_i32_67, %c3_i32 : i32
    %252 = arith.index_cast %c3_i32 : i32 to index
    %c0_68 = arith.constant 0 : index
    %c0_69 = arith.constant 0 : index
    %253 = vector.load %arg10[%252, %c0_68, %c0_69] : memref<8x8x128xf32, #tpu.memory_space<vmem>>, vector<1x8x128xf32>
    %254 = vector.shape_cast %253 : vector<1x8x128xf32> to vector<8x128xf32>
    %cst_70 = arith.constant dense<0.000000e+00> : vector<8x128xf32>
    %255 = tpu.matmul %202, %16, %cst_70 {dimension_numbers = #tpu.dot_dimension_numbers<[1], [0], [0], [1], [0, 0, 1, 1], [], []>} : vector<8x32xf32>, vector<32x128xf32>, vector<8x128xf32> -> vector<8x128xf32>
    %256 = arith.addf %254, %255 : vector<8x128xf32>
    %257 = math.tanh %256 : vector<8x128xf32>
    %258 = arith.negf %256 : vector<8x128xf32>
    %259 = math.exp %258 : vector<8x128xf32>
    %cst_71 = arith.constant 1.000000e+00 : f32
    %260 = vector.broadcast %cst_71 : f32 to vector<8x128xf32>
    %261 = arith.addf %260, %259 : vector<8x128xf32>
    %262 = arith.divf %260, %261 : vector<8x128xf32>
    %263 = arith.select %24, %257, %262 : vector<8x128xi1>, vector<8x128xf32>
    %264 = vector.extract_strided_slice %263 {offsets = [0, 0], sizes = [8, 32], strides = [1, 1]} : vector<8x128xf32> to vector<8x32xf32>
    %265 = vector.extract_strided_slice %263 {offsets = [0, 32], sizes = [8, 32], strides = [1, 1]} : vector<8x128xf32> to vector<8x32xf32>
    %266 = vector.extract_strided_slice %263 {offsets = [0, 64], sizes = [8, 32], strides = [1, 1]} : vector<8x128xf32> to vector<8x32xf32>
    %267 = vector.extract_strided_slice %263 {offsets = [0, 96], sizes = [8, 32], strides = [1, 1]} : vector<8x128xf32> to vector<8x32xf32>
    %268 = arith.mulf %265, %205 : vector<8x32xf32>
    %269 = arith.mulf %264, %266 : vector<8x32xf32>
    %270 = arith.addf %268, %269 : vector<8x32xf32>
    %271 = math.tanh %270 : vector<8x32xf32>
    %272 = arith.mulf %267, %271 : vector<8x32xf32>
    %273 = vector.broadcast %c3_i32 : i32 to vector<8x1xi32>
    %274 = arith.cmpi slt, %273, %18 : vector<8x1xi32>
    %275 = vector.shape_cast %274 : vector<8x1xi1> to vector<8x1xi1>
    %276 = vector.broadcast %275 : vector<8x1xi1> to vector<8x32xi1>
    %277 = arith.select %276, %272, %202 : vector<8x32xi1>, vector<8x32xf32>
    %278 = vector.shape_cast %274 : vector<8x1xi1> to vector<8x1xi1>
    %279 = vector.broadcast %278 : vector<8x1xi1> to vector<8x32xi1>
    %280 = arith.select %279, %270, %205 : vector<8x32xi1>, vector<8x32xf32>
    %281 = arith.index_cast %251 : i32 to index
    %c0_72 = arith.constant 0 : index
    %c0_73 = arith.constant 0 : index
    %282 = vector.load %arg11[%281, %c0_72, %c0_73] : memref<8x8x128xf32, #tpu.memory_space<vmem>>, vector<1x8x128xf32>
    %283 = vector.shape_cast %282 : vector<1x8x128xf32> to vector<8x128xf32>
    %cst_74 = arith.constant dense<0.000000e+00> : vector<8x128xf32>
    %284 = tpu.matmul %231, %17, %cst_74 {dimension_numbers = #tpu.dot_dimension_numbers<[1], [0], [0], [1], [0, 0, 1, 1], [], []>} : vector<8x32xf32>, vector<32x128xf32>, vector<8x128xf32> -> vector<8x128xf32>
    %285 = arith.addf %283, %284 : vector<8x128xf32>
    %286 = math.tanh %285 : vector<8x128xf32>
    %287 = arith.negf %285 : vector<8x128xf32>
    %288 = math.exp %287 : vector<8x128xf32>
    %cst_75 = arith.constant 1.000000e+00 : f32
    %289 = vector.broadcast %cst_75 : f32 to vector<8x128xf32>
    %290 = arith.addf %289, %288 : vector<8x128xf32>
    %291 = arith.divf %289, %290 : vector<8x128xf32>
    %292 = arith.select %24, %286, %291 : vector<8x128xi1>, vector<8x128xf32>
    %293 = vector.extract_strided_slice %292 {offsets = [0, 0], sizes = [8, 32], strides = [1, 1]} : vector<8x128xf32> to vector<8x32xf32>
    %294 = vector.extract_strided_slice %292 {offsets = [0, 32], sizes = [8, 32], strides = [1, 1]} : vector<8x128xf32> to vector<8x32xf32>
    %295 = vector.extract_strided_slice %292 {offsets = [0, 64], sizes = [8, 32], strides = [1, 1]} : vector<8x128xf32> to vector<8x32xf32>
    %296 = vector.extract_strided_slice %292 {offsets = [0, 96], sizes = [8, 32], strides = [1, 1]} : vector<8x128xf32> to vector<8x32xf32>
    %297 = arith.mulf %294, %234 : vector<8x32xf32>
    %298 = arith.mulf %293, %295 : vector<8x32xf32>
    %299 = arith.addf %297, %298 : vector<8x32xf32>
    %300 = math.tanh %299 : vector<8x32xf32>
    %301 = arith.mulf %296, %300 : vector<8x32xf32>
    %302 = vector.broadcast %251 : i32 to vector<8x1xi32>
    %303 = arith.cmpi slt, %302, %18 : vector<8x1xi32>
    %304 = vector.shape_cast %303 : vector<8x1xi1> to vector<8x1xi1>
    %305 = vector.broadcast %304 : vector<8x1xi1> to vector<8x32xi1>
    %306 = arith.select %305, %301, %231 : vector<8x32xi1>, vector<8x32xf32>
    %307 = vector.shape_cast %303 : vector<8x1xi1> to vector<8x1xi1>
    %308 = vector.broadcast %307 : vector<8x1xi1> to vector<8x32xi1>
    %309 = arith.select %308, %299, %234 : vector<8x32xi1>, vector<8x32xf32>
    %cst_76 = arith.constant 0.000000e+00 : f32
    %310 = vector.broadcast %cst_76 : f32 to vector<8x32xf32>
    %311 = vector.shape_cast %274 : vector<8x1xi1> to vector<8x1xi1>
    %312 = vector.broadcast %311 : vector<8x1xi1> to vector<8x32xi1>
    %313 = arith.select %312, %272, %310 : vector<8x32xi1>, vector<8x32xf32>
    %314 = arith.index_cast %c3_i32 : i32 to index
    %c0_77 = arith.constant 0 : index
    %c0_78 = arith.constant 0 : index
    %315 = vector.load %arg9[%314, %c0_77, %c0_78] : memref<8x8x64xf32, #tpu.memory_space<vmem>>, vector<1x8x32xf32>
    %316 = vector.shape_cast %315 : vector<1x8x32xf32> to vector<8x32xf32>
    %317 = vector.shape_cast %313 : vector<8x32xf32> to vector<1x8x32xf32>
    tpu.vector_store %arg9[%314, %c0_77, %c0_78], %317 {strides = array<i32>} : memref<8x8x64xf32, #tpu.memory_space<vmem>>, vector<1x8x32xf32>,
    %cst_79 = arith.constant 0.000000e+00 : f32
    %318 = vector.broadcast %cst_79 : f32 to vector<8x32xf32>
    %319 = vector.shape_cast %303 : vector<8x1xi1> to vector<8x1xi1>
    %320 = vector.broadcast %319 : vector<8x1xi1> to vector<8x32xi1>
    %321 = arith.select %320, %301, %318 : vector<8x32xi1>, vector<8x32xf32>
    %322 = arith.index_cast %251 : i32 to index
    %c0_80 = arith.constant 0 : index
    %c32_81 = arith.constant 32 : index
    %323 = vector.load %arg9[%322, %c0_80, %c32_81] : memref<8x8x64xf32, #tpu.memory_space<vmem>>, vector<1x8x32xf32>
    %324 = vector.shape_cast %323 : vector<1x8x32xf32> to vector<8x32xf32>
    %325 = vector.shape_cast %321 : vector<8x32xf32> to vector<1x8x32xf32>
    tpu.vector_store %arg9[%322, %c0_80, %c32_81], %325 {strides = array<i32>} : memref<8x8x64xf32, #tpu.memory_space<vmem>>, vector<1x8x32xf32>,
    %c4_i32 = arith.constant 4 : i32
    %c7_i32_82 = arith.constant 7 : i32
    %326 = arith.subi %c7_i32_82, %c4_i32 : i32
    %327 = arith.index_cast %c4_i32 : i32 to index
    %c0_83 = arith.constant 0 : index
    %c0_84 = arith.constant 0 : index
    %328 = vector.load %arg10[%327, %c0_83, %c0_84] : memref<8x8x128xf32, #tpu.memory_space<vmem>>, vector<1x8x128xf32>
    %329 = vector.shape_cast %328 : vector<1x8x128xf32> to vector<8x128xf32>
    %cst_85 = arith.constant dense<0.000000e+00> : vector<8x128xf32>
    %330 = tpu.matmul %277, %16, %cst_85 {dimension_numbers = #tpu.dot_dimension_numbers<[1], [0], [0], [1], [0, 0, 1, 1], [], []>} : vector<8x32xf32>, vector<32x128xf32>, vector<8x128xf32> -> vector<8x128xf32>
    %331 = arith.addf %329, %330 : vector<8x128xf32>
    %332 = math.tanh %331 : vector<8x128xf32>
    %333 = arith.negf %331 : vector<8x128xf32>
    %334 = math.exp %333 : vector<8x128xf32>
    %cst_86 = arith.constant 1.000000e+00 : f32
    %335 = vector.broadcast %cst_86 : f32 to vector<8x128xf32>
    %336 = arith.addf %335, %334 : vector<8x128xf32>
    %337 = arith.divf %335, %336 : vector<8x128xf32>
    %338 = arith.select %24, %332, %337 : vector<8x128xi1>, vector<8x128xf32>
    %339 = vector.extract_strided_slice %338 {offsets = [0, 0], sizes = [8, 32], strides = [1, 1]} : vector<8x128xf32> to vector<8x32xf32>
    %340 = vector.extract_strided_slice %338 {offsets = [0, 32], sizes = [8, 32], strides = [1, 1]} : vector<8x128xf32> to vector<8x32xf32>
    %341 = vector.extract_strided_slice %338 {offsets = [0, 64], sizes = [8, 32], strides = [1, 1]} : vector<8x128xf32> to vector<8x32xf32>
    %342 = vector.extract_strided_slice %338 {offsets = [0, 96], sizes = [8, 32], strides = [1, 1]} : vector<8x128xf32> to vector<8x32xf32>
    %343 = arith.mulf %340, %280 : vector<8x32xf32>
    %344 = arith.mulf %339, %341 : vector<8x32xf32>
    %345 = arith.addf %343, %344 : vector<8x32xf32>
    %346 = math.tanh %345 : vector<8x32xf32>
    %347 = arith.mulf %342, %346 : vector<8x32xf32>
    %348 = vector.broadcast %c4_i32 : i32 to vector<8x1xi32>
    %349 = arith.cmpi slt, %348, %18 : vector<8x1xi32>
    %350 = vector.shape_cast %349 : vector<8x1xi1> to vector<8x1xi1>
    %351 = vector.broadcast %350 : vector<8x1xi1> to vector<8x32xi1>
    %352 = arith.select %351, %347, %277 : vector<8x32xi1>, vector<8x32xf32>
    %353 = vector.shape_cast %349 : vector<8x1xi1> to vector<8x1xi1>
    %354 = vector.broadcast %353 : vector<8x1xi1> to vector<8x32xi1>
    %355 = arith.select %354, %345, %280 : vector<8x32xi1>, vector<8x32xf32>
    %356 = arith.index_cast %326 : i32 to index
    %c0_87 = arith.constant 0 : index
    %c0_88 = arith.constant 0 : index
    %357 = vector.load %arg11[%356, %c0_87, %c0_88] : memref<8x8x128xf32, #tpu.memory_space<vmem>>, vector<1x8x128xf32>
    %358 = vector.shape_cast %357 : vector<1x8x128xf32> to vector<8x128xf32>
    %cst_89 = arith.constant dense<0.000000e+00> : vector<8x128xf32>
    %359 = tpu.matmul %306, %17, %cst_89 {dimension_numbers = #tpu.dot_dimension_numbers<[1], [0], [0], [1], [0, 0, 1, 1], [], []>} : vector<8x32xf32>, vector<32x128xf32>, vector<8x128xf32> -> vector<8x128xf32>
    %360 = arith.addf %358, %359 : vector<8x128xf32>
    %361 = math.tanh %360 : vector<8x128xf32>
    %362 = arith.negf %360 : vector<8x128xf32>
    %363 = math.exp %362 : vector<8x128xf32>
    %cst_90 = arith.constant 1.000000e+00 : f32
    %364 = vector.broadcast %cst_90 : f32 to vector<8x128xf32>
    %365 = arith.addf %364, %363 : vector<8x128xf32>
    %366 = arith.divf %364, %365 : vector<8x128xf32>
    %367 = arith.select %24, %361, %366 : vector<8x128xi1>, vector<8x128xf32>
    %368 = vector.extract_strided_slice %367 {offsets = [0, 0], sizes = [8, 32], strides = [1, 1]} : vector<8x128xf32> to vector<8x32xf32>
    %369 = vector.extract_strided_slice %367 {offsets = [0, 32], sizes = [8, 32], strides = [1, 1]} : vector<8x128xf32> to vector<8x32xf32>
    %370 = vector.extract_strided_slice %367 {offsets = [0, 64], sizes = [8, 32], strides = [1, 1]} : vector<8x128xf32> to vector<8x32xf32>
    %371 = vector.extract_strided_slice %367 {offsets = [0, 96], sizes = [8, 32], strides = [1, 1]} : vector<8x128xf32> to vector<8x32xf32>
    %372 = arith.mulf %369, %309 : vector<8x32xf32>
    %373 = arith.mulf %368, %370 : vector<8x32xf32>
    %374 = arith.addf %372, %373 : vector<8x32xf32>
    %375 = math.tanh %374 : vector<8x32xf32>
    %376 = arith.mulf %371, %375 : vector<8x32xf32>
    %377 = vector.broadcast %326 : i32 to vector<8x1xi32>
    %378 = arith.cmpi slt, %377, %18 : vector<8x1xi32>
    %379 = vector.shape_cast %378 : vector<8x1xi1> to vector<8x1xi1>
    %380 = vector.broadcast %379 : vector<8x1xi1> to vector<8x32xi1>
    %381 = arith.select %380, %376, %306 : vector<8x32xi1>, vector<8x32xf32>
    %382 = vector.shape_cast %378 : vector<8x1xi1> to vector<8x1xi1>
    %383 = vector.broadcast %382 : vector<8x1xi1> to vector<8x32xi1>
    %384 = arith.select %383, %374, %309 : vector<8x32xi1>, vector<8x32xf32>
    %cst_91 = arith.constant 0.000000e+00 : f32
    %385 = vector.broadcast %cst_91 : f32 to vector<8x32xf32>
    %386 = vector.shape_cast %349 : vector<8x1xi1> to vector<8x1xi1>
    %387 = vector.broadcast %386 : vector<8x1xi1> to vector<8x32xi1>
    %388 = arith.select %387, %347, %385 : vector<8x32xi1>, vector<8x32xf32>
    %389 = arith.index_cast %c4_i32 : i32 to index
    %c0_92 = arith.constant 0 : index
    %c0_93 = arith.constant 0 : index
    %390 = vector.load %arg9[%389, %c0_92, %c0_93] : memref<8x8x64xf32, #tpu.memory_space<vmem>>, vector<1x8x32xf32>
    %391 = vector.shape_cast %390 : vector<1x8x32xf32> to vector<8x32xf32>
    %392 = vector.shape_cast %388 : vector<8x32xf32> to vector<1x8x32xf32>
    tpu.vector_store %arg9[%389, %c0_92, %c0_93], %392 {strides = array<i32>} : memref<8x8x64xf32, #tpu.memory_space<vmem>>, vector<1x8x32xf32>,
    %cst_94 = arith.constant 0.000000e+00 : f32
    %393 = vector.broadcast %cst_94 : f32 to vector<8x32xf32>
    %394 = vector.shape_cast %378 : vector<8x1xi1> to vector<8x1xi1>
    %395 = vector.broadcast %394 : vector<8x1xi1> to vector<8x32xi1>
    %396 = arith.select %395, %376, %393 : vector<8x32xi1>, vector<8x32xf32>
    %397 = arith.index_cast %326 : i32 to index
    %c0_95 = arith.constant 0 : index
    %c32_96 = arith.constant 32 : index
    %398 = vector.load %arg9[%397, %c0_95, %c32_96] : memref<8x8x64xf32, #tpu.memory_space<vmem>>, vector<1x8x32xf32>
    %399 = vector.shape_cast %398 : vector<1x8x32xf32> to vector<8x32xf32>
    %400 = vector.shape_cast %396 : vector<8x32xf32> to vector<1x8x32xf32>
    tpu.vector_store %arg9[%397, %c0_95, %c32_96], %400 {strides = array<i32>} : memref<8x8x64xf32, #tpu.memory_space<vmem>>, vector<1x8x32xf32>,
    %c5_i32 = arith.constant 5 : i32
    %c7_i32_97 = arith.constant 7 : i32
    %401 = arith.subi %c7_i32_97, %c5_i32 : i32
    %402 = arith.index_cast %c5_i32 : i32 to index
    %c0_98 = arith.constant 0 : index
    %c0_99 = arith.constant 0 : index
    %403 = vector.load %arg10[%402, %c0_98, %c0_99] : memref<8x8x128xf32, #tpu.memory_space<vmem>>, vector<1x8x128xf32>
    %404 = vector.shape_cast %403 : vector<1x8x128xf32> to vector<8x128xf32>
    %cst_100 = arith.constant dense<0.000000e+00> : vector<8x128xf32>
    %405 = tpu.matmul %352, %16, %cst_100 {dimension_numbers = #tpu.dot_dimension_numbers<[1], [0], [0], [1], [0, 0, 1, 1], [], []>} : vector<8x32xf32>, vector<32x128xf32>, vector<8x128xf32> -> vector<8x128xf32>
    %406 = arith.addf %404, %405 : vector<8x128xf32>
    %407 = math.tanh %406 : vector<8x128xf32>
    %408 = arith.negf %406 : vector<8x128xf32>
    %409 = math.exp %408 : vector<8x128xf32>
    %cst_101 = arith.constant 1.000000e+00 : f32
    %410 = vector.broadcast %cst_101 : f32 to vector<8x128xf32>
    %411 = arith.addf %410, %409 : vector<8x128xf32>
    %412 = arith.divf %410, %411 : vector<8x128xf32>
    %413 = arith.select %24, %407, %412 : vector<8x128xi1>, vector<8x128xf32>
    %414 = vector.extract_strided_slice %413 {offsets = [0, 0], sizes = [8, 32], strides = [1, 1]} : vector<8x128xf32> to vector<8x32xf32>
    %415 = vector.extract_strided_slice %413 {offsets = [0, 32], sizes = [8, 32], strides = [1, 1]} : vector<8x128xf32> to vector<8x32xf32>
    %416 = vector.extract_strided_slice %413 {offsets = [0, 64], sizes = [8, 32], strides = [1, 1]} : vector<8x128xf32> to vector<8x32xf32>
    %417 = vector.extract_strided_slice %413 {offsets = [0, 96], sizes = [8, 32], strides = [1, 1]} : vector<8x128xf32> to vector<8x32xf32>
    %418 = arith.mulf %415, %355 : vector<8x32xf32>
    %419 = arith.mulf %414, %416 : vector<8x32xf32>
    %420 = arith.addf %418, %419 : vector<8x32xf32>
    %421 = math.tanh %420 : vector<8x32xf32>
    %422 = arith.mulf %417, %421 : vector<8x32xf32>
    %423 = vector.broadcast %c5_i32 : i32 to vector<8x1xi32>
    %424 = arith.cmpi slt, %423, %18 : vector<8x1xi32>
    %425 = vector.shape_cast %424 : vector<8x1xi1> to vector<8x1xi1>
    %426 = vector.broadcast %425 : vector<8x1xi1> to vector<8x32xi1>
    %427 = arith.select %426, %422, %352 : vector<8x32xi1>, vector<8x32xf32>
    %428 = vector.shape_cast %424 : vector<8x1xi1> to vector<8x1xi1>
    %429 = vector.broadcast %428 : vector<8x1xi1> to vector<8x32xi1>
    %430 = arith.select %429, %420, %355 : vector<8x32xi1>, vector<8x32xf32>
    %431 = arith.index_cast %401 : i32 to index
    %c0_102 = arith.constant 0 : index
    %c0_103 = arith.constant 0 : index
    %432 = vector.load %arg11[%431, %c0_102, %c0_103] : memref<8x8x128xf32, #tpu.memory_space<vmem>>, vector<1x8x128xf32>
    %433 = vector.shape_cast %432 : vector<1x8x128xf32> to vector<8x128xf32>
    %cst_104 = arith.constant dense<0.000000e+00> : vector<8x128xf32>
    %434 = tpu.matmul %381, %17, %cst_104 {dimension_numbers = #tpu.dot_dimension_numbers<[1], [0], [0], [1], [0, 0, 1, 1], [], []>} : vector<8x32xf32>, vector<32x128xf32>, vector<8x128xf32> -> vector<8x128xf32>
    %435 = arith.addf %433, %434 : vector<8x128xf32>
    %436 = math.tanh %435 : vector<8x128xf32>
    %437 = arith.negf %435 : vector<8x128xf32>
    %438 = math.exp %437 : vector<8x128xf32>
    %cst_105 = arith.constant 1.000000e+00 : f32
    %439 = vector.broadcast %cst_105 : f32 to vector<8x128xf32>
    %440 = arith.addf %439, %438 : vector<8x128xf32>
    %441 = arith.divf %439, %440 : vector<8x128xf32>
    %442 = arith.select %24, %436, %441 : vector<8x128xi1>, vector<8x128xf32>
    %443 = vector.extract_strided_slice %442 {offsets = [0, 0], sizes = [8, 32], strides = [1, 1]} : vector<8x128xf32> to vector<8x32xf32>
    %444 = vector.extract_strided_slice %442 {offsets = [0, 32], sizes = [8, 32], strides = [1, 1]} : vector<8x128xf32> to vector<8x32xf32>
    %445 = vector.extract_strided_slice %442 {offsets = [0, 64], sizes = [8, 32], strides = [1, 1]} : vector<8x128xf32> to vector<8x32xf32>
    %446 = vector.extract_strided_slice %442 {offsets = [0, 96], sizes = [8, 32], strides = [1, 1]} : vector<8x128xf32> to vector<8x32xf32>
    %447 = arith.mulf %444, %384 : vector<8x32xf32>
    %448 = arith.mulf %443, %445 : vector<8x32xf32>
    %449 = arith.addf %447, %448 : vector<8x32xf32>
    %450 = math.tanh %449 : vector<8x32xf32>
    %451 = arith.mulf %446, %450 : vector<8x32xf32>
    %452 = vector.broadcast %401 : i32 to vector<8x1xi32>
    %453 = arith.cmpi slt, %452, %18 : vector<8x1xi32>
    %454 = vector.shape_cast %453 : vector<8x1xi1> to vector<8x1xi1>
    %455 = vector.broadcast %454 : vector<8x1xi1> to vector<8x32xi1>
    %456 = arith.select %455, %451, %381 : vector<8x32xi1>, vector<8x32xf32>
    %457 = vector.shape_cast %453 : vector<8x1xi1> to vector<8x1xi1>
    %458 = vector.broadcast %457 : vector<8x1xi1> to vector<8x32xi1>
    %459 = arith.select %458, %449, %384 : vector<8x32xi1>, vector<8x32xf32>
    %cst_106 = arith.constant 0.000000e+00 : f32
    %460 = vector.broadcast %cst_106 : f32 to vector<8x32xf32>
    %461 = vector.shape_cast %424 : vector<8x1xi1> to vector<8x1xi1>
    %462 = vector.broadcast %461 : vector<8x1xi1> to vector<8x32xi1>
    %463 = arith.select %462, %422, %460 : vector<8x32xi1>, vector<8x32xf32>
    %464 = arith.index_cast %c5_i32 : i32 to index
    %c0_107 = arith.constant 0 : index
    %c0_108 = arith.constant 0 : index
    %465 = vector.load %arg9[%464, %c0_107, %c0_108] : memref<8x8x64xf32, #tpu.memory_space<vmem>>, vector<1x8x32xf32>
    %466 = vector.shape_cast %465 : vector<1x8x32xf32> to vector<8x32xf32>
    %467 = vector.shape_cast %463 : vector<8x32xf32> to vector<1x8x32xf32>
    tpu.vector_store %arg9[%464, %c0_107, %c0_108], %467 {strides = array<i32>} : memref<8x8x64xf32, #tpu.memory_space<vmem>>, vector<1x8x32xf32>,
    %cst_109 = arith.constant 0.000000e+00 : f32
    %468 = vector.broadcast %cst_109 : f32 to vector<8x32xf32>
    %469 = vector.shape_cast %453 : vector<8x1xi1> to vector<8x1xi1>
    %470 = vector.broadcast %469 : vector<8x1xi1> to vector<8x32xi1>
    %471 = arith.select %470, %451, %468 : vector<8x32xi1>, vector<8x32xf32>
    %472 = arith.index_cast %401 : i32 to index
    %c0_110 = arith.constant 0 : index
    %c32_111 = arith.constant 32 : index
    %473 = vector.load %arg9[%472, %c0_110, %c32_111] : memref<8x8x64xf32, #tpu.memory_space<vmem>>, vector<1x8x32xf32>
    %474 = vector.shape_cast %473 : vector<1x8x32xf32> to vector<8x32xf32>
    %475 = vector.shape_cast %471 : vector<8x32xf32> to vector<1x8x32xf32>
    tpu.vector_store %arg9[%472, %c0_110, %c32_111], %475 {strides = array<i32>} : memref<8x8x64xf32, #tpu.memory_space<vmem>>, vector<1x8x32xf32>,
    %c6_i32 = arith.constant 6 : i32
    %c7_i32_112 = arith.constant 7 : i32
    %476 = arith.subi %c7_i32_112, %c6_i32 : i32
    %477 = arith.index_cast %c6_i32 : i32 to index
    %c0_113 = arith.constant 0 : index
    %c0_114 = arith.constant 0 : index
    %478 = vector.load %arg10[%477, %c0_113, %c0_114] : memref<8x8x128xf32, #tpu.memory_space<vmem>>, vector<1x8x128xf32>
    %479 = vector.shape_cast %478 : vector<1x8x128xf32> to vector<8x128xf32>
    %cst_115 = arith.constant dense<0.000000e+00> : vector<8x128xf32>
    %480 = tpu.matmul %427, %16, %cst_115 {dimension_numbers = #tpu.dot_dimension_numbers<[1], [0], [0], [1], [0, 0, 1, 1], [], []>} : vector<8x32xf32>, vector<32x128xf32>, vector<8x128xf32> -> vector<8x128xf32>
    %481 = arith.addf %479, %480 : vector<8x128xf32>
    %482 = math.tanh %481 : vector<8x128xf32>
    %483 = arith.negf %481 : vector<8x128xf32>
    %484 = math.exp %483 : vector<8x128xf32>
    %cst_116 = arith.constant 1.000000e+00 : f32
    %485 = vector.broadcast %cst_116 : f32 to vector<8x128xf32>
    %486 = arith.addf %485, %484 : vector<8x128xf32>
    %487 = arith.divf %485, %486 : vector<8x128xf32>
    %488 = arith.select %24, %482, %487 : vector<8x128xi1>, vector<8x128xf32>
    %489 = vector.extract_strided_slice %488 {offsets = [0, 0], sizes = [8, 32], strides = [1, 1]} : vector<8x128xf32> to vector<8x32xf32>
    %490 = vector.extract_strided_slice %488 {offsets = [0, 32], sizes = [8, 32], strides = [1, 1]} : vector<8x128xf32> to vector<8x32xf32>
    %491 = vector.extract_strided_slice %488 {offsets = [0, 64], sizes = [8, 32], strides = [1, 1]} : vector<8x128xf32> to vector<8x32xf32>
    %492 = vector.extract_strided_slice %488 {offsets = [0, 96], sizes = [8, 32], strides = [1, 1]} : vector<8x128xf32> to vector<8x32xf32>
    %493 = arith.mulf %490, %430 : vector<8x32xf32>
    %494 = arith.mulf %489, %491 : vector<8x32xf32>
    %495 = arith.addf %493, %494 : vector<8x32xf32>
    %496 = math.tanh %495 : vector<8x32xf32>
    %497 = arith.mulf %492, %496 : vector<8x32xf32>
    %498 = vector.broadcast %c6_i32 : i32 to vector<8x1xi32>
    %499 = arith.cmpi slt, %498, %18 : vector<8x1xi32>
    %500 = vector.shape_cast %499 : vector<8x1xi1> to vector<8x1xi1>
    %501 = vector.broadcast %500 : vector<8x1xi1> to vector<8x32xi1>
    %502 = arith.select %501, %497, %427 : vector<8x32xi1>, vector<8x32xf32>
    %503 = vector.shape_cast %499 : vector<8x1xi1> to vector<8x1xi1>
    %504 = vector.broadcast %503 : vector<8x1xi1> to vector<8x32xi1>
    %505 = arith.select %504, %495, %430 : vector<8x32xi1>, vector<8x32xf32>
    %506 = arith.index_cast %476 : i32 to index
    %c0_117 = arith.constant 0 : index
    %c0_118 = arith.constant 0 : index
    %507 = vector.load %arg11[%506, %c0_117, %c0_118] : memref<8x8x128xf32, #tpu.memory_space<vmem>>, vector<1x8x128xf32>
    %508 = vector.shape_cast %507 : vector<1x8x128xf32> to vector<8x128xf32>
    %cst_119 = arith.constant dense<0.000000e+00> : vector<8x128xf32>
    %509 = tpu.matmul %456, %17, %cst_119 {dimension_numbers = #tpu.dot_dimension_numbers<[1], [0], [0], [1], [0, 0, 1, 1], [], []>} : vector<8x32xf32>, vector<32x128xf32>, vector<8x128xf32> -> vector<8x128xf32>
    %510 = arith.addf %508, %509 : vector<8x128xf32>
    %511 = math.tanh %510 : vector<8x128xf32>
    %512 = arith.negf %510 : vector<8x128xf32>
    %513 = math.exp %512 : vector<8x128xf32>
    %cst_120 = arith.constant 1.000000e+00 : f32
    %514 = vector.broadcast %cst_120 : f32 to vector<8x128xf32>
    %515 = arith.addf %514, %513 : vector<8x128xf32>
    %516 = arith.divf %514, %515 : vector<8x128xf32>
    %517 = arith.select %24, %511, %516 : vector<8x128xi1>, vector<8x128xf32>
    %518 = vector.extract_strided_slice %517 {offsets = [0, 0], sizes = [8, 32], strides = [1, 1]} : vector<8x128xf32> to vector<8x32xf32>
    %519 = vector.extract_strided_slice %517 {offsets = [0, 32], sizes = [8, 32], strides = [1, 1]} : vector<8x128xf32> to vector<8x32xf32>
    %520 = vector.extract_strided_slice %517 {offsets = [0, 64], sizes = [8, 32], strides = [1, 1]} : vector<8x128xf32> to vector<8x32xf32>
    %521 = vector.extract_strided_slice %517 {offsets = [0, 96], sizes = [8, 32], strides = [1, 1]} : vector<8x128xf32> to vector<8x32xf32>
    %522 = arith.mulf %519, %459 : vector<8x32xf32>
    %523 = arith.mulf %518, %520 : vector<8x32xf32>
    %524 = arith.addf %522, %523 : vector<8x32xf32>
    %525 = math.tanh %524 : vector<8x32xf32>
    %526 = arith.mulf %521, %525 : vector<8x32xf32>
    %527 = vector.broadcast %476 : i32 to vector<8x1xi32>
    %528 = arith.cmpi slt, %527, %18 : vector<8x1xi32>
    %529 = vector.shape_cast %528 : vector<8x1xi1> to vector<8x1xi1>
    %530 = vector.broadcast %529 : vector<8x1xi1> to vector<8x32xi1>
    %531 = arith.select %530, %526, %456 : vector<8x32xi1>, vector<8x32xf32>
    %532 = vector.shape_cast %528 : vector<8x1xi1> to vector<8x1xi1>
    %533 = vector.broadcast %532 : vector<8x1xi1> to vector<8x32xi1>
    %534 = arith.select %533, %524, %459 : vector<8x32xi1>, vector<8x32xf32>
    %cst_121 = arith.constant 0.000000e+00 : f32
    %535 = vector.broadcast %cst_121 : f32 to vector<8x32xf32>
    %536 = vector.shape_cast %499 : vector<8x1xi1> to vector<8x1xi1>
    %537 = vector.broadcast %536 : vector<8x1xi1> to vector<8x32xi1>
    %538 = arith.select %537, %497, %535 : vector<8x32xi1>, vector<8x32xf32>
    %539 = arith.index_cast %c6_i32 : i32 to index
    %c0_122 = arith.constant 0 : index
    %c0_123 = arith.constant 0 : index
    %540 = vector.load %arg9[%539, %c0_122, %c0_123] : memref<8x8x64xf32, #tpu.memory_space<vmem>>, vector<1x8x32xf32>
    %541 = vector.shape_cast %540 : vector<1x8x32xf32> to vector<8x32xf32>
    %542 = vector.shape_cast %538 : vector<8x32xf32> to vector<1x8x32xf32>
    tpu.vector_store %arg9[%539, %c0_122, %c0_123], %542 {strides = array<i32>} : memref<8x8x64xf32, #tpu.memory_space<vmem>>, vector<1x8x32xf32>,
    %cst_124 = arith.constant 0.000000e+00 : f32
    %543 = vector.broadcast %cst_124 : f32 to vector<8x32xf32>
    %544 = vector.shape_cast %528 : vector<8x1xi1> to vector<8x1xi1>
    %545 = vector.broadcast %544 : vector<8x1xi1> to vector<8x32xi1>
    %546 = arith.select %545, %526, %543 : vector<8x32xi1>, vector<8x32xf32>
    %547 = arith.index_cast %476 : i32 to index
    %c0_125 = arith.constant 0 : index
    %c32_126 = arith.constant 32 : index
    %548 = vector.load %arg9[%547, %c0_125, %c32_126] : memref<8x8x64xf32, #tpu.memory_space<vmem>>, vector<1x8x32xf32>
    %549 = vector.shape_cast %548 : vector<1x8x32xf32> to vector<8x32xf32>
    %550 = vector.shape_cast %546 : vector<8x32xf32> to vector<1x8x32xf32>
    tpu.vector_store %arg9[%547, %c0_125, %c32_126], %550 {strides = array<i32>} : memref<8x8x64xf32, #tpu.memory_space<vmem>>, vector<1x8x32xf32>,
    %c7_i32_127 = arith.constant 7 : i32
    %c7_i32_128 = arith.constant 7 : i32
    %551 = arith.subi %c7_i32_128, %c7_i32_127 : i32
    %552 = arith.index_cast %c7_i32_127 : i32 to index
    %c0_129 = arith.constant 0 : index
    %c0_130 = arith.constant 0 : index
    %553 = vector.load %arg10[%552, %c0_129, %c0_130] : memref<8x8x128xf32, #tpu.memory_space<vmem>>, vector<1x8x128xf32>
    %554 = vector.shape_cast %553 : vector<1x8x128xf32> to vector<8x128xf32>
    %cst_131 = arith.constant dense<0.000000e+00> : vector<8x128xf32>
    %555 = tpu.matmul %502, %16, %cst_131 {dimension_numbers = #tpu.dot_dimension_numbers<[1], [0], [0], [1], [0, 0, 1, 1], [], []>} : vector<8x32xf32>, vector<32x128xf32>, vector<8x128xf32> -> vector<8x128xf32>
    %556 = arith.addf %554, %555 : vector<8x128xf32>
    %557 = math.tanh %556 : vector<8x128xf32>
    %558 = arith.negf %556 : vector<8x128xf32>
    %559 = math.exp %558 : vector<8x128xf32>
    %cst_132 = arith.constant 1.000000e+00 : f32
    %560 = vector.broadcast %cst_132 : f32 to vector<8x128xf32>
    %561 = arith.addf %560, %559 : vector<8x128xf32>
    %562 = arith.divf %560, %561 : vector<8x128xf32>
    %563 = arith.select %24, %557, %562 : vector<8x128xi1>, vector<8x128xf32>
    %564 = vector.extract_strided_slice %563 {offsets = [0, 0], sizes = [8, 32], strides = [1, 1]} : vector<8x128xf32> to vector<8x32xf32>
    %565 = vector.extract_strided_slice %563 {offsets = [0, 32], sizes = [8, 32], strides = [1, 1]} : vector<8x128xf32> to vector<8x32xf32>
    %566 = vector.extract_strided_slice %563 {offsets = [0, 64], sizes = [8, 32], strides = [1, 1]} : vector<8x128xf32> to vector<8x32xf32>
    %567 = vector.extract_strided_slice %563 {offsets = [0, 96], sizes = [8, 32], strides = [1, 1]} : vector<8x128xf32> to vector<8x32xf32>
    %568 = arith.mulf %565, %505 : vector<8x32xf32>
    %569 = arith.mulf %564, %566 : vector<8x32xf32>
    %570 = arith.addf %568, %569 : vector<8x32xf32>
    %571 = math.tanh %570 : vector<8x32xf32>
    %572 = arith.mulf %567, %571 : vector<8x32xf32>
    %573 = vector.broadcast %c7_i32_127 : i32 to vector<8x1xi32>
    %574 = arith.cmpi slt, %573, %18 : vector<8x1xi32>
    %575 = vector.shape_cast %574 : vector<8x1xi1> to vector<8x1xi1>
    %576 = vector.broadcast %575 : vector<8x1xi1> to vector<8x32xi1>
    %577 = arith.select %576, %572, %502 : vector<8x32xi1>, vector<8x32xf32>
    %578 = vector.shape_cast %574 : vector<8x1xi1> to vector<8x1xi1>
    %579 = vector.broadcast %578 : vector<8x1xi1> to vector<8x32xi1>
    %580 = arith.select %579, %570, %505 : vector<8x32xi1>, vector<8x32xf32>
    %581 = arith.index_cast %551 : i32 to index
    %c0_133 = arith.constant 0 : index
    %c0_134 = arith.constant 0 : index
    %582 = vector.load %arg11[%581, %c0_133, %c0_134] : memref<8x8x128xf32, #tpu.memory_space<vmem>>, vector<1x8x128xf32>
    %583 = vector.shape_cast %582 : vector<1x8x128xf32> to vector<8x128xf32>
    %cst_135 = arith.constant dense<0.000000e+00> : vector<8x128xf32>
    %584 = tpu.matmul %531, %17, %cst_135 {dimension_numbers = #tpu.dot_dimension_numbers<[1], [0], [0], [1], [0, 0, 1, 1], [], []>} : vector<8x32xf32>, vector<32x128xf32>, vector<8x128xf32> -> vector<8x128xf32>
    %585 = arith.addf %583, %584 : vector<8x128xf32>
    %586 = math.tanh %585 : vector<8x128xf32>
    %587 = arith.negf %585 : vector<8x128xf32>
    %588 = math.exp %587 : vector<8x128xf32>
    %cst_136 = arith.constant 1.000000e+00 : f32
    %589 = vector.broadcast %cst_136 : f32 to vector<8x128xf32>
    %590 = arith.addf %589, %588 : vector<8x128xf32>
    %591 = arith.divf %589, %590 : vector<8x128xf32>
    %592 = arith.select %24, %586, %591 : vector<8x128xi1>, vector<8x128xf32>
    %593 = vector.extract_strided_slice %592 {offsets = [0, 0], sizes = [8, 32], strides = [1, 1]} : vector<8x128xf32> to vector<8x32xf32>
    %594 = vector.extract_strided_slice %592 {offsets = [0, 32], sizes = [8, 32], strides = [1, 1]} : vector<8x128xf32> to vector<8x32xf32>
    %595 = vector.extract_strided_slice %592 {offsets = [0, 64], sizes = [8, 32], strides = [1, 1]} : vector<8x128xf32> to vector<8x32xf32>
    %596 = vector.extract_strided_slice %592 {offsets = [0, 96], sizes = [8, 32], strides = [1, 1]} : vector<8x128xf32> to vector<8x32xf32>
    %597 = arith.mulf %594, %534 : vector<8x32xf32>
    %598 = arith.mulf %593, %595 : vector<8x32xf32>
    %599 = arith.addf %597, %598 : vector<8x32xf32>
    %600 = math.tanh %599 : vector<8x32xf32>
    %601 = arith.mulf %596, %600 : vector<8x32xf32>
    %602 = vector.broadcast %551 : i32 to vector<8x1xi32>
    %603 = arith.cmpi slt, %602, %18 : vector<8x1xi32>
    %604 = vector.shape_cast %603 : vector<8x1xi1> to vector<8x1xi1>
    %605 = vector.broadcast %604 : vector<8x1xi1> to vector<8x32xi1>
    %606 = arith.select %605, %601, %531 : vector<8x32xi1>, vector<8x32xf32>
    %607 = vector.shape_cast %603 : vector<8x1xi1> to vector<8x1xi1>
    %608 = vector.broadcast %607 : vector<8x1xi1> to vector<8x32xi1>
    %609 = arith.select %608, %599, %534 : vector<8x32xi1>, vector<8x32xf32>
    %cst_137 = arith.constant 0.000000e+00 : f32
    %610 = vector.broadcast %cst_137 : f32 to vector<8x32xf32>
    %611 = vector.shape_cast %574 : vector<8x1xi1> to vector<8x1xi1>
    %612 = vector.broadcast %611 : vector<8x1xi1> to vector<8x32xi1>
    %613 = arith.select %612, %572, %610 : vector<8x32xi1>, vector<8x32xf32>
    %614 = arith.index_cast %c7_i32_127 : i32 to index
    %c0_138 = arith.constant 0 : index
    %c0_139 = arith.constant 0 : index
    %615 = vector.load %arg9[%614, %c0_138, %c0_139] : memref<8x8x64xf32, #tpu.memory_space<vmem>>, vector<1x8x32xf32>
    %616 = vector.shape_cast %615 : vector<1x8x32xf32> to vector<8x32xf32>
    %617 = vector.shape_cast %613 : vector<8x32xf32> to vector<1x8x32xf32>
    tpu.vector_store %arg9[%614, %c0_138, %c0_139], %617 {strides = array<i32>} : memref<8x8x64xf32, #tpu.memory_space<vmem>>, vector<1x8x32xf32>,
    %cst_140 = arith.constant 0.000000e+00 : f32
    %618 = vector.broadcast %cst_140 : f32 to vector<8x32xf32>
    %619 = vector.shape_cast %603 : vector<8x1xi1> to vector<8x1xi1>
    %620 = vector.broadcast %619 : vector<8x1xi1> to vector<8x32xi1>
    %621 = arith.select %620, %601, %618 : vector<8x32xi1>, vector<8x32xf32>
    %622 = arith.index_cast %551 : i32 to index
    %c0_141 = arith.constant 0 : index
    %c32_142 = arith.constant 32 : index
    %623 = vector.load %arg9[%622, %c0_141, %c32_142] : memref<8x8x64xf32, #tpu.memory_space<vmem>>, vector<1x8x32xf32>
    %624 = vector.shape_cast %623 : vector<1x8x32xf32> to vector<8x32xf32>
    %625 = vector.shape_cast %621 : vector<8x32xf32> to vector<1x8x32xf32>
    tpu.vector_store %arg9[%622, %c0_141, %c32_142], %625 {strides = array<i32>} : memref<8x8x64xf32, #tpu.memory_space<vmem>>, vector<1x8x32xf32>,
    %c8_i32 = arith.constant 8 : i32
    return
  }
  func.func @transform_0(%arg0: i32) -> (i32, i32, i32) {
    %c0_i32 = arith.constant 0 : i32
    %c0_i32_0 = arith.constant 0 : i32
    %c0_i32_1 = arith.constant 0 : i32
    return %c0_i32, %arg0, %c0_i32_0 : i32, i32, i32
  }
  func.func @transform_1(%arg0: i32) -> (i32, i32) {
    %c0_i32 = arith.constant 0 : i32
    %c0_i32_0 = arith.constant 0 : i32
    %c0_i32_1 = arith.constant 0 : i32
    return %c0_i32, %c0_i32_0 : i32, i32
  }
  func.func @transform_2(%arg0: i32) -> (i32, i32) {
    %c0_i32 = arith.constant 0 : i32
    %c0_i32_0 = arith.constant 0 : i32
    %c0_i32_1 = arith.constant 0 : i32
    return %c0_i32, %c0_i32_0 : i32, i32
  }
  func.func @transform_3(%arg0: i32) -> (i32, i32) {
    %c0_i32 = arith.constant 0 : i32
    %c0_i32_0 = arith.constant 0 : i32
    %c0_i32_1 = arith.constant 0 : i32
    return %c0_i32, %c0_i32_0 : i32, i32
  }
  func.func @transform_4(%arg0: i32) -> (i32, i32) {
    %c0_i32 = arith.constant 0 : i32
    %c0_i32_0 = arith.constant 0 : i32
    %c0_i32_1 = arith.constant 0 : i32
    return %c0_i32, %c0_i32_0 : i32, i32
  }
  func.func @transform_5(%arg0: i32) -> (i32, i32) {
    %c0_i32 = arith.constant 0 : i32
    %c0_i32_0 = arith.constant 0 : i32
    %c0_i32_1 = arith.constant 0 : i32
    return %c0_i32, %c0_i32_0 : i32, i32
  }
  func.func @transform_6(%arg0: i32) -> (i32, i32) {
    %c0_i32 = arith.constant 0 : i32
    %c0_i32_0 = arith.constant 0 : i32
    %c0_i32_1 = arith.constant 0 : i32
    return %c0_i32, %c0_i32_0 : i32, i32
  }
  func.func @transform_7(%arg0: i32) -> (i32, i32) {
    %c0_i32 = arith.constant 0 : i32
    %c0_i32_0 = arith.constant 0 : i32
    return %arg0, %c0_i32 : i32, i32
  }
  func.func @transform_8(%arg0: i32) -> (i32, i32, i32) {
    %c0_i32 = arith.constant 0 : i32
    %c0_i32_0 = arith.constant 0 : i32
    %c0_i32_1 = arith.constant 0 : i32
    return %c0_i32, %arg0, %c0_i32_0 : i32, i32, i32
  }
}

</mosaic_0001>

<llo_original>
// kernel: _lambda_.2
$region0: #{_lambda_.2}
  #allocation0 [shape = 'u32[]', space=smem, size = 0x4, offset = 0x4, fixed_abs, tag = 'smem constant byte address 0x4 - core index']
  #allocation1 [shape = 'u32[144,128]{1,0:T(1,128)}', space=vmem, size = 0x12000, scoped, tag = 'internal scratch']
  #allocation2 [shape = 'f32[8,8,128]{2,1,0:T(8,128)}', space=vmem, size = 0x8000, scoped, tag = 'scratch operand']
  #allocation3 [shape = 'f32[8,8,128]{2,1,0:T(8,128)}', space=vmem, size = 0x8000, scoped, tag = 'scratch operand']
  %s0 = inlined_call_operand.vmem [shape: f32[8,8,64], index: 0, kind: input, shape index: {}]
  %s1 = inlined_call_operand.vmem [shape: f32[64,128], index: 1, kind: input, shape index: {}]
  %s2 = inlined_call_operand.vmem [shape: f32[32,128], index: 2, kind: input, shape index: {}]
  %s3 = inlined_call_operand.vmem [shape: f32[1,128], index: 3, kind: input, shape index: {}]
  %s4 = inlined_call_operand.vmem [shape: f32[64,128], index: 4, kind: input, shape index: {}]
  %s5 = inlined_call_operand.vmem [shape: f32[32,128], index: 5, kind: input, shape index: {}]
  %s6 = inlined_call_operand.vmem [shape: f32[1,128], index: 6, kind: input, shape index: {}]
  %s7 = inlined_call_operand.vmem [shape: s32[8,1], index: 7, kind: input, shape index: {}]
  %s8 = inlined_call_operand.vmem [shape: f32[8,8,64], index: 8, kind: output, shape index: {}]
  %s9 = sld [smem:[#allocation0]]
  $region42: #{_lambda_.2} parent=0
    _
  %s11 = ssub.s32 1, %s9
  %s12 = scalar_select 0, %s11, %s9
  // Predicated region
  $region2: #{_lambda_.2} parent=0 // pred_check
    _
  $region3: #{_lambda_.2} parent=0 // pred_check_branch
    %14 = sbr.rel (0) target = $region5
  $region4: #{_lambda_.2} parent=0 // pred_region
    _
  $region5: #{_lambda_.2} parent=0 // pred_fallthru
    _
  // Predicated region
  $region6: #{_lambda_.2} parent=0 // pred_check
    _
  $region7: #{_lambda_.2} parent=0 // pred_check_branch
    %16 = sbr.rel (0) target = $region9
  $region8: #{_lambda_.2} parent=0 // pred_region
    _
  $region9: #{_lambda_.2} parent=0 // pred_fallthru
    _
  // Predicated region
  $region10: #{_lambda_.2} parent=0 // pred_check
    _
  $region11: #{_lambda_.2} parent=0 // pred_check_branch
    %18 = sbr.rel (0) target = $region13
  $region12: #{_lambda_.2} parent=0 // pred_region
    _
  $region13: #{_lambda_.2} parent=0 // pred_fallthru
    _
  // Predicated region
  $region14: #{_lambda_.2} parent=0 // pred_check
    _
  $region15: #{_lambda_.2} parent=0 // pred_check_branch
    %20 = sbr.rel (0) target = $region17
  $region16: #{_lambda_.2} parent=0 // pred_region
    _
  $region17: #{_lambda_.2} parent=0 // pred_fallthru
    _
  // Predicated region
  $region18: #{_lambda_.2} parent=0 // pred_check
    _
  $region19: #{_lambda_.2} parent=0 // pred_check_branch
    %22 = sbr.rel (0) target = $region21
  $region20: #{_lambda_.2} parent=0 // pred_region
    _
  $region21: #{_lambda_.2} parent=0 // pred_fallthru
    _
  // Predicated region
  $region22: #{_lambda_.2} parent=0 // pred_check
    _
  $region23: #{_lambda_.2} parent=0 // pred_check_branch
    %24 = sbr.rel (0) target = $region25
  $region24: #{_lambda_.2} parent=0 // pred_region
    _
  $region25: #{_lambda_.2} parent=0 // pred_fallthru
    _
  // Predicated region
  $region26: #{_lambda_.2} parent=0 // pred_check
    _
  $region27: #{_lambda_.2} parent=0 // pred_check_branch
    %26 = sbr.rel (0) target = $region29
  $region28: #{_lambda_.2} parent=0 // pred_region
    _
  $region29: #{_lambda_.2} parent=0 // pred_fallthru
    _
  // Predicated region
  $region30: #{_lambda_.2} parent=0 // pred_check
    _
  $region31: #{_lambda_.2} parent=0 // pred_check_branch
    %28 = sbr.rel (0) target = $region33
  $region32: #{_lambda_.2} parent=0 // pred_region
    _
  $region33: #{_lambda_.2} parent=0 // pred_fallthru
    _
  %v29 = vld [vmem:[%s0] sm:$0xff]
  %v30 = vld [vmem:[%s0 + $0x8] sm:$0xff]
  %v31 = vld [vmem:[%s0 + $0x10] sm:$0xff]
  %v32 = vld [vmem:[%s0 + $0x18] sm:$0xff]
  %v33 = vld [vmem:[%s0 + $0x20] sm:$0xff]
  %v34 = vld [vmem:[%s0 + $0x28] sm:$0xff]
  %v35 = vld [vmem:[%s0 + $0x30] sm:$0xff]
  %v36 = vld [vmem:[%s0 + $0x38] sm:$0xff]
  %v37 = vld [vmem:[%s1] sm:$0xff]
  %v38 = vld [vmem:[%s1 + $0x8] sm:$0xff]
  %v39 = vld [vmem:[%s1 + $0x10] sm:$0xff]
  %v40 = vld [vmem:[%s1 + $0x18] sm:$0xff]
  %v41 = vld [vmem:[%s1 + $0x20] sm:$0xff]
  %v42 = vld [vmem:[%s1 + $0x28] sm:$0xff]
  %v43 = vld [vmem:[%s1 + $0x30] sm:$0xff]
  %v44 = vld [vmem:[%s1 + $0x38] sm:$0xff]
  %v45 = vld [vmem:[%s3] sm:$0x1]
  %v47 = vlaneseq
  %v48 = vshrl.u32 %v47, 7
  %v49 = vsub.s32 0, %v48
  %v50 = vrot.slane %v45, %v49
  %vm52 = vcmask 523264
  %v54 = vsel %vm52, %v29, 0
  %v57 = vsel %vm52, %v30, 0
  %v60 = vsel %vm52, %v31, 0
  %v63 = vsel %vm52, %v32, 0
  %v66 = vsel %vm52, %v33, 0
  %v69 = vsel %vm52, %v34, 0
  %v72 = vsel %vm52, %v35, 0
  %v75 = vsel %vm52, %v36, 0
  %77 = vmatprep.subr.mxu0 0.0
  %78 = vmatpush1.msra.mxu0 0.0
  %79 = vmatprep.subr.mxu0 0.0
  %80 = vmatpush1.msra.mxu0 0.0
  %81 = vmatprep.subr.mxu0 0.0
  %82 = vmatpush1.msra.mxu0 0.0
  %83 = vmatprep.subr.mxu0 0.0
  %84 = vmatpush1.msra.mxu0 0.0
  %85 = vmatprep.subr.mxu0 0.0
  %86 = vmatpush1.msra.mxu0 0.0
  %87 = vmatprep.subr.mxu0 0.0
  %88 = vmatpush1.msra.mxu0 0.0
  %89 = vmatprep.subr.mxu0 0.0
  %90 = vmatpush1.msra.mxu0 0.0
  %91 = vmatprep.subr.mxu0 0.0
  %92 = vmatpush1.msra.mxu0 0.0
  %93 = vmatprep.subr.mxu0 0.0
  %94 = vmatpush1.msra.mxu0 %v44
  %95 = vmatprep.subr.mxu0 0.0
  %96 = vmatpush1.msra.mxu0 %v43
  %97 = vmatprep.subr.mxu0 0.0
  %98 = vmatpush1.msra.mxu0 %v42
  %99 = vmatprep.subr.mxu0 0.0
  %100 = vmatpush1.msra.mxu0 %v41
  %101 = vmatprep.subr.mxu0 0.0
  %102 = vmatpush1.msra.mxu0 %v40
  %103 = vmatprep.subr.mxu0 0.0
  %104 = vmatpush1.msra.mxu0 %v39
  %105 = vmatprep.subr.mxu0 0.0
  %106 = vmatpush1.msra.mxu0 %v38
  %107 = vmatprep.subr.mxu0 0.0
  %108 = vmatpush1.msra.mxu0 %v37
  %109 = vmatprep.subr.mxu0 0.0
  %110 = vmatpush2.msra.mxu0 0.0
  %111 = vmatprep.subr.mxu0 0.0
  %112 = vmatpush2.msra.mxu0 0.0
  %113 = vmatprep.subr.mxu0 0.0
  %114 = vmatpush2.msra.mxu0 0.0
  %115 = vmatprep.subr.mxu0 0.0
  %116 = vmatpush2.msra.mxu0 0.0
  %117 = vmatprep.subr.mxu0 0.0
  %118 = vmatpush2.msra.mxu0 0.0
  %119 = vmatprep.subr.mxu0 0.0
  %120 = vmatpush2.msra.mxu0 0.0
  %121 = vmatprep.subr.mxu0 0.0
  %122 = vmatpush2.msra.mxu0 0.0
  %123 = vmatprep.subr.mxu0 0.0
  %124 = vmatpush2.msra.mxu0 0.0
  %125 = vmatprep.subr.mxu0 0.0
  %126 = vmatpush2.msra.mxu0 0.0
  %127 = vmatprep.subr.mxu0 0.0
  %128 = vmatpush2.msra.mxu0 0.0
  %129 = vmatprep.subr.mxu0 0.0
  %130 = vmatpush2.msra.mxu0 0.0
  %131 = vmatprep.subr.mxu0 0.0
  %132 = vmatpush2.msra.mxu0 0.0
  %133 = vmatprep.subr.mxu0 0.0
  %134 = vmatpush2.msra.mxu0 0.0
  %135 = vmatprep.subr.mxu0 0.0
  %136 = vmatpush2.msra.mxu0 0.0
  %137 = vmatprep.subr.mxu0 0.0
  %138 = vmatpush2.msra.mxu0 0.0
  %139 = vmatprep.subr.mxu0 0.0
  %140 = vmatpush2.msra.mxu0 0.0
  %141 = vmatprep.mubr.f32.mxu0 0.0
  %142 = vmatmul.mubr.f32.gmra.mxu0 %v54
  %v143 = vpop.f32.mrf.mxu0
  %v144 = vadd.f32 %v50, %v143
  %v145 = vpop.f32.mrf.mxu0
  %146 = vmatprep.mubr.f32.mxu0 0.0
  %147 = vmatmul.mubr.f32.gmra.mxu0 %v57
  %v148 = vpop.f32.mrf.mxu0
  %v149 = vadd.f32 %v50, %v148
  %v150 = vpop.f32.mrf.mxu0
  %151 = vmatprep.mubr.f32.mxu0 0.0
  %152 = vmatmul.mubr.f32.gmra.mxu0 %v60
  %v153 = vpop.f32.mrf.mxu0
  %v154 = vadd.f32 %v50, %v153
  %v155 = vpop.f32.mrf.mxu0
  %156 = vmatprep.mubr.f32.mxu0 0.0
  %157 = vmatmul.mubr.f32.gmra.mxu0 %v63
  %v158 = vpop.f32.mrf.mxu0
  %v159 = vadd.f32 %v50, %v158
  %v160 = vpop.f32.mrf.mxu0
  %161 = vmatprep.mubr.f32.mxu0 0.0
  %162 = vmatmul.mubr.f32.gmra.mxu0 %v66
  %v163 = vpop.f32.mrf.mxu0
  %v164 = vadd.f32 %v50, %v163
  %v165 = vpop.f32.mrf.mxu0
  %166 = vmatprep.mubr.f32.mxu0 0.0
  %167 = vmatmul.mubr.f32.gmra.mxu0 %v69
  %v168 = vpop.f32.mrf.mxu0
  %v169 = vadd.f32 %v50, %v168
  %v170 = vpop.f32.mrf.mxu0
  %171 = vmatprep.mubr.f32.mxu0 0.0
  %172 = vmatmul.mubr.f32.gmra.mxu0 %v72
  %v173 = vpop.f32.mrf.mxu0
  %v174 = vadd.f32 %v50, %v173
  %v175 = vpop.f32.mrf.mxu0
  %176 = vmatprep.mubr.f32.mxu0 0.0
  %177 = vmatmul.mubr.f32.gmra.mxu0 %v75
  %v178 = vpop.f32.mrf.mxu0
  %v179 = vadd.f32 %v50, %v178
  %v180 = vpop.f32.mrf.mxu0
  %181 = vdwg.mxu0
  %182 = vst [vmem:[#allocation2] sm:$0xff] %v144
  %183 = vst [vmem:[#allocation2 + $0x8] sm:$0xff] %v149
  %184 = vst [vmem:[#allocation2 + $0x10] sm:$0xff] %v154
  %185 = vst [vmem:[#allocation2 + $0x18] sm:$0xff] %v159
  %186 = vst [vmem:[#allocation2 + $0x20] sm:$0xff] %v164
  %187 = vst [vmem:[#allocation2 + $0x28] sm:$0xff] %v169
  %188 = vst [vmem:[#allocation2 + $0x30] sm:$0xff] %v174
  %189 = vst [vmem:[#allocation2 + $0x38] sm:$0xff] %v179
  %v190 = vld [vmem:[%s4] sm:$0xff]
  %v191 = vld [vmem:[%s4 + $0x8] sm:$0xff]
  %v192 = vld [vmem:[%s4 + $0x10] sm:$0xff]
  %v193 = vld [vmem:[%s4 + $0x18] sm:$0xff]
  %v194 = vld [vmem:[%s4 + $0x20] sm:$0xff]
  %v195 = vld [vmem:[%s4 + $0x28] sm:$0xff]
  %v196 = vld [vmem:[%s4 + $0x30] sm:$0xff]
  %v197 = vld [vmem:[%s4 + $0x38] sm:$0xff]
  %v198 = vld [vmem:[%s6] sm:$0x1]
  %v200 = vlaneseq
  %v201 = vshrl.u32 %v200, 7
  %v202 = vsub.s32 0, %v201
  %v203 = vrot.slane %v198, %v202
  %205 = vmatprep.subr.mxu0 0.0
  %206 = vmatpush1.msra.mxu0 0.0
  %207 = vmatprep.subr.mxu0 0.0
  %208 = vmatpush1.msra.mxu0 0.0
  %209 = vmatprep.subr.mxu0 0.0
  %210 = vmatpush1.msra.mxu0 0.0
  %211 = vmatprep.subr.mxu0 0.0
  %212 = vmatpush1.msra.mxu0 0.0
  %213 = vmatprep.subr.mxu0 0.0
  %214 = vmatpush1.msra.mxu0 0.0
  %215 = vmatprep.subr.mxu0 0.0
  %216 = vmatpush1.msra.mxu0 0.0
  %217 = vmatprep.subr.mxu0 0.0
  %218 = vmatpush1.msra.mxu0 0.0
  %219 = vmatprep.subr.mxu0 0.0
  %220 = vmatpush1.msra.mxu0 0.0
  %221 = vmatprep.subr.mxu0 0.0
  %222 = vmatpush1.msra.mxu0 %v197
  %223 = vmatprep.subr.mxu0 0.0
  %224 = vmatpush1.msra.mxu0 %v196
  %225 = vmatprep.subr.mxu0 0.0
  %226 = vmatpush1.msra.mxu0 %v195
  %227 = vmatprep.subr.mxu0 0.0
  %228 = vmatpush1.msra.mxu0 %v194
  %229 = vmatprep.subr.mxu0 0.0
  %230 = vmatpush1.msra.mxu0 %v193
  %231 = vmatprep.subr.mxu0 0.0
  %232 = vmatpush1.msra.mxu0 %v192
  %233 = vmatprep.subr.mxu0 0.0
  %234 = vmatpush1.msra.mxu0 %v191
  %235 = vmatprep.subr.mxu0 0.0
  %236 = vmatpush1.msra.mxu0 %v190
  %237 = vmatprep.subr.mxu0 0.0
  %238 = vmatpush2.msra.mxu0 0.0
  %239 = vmatprep.subr.mxu0 0.0
  %240 = vmatpush2.msra.mxu0 0.0
  %241 = vmatprep.subr.mxu0 0.0
  %242 = vmatpush2.msra.mxu0 0.0
  %243 = vmatprep.subr.mxu0 0.0
  %244 = vmatpush2.msra.mxu0 0.0
  %245 = vmatprep.subr.mxu0 0.0
  %246 = vmatpush2.msra.mxu0 0.0
  %247 = vmatprep.subr.mxu0 0.0
  %248 = vmatpush2.msra.mxu0 0.0
  %249 = vmatprep.subr.mxu0 0.0
  %250 = vmatpush2.msra.mxu0 0.0
  %251 = vmatprep.subr.mxu0 0.0
  %252 = vmatpush2.msra.mxu0 0.0
  %253 = vmatprep.subr.mxu0 0.0
  %254 = vmatpush2.msra.mxu0 0.0
  %255 = vmatprep.subr.mxu0 0.0
  %256 = vmatpush2.msra.mxu0 0.0
  %257 = vmatprep.subr.mxu0 0.0
  %258 = vmatpush2.msra.mxu0 0.0
  %259 = vmatprep.subr.mxu0 0.0
  %260 = vmatpush2.msra.mxu0 0.0
  %261 = vmatprep.subr.mxu0 0.0
  %262 = vmatpush2.msra.mxu0 0.0
  %263 = vmatprep.subr.mxu0 0.0
  %264 = vmatpush2.msra.mxu0 0.0
  %265 = vmatprep.subr.mxu0 0.0
  %266 = vmatpush2.msra.mxu0 0.0
  %267 = vmatprep.subr.mxu0 0.0
  %268 = vmatpush2.msra.mxu0 0.0
  %269 = vmatprep.mubr.f32.mxu0 0.0
  %270 = vmatmul.mubr.f32.gmra.mxu0 %v54
  %v271 = vpop.f32.mrf.mxu0
  %v272 = vadd.f32 %v203, %v271
  %v273 = vpop.f32.mrf.mxu0
  %274 = vmatprep.mubr.f32.mxu0 0.0
  %275 = vmatmul.mubr.f32.gmra.mxu0 %v57
  %v276 = vpop.f32.mrf.mxu0
  %v277 = vadd.f32 %v203, %v276
  %v278 = vpop.f32.mrf.mxu0
  %279 = vmatprep.mubr.f32.mxu0 0.0
  %280 = vmatmul.mubr.f32.gmra.mxu0 %v60
  %v281 = vpop.f32.mrf.mxu0
  %v282 = vadd.f32 %v203, %v281
  %v283 = vpop.f32.mrf.mxu0
  %284 = vmatprep.mubr.f32.mxu0 0.0
  %285 = vmatmul.mubr.f32.gmra.mxu0 %v63
  %v286 = vpop.f32.mrf.mxu0
  %v287 = vadd.f32 %v203, %v286
  %v288 = vpop.f32.mrf.mxu0
  %289 = vmatprep.mubr.f32.mxu0 0.0
  %290 = vmatmul.mubr.f32.gmra.mxu0 %v66
  %v291 = vpop.f32.mrf.mxu0
  %v292 = vadd.f32 %v203, %v291
  %v293 = vpop.f32.mrf.mxu0
  %294 = vmatprep.mubr.f32.mxu0 0.0
  %295 = vmatmul.mubr.f32.gmra.mxu0 %v69
  %v296 = vpop.f32.mrf.mxu0
  %v297 = vadd.f32 %v203, %v296
  %v298 = vpop.f32.mrf.mxu0
  %299 = vmatprep.mubr.f32.mxu0 0.0
  %300 = vmatmul.mubr.f32.gmra.mxu0 %v72
  %v301 = vpop.f32.mrf.mxu0
  %v302 = vadd.f32 %v203, %v301
  %v303 = vpop.f32.mrf.mxu0
  %304 = vmatprep.mubr.f32.mxu0 0.0
  %305 = vmatmul.mubr.f32.gmra.mxu0 %v75
  %v306 = vpop.f32.mrf.mxu0
  %v307 = vadd.f32 %v203, %v306
  %v308 = vpop.f32.mrf.mxu0
  %309 = vdwg.mxu0
  %310 = vst [vmem:[#allocation3] sm:$0xff] %v272
  %311 = vst [vmem:[#allocation3 + $0x8] sm:$0xff] %v277
  %312 = vst [vmem:[#allocation3 + $0x10] sm:$0xff] %v282
  %313 = vst [vmem:[#allocation3 + $0x18] sm:$0xff] %v287
  %314 = vst [vmem:[#allocation3 + $0x20] sm:$0xff] %v292
  %315 = vst [vmem:[#allocation3 + $0x28] sm:$0xff] %v297
  %316 = vst [vmem:[#allocation3 + $0x30] sm:$0xff] %v302
  %317 = vst [vmem:[#allocation3 + $0x38] sm:$0xff] %v307
  %v318 = vld [vmem:[%s2] sm:$0xff]
  %v319 = vld [vmem:[%s2 + $0x8] sm:$0xff]
  %v320 = vld [vmem:[%s2 + $0x10] sm:$0xff]
  %v321 = vld [vmem:[%s2 + $0x18] sm:$0xff]
  %v322 = vld [vmem:[%s5] sm:$0xff]
  %v323 = vld [vmem:[%s5 + $0x8] sm:$0xff]
  %v324 = vld [vmem:[%s5 + $0x10] sm:$0xff]
  %v325 = vld [vmem:[%s5 + $0x18] sm:$0xff]
  %v326 = vld [vmem:[%s7] sm:$0xff]
  %v327 = vlaneseq
  %v328 = vand.u32 %v327, 127
  %vm329 = vcmp.ge.s32.totalorder %v328, 64
  %vm330 = vcmp.lt.s32.totalorder %v328, 96
  %vm331 = vmand %vm329, %vm330
  %v332 = vld [vmem:[#allocation2] sm:$0xff]
  %vm333 = vcmask 261120
  %v335 = vsel %vm333, 0.0, 0
  %337 = vmatprep.subr.mxu0 0.0
  %338 = vmatpush1.msra.mxu0 0.0
  %339 = vmatprep.subr.mxu0 0.0
  %340 = vmatpush1.msra.mxu0 0.0
  %341 = vmatprep.subr.mxu0 0.0
  %342 = vmatpush1.msra.mxu0 0.0
  %343 = vmatprep.subr.mxu0 0.0
  %344 = vmatpush1.msra.mxu0 0.0
  %345 = vmatprep.subr.mxu0 0.0
  %346 = vmatpush1.msra.mxu0 0.0
  %347 = vmatprep.subr.mxu0 0.0
  %348 = vmatpush1.msra.mxu0 0.0
  %349 = vmatprep.subr.mxu0 0.0
  %350 = vmatpush1.msra.mxu0 0.0
  %351 = vmatprep.subr.mxu0 0.0
  %352 = vmatpush1.msra.mxu0 0.0
  %353 = vmatprep.subr.mxu0 0.0
  %354 = vmatpush1.msra.mxu0 0.0
  %355 = vmatprep.subr.mxu0 0.0
  %356 = vmatpush1.msra.mxu0 0.0
  %357 = vmatprep.subr.mxu0 0.0
  %358 = vmatpush1.msra.mxu0 0.0
  %359 = vmatprep.subr.mxu0 0.0
  %360 = vmatpush1.msra.mxu0 0.0
  %361 = vmatprep.subr.mxu0 0.0
  %362 = vmatpush1.msra.mxu0 %v321
  %363 = vmatprep.subr.mxu0 0.0
  %364 = vmatpush1.msra.mxu0 %v320
  %365 = vmatprep.subr.mxu0 0.0
  %366 = vmatpush1.msra.mxu0 %v319
  %367 = vmatprep.subr.mxu0 0.0
  %368 = vmatpush1.msra.mxu0 %v318
  %369 = vmatprep.subr.mxu0 0.0
  %370 = vmatpush2.msra.mxu0 0.0
  %371 = vmatprep.subr.mxu0 0.0
  %372 = vmatpush2.msra.mxu0 0.0
  %373 = vmatprep.subr.mxu0 0.0
  %374 = vmatpush2.msra.mxu0 0.0
  %375 = vmatprep.subr.mxu0 0.0
  %376 = vmatpush2.msra.mxu0 0.0
  %377 = vmatprep.subr.mxu0 0.0
  %378 = vmatpush2.msra.mxu0 0.0
  %379 = vmatprep.subr.mxu0 0.0
  %380 = vmatpush2.msra.mxu0 0.0
  %381 = vmatprep.subr.mxu0 0.0
  %382 = vmatpush2.msra.mxu0 0.0
  %383 = vmatprep.subr.mxu0 0.0
  %384 = vmatpush2.msra.mxu0 0.0
  %385 = vmatprep.subr.mxu0 0.0
  %386 = vmatpush2.msra.mxu0 0.0
  %387 = vmatprep.subr.mxu0 0.0
  %388 = vmatpush2.msra.mxu0 0.0
  %389 = vmatprep.subr.mxu0 0.0
  %390 = vmatpush2.msra.mxu0 0.0
  %391 = vmatprep.subr.mxu0 0.0
  %392 = vmatpush2.msra.mxu0 0.0
  %393 = vmatprep.subr.mxu0 0.0
  %394 = vmatpush2.msra.mxu0 0.0
  %395 = vmatprep.subr.mxu0 0.0
  %396 = vmatpush2.msra.mxu0 0.0
  %397 = vmatprep.subr.mxu0 0.0
  %398 = vmatpush2.msra.mxu0 0.0
  %399 = vmatprep.subr.mxu0 0.0
  %400 = vmatpush2.msra.mxu0 0.0
  %401 = vmatprep.mubr.f32.mxu0 0.0
  %402 = vmatmul.mubr.f32.gmra.mxu0 %v335
  %v403 = vpop.f32.mrf.mxu0
  %v404 = vadd.f32 0.0, %v403
  %v405 = vpop.f32.mrf.mxu0
  %406 = vdwg.mxu0
  %v407 = vadd.f32 %v332, %v404
  %v408 = vtanh.pop %v407
  %v409 = vxor.u32 %v407, 2147483648
  %v410 = vmul.f32 %v409, 1.442695
  %v411 = vpow.pop %v410
  %v412 = vadd.f32 %v411, 1.0
  %v413 = vrcp.pop %v412
  %v414 = vmul.f32 1.0, %v413
  %v415 = vsel %vm331, %v408, %v414
  %v416 = vmul.f32 %v415, 0.0
  %418 = vrot.lane.b32.xlu0 %v415, 64
  %v419 = vpop.permute.xlu0 %418
  %v421 = vmul.f32 %v415, %v419
  %423 = vrot.lane.b32.xlu0 %v421, 32
  %v424 = vpop.permute.xlu0 %423
  %v426 = vadd.f32 %v416, %v424
  %v427 = vtanh.pop %v426
  %429 = vrot.lane.b32.xlu0 %v427, 64
  %v430 = vpop.permute.xlu0 %429
  %v432 = vmul.f32 %v415, %v430
  %vm433 = vcmp.gt.s32.totalorder %v326, 0
  %v434 = vsel %vm433, 1, 0
  %435 = vset.pattern.permute.xlu0 0
  %436 = vperm.xlu0 %435, %v434
  %v437 = vpop.permute.xlu0 %436
  %vm438 = vcmp.eq.s32.totalorder %v437, 1
  %v439 = vsel %vm438, %v432, 0.0
  %v440 = vsel %vm438, %v426, 0.0
  %s441 = scalar_lea.vmem [#allocation3], 56
  %v442 = vld [vmem:[%s441] sm:$0xff]
  %443 = vmatprep.subr.mxu0 0.0
  %444 = vmatpush1.msra.mxu0 0.0
  %445 = vmatprep.subr.mxu0 0.0
  %446 = vmatpush1.msra.mxu0 0.0
  %447 = vmatprep.subr.mxu0 0.0
  %448 = vmatpush1.msra.mxu0 0.0
  %449 = vmatprep.subr.mxu0 0.0
  %450 = vmatpush1.msra.mxu0 0.0
  %451 = vmatprep.subr.mxu0 0.0
  %452 = vmatpush1.msra.mxu0 0.0
  %453 = vmatprep.subr.mxu0 0.0
  %454 = vmatpush1.msra.mxu0 0.0
  %455 = vmatprep.subr.mxu0 0.0
  %456 = vmatpush1.msra.mxu0 0.0
  %457 = vmatprep.subr.mxu0 0.0
  %458 = vmatpush1.msra.mxu0 0.0
  %459 = vmatprep.subr.mxu0 0.0
  %460 = vmatpush1.msra.mxu0 0.0
  %461 = vmatprep.subr.mxu0 0.0
  %462 = vmatpush1.msra.mxu0 0.0
  %463 = vmatprep.subr.mxu0 0.0
  %464 = vmatpush1.msra.mxu0 0.0
  %465 = vmatprep.subr.mxu0 0.0
  %466 = vmatpush1.msra.mxu0 0.0
  %467 = vmatprep.subr.mxu0 0.0
  %468 = vmatpush1.msra.mxu0 %v325
  %469 = vmatprep.subr.mxu0 0.0
  %470 = vmatpush1.msra.mxu0 %v324
  %471 = vmatprep.subr.mxu0 0.0
  %472 = vmatpush1.msra.mxu0 %v323
  %473 = vmatprep.subr.mxu0 0.0
  %474 = vmatpush1.msra.mxu0 %v322
  %475 = vmatprep.subr.mxu0 0.0
  %476 = vmatpush2.msra.mxu0 0.0
  %477 = vmatprep.subr.mxu0 0.0
  %478 = vmatpush2.msra.mxu0 0.0
  %479 = vmatprep.subr.mxu0 0.0
  %480 = vmatpush2.msra.mxu0 0.0
  %481 = vmatprep.subr.mxu0 0.0
  %482 = vmatpush2.msra.mxu0 0.0
  %483 = vmatprep.subr.mxu0 0.0
  %484 = vmatpush2.msra.mxu0 0.0
  %485 = vmatprep.subr.mxu0 0.0
  %486 = vmatpush2.msra.mxu0 0.0
  %487 = vmatprep.subr.mxu0 0.0
  %488 = vmatpush2.msra.mxu0 0.0
  %489 = vmatprep.subr.mxu0 0.0
  %490 = vmatpush2.msra.mxu0 0.0
  %491 = vmatprep.subr.mxu0 0.0
  %492 = vmatpush2.msra.mxu0 0.0
  %493 = vmatprep.subr.mxu0 0.0
  %494 = vmatpush2.msra.mxu0 0.0
  %495 = vmatprep.subr.mxu0 0.0
  %496 = vmatpush2.msra.mxu0 0.0
  %497 = vmatprep.subr.mxu0 0.0
  %498 = vmatpush2.msra.mxu0 0.0
  %499 = vmatprep.subr.mxu0 0.0
  %500 = vmatpush2.msra.mxu0 0.0
  %501 = vmatprep.subr.mxu0 0.0
  %502 = vmatpush2.msra.mxu0 0.0
  %503 = vmatprep.subr.mxu0 0.0
  %504 = vmatpush2.msra.mxu0 0.0
  %505 = vmatprep.subr.mxu0 0.0
  %506 = vmatpush2.msra.mxu0 0.0
  %507 = vmatprep.mubr.f32.mxu0 0.0
  %508 = vmatmul.mubr.f32.gmra.mxu0 %v335
  %v509 = vpop.f32.mrf.mxu0
  %v510 = vadd.f32 0.0, %v509
  %v511 = vpop.f32.mrf.mxu0
  %512 = vdwg.mxu0
  %v513 = vadd.f32 %v442, %v510
  %v514 = vtanh.pop %v513
  %v515 = vxor.u32 %v513, 2147483648
  %v516 = vmul.f32 %v515, 1.442695
  %v517 = vpow.pop %v516
  %v518 = vadd.f32 %v517, 1.0
  %v519 = vrcp.pop %v518
  %v520 = vmul.f32 1.0, %v519
  %v521 = vsel %vm331, %v514, %v520
  %v522 = vmul.f32 %v521, 0.0
  %524 = vrot.lane.b32.xlu0 %v521, 64
  %v525 = vpop.permute.xlu0 %524
  %v527 = vmul.f32 %v521, %v525
  %529 = vrot.lane.b32.xlu0 %v527, 32
  %v530 = vpop.permute.xlu0 %529
  %v532 = vadd.f32 %v522, %v530
  %v533 = vtanh.pop %v532
  %535 = vrot.lane.b32.xlu0 %v533, 64
  %v536 = vpop.permute.xlu0 %535
  %v538 = vmul.f32 %v521, %v536
  %vm539 = vcmp.gt.s32.totalorder %v326, 7
  %v540 = vsel %vm539, 1, 0
  %541 = vset.pattern.permute.xlu0 0
  %542 = vperm.xlu0 %541, %v540
  %v543 = vpop.permute.xlu0 %542
  %vm544 = vcmp.eq.s32.totalorder %v543, 1
  %v545 = vsel %vm544, %v538, 0.0
  %v546 = vsel %vm544, %v532, 0.0
  %548 = vrot.lane.b32.xlu0 %v439, 32
  %v549 = vpop.permute.xlu0 %548
  %551 = vst.msk [vmem:[%s8] sm:$0xff] %vm333, %v549
  %553 = vrot.lane.b32.xlu0 %v545, 64
  %v554 = vpop.permute.xlu0 %553
  %s556 = scalar_lea.vmem %s8, 56
  %vm557 = vcmask 523520
  %558 = vst.msk [vmem:[%s556] sm:$0xff] %vm557, %v554
  %s559 = scalar_lea.vmem [#allocation2], 8
  %v560 = vld [vmem:[%s559] sm:$0xff]
  %v561 = vsel %vm333, %v549, 0
  %563 = vmatprep.subr.mxu0 0.0
  %564 = vmatpush1.msra.mxu0 0.0
  %565 = vmatprep.subr.mxu0 0.0
  %566 = vmatpush1.msra.mxu0 0.0
  %567 = vmatprep.subr.mxu0 0.0
  %568 = vmatpush1.msra.mxu0 0.0
  %569 = vmatprep.subr.mxu0 0.0
  %570 = vmatpush1.msra.mxu0 0.0
  %571 = vmatprep.subr.mxu0 0.0
  %572 = vmatpush1.msra.mxu0 0.0
  %573 = vmatprep.subr.mxu0 0.0
  %574 = vmatpush1.msra.mxu0 0.0
  %575 = vmatprep.subr.mxu0 0.0
  %576 = vmatpush1.msra.mxu0 0.0
  %577 = vmatprep.subr.mxu0 0.0
  %578 = vmatpush1.msra.mxu0 0.0
  %579 = vmatprep.subr.mxu0 0.0
  %580 = vmatpush1.msra.mxu0 0.0
  %581 = vmatprep.subr.mxu0 0.0
  %582 = vmatpush1.msra.mxu0 0.0
  %583 = vmatprep.subr.mxu0 0.0
  %584 = vmatpush1.msra.mxu0 0.0
  %585 = vmatprep.subr.mxu0 0.0
  %586 = vmatpush1.msra.mxu0 0.0
  %587 = vmatprep.subr.mxu0 0.0
  %588 = vmatpush1.msra.mxu0 %v321
  %589 = vmatprep.subr.mxu0 0.0
  %590 = vmatpush1.msra.mxu0 %v320
  %591 = vmatprep.subr.mxu0 0.0
  %592 = vmatpush1.msra.mxu0 %v319
  %593 = vmatprep.subr.mxu0 0.0
  %594 = vmatpush1.msra.mxu0 %v318
  %595 = vmatprep.subr.mxu0 0.0
  %596 = vmatpush2.msra.mxu0 0.0
  %597 = vmatprep.subr.mxu0 0.0
  %598 = vmatpush2.msra.mxu0 0.0
  %599 = vmatprep.subr.mxu0 0.0
  %600 = vmatpush2.msra.mxu0 0.0
  %601 = vmatprep.subr.mxu0 0.0
  %602 = vmatpush2.msra.mxu0 0.0
  %603 = vmatprep.subr.mxu0 0.0
  %604 = vmatpush2.msra.mxu0 0.0
  %605 = vmatprep.subr.mxu0 0.0
  %606 = vmatpush2.msra.mxu0 0.0
  %607 = vmatprep.subr.mxu0 0.0
  %608 = vmatpush2.msra.mxu0 0.0
  %609 = vmatprep.subr.mxu0 0.0
  %610 = vmatpush2.msra.mxu0 0.0
  %611 = vmatprep.subr.mxu0 0.0
  %612 = vmatpush2.msra.mxu0 0.0
  %613 = vmatprep.subr.mxu0 0.0
  %614 = vmatpush2.msra.mxu0 0.0
  %615 = vmatprep.subr.mxu0 0.0
  %616 = vmatpush2.msra.mxu0 0.0
  %617 = vmatprep.subr.mxu0 0.0
  %618 = vmatpush2.msra.mxu0 0.0
  %619 = vmatprep.subr.mxu0 0.0
  %620 = vmatpush2.msra.mxu0 0.0
  %621 = vmatprep.subr.mxu0 0.0
  %622 = vmatpush2.msra.mxu0 0.0
  %623 = vmatprep.subr.mxu0 0.0
  %624 = vmatpush2.msra.mxu0 0.0
  %625 = vmatprep.subr.mxu0 0.0
  %626 = vmatpush2.msra.mxu0 0.0
  %627 = vmatprep.mubr.f32.mxu0 0.0
  %628 = vmatmul.mubr.f32.gmra.mxu0 %v561
  %v629 = vpop.f32.mrf.mxu0
  %v630 = vadd.f32 0.0, %v629
  %v631 = vpop.f32.mrf.mxu0
  %632 = vdwg.mxu0
  %v633 = vadd.f32 %v560, %v630
  %v634 = vtanh.pop %v633
  %v635 = vxor.u32 %v633, 2147483648
  %v636 = vmul.f32 %v635, 1.442695
  %v637 = vpow.pop %v636
  %v638 = vadd.f32 %v637, 1.0
  %v639 = vrcp.pop %v638
  %v640 = vmul.f32 1.0, %v639
  %v641 = vsel %vm331, %v634, %v640
  %v642 = vmul.f32 %v641, %v440
  %644 = vrot.lane.b32.xlu0 %v641, 64
  %v645 = vpop.permute.xlu0 %644
  %v647 = vmul.f32 %v641, %v645
  %649 = vrot.lane.b32.xlu0 %v647, 32
  %v650 = vpop.permute.xlu0 %649
  %v652 = vadd.f32 %v642, %v650
  %v653 = vtanh.pop %v652
  %655 = vrot.lane.b32.xlu0 %v653, 64
  %v656 = vpop.permute.xlu0 %655
  %v658 = vmul.f32 %v641, %v656
  %vm659 = vcmp.gt.s32.totalorder %v326, 1
  %v660 = vsel %vm659, 1, 0
  %661 = vset.pattern.permute.xlu0 0
  %662 = vperm.xlu0 %661, %v660
  %v663 = vpop.permute.xlu0 %662
  %vm664 = vcmp.eq.s32.totalorder %v663, 1
  %v665 = vsel %vm664, %v658, %v439
  %v666 = vsel %vm664, %v652, %v440
  %s667 = scalar_lea.vmem [#allocation3], 48
  %v668 = vld [vmem:[%s667] sm:$0xff]
  %669 = vrot.lane.b32.xlu0 %v545, 32
  %v670 = vpop.permute.xlu0 %669
  %v671 = vsel %vm333, %v670, 0
  %673 = vmatprep.subr.mxu0 0.0
  %674 = vmatpush1.msra.mxu0 0.0
  %675 = vmatprep.subr.mxu0 0.0
  %676 = vmatpush1.msra.mxu0 0.0
  %677 = vmatprep.subr.mxu0 0.0
  %678 = vmatpush1.msra.mxu0 0.0
  %679 = vmatprep.subr.mxu0 0.0
  %680 = vmatpush1.msra.mxu0 0.0
  %681 = vmatprep.subr.mxu0 0.0
  %682 = vmatpush1.msra.mxu0 0.0
  %683 = vmatprep.subr.mxu0 0.0
  %684 = vmatpush1.msra.mxu0 0.0
  %685 = vmatprep.subr.mxu0 0.0
  %686 = vmatpush1.msra.mxu0 0.0
  %687 = vmatprep.subr.mxu0 0.0
  %688 = vmatpush1.msra.mxu0 0.0
  %689 = vmatprep.subr.mxu0 0.0
  %690 = vmatpush1.msra.mxu0 0.0
  %691 = vmatprep.subr.mxu0 0.0
  %692 = vmatpush1.msra.mxu0 0.0
  %693 = vmatprep.subr.mxu0 0.0
  %694 = vmatpush1.msra.mxu0 0.0
  %695 = vmatprep.subr.mxu0 0.0
  %696 = vmatpush1.msra.mxu0 0.0
  %697 = vmatprep.subr.mxu0 0.0
  %698 = vmatpush1.msra.mxu0 %v325
  %699 = vmatprep.subr.mxu0 0.0
  %700 = vmatpush1.msra.mxu0 %v324
  %701 = vmatprep.subr.mxu0 0.0
  %702 = vmatpush1.msra.mxu0 %v323
  %703 = vmatprep.subr.mxu0 0.0
  %704 = vmatpush1.msra.mxu0 %v322
  %705 = vmatprep.subr.mxu0 0.0
  %706 = vmatpush2.msra.mxu0 0.0
  %707 = vmatprep.subr.mxu0 0.0
  %708 = vmatpush2.msra.mxu0 0.0
  %709 = vmatprep.subr.mxu0 0.0
  %710 = vmatpush2.msra.mxu0 0.0
  %711 = vmatprep.subr.mxu0 0.0
  %712 = vmatpush2.msra.mxu0 0.0
  %713 = vmatprep.subr.mxu0 0.0
  %714 = vmatpush2.msra.mxu0 0.0
  %715 = vmatprep.subr.mxu0 0.0
  %716 = vmatpush2.msra.mxu0 0.0
  %717 = vmatprep.subr.mxu0 0.0
  %718 = vmatpush2.msra.mxu0 0.0
  %719 = vmatprep.subr.mxu0 0.0
  %720 = vmatpush2.msra.mxu0 0.0
  %721 = vmatprep.subr.mxu0 0.0
  %722 = vmatpush2.msra.mxu0 0.0
  %723 = vmatprep.subr.mxu0 0.0
  %724 = vmatpush2.msra.mxu0 0.0
  %725 = vmatprep.subr.mxu0 0.0
  %726 = vmatpush2.msra.mxu0 0.0
  %727 = vmatprep.subr.mxu0 0.0
  %728 = vmatpush2.msra.mxu0 0.0
  %729 = vmatprep.subr.mxu0 0.0
  %730 = vmatpush2.msra.mxu0 0.0
  %731 = vmatprep.subr.mxu0 0.0
  %732 = vmatpush2.msra.mxu0 0.0
  %733 = vmatprep.subr.mxu0 0.0
  %734 = vmatpush2.msra.mxu0 0.0
  %735 = vmatprep.subr.mxu0 0.0
  %736 = vmatpush2.msra.mxu0 0.0
  %737 = vmatprep.mubr.f32.mxu0 0.0
  %738 = vmatmul.mubr.f32.gmra.mxu0 %v671
  %v739 = vpop.f32.mrf.mxu0
  %v740 = vadd.f32 0.0, %v739
  %v741 = vpop.f32.mrf.mxu0
  %742 = vdwg.mxu0
  %v743 = vadd.f32 %v668, %v740
  %v744 = vtanh.pop %v743
  %v745 = vxor.u32 %v743, 2147483648
  %v746 = vmul.f32 %v745, 1.442695
  %v747 = vpow.pop %v746
  %v748 = vadd.f32 %v747, 1.0
  %v749 = vrcp.pop %v748
  %v750 = vmul.f32 1.0, %v749
  %v751 = vsel %vm331, %v744, %v750
  %v752 = vmul.f32 %v751, %v546
  %754 = vrot.lane.b32.xlu0 %v751, 64
  %v755 = vpop.permute.xlu0 %754
  %v757 = vmul.f32 %v751, %v755
  %759 = vrot.lane.b32.xlu0 %v757, 32
  %v760 = vpop.permute.xlu0 %759
  %v762 = vadd.f32 %v752, %v760
  %v763 = vtanh.pop %v762
  %765 = vrot.lane.b32.xlu0 %v763, 64
  %v766 = vpop.permute.xlu0 %765
  %v768 = vmul.f32 %v751, %v766
  %vm769 = vcmp.gt.s32.totalorder %v326, 6
  %v770 = vsel %vm769, 1, 0
  %771 = vset.pattern.permute.xlu0 0
  %772 = vperm.xlu0 %771, %v770
  %v773 = vpop.permute.xlu0 %772
  %vm774 = vcmp.eq.s32.totalorder %v773, 1
  %v775 = vsel %vm774, %v768, %v545
  %v776 = vsel %vm774, %v762, %v546
  %v777 = vsel %vm664, %v658, 0.0
  %779 = vrot.lane.b32.xlu0 %v777, 32
  %v780 = vpop.permute.xlu0 %779
  %s782 = scalar_lea.vmem %s8, 8
  %783 = vst.msk [vmem:[%s782] sm:$0xff] %vm333, %v780
  %v784 = vsel %vm774, %v768, 0.0
  %786 = vrot.lane.b32.xlu0 %v784, 64
  %v787 = vpop.permute.xlu0 %786
  %s789 = scalar_lea.vmem %s8, 48
  %790 = vst.msk [vmem:[%s789] sm:$0xff] %vm557, %v787
  %s791 = scalar_lea.vmem [#allocation2], 16
  %v792 = vld [vmem:[%s791] sm:$0xff]
  %794 = vrot.lane.b32.xlu0 %v665, 32
  %v795 = vpop.permute.xlu0 %794
  %v796 = vsel %vm333, %v795, 0
  %798 = vmatprep.subr.mxu0 0.0
  %799 = vmatpush1.msra.mxu0 0.0
  %800 = vmatprep.subr.mxu0 0.0
  %801 = vmatpush1.msra.mxu0 0.0
  %802 = vmatprep.subr.mxu0 0.0
  %803 = vmatpush1.msra.mxu0 0.0
  %804 = vmatprep.subr.mxu0 0.0
  %805 = vmatpush1.msra.mxu0 0.0
  %806 = vmatprep.subr.mxu0 0.0
  %807 = vmatpush1.msra.mxu0 0.0
  %808 = vmatprep.subr.mxu0 0.0
  %809 = vmatpush1.msra.mxu0 0.0
  %810 = vmatprep.subr.mxu0 0.0
  %811 = vmatpush1.msra.mxu0 0.0
  %812 = vmatprep.subr.mxu0 0.0
  %813 = vmatpush1.msra.mxu0 0.0
  %814 = vmatprep.subr.mxu0 0.0
  %815 = vmatpush1.msra.mxu0 0.0
  %816 = vmatprep.subr.mxu0 0.0
  %817 = vmatpush1.msra.mxu0 0.0
  %818 = vmatprep.subr.mxu0 0.0
  %819 = vmatpush1.msra.mxu0 0.0
  %820 = vmatprep.subr.mxu0 0.0
  %821 = vmatpush1.msra.mxu0 0.0
  %822 = vmatprep.subr.mxu0 0.0
  %823 = vmatpush1.msra.mxu0 %v321
  %824 = vmatprep.subr.mxu0 0.0
  %825 = vmatpush1.msra.mxu0 %v320
  %826 = vmatprep.subr.mxu0 0.0
  %827 = vmatpush1.msra.mxu0 %v319
  %828 = vmatprep.subr.mxu0 0.0
  %829 = vmatpush1.msra.mxu0 %v318
  %830 = vmatprep.subr.mxu0 0.0
  %831 = vmatpush2.msra.mxu0 0.0
  %832 = vmatprep.subr.mxu0 0.0
  %833 = vmatpush2.msra.mxu0 0.0
  %834 = vmatprep.subr.mxu0 0.0
  %835 = vmatpush2.msra.mxu0 0.0
  %836 = vmatprep.subr.mxu0 0.0
  %837 = vmatpush2.msra.mxu0 0.0
  %838 = vmatprep.subr.mxu0 0.0
  %839 = vmatpush2.msra.mxu0 0.0
  %840 = vmatprep.subr.mxu0 0.0
  %841 = vmatpush2.msra.mxu0 0.0
  %842 = vmatprep.subr.mxu0 0.0
  %843 = vmatpush2.msra.mxu0 0.0
  %844 = vmatprep.subr.mxu0 0.0
  %845 = vmatpush2.msra.mxu0 0.0
  %846 = vmatprep.subr.mxu0 0.0
  %847 = vmatpush2.msra.mxu0 0.0
  %848 = vmatprep.subr.mxu0 0.0
  %849 = vmatpush2.msra.mxu0 0.0
  %850 = vmatprep.subr.mxu0 0.0
  %851 = vmatpush2.msra.mxu0 0.0
  %852 = vmatprep.subr.mxu0 0.0
  %853 = vmatpush2.msra.mxu0 0.0
  %854 = vmatprep.subr.mxu0 0.0
  %855 = vmatpush2.msra.mxu0 0.0
  %856 = vmatprep.subr.mxu0 0.0
  %857 = vmatpush2.msra.mxu0 0.0
  %858 = vmatprep.subr.mxu0 0.0
  %859 = vmatpush2.msra.mxu0 0.0
  %860 = vmatprep.subr.mxu0 0.0
  %861 = vmatpush2.msra.mxu0 0.0
  %862 = vmatprep.mubr.f32.mxu0 0.0
  %863 = vmatmul.mubr.f32.gmra.mxu0 %v796
  %v864 = vpop.f32.mrf.mxu0
  %v865 = vadd.f32 0.0, %v864
  %v866 = vpop.f32.mrf.mxu0
  %867 = vdwg.mxu0
  %v868 = vadd.f32 %v792, %v865
  %v869 = vtanh.pop %v868
  %v870 = vxor.u32 %v868, 2147483648
  %v871 = vmul.f32 %v870, 1.442695
  %v872 = vpow.pop %v871
  %v873 = vadd.f32 %v872, 1.0
  %v874 = vrcp.pop %v873
  %v875 = vmul.f32 1.0, %v874
  %v876 = vsel %vm331, %v869, %v875
  %v877 = vmul.f32 %v876, %v666
  %879 = vrot.lane.b32.xlu0 %v876, 64
  %v880 = vpop.permute.xlu0 %879
  %v882 = vmul.f32 %v876, %v880
  %884 = vrot.lane.b32.xlu0 %v882, 32
  %v885 = vpop.permute.xlu0 %884
  %v887 = vadd.f32 %v877, %v885
  %v888 = vtanh.pop %v887
  %890 = vrot.lane.b32.xlu0 %v888, 64
  %v891 = vpop.permute.xlu0 %890
  %v893 = vmul.f32 %v876, %v891
  %vm894 = vcmp.gt.s32.totalorder %v326, 2
  %v895 = vsel %vm894, 1, 0
  %896 = vset.pattern.permute.xlu0 0
  %897 = vperm.xlu0 %896, %v895
  %v898 = vpop.permute.xlu0 %897
  %vm899 = vcmp.eq.s32.totalorder %v898, 1
  %v900 = vsel %vm899, %v893, %v665
  %v901 = vsel %vm899, %v887, %v666
  %s902 = scalar_lea.vmem [#allocation3], 40
  %v903 = vld [vmem:[%s902] sm:$0xff]
  %905 = vrot.lane.b32.xlu0 %v775, 32
  %v906 = vpop.permute.xlu0 %905
  %v907 = vsel %vm333, %v906, 0
  %909 = vmatprep.subr.mxu0 0.0
  %910 = vmatpush1.msra.mxu0 0.0
  %911 = vmatprep.subr.mxu0 0.0
  %912 = vmatpush1.msra.mxu0 0.0
  %913 = vmatprep.subr.mxu0 0.0
  %914 = vmatpush1.msra.mxu0 0.0
  %915 = vmatprep.subr.mxu0 0.0
  %916 = vmatpush1.msra.mxu0 0.0
  %917 = vmatprep.subr.mxu0 0.0
  %918 = vmatpush1.msra.mxu0 0.0
  %919 = vmatprep.subr.mxu0 0.0
  %920 = vmatpush1.msra.mxu0 0.0
  %921 = vmatprep.subr.mxu0 0.0
  %922 = vmatpush1.msra.mxu0 0.0
  %923 = vmatprep.subr.mxu0 0.0
  %924 = vmatpush1.msra.mxu0 0.0
  %925 = vmatprep.subr.mxu0 0.0
  %926 = vmatpush1.msra.mxu0 0.0
  %927 = vmatprep.subr.mxu0 0.0
  %928 = vmatpush1.msra.mxu0 0.0
  %929 = vmatprep.subr.mxu0 0.0
  %930 = vmatpush1.msra.mxu0 0.0
  %931 = vmatprep.subr.mxu0 0.0
  %932 = vmatpush1.msra.mxu0 0.0
  %933 = vmatprep.subr.mxu0 0.0
  %934 = vmatpush1.msra.mxu0 %v325
  %935 = vmatprep.subr.mxu0 0.0
  %936 = vmatpush1.msra.mxu0 %v324
  %937 = vmatprep.subr.mxu0 0.0
  %938 = vmatpush1.msra.mxu0 %v323
  %939 = vmatprep.subr.mxu0 0.0
  %940 = vmatpush1.msra.mxu0 %v322
  %941 = vmatprep.subr.mxu0 0.0
  %942 = vmatpush2.msra.mxu0 0.0
  %943 = vmatprep.subr.mxu0 0.0
  %944 = vmatpush2.msra.mxu0 0.0
  %945 = vmatprep.subr.mxu0 0.0
  %946 = vmatpush2.msra.mxu0 0.0
  %947 = vmatprep.subr.mxu0 0.0
  %948 = vmatpush2.msra.mxu0 0.0
  %949 = vmatprep.subr.mxu0 0.0
  %950 = vmatpush2.msra.mxu0 0.0
  %951 = vmatprep.subr.mxu0 0.0
  %952 = vmatpush2.msra.mxu0 0.0
  %953 = vmatprep.subr.mxu0 0.0
  %954 = vmatpush2.msra.mxu0 0.0
  %955 = vmatprep.subr.mxu0 0.0
  %956 = vmatpush2.msra.mxu0 0.0
  %957 = vmatprep.subr.mxu0 0.0
  %958 = vmatpush2.msra.mxu0 0.0
  %959 = vmatprep.subr.mxu0 0.0
  %960 = vmatpush2.msra.mxu0 0.0
  %961 = vmatprep.subr.mxu0 0.0
  %962 = vmatpush2.msra.mxu0 0.0
  %963 = vmatprep.subr.mxu0 0.0
  %964 = vmatpush2.msra.mxu0 0.0
  %965 = vmatprep.subr.mxu0 0.0
  %966 = vmatpush2.msra.mxu0 0.0
  %967 = vmatprep.subr.mxu0 0.0
  %968 = vmatpush2.msra.mxu0 0.0
  %969 = vmatprep.subr.mxu0 0.0
  %970 = vmatpush2.msra.mxu0 0.0
  %971 = vmatprep.subr.mxu0 0.0
  %972 = vmatpush2.msra.mxu0 0.0
  %973 = vmatprep.mubr.f32.mxu0 0.0
  %974 = vmatmul.mubr.f32.gmra.mxu0 %v907
  %v975 = vpop.f32.mrf.mxu0
  %v976 = vadd.f32 0.0, %v975
  %v977 = vpop.f32.mrf.mxu0
  %978 = vdwg.mxu0
  %v979 = vadd.f32 %v903, %v976
  %v980 = vtanh.pop %v979
  %v981 = vxor.u32 %v979, 2147483648
  %v982 = vmul.f32 %v981, 1.442695
  %v983 = vpow.pop %v982
  %v984 = vadd.f32 %v983, 1.0
  %v985 = vrcp.pop %v984
  %v986 = vmul.f32 1.0, %v985
  %v987 = vsel %vm331, %v980, %v986
  %v988 = vmul.f32 %v987, %v776
  %990 = vrot.lane.b32.xlu0 %v987, 64
  %v991 = vpop.permute.xlu0 %990
  %v993 = vmul.f32 %v987, %v991
  %995 = vrot.lane.b32.xlu0 %v993, 32
  %v996 = vpop.permute.xlu0 %995
  %v998 = vadd.f32 %v988, %v996
  %v999 = vtanh.pop %v998
  %1001 = vrot.lane.b32.xlu0 %v999, 64
  %v1002 = vpop.permute.xlu0 %1001
  %v1004 = vmul.f32 %v987, %v1002
  %vm1005 = vcmp.gt.s32.totalorder %v326, 5
  %v1006 = vsel %vm1005, 1, 0
  %1007 = vset.pattern.permute.xlu0 0
  %1008 = vperm.xlu0 %1007, %v1006
  %v1009 = vpop.permute.xlu0 %1008
  %vm1010 = vcmp.eq.s32.totalorder %v1009, 1
  %v1011 = vsel %vm1010, %v1004, %v775
  %v1012 = vsel %vm1010, %v998, %v776
  %v1013 = vsel %vm899, %v893, 0.0
  %1015 = vrot.lane.b32.xlu0 %v1013, 32
  %v1016 = vpop.permute.xlu0 %1015
  %s1018 = scalar_lea.vmem %s8, 16
  %1019 = vst.msk [vmem:[%s1018] sm:$0xff] %vm333, %v1016
  %v1020 = vsel %vm1010, %v1004, 0.0
  %1022 = vrot.lane.b32.xlu0 %v1020, 64
  %v1023 = vpop.permute.xlu0 %1022
  %s1025 = scalar_lea.vmem %s8, 40
  %1026 = vst.msk [vmem:[%s1025] sm:$0xff] %vm557, %v1023
  %s1027 = scalar_lea.vmem [#allocation2], 24
  %v1028 = vld [vmem:[%s1027] sm:$0xff]
  %1030 = vrot.lane.b32.xlu0 %v900, 32
  %v1031 = vpop.permute.xlu0 %1030
  %v1032 = vsel %vm333, %v1031, 0
  %1034 = vmatprep.subr.mxu0 0.0
  %1035 = vmatpush1.msra.mxu0 0.0
  %1036 = vmatprep.subr.mxu0 0.0
  %1037 = vmatpush1.msra.mxu0 0.0
  %1038 = vmatprep.subr.mxu0 0.0
  %1039 = vmatpush1.msra.mxu0 0.0
  %1040 = vmatprep.subr.mxu0 0.0
  %1041 = vmatpush1.msra.mxu0 0.0
  %1042 = vmatprep.subr.mxu0 0.0
  %1043 = vmatpush1.msra.mxu0 0.0
  %1044 = vmatprep.subr.mxu0 0.0
  %1045 = vmatpush1.msra.mxu0 0.0
  %1046 = vmatprep.subr.mxu0 0.0
  %1047 = vmatpush1.msra.mxu0 0.0
  %1048 = vmatprep.subr.mxu0 0.0
  %1049 = vmatpush1.msra.mxu0 0.0
  %1050 = vmatprep.subr.mxu0 0.0
  %1051 = vmatpush1.msra.mxu0 0.0
  %1052 = vmatprep.subr.mxu0 0.0
  %1053 = vmatpush1.msra.mxu0 0.0
  %1054 = vmatprep.subr.mxu0 0.0
  %1055 = vmatpush1.msra.mxu0 0.0
  %1056 = vmatprep.subr.mxu0 0.0
  %1057 = vmatpush1.msra.mxu0 0.0
  %1058 = vmatprep.subr.mxu0 0.0
  %1059 = vmatpush1.msra.mxu0 %v321
  %1060 = vmatprep.subr.mxu0 0.0
  %1061 = vmatpush1.msra.mxu0 %v320
  %1062 = vmatprep.subr.mxu0 0.0
  %1063 = vmatpush1.msra.mxu0 %v319
  %1064 = vmatprep.subr.mxu0 0.0
  %1065 = vmatpush1.msra.mxu0 %v318
  %1066 = vmatprep.subr.mxu0 0.0
  %1067 = vmatpush2.msra.mxu0 0.0
  %1068 = vmatprep.subr.mxu0 0.0
  %1069 = vmatpush2.msra.mxu0 0.0
  %1070 = vmatprep.subr.mxu0 0.0
  %1071 = vmatpush2.msra.mxu0 0.0
  %1072 = vmatprep.subr.mxu0 0.0
  %1073 = vmatpush2.msra.mxu0 0.0
  %1074 = vmatprep.subr.mxu0 0.0
  %1075 = vmatpush2.msra.mxu0 0.0
  %1076 = vmatprep.subr.mxu0 0.0
  %1077 = vmatpush2.msra.mxu0 0.0
  %1078 = vmatprep.subr.mxu0 0.0
  %1079 = vmatpush2.msra.mxu0 0.0
  %1080 = vmatprep.subr.mxu0 0.0
  %1081 = vmatpush2.msra.mxu0 0.0
  %1082 = vmatprep.subr.mxu0 0.0
  %1083 = vmatpush2.msra.mxu0 0.0
  %1084 = vmatprep.subr.mxu0 0.0
  %1085 = vmatpush2.msra.mxu0 0.0
  %1086 = vmatprep.subr.mxu0 0.0
  %1087 = vmatpush2.msra.mxu0 0.0
  %1088 = vmatprep.subr.mxu0 0.0
  %1089 = vmatpush2.msra.mxu0 0.0
  %1090 = vmatprep.subr.mxu0 0.0
  %1091 = vmatpush2.msra.mxu0 0.0
  %1092 = vmatprep.subr.mxu0 0.0
  %1093 = vmatpush2.msra.mxu0 0.0
  %1094 = vmatprep.subr.mxu0 0.0
  %1095 = vmatpush2.msra.mxu0 0.0
  %1096 = vmatprep.subr.mxu0 0.0
  %1097 = vmatpush2.msra.mxu0 0.0
  %1098 = vmatprep.mubr.f32.mxu0 0.0
  %1099 = vmatmul.mubr.f32.gmra.mxu0 %v1032
  %v1100 = vpop.f32.mrf.mxu0
  %v1101 = vadd.f32 0.0, %v1100
  %v1102 = vpop.f32.mrf.mxu0
  %1103 = vdwg.mxu0
  %v1104 = vadd.f32 %v1028, %v1101
  %v1105 = vtanh.pop %v1104
  %v1106 = vxor.u32 %v1104, 2147483648
  %v1107 = vmul.f32 %v1106, 1.442695
  %v1108 = vpow.pop %v1107
  %v1109 = vadd.f32 %v1108, 1.0
  %v1110 = vrcp.pop %v1109
  %v1111 = vmul.f32 1.0, %v1110
  %v1112 = vsel %vm331, %v1105, %v1111
  %v1113 = vmul.f32 %v1112, %v901
  %1115 = vrot.lane.b32.xlu0 %v1112, 64
  %v1116 = vpop.permute.xlu0 %1115
  %v1118 = vmul.f32 %v1112, %v1116
  %1120 = vrot.lane.b32.xlu0 %v1118, 32
  %v1121 = vpop.permute.xlu0 %1120
  %v1123 = vadd.f32 %v1113, %v1121
  %v1124 = vtanh.pop %v1123
  %1126 = vrot.lane.b32.xlu0 %v1124, 64
  %v1127 = vpop.permute.xlu0 %1126
  %v1129 = vmul.f32 %v1112, %v1127
  %vm1130 = vcmp.gt.s32.totalorder %v326, 3
  %v1131 = vsel %vm1130, 1, 0
  %1132 = vset.pattern.permute.xlu0 0
  %1133 = vperm.xlu0 %1132, %v1131
  %v1134 = vpop.permute.xlu0 %1133
  %vm1135 = vcmp.eq.s32.totalorder %v1134, 1
  %v1136 = vsel %vm1135, %v1129, %v900
  %v1137 = vsel %vm1135, %v1123, %v901
  %s1138 = scalar_lea.vmem [#allocation3], 32
  %v1139 = vld [vmem:[%s1138] sm:$0xff]
  %1141 = vrot.lane.b32.xlu0 %v1011, 32
  %v1142 = vpop.permute.xlu0 %1141
  %v1143 = vsel %vm333, %v1142, 0
  %1145 = vmatprep.subr.mxu0 0.0
  %1146 = vmatpush1.msra.mxu0 0.0
  %1147 = vmatprep.subr.mxu0 0.0
  %1148 = vmatpush1.msra.mxu0 0.0
  %1149 = vmatprep.subr.mxu0 0.0
  %1150 = vmatpush1.msra.mxu0 0.0
  %1151 = vmatprep.subr.mxu0 0.0
  %1152 = vmatpush1.msra.mxu0 0.0
  %1153 = vmatprep.subr.mxu0 0.0
  %1154 = vmatpush1.msra.mxu0 0.0
  %1155 = vmatprep.subr.mxu0 0.0
  %1156 = vmatpush1.msra.mxu0 0.0
  %1157 = vmatprep.subr.mxu0 0.0
  %1158 = vmatpush1.msra.mxu0 0.0
  %1159 = vmatprep.subr.mxu0 0.0
  %1160 = vmatpush1.msra.mxu0 0.0
  %1161 = vmatprep.subr.mxu0 0.0
  %1162 = vmatpush1.msra.mxu0 0.0
  %1163 = vmatprep.subr.mxu0 0.0
  %1164 = vmatpush1.msra.mxu0 0.0
  %1165 = vmatprep.subr.mxu0 0.0
  %1166 = vmatpush1.msra.mxu0 0.0
  %1167 = vmatprep.subr.mxu0 0.0
  %1168 = vmatpush1.msra.mxu0 0.0
  %1169 = vmatprep.subr.mxu0 0.0
  %1170 = vmatpush1.msra.mxu0 %v325
  %1171 = vmatprep.subr.mxu0 0.0
  %1172 = vmatpush1.msra.mxu0 %v324
  %1173 = vmatprep.subr.mxu0 0.0
  %1174 = vmatpush1.msra.mxu0 %v323
  %1175 = vmatprep.subr.mxu0 0.0
  %1176 = vmatpush1.msra.mxu0 %v322
  %1177 = vmatprep.subr.mxu0 0.0
  %1178 = vmatpush2.msra.mxu0 0.0
  %1179 = vmatprep.subr.mxu0 0.0
  %1180 = vmatpush2.msra.mxu0 0.0
  %1181 = vmatprep.subr.mxu0 0.0
  %1182 = vmatpush2.msra.mxu0 0.0
  %1183 = vmatprep.subr.mxu0 0.0
  %1184 = vmatpush2.msra.mxu0 0.0
  %1185 = vmatprep.subr.mxu0 0.0
  %1186 = vmatpush2.msra.mxu0 0.0
  %1187 = vmatprep.subr.mxu0 0.0
  %1188 = vmatpush2.msra.mxu0 0.0
  %1189 = vmatprep.subr.mxu0 0.0
  %1190 = vmatpush2.msra.mxu0 0.0
  %1191 = vmatprep.subr.mxu0 0.0
  %1192 = vmatpush2.msra.mxu0 0.0
  %1193 = vmatprep.subr.mxu0 0.0
  %1194 = vmatpush2.msra.mxu0 0.0
  %1195 = vmatprep.subr.mxu0 0.0
  %1196 = vmatpush2.msra.mxu0 0.0
  %1197 = vmatprep.subr.mxu0 0.0
  %1198 = vmatpush2.msra.mxu0 0.0
  %1199 = vmatprep.subr.mxu0 0.0
  %1200 = vmatpush2.msra.mxu0 0.0
  %1201 = vmatprep.subr.mxu0 0.0
  %1202 = vmatpush2.msra.mxu0 0.0
  %1203 = vmatprep.subr.mxu0 0.0
  %1204 = vmatpush2.msra.mxu0 0.0
  %1205 = vmatprep.subr.mxu0 0.0
  %1206 = vmatpush2.msra.mxu0 0.0
  %1207 = vmatprep.subr.mxu0 0.0
  %1208 = vmatpush2.msra.mxu0 0.0
  %1209 = vmatprep.mubr.f32.mxu0 0.0
  %1210 = vmatmul.mubr.f32.gmra.mxu0 %v1143
  %v1211 = vpop.f32.mrf.mxu0
  %v1212 = vadd.f32 0.0, %v1211
  %v1213 = vpop.f32.mrf.mxu0
  %1214 = vdwg.mxu0
  %v1215 = vadd.f32 %v1139, %v1212
  %v1216 = vtanh.pop %v1215
  %v1217 = vxor.u32 %v1215, 2147483648
  %v1218 = vmul.f32 %v1217, 1.442695
  %v1219 = vpow.pop %v1218
  %v1220 = vadd.f32 %v1219, 1.0
  %v1221 = vrcp.pop %v1220
  %v1222 = vmul.f32 1.0, %v1221
  %v1223 = vsel %vm331, %v1216, %v1222
  %v1224 = vmul.f32 %v1223, %v1012
  %1226 = vrot.lane.b32.xlu0 %v1223, 64
  %v1227 = vpop.permute.xlu0 %1226
  %v1229 = vmul.f32 %v1223, %v1227
  %1231 = vrot.lane.b32.xlu0 %v1229, 32
  %v1232 = vpop.permute.xlu0 %1231
  %v1234 = vadd.f32 %v1224, %v1232
  %v1235 = vtanh.pop %v1234
  %1237 = vrot.lane.b32.xlu0 %v1235, 64
  %v1238 = vpop.permute.xlu0 %1237
  %v1240 = vmul.f32 %v1223, %v1238
  %vm1241 = vcmp.gt.s32.totalorder %v326, 4
  %v1242 = vsel %vm1241, 1, 0
  %1243 = vset.pattern.permute.xlu0 0
  %1244 = vperm.xlu0 %1243, %v1242
  %v1245 = vpop.permute.xlu0 %1244
  %vm1246 = vcmp.eq.s32.totalorder %v1245, 1
  %v1247 = vsel %vm1246, %v1240, %v1011
  %v1248 = vsel %vm1246, %v1234, %v1012
  %v1249 = vsel %vm1135, %v1129, 0.0
  %1251 = vrot.lane.b32.xlu0 %v1249, 32
  %v1252 = vpop.permute.xlu0 %1251
  %s1254 = scalar_lea.vmem %s8, 24
  %1255 = vst.msk [vmem:[%s1254] sm:$0xff] %vm333, %v1252
  %v1256 = vsel %vm1246, %v1240, 0.0
  %1258 = vrot.lane.b32.xlu0 %v1256, 64
  %v1259 = vpop.permute.xlu0 %1258
  %s1261 = scalar_lea.vmem %s8, 32
  %1262 = vst.msk [vmem:[%s1261] sm:$0xff] %vm557, %v1259
  %s1263 = scalar_lea.vmem [#allocation2], 32
  %v1264 = vld [vmem:[%s1263] sm:$0xff]
  %1266 = vrot.lane.b32.xlu0 %v1136, 32
  %v1267 = vpop.permute.xlu0 %1266
  %v1268 = vsel %vm333, %v1267, 0
  %1270 = vmatprep.subr.mxu0 0.0
  %1271 = vmatpush1.msra.mxu0 0.0
  %1272 = vmatprep.subr.mxu0 0.0
  %1273 = vmatpush1.msra.mxu0 0.0
  %1274 = vmatprep.subr.mxu0 0.0
  %1275 = vmatpush1.msra.mxu0 0.0
  %1276 = vmatprep.subr.mxu0 0.0
  %1277 = vmatpush1.msra.mxu0 0.0
  %1278 = vmatprep.subr.mxu0 0.0
  %1279 = vmatpush1.msra.mxu0 0.0
  %1280 = vmatprep.subr.mxu0 0.0
  %1281 = vmatpush1.msra.mxu0 0.0
  %1282 = vmatprep.subr.mxu0 0.0
  %1283 = vmatpush1.msra.mxu0 0.0
  %1284 = vmatprep.subr.mxu0 0.0
  %1285 = vmatpush1.msra.mxu0 0.0
  %1286 = vmatprep.subr.mxu0 0.0
  %1287 = vmatpush1.msra.mxu0 0.0
  %1288 = vmatprep.subr.mxu0 0.0
  %1289 = vmatpush1.msra.mxu0 0.0
  %1290 = vmatprep.subr.mxu0 0.0
  %1291 = vmatpush1.msra.mxu0 0.0
  %1292 = vmatprep.subr.mxu0 0.0
  %1293 = vmatpush1.msra.mxu0 0.0
  %1294 = vmatprep.subr.mxu0 0.0
  %1295 = vmatpush1.msra.mxu0 %v321
  %1296 = vmatprep.subr.mxu0 0.0
  %1297 = vmatpush1.msra.mxu0 %v320
  %1298 = vmatprep.subr.mxu0 0.0
  %1299 = vmatpush1.msra.mxu0 %v319
  %1300 = vmatprep.subr.mxu0 0.0
  %1301 = vmatpush1.msra.mxu0 %v318
  %1302 = vmatprep.subr.mxu0 0.0
  %1303 = vmatpush2.msra.mxu0 0.0
  %1304 = vmatprep.subr.mxu0 0.0
  %1305 = vmatpush2.msra.mxu0 0.0
  %1306 = vmatprep.subr.mxu0 0.0
  %1307 = vmatpush2.msra.mxu0 0.0
  %1308 = vmatprep.subr.mxu0 0.0
  %1309 = vmatpush2.msra.mxu0 0.0
  %1310 = vmatprep.subr.mxu0 0.0
  %1311 = vmatpush2.msra.mxu0 0.0
  %1312 = vmatprep.subr.mxu0 0.0
  %1313 = vmatpush2.msra.mxu0 0.0
  %1314 = vmatprep.subr.mxu0 0.0
  %1315 = vmatpush2.msra.mxu0 0.0
  %1316 = vmatprep.subr.mxu0 0.0
  %1317 = vmatpush2.msra.mxu0 0.0
  %1318 = vmatprep.subr.mxu0 0.0
  %1319 = vmatpush2.msra.mxu0 0.0
  %1320 = vmatprep.subr.mxu0 0.0
  %1321 = vmatpush2.msra.mxu0 0.0
  %1322 = vmatprep.subr.mxu0 0.0
  %1323 = vmatpush2.msra.mxu0 0.0
  %1324 = vmatprep.subr.mxu0 0.0
  %1325 = vmatpush2.msra.mxu0 0.0
  %1326 = vmatprep.subr.mxu0 0.0
  %1327 = vmatpush2.msra.mxu0 0.0
  %1328 = vmatprep.subr.mxu0 0.0
  %1329 = vmatpush2.msra.mxu0 0.0
  %1330 = vmatprep.subr.mxu0 0.0
  %1331 = vmatpush2.msra.mxu0 0.0
  %1332 = vmatprep.subr.mxu0 0.0
  %1333 = vmatpush2.msra.mxu0 0.0
  %1334 = vmatprep.mubr.f32.mxu0 0.0
  %1335 = vmatmul.mubr.f32.gmra.mxu0 %v1268
  %v1336 = vpop.f32.mrf.mxu0
  %v1337 = vadd.f32 0.0, %v1336
  %v1338 = vpop.f32.mrf.mxu0
  %1339 = vdwg.mxu0
  %v1340 = vadd.f32 %v1264, %v1337
  %v1341 = vtanh.pop %v1340
  %v1342 = vxor.u32 %v1340, 2147483648
  %v1343 = vmul.f32 %v1342, 1.442695
  %v1344 = vpow.pop %v1343
  %v1345 = vadd.f32 %v1344, 1.0
  %v1346 = vrcp.pop %v1345
  %v1347 = vmul.f32 1.0, %v1346
  %v1348 = vsel %vm331, %v1341, %v1347
  %v1349 = vmul.f32 %v1348, %v1137
  %1351 = vrot.lane.b32.xlu0 %v1348, 64
  %v1352 = vpop.permute.xlu0 %1351
  %v1354 = vmul.f32 %v1348, %v1352
  %1356 = vrot.lane.b32.xlu0 %v1354, 32
  %v1357 = vpop.permute.xlu0 %1356
  %v1359 = vadd.f32 %v1349, %v1357
  %v1360 = vtanh.pop %v1359
  %1362 = vrot.lane.b32.xlu0 %v1360, 64
  %v1363 = vpop.permute.xlu0 %1362
  %v1365 = vmul.f32 %v1348, %v1363
  %v1366 = vsel %vm1246, %v1365, %v1136
  %v1367 = vsel %vm1246, %v1359, %v1137
  %s1368 = scalar_lea.vmem [#allocation3], 24
  %v1369 = vld [vmem:[%s1368] sm:$0xff]
  %1371 = vrot.lane.b32.xlu0 %v1247, 32
  %v1372 = vpop.permute.xlu0 %1371
  %v1373 = vsel %vm333, %v1372, 0
  %1375 = vmatprep.subr.mxu0 0.0
  %1376 = vmatpush1.msra.mxu0 0.0
  %1377 = vmatprep.subr.mxu0 0.0
  %1378 = vmatpush1.msra.mxu0 0.0
  %1379 = vmatprep.subr.mxu0 0.0
  %1380 = vmatpush1.msra.mxu0 0.0
  %1381 = vmatprep.subr.mxu0 0.0
  %1382 = vmatpush1.msra.mxu0 0.0
  %1383 = vmatprep.subr.mxu0 0.0
  %1384 = vmatpush1.msra.mxu0 0.0
  %1385 = vmatprep.subr.mxu0 0.0
  %1386 = vmatpush1.msra.mxu0 0.0
  %1387 = vmatprep.subr.mxu0 0.0
  %1388 = vmatpush1.msra.mxu0 0.0
  %1389 = vmatprep.subr.mxu0 0.0
  %1390 = vmatpush1.msra.mxu0 0.0
  %1391 = vmatprep.subr.mxu0 0.0
  %1392 = vmatpush1.msra.mxu0 0.0
  %1393 = vmatprep.subr.mxu0 0.0
  %1394 = vmatpush1.msra.mxu0 0.0
  %1395 = vmatprep.subr.mxu0 0.0
  %1396 = vmatpush1.msra.mxu0 0.0
  %1397 = vmatprep.subr.mxu0 0.0
  %1398 = vmatpush1.msra.mxu0 0.0
  %1399 = vmatprep.subr.mxu0 0.0
  %1400 = vmatpush1.msra.mxu0 %v325
  %1401 = vmatprep.subr.mxu0 0.0
  %1402 = vmatpush1.msra.mxu0 %v324
  %1403 = vmatprep.subr.mxu0 0.0
  %1404 = vmatpush1.msra.mxu0 %v323
  %1405 = vmatprep.subr.mxu0 0.0
  %1406 = vmatpush1.msra.mxu0 %v322
  %1407 = vmatprep.subr.mxu0 0.0
  %1408 = vmatpush2.msra.mxu0 0.0
  %1409 = vmatprep.subr.mxu0 0.0
  %1410 = vmatpush2.msra.mxu0 0.0
  %1411 = vmatprep.subr.mxu0 0.0
  %1412 = vmatpush2.msra.mxu0 0.0
  %1413 = vmatprep.subr.mxu0 0.0
  %1414 = vmatpush2.msra.mxu0 0.0
  %1415 = vmatprep.subr.mxu0 0.0
  %1416 = vmatpush2.msra.mxu0 0.0
  %1417 = vmatprep.subr.mxu0 0.0
  %1418 = vmatpush2.msra.mxu0 0.0
  %1419 = vmatprep.subr.mxu0 0.0
  %1420 = vmatpush2.msra.mxu0 0.0
  %1421 = vmatprep.subr.mxu0 0.0
  %1422 = vmatpush2.msra.mxu0 0.0
  %1423 = vmatprep.subr.mxu0 0.0
  %1424 = vmatpush2.msra.mxu0 0.0
  %1425 = vmatprep.subr.mxu0 0.0
  %1426 = vmatpush2.msra.mxu0 0.0
  %1427 = vmatprep.subr.mxu0 0.0
  %1428 = vmatpush2.msra.mxu0 0.0
  %1429 = vmatprep.subr.mxu0 0.0
  %1430 = vmatpush2.msra.mxu0 0.0
  %1431 = vmatprep.subr.mxu0 0.0
  %1432 = vmatpush2.msra.mxu0 0.0
  %1433 = vmatprep.subr.mxu0 0.0
  %1434 = vmatpush2.msra.mxu0 0.0
  %1435 = vmatprep.subr.mxu0 0.0
  %1436 = vmatpush2.msra.mxu0 0.0
  %1437 = vmatprep.subr.mxu0 0.0
  %1438 = vmatpush2.msra.mxu0 0.0
  %1439 = vmatprep.mubr.f32.mxu0 0.0
  %1440 = vmatmul.mubr.f32.gmra.mxu0 %v1373
  %v1441 = vpop.f32.mrf.mxu0
  %v1442 = vadd.f32 0.0, %v1441
  %v1443 = vpop.f32.mrf.mxu0
  %1444 = vdwg.mxu0
  %v1445 = vadd.f32 %v1369, %v1442
  %v1446 = vtanh.pop %v1445
  %v1447 = vxor.u32 %v1445, 2147483648
  %v1448 = vmul.f32 %v1447, 1.442695
  %v1449 = vpow.pop %v1448
  %v1450 = vadd.f32 %v1449, 1.0
  %v1451 = vrcp.pop %v1450
  %v1452 = vmul.f32 1.0, %v1451
  %v1453 = vsel %vm331, %v1446, %v1452
  %v1454 = vmul.f32 %v1453, %v1248
  %1456 = vrot.lane.b32.xlu0 %v1453, 64
  %v1457 = vpop.permute.xlu0 %1456
  %v1459 = vmul.f32 %v1453, %v1457
  %1461 = vrot.lane.b32.xlu0 %v1459, 32
  %v1462 = vpop.permute.xlu0 %1461
  %v1464 = vadd.f32 %v1454, %v1462
  %v1465 = vtanh.pop %v1464
  %1467 = vrot.lane.b32.xlu0 %v1465, 64
  %v1468 = vpop.permute.xlu0 %1467
  %v1470 = vmul.f32 %v1453, %v1468
  %v1471 = vsel %vm1135, %v1470, %v1247
  %v1472 = vsel %vm1135, %v1464, %v1248
  %v1473 = vsel %vm1246, %v1365, 0.0
  %1475 = vrot.lane.b32.xlu0 %v1473, 32
  %v1476 = vpop.permute.xlu0 %1475
  %1478 = vst.msk [vmem:[%s1261] sm:$0xff] %vm333, %v1476
  %v1479 = vsel %vm1135, %v1470, 0.0
  %1481 = vrot.lane.b32.xlu0 %v1479, 64
  %v1482 = vpop.permute.xlu0 %1481
  %1484 = vst.msk [vmem:[%s1254] sm:$0xff] %vm557, %v1482
  %s1485 = scalar_lea.vmem [#allocation2], 40
  %v1486 = vld [vmem:[%s1485] sm:$0xff]
  %1488 = vrot.lane.b32.xlu0 %v1366, 32
  %v1489 = vpop.permute.xlu0 %1488
  %v1490 = vsel %vm333, %v1489, 0
  %1492 = vmatprep.subr.mxu0 0.0
  %1493 = vmatpush1.msra.mxu0 0.0
  %1494 = vmatprep.subr.mxu0 0.0
  %1495 = vmatpush1.msra.mxu0 0.0
  %1496 = vmatprep.subr.mxu0 0.0
  %1497 = vmatpush1.msra.mxu0 0.0
  %1498 = vmatprep.subr.mxu0 0.0
  %1499 = vmatpush1.msra.mxu0 0.0
  %1500 = vmatprep.subr.mxu0 0.0
  %1501 = vmatpush1.msra.mxu0 0.0
  %1502 = vmatprep.subr.mxu0 0.0
  %1503 = vmatpush1.msra.mxu0 0.0
  %1504 = vmatprep.subr.mxu0 0.0
  %1505 = vmatpush1.msra.mxu0 0.0
  %1506 = vmatprep.subr.mxu0 0.0
  %1507 = vmatpush1.msra.mxu0 0.0
  %1508 = vmatprep.subr.mxu0 0.0
  %1509 = vmatpush1.msra.mxu0 0.0
  %1510 = vmatprep.subr.mxu0 0.0
  %1511 = vmatpush1.msra.mxu0 0.0
  %1512 = vmatprep.subr.mxu0 0.0
  %1513 = vmatpush1.msra.mxu0 0.0
  %1514 = vmatprep.subr.mxu0 0.0
  %1515 = vmatpush1.msra.mxu0 0.0
  %1516 = vmatprep.subr.mxu0 0.0
  %1517 = vmatpush1.msra.mxu0 %v321
  %1518 = vmatprep.subr.mxu0 0.0
  %1519 = vmatpush1.msra.mxu0 %v320
  %1520 = vmatprep.subr.mxu0 0.0
  %1521 = vmatpush1.msra.mxu0 %v319
  %1522 = vmatprep.subr.mxu0 0.0
  %1523 = vmatpush1.msra.mxu0 %v318
  %1524 = vmatprep.subr.mxu0 0.0
  %1525 = vmatpush2.msra.mxu0 0.0
  %1526 = vmatprep.subr.mxu0 0.0
  %1527 = vmatpush2.msra.mxu0 0.0
  %1528 = vmatprep.subr.mxu0 0.0
  %1529 = vmatpush2.msra.mxu0 0.0
  %1530 = vmatprep.subr.mxu0 0.0
  %1531 = vmatpush2.msra.mxu0 0.0
  %1532 = vmatprep.subr.mxu0 0.0
  %1533 = vmatpush2.msra.mxu0 0.0
  %1534 = vmatprep.subr.mxu0 0.0
  %1535 = vmatpush2.msra.mxu0 0.0
  %1536 = vmatprep.subr.mxu0 0.0
  %1537 = vmatpush2.msra.mxu0 0.0
  %1538 = vmatprep.subr.mxu0 0.0
  %1539 = vmatpush2.msra.mxu0 0.0
  %1540 = vmatprep.subr.mxu0 0.0
  %1541 = vmatpush2.msra.mxu0 0.0
  %1542 = vmatprep.subr.mxu0 0.0
  %1543 = vmatpush2.msra.mxu0 0.0
  %1544 = vmatprep.subr.mxu0 0.0
  %1545 = vmatpush2.msra.mxu0 0.0
  %1546 = vmatprep.subr.mxu0 0.0
  %1547 = vmatpush2.msra.mxu0 0.0
  %1548 = vmatprep.subr.mxu0 0.0
  %1549 = vmatpush2.msra.mxu0 0.0
  %1550 = vmatprep.subr.mxu0 0.0
  %1551 = vmatpush2.msra.mxu0 0.0
  %1552 = vmatprep.subr.mxu0 0.0
  %1553 = vmatpush2.msra.mxu0 0.0
  %1554 = vmatprep.subr.mxu0 0.0
  %1555 = vmatpush2.msra.mxu0 0.0
  %1556 = vmatprep.mubr.f32.mxu0 0.0
  %1557 = vmatmul.mubr.f32.gmra.mxu0 %v1490
  %v1558 = vpop.f32.mrf.mxu0
  %v1559 = vadd.f32 0.0, %v1558
  %v1560 = vpop.f32.mrf.mxu0
  %1561 = vdwg.mxu0
  %v1562 = vadd.f32 %v1486, %v1559
  %v1563 = vtanh.pop %v1562
  %v1564 = vxor.u32 %v1562, 2147483648
  %v1565 = vmul.f32 %v1564, 1.442695
  %v1566 = vpow.pop %v1565
  %v1567 = vadd.f32 %v1566, 1.0
  %v1568 = vrcp.pop %v1567
  %v1569 = vmul.f32 1.0, %v1568
  %v1570 = vsel %vm331, %v1563, %v1569
  %v1571 = vmul.f32 %v1570, %v1367
  %1573 = vrot.lane.b32.xlu0 %v1570, 64
  %v1574 = vpop.permute.xlu0 %1573
  %v1576 = vmul.f32 %v1570, %v1574
  %1578 = vrot.lane.b32.xlu0 %v1576, 32
  %v1579 = vpop.permute.xlu0 %1578
  %v1581 = vadd.f32 %v1571, %v1579
  %v1582 = vtanh.pop %v1581
  %1584 = vrot.lane.b32.xlu0 %v1582, 64
  %v1585 = vpop.permute.xlu0 %1584
  %v1587 = vmul.f32 %v1570, %v1585
  %v1588 = vsel %vm1010, %v1587, %v1366
  %v1589 = vsel %vm1010, %v1581, %v1367
  %s1590 = scalar_lea.vmem [#allocation3], 16
  %v1591 = vld [vmem:[%s1590] sm:$0xff]
  %1593 = vrot.lane.b32.xlu0 %v1471, 32
  %v1594 = vpop.permute.xlu0 %1593
  %v1595 = vsel %vm333, %v1594, 0
  %1597 = vmatprep.subr.mxu0 0.0
  %1598 = vmatpush1.msra.mxu0 0.0
  %1599 = vmatprep.subr.mxu0 0.0
  %1600 = vmatpush1.msra.mxu0 0.0
  %1601 = vmatprep.subr.mxu0 0.0
  %1602 = vmatpush1.msra.mxu0 0.0
  %1603 = vmatprep.subr.mxu0 0.0
  %1604 = vmatpush1.msra.mxu0 0.0
  %1605 = vmatprep.subr.mxu0 0.0
  %1606 = vmatpush1.msra.mxu0 0.0
  %1607 = vmatprep.subr.mxu0 0.0
  %1608 = vmatpush1.msra.mxu0 0.0
  %1609 = vmatprep.subr.mxu0 0.0
  %1610 = vmatpush1.msra.mxu0 0.0
  %1611 = vmatprep.subr.mxu0 0.0
  %1612 = vmatpush1.msra.mxu0 0.0
  %1613 = vmatprep.subr.mxu0 0.0
  %1614 = vmatpush1.msra.mxu0 0.0
  %1615 = vmatprep.subr.mxu0 0.0
  %1616 = vmatpush1.msra.mxu0 0.0
  %1617 = vmatprep.subr.mxu0 0.0
  %1618 = vmatpush1.msra.mxu0 0.0
  %1619 = vmatprep.subr.mxu0 0.0
  %1620 = vmatpush1.msra.mxu0 0.0
  %1621 = vmatprep.subr.mxu0 0.0
  %1622 = vmatpush1.msra.mxu0 %v325
  %1623 = vmatprep.subr.mxu0 0.0
  %1624 = vmatpush1.msra.mxu0 %v324
  %1625 = vmatprep.subr.mxu0 0.0
  %1626 = vmatpush1.msra.mxu0 %v323
  %1627 = vmatprep.subr.mxu0 0.0
  %1628 = vmatpush1.msra.mxu0 %v322
  %1629 = vmatprep.subr.mxu0 0.0
  %1630 = vmatpush2.msra.mxu0 0.0
  %1631 = vmatprep.subr.mxu0 0.0
  %1632 = vmatpush2.msra.mxu0 0.0
  %1633 = vmatprep.subr.mxu0 0.0
  %1634 = vmatpush2.msra.mxu0 0.0
  %1635 = vmatprep.subr.mxu0 0.0
  %1636 = vmatpush2.msra.mxu0 0.0
  %1637 = vmatprep.subr.mxu0 0.0
  %1638 = vmatpush2.msra.mxu0 0.0
  %1639 = vmatprep.subr.mxu0 0.0
  %1640 = vmatpush2.msra.mxu0 0.0
  %1641 = vmatprep.subr.mxu0 0.0
  %1642 = vmatpush2.msra.mxu0 0.0
  %1643 = vmatprep.subr.mxu0 0.0
  %1644 = vmatpush2.msra.mxu0 0.0
  %1645 = vmatprep.subr.mxu0 0.0
  %1646 = vmatpush2.msra.mxu0 0.0
  %1647 = vmatprep.subr.mxu0 0.0
  %1648 = vmatpush2.msra.mxu0 0.0
  %1649 = vmatprep.subr.mxu0 0.0
  %1650 = vmatpush2.msra.mxu0 0.0
  %1651 = vmatprep.subr.mxu0 0.0
  %1652 = vmatpush2.msra.mxu0 0.0
  %1653 = vmatprep.subr.mxu0 0.0
  %1654 = vmatpush2.msra.mxu0 0.0
  %1655 = vmatprep.subr.mxu0 0.0
  %1656 = vmatpush2.msra.mxu0 0.0
  %1657 = vmatprep.subr.mxu0 0.0
  %1658 = vmatpush2.msra.mxu0 0.0
  %1659 = vmatprep.subr.mxu0 0.0
  %1660 = vmatpush2.msra.mxu0 0.0
  %1661 = vmatprep.mubr.f32.mxu0 0.0
  %1662 = vmatmul.mubr.f32.gmra.mxu0 %v1595
  %v1663 = vpop.f32.mrf.mxu0
  %v1664 = vadd.f32 0.0, %v1663
  %v1665 = vpop.f32.mrf.mxu0
  %1666 = vdwg.mxu0
  %v1667 = vadd.f32 %v1591, %v1664
  %v1668 = vtanh.pop %v1667
  %v1669 = vxor.u32 %v1667, 2147483648
  %v1670 = vmul.f32 %v1669, 1.442695
  %v1671 = vpow.pop %v1670
  %v1672 = vadd.f32 %v1671, 1.0
  %v1673 = vrcp.pop %v1672
  %v1674 = vmul.f32 1.0, %v1673
  %v1675 = vsel %vm331, %v1668, %v1674
  %v1676 = vmul.f32 %v1675, %v1472
  %1678 = vrot.lane.b32.xlu0 %v1675, 64
  %v1679 = vpop.permute.xlu0 %1678
  %v1681 = vmul.f32 %v1675, %v1679
  %1683 = vrot.lane.b32.xlu0 %v1681, 32
  %v1684 = vpop.permute.xlu0 %1683
  %v1686 = vadd.f32 %v1676, %v1684
  %v1687 = vtanh.pop %v1686
  %1689 = vrot.lane.b32.xlu0 %v1687, 64
  %v1690 = vpop.permute.xlu0 %1689
  %v1692 = vmul.f32 %v1675, %v1690
  %v1693 = vsel %vm899, %v1692, %v1471
  %v1694 = vsel %vm899, %v1686, %v1472
  %v1695 = vsel %vm1010, %v1587, 0.0
  %1697 = vrot.lane.b32.xlu0 %v1695, 32
  %v1698 = vpop.permute.xlu0 %1697
  %1700 = vst.msk [vmem:[%s1025] sm:$0xff] %vm333, %v1698
  %v1701 = vsel %vm899, %v1692, 0.0
  %1703 = vrot.lane.b32.xlu0 %v1701, 64
  %v1704 = vpop.permute.xlu0 %1703
  %1706 = vst.msk [vmem:[%s1018] sm:$0xff] %vm557, %v1704
  %s1707 = scalar_lea.vmem [#allocation2], 48
  %v1708 = vld [vmem:[%s1707] sm:$0xff]
  %1710 = vrot.lane.b32.xlu0 %v1588, 32
  %v1711 = vpop.permute.xlu0 %1710
  %v1712 = vsel %vm333, %v1711, 0
  %1714 = vmatprep.subr.mxu0 0.0
  %1715 = vmatpush1.msra.mxu0 0.0
  %1716 = vmatprep.subr.mxu0 0.0
  %1717 = vmatpush1.msra.mxu0 0.0
  %1718 = vmatprep.subr.mxu0 0.0
  %1719 = vmatpush1.msra.mxu0 0.0
  %1720 = vmatprep.subr.mxu0 0.0
  %1721 = vmatpush1.msra.mxu0 0.0
  %1722 = vmatprep.subr.mxu0 0.0
  %1723 = vmatpush1.msra.mxu0 0.0
  %1724 = vmatprep.subr.mxu0 0.0
  %1725 = vmatpush1.msra.mxu0 0.0
  %1726 = vmatprep.subr.mxu0 0.0
  %1727 = vmatpush1.msra.mxu0 0.0
  %1728 = vmatprep.subr.mxu0 0.0
  %1729 = vmatpush1.msra.mxu0 0.0
  %1730 = vmatprep.subr.mxu0 0.0
  %1731 = vmatpush1.msra.mxu0 0.0
  %1732 = vmatprep.subr.mxu0 0.0
  %1733 = vmatpush1.msra.mxu0 0.0
  %1734 = vmatprep.subr.mxu0 0.0
  %1735 = vmatpush1.msra.mxu0 0.0
  %1736 = vmatprep.subr.mxu0 0.0
  %1737 = vmatpush1.msra.mxu0 0.0
  %1738 = vmatprep.subr.mxu0 0.0
  %1739 = vmatpush1.msra.mxu0 %v321
  %1740 = vmatprep.subr.mxu0 0.0
  %1741 = vmatpush1.msra.mxu0 %v320
  %1742 = vmatprep.subr.mxu0 0.0
  %1743 = vmatpush1.msra.mxu0 %v319
  %1744 = vmatprep.subr.mxu0 0.0
  %1745 = vmatpush1.msra.mxu0 %v318
  %1746 = vmatprep.subr.mxu0 0.0
  %1747 = vmatpush2.msra.mxu0 0.0
  %1748 = vmatprep.subr.mxu0 0.0
  %1749 = vmatpush2.msra.mxu0 0.0
  %1750 = vmatprep.subr.mxu0 0.0
  %1751 = vmatpush2.msra.mxu0 0.0
  %1752 = vmatprep.subr.mxu0 0.0
  %1753 = vmatpush2.msra.mxu0 0.0
  %1754 = vmatprep.subr.mxu0 0.0
  %1755 = vmatpush2.msra.mxu0 0.0
  %1756 = vmatprep.subr.mxu0 0.0
  %1757 = vmatpush2.msra.mxu0 0.0
  %1758 = vmatprep.subr.mxu0 0.0
  %1759 = vmatpush2.msra.mxu0 0.0
  %1760 = vmatprep.subr.mxu0 0.0
  %1761 = vmatpush2.msra.mxu0 0.0
  %1762 = vmatprep.subr.mxu0 0.0
  %1763 = vmatpush2.msra.mxu0 0.0
  %1764 = vmatprep.subr.mxu0 0.0
  %1765 = vmatpush2.msra.mxu0 0.0
  %1766 = vmatprep.subr.mxu0 0.0
  %1767 = vmatpush2.msra.mxu0 0.0
  %1768 = vmatprep.subr.mxu0 0.0
  %1769 = vmatpush2.msra.mxu0 0.0
  %1770 = vmatprep.subr.mxu0 0.0
  %1771 = vmatpush2.msra.mxu0 0.0
  %1772 = vmatprep.subr.mxu0 0.0
  %1773 = vmatpush2.msra.mxu0 0.0
  %1774 = vmatprep.subr.mxu0 0.0
  %1775 = vmatpush2.msra.mxu0 0.0
  %1776 = vmatprep.subr.mxu0 0.0
  %1777 = vmatpush2.msra.mxu0 0.0
  %1778 = vmatprep.mubr.f32.mxu0 0.0
  %1779 = vmatmul.mubr.f32.gmra.mxu0 %v1712
  %v1780 = vpop.f32.mrf.mxu0
  %v1781 = vadd.f32 0.0, %v1780
  %v1782 = vpop.f32.mrf.mxu0
  %1783 = vdwg.mxu0
  %v1784 = vadd.f32 %v1708, %v1781
  %v1785 = vtanh.pop %v1784
  %v1786 = vxor.u32 %v1784, 2147483648
  %v1787 = vmul.f32 %v1786, 1.442695
  %v1788 = vpow.pop %v1787
  %v1789 = vadd.f32 %v1788, 1.0
  %v1790 = vrcp.pop %v1789
  %v1791 = vmul.f32 1.0, %v1790
  %v1792 = vsel %vm331, %v1785, %v1791
  %v1793 = vmul.f32 %v1792, %v1589
  %1795 = vrot.lane.b32.xlu0 %v1792, 64
  %v1796 = vpop.permute.xlu0 %1795
  %v1798 = vmul.f32 %v1792, %v1796
  %1800 = vrot.lane.b32.xlu0 %v1798, 32
  %v1801 = vpop.permute.xlu0 %1800
  %v1803 = vadd.f32 %v1793, %v1801
  %v1804 = vtanh.pop %v1803
  %1806 = vrot.lane.b32.xlu0 %v1804, 64
  %v1807 = vpop.permute.xlu0 %1806
  %v1809 = vmul.f32 %v1792, %v1807
  %v1810 = vsel %vm774, %v1809, %v1588
  %v1811 = vsel %vm774, %v1803, %v1589
  %s1812 = scalar_lea.vmem [#allocation3], 8
  %v1813 = vld [vmem:[%s1812] sm:$0xff]
  %1815 = vrot.lane.b32.xlu0 %v1693, 32
  %v1816 = vpop.permute.xlu0 %1815
  %v1817 = vsel %vm333, %v1816, 0
  %1819 = vmatprep.subr.mxu0 0.0
  %1820 = vmatpush1.msra.mxu0 0.0
  %1821 = vmatprep.subr.mxu0 0.0
  %1822 = vmatpush1.msra.mxu0 0.0
  %1823 = vmatprep.subr.mxu0 0.0
  %1824 = vmatpush1.msra.mxu0 0.0
  %1825 = vmatprep.subr.mxu0 0.0
  %1826 = vmatpush1.msra.mxu0 0.0
  %1827 = vmatprep.subr.mxu0 0.0
  %1828 = vmatpush1.msra.mxu0 0.0
  %1829 = vmatprep.subr.mxu0 0.0
  %1830 = vmatpush1.msra.mxu0 0.0
  %1831 = vmatprep.subr.mxu0 0.0
  %1832 = vmatpush1.msra.mxu0 0.0
  %1833 = vmatprep.subr.mxu0 0.0
  %1834 = vmatpush1.msra.mxu0 0.0
  %1835 = vmatprep.subr.mxu0 0.0
  %1836 = vmatpush1.msra.mxu0 0.0
  %1837 = vmatprep.subr.mxu0 0.0
  %1838 = vmatpush1.msra.mxu0 0.0
  %1839 = vmatprep.subr.mxu0 0.0
  %1840 = vmatpush1.msra.mxu0 0.0
  %1841 = vmatprep.subr.mxu0 0.0
  %1842 = vmatpush1.msra.mxu0 0.0
  %1843 = vmatprep.subr.mxu0 0.0
  %1844 = vmatpush1.msra.mxu0 %v325
  %1845 = vmatprep.subr.mxu0 0.0
  %1846 = vmatpush1.msra.mxu0 %v324
  %1847 = vmatprep.subr.mxu0 0.0
  %1848 = vmatpush1.msra.mxu0 %v323
  %1849 = vmatprep.subr.mxu0 0.0
  %1850 = vmatpush1.msra.mxu0 %v322
  %1851 = vmatprep.subr.mxu0 0.0
  %1852 = vmatpush2.msra.mxu0 0.0
  %1853 = vmatprep.subr.mxu0 0.0
  %1854 = vmatpush2.msra.mxu0 0.0
  %1855 = vmatprep.subr.mxu0 0.0
  %1856 = vmatpush2.msra.mxu0 0.0
  %1857 = vmatprep.subr.mxu0 0.0
  %1858 = vmatpush2.msra.mxu0 0.0
  %1859 = vmatprep.subr.mxu0 0.0
  %1860 = vmatpush2.msra.mxu0 0.0
  %1861 = vmatprep.subr.mxu0 0.0
  %1862 = vmatpush2.msra.mxu0 0.0
  %1863 = vmatprep.subr.mxu0 0.0
  %1864 = vmatpush2.msra.mxu0 0.0
  %1865 = vmatprep.subr.mxu0 0.0
  %1866 = vmatpush2.msra.mxu0 0.0
  %1867 = vmatprep.subr.mxu0 0.0
  %1868 = vmatpush2.msra.mxu0 0.0
  %1869 = vmatprep.subr.mxu0 0.0
  %1870 = vmatpush2.msra.mxu0 0.0
  %1871 = vmatprep.subr.mxu0 0.0
  %1872 = vmatpush2.msra.mxu0 0.0
  %1873 = vmatprep.subr.mxu0 0.0
  %1874 = vmatpush2.msra.mxu0 0.0
  %1875 = vmatprep.subr.mxu0 0.0
  %1876 = vmatpush2.msra.mxu0 0.0
  %1877 = vmatprep.subr.mxu0 0.0
  %1878 = vmatpush2.msra.mxu0 0.0
  %1879 = vmatprep.subr.mxu0 0.0
  %1880 = vmatpush2.msra.mxu0 0.0
  %1881 = vmatprep.subr.mxu0 0.0
  %1882 = vmatpush2.msra.mxu0 0.0
  %1883 = vmatprep.mubr.f32.mxu0 0.0
  %1884 = vmatmul.mubr.f32.gmra.mxu0 %v1817
  %v1885 = vpop.f32.mrf.mxu0
  %v1886 = vadd.f32 0.0, %v1885
  %v1887 = vpop.f32.mrf.mxu0
  %1888 = vdwg.mxu0
  %v1889 = vadd.f32 %v1813, %v1886
  %v1890 = vtanh.pop %v1889
  %v1891 = vxor.u32 %v1889, 2147483648
  %v1892 = vmul.f32 %v1891, 1.442695
  %v1893 = vpow.pop %v1892
  %v1894 = vadd.f32 %v1893, 1.0
  %v1895 = vrcp.pop %v1894
  %v1896 = vmul.f32 1.0, %v1895
  %v1897 = vsel %vm331, %v1890, %v1896
  %v1898 = vmul.f32 %v1897, %v1694
  %1900 = vrot.lane.b32.xlu0 %v1897, 64
  %v1901 = vpop.permute.xlu0 %1900
  %v1903 = vmul.f32 %v1897, %v1901
  %1905 = vrot.lane.b32.xlu0 %v1903, 32
  %v1906 = vpop.permute.xlu0 %1905
  %v1908 = vadd.f32 %v1898, %v1906
  %v1909 = vtanh.pop %v1908
  %1911 = vrot.lane.b32.xlu0 %v1909, 64
  %v1912 = vpop.permute.xlu0 %1911
  %v1914 = vmul.f32 %v1897, %v1912
  %v1915 = vsel %vm664, %v1914, %v1693
  %v1916 = vsel %vm664, %v1908, %v1694
  %v1917 = vsel %vm774, %v1809, 0.0
  %1919 = vrot.lane.b32.xlu0 %v1917, 32
  %v1920 = vpop.permute.xlu0 %1919
  %1922 = vst.msk [vmem:[%s789] sm:$0xff] %vm333, %v1920
  %v1923 = vsel %vm664, %v1914, 0.0
  %1925 = vrot.lane.b32.xlu0 %v1923, 64
  %v1926 = vpop.permute.xlu0 %1925
  %1928 = vst.msk [vmem:[%s782] sm:$0xff] %vm557, %v1926
  %s1929 = scalar_lea.vmem [#allocation2], 56
  %v1930 = vld [vmem:[%s1929] sm:$0xff]
  %1932 = vrot.lane.b32.xlu0 %v1810, 32
  %v1933 = vpop.permute.xlu0 %1932
  %v1934 = vsel %vm333, %v1933, 0
  %1936 = vmatprep.subr.mxu0 0.0
  %1937 = vmatpush1.msra.mxu0 0.0
  %1938 = vmatprep.subr.mxu0 0.0
  %1939 = vmatpush1.msra.mxu0 0.0
  %1940 = vmatprep.subr.mxu0 0.0
  %1941 = vmatpush1.msra.mxu0 0.0
  %1942 = vmatprep.subr.mxu0 0.0
  %1943 = vmatpush1.msra.mxu0 0.0
  %1944 = vmatprep.subr.mxu0 0.0
  %1945 = vmatpush1.msra.mxu0 0.0
  %1946 = vmatprep.subr.mxu0 0.0
  %1947 = vmatpush1.msra.mxu0 0.0
  %1948 = vmatprep.subr.mxu0 0.0
  %1949 = vmatpush1.msra.mxu0 0.0
  %1950 = vmatprep.subr.mxu0 0.0
  %1951 = vmatpush1.msra.mxu0 0.0
  %1952 = vmatprep.subr.mxu0 0.0
  %1953 = vmatpush1.msra.mxu0 0.0
  %1954 = vmatprep.subr.mxu0 0.0
  %1955 = vmatpush1.msra.mxu0 0.0
  %1956 = vmatprep.subr.mxu0 0.0
  %1957 = vmatpush1.msra.mxu0 0.0
  %1958 = vmatprep.subr.mxu0 0.0
  %1959 = vmatpush1.msra.mxu0 0.0
  %1960 = vmatprep.subr.mxu0 0.0
  %1961 = vmatpush1.msra.mxu0 %v321
  %1962 = vmatprep.subr.mxu0 0.0
  %1963 = vmatpush1.msra.mxu0 %v320
  %1964 = vmatprep.subr.mxu0 0.0
  %1965 = vmatpush1.msra.mxu0 %v319
  %1966 = vmatprep.subr.mxu0 0.0
  %1967 = vmatpush1.msra.mxu0 %v318
  %1968 = vmatprep.subr.mxu0 0.0
  %1969 = vmatpush2.msra.mxu0 0.0
  %1970 = vmatprep.subr.mxu0 0.0
  %1971 = vmatpush2.msra.mxu0 0.0
  %1972 = vmatprep.subr.mxu0 0.0
  %1973 = vmatpush2.msra.mxu0 0.0
  %1974 = vmatprep.subr.mxu0 0.0
  %1975 = vmatpush2.msra.mxu0 0.0
  %1976 = vmatprep.subr.mxu0 0.0
  %1977 = vmatpush2.msra.mxu0 0.0
  %1978 = vmatprep.subr.mxu0 0.0
  %1979 = vmatpush2.msra.mxu0 0.0
  %1980 = vmatprep.subr.mxu0 0.0
  %1981 = vmatpush2.msra.mxu0 0.0
  %1982 = vmatprep.subr.mxu0 0.0
  %1983 = vmatpush2.msra.mxu0 0.0
  %1984 = vmatprep.subr.mxu0 0.0
  %1985 = vmatpush2.msra.mxu0 0.0
  %1986 = vmatprep.subr.mxu0 0.0
  %1987 = vmatpush2.msra.mxu0 0.0
  %1988 = vmatprep.subr.mxu0 0.0
  %1989 = vmatpush2.msra.mxu0 0.0
  %1990 = vmatprep.subr.mxu0 0.0
  %1991 = vmatpush2.msra.mxu0 0.0
  %1992 = vmatprep.subr.mxu0 0.0
  %1993 = vmatpush2.msra.mxu0 0.0
  %1994 = vmatprep.subr.mxu0 0.0
  %1995 = vmatpush2.msra.mxu0 0.0
  %1996 = vmatprep.subr.mxu0 0.0
  %1997 = vmatpush2.msra.mxu0 0.0
  %1998 = vmatprep.subr.mxu0 0.0
  %1999 = vmatpush2.msra.mxu0 0.0
  %2000 = vmatprep.mubr.f32.mxu0 0.0
  %2001 = vmatmul.mubr.f32.gmra.mxu0 %v1934
  %v2002 = vpop.f32.mrf.mxu0
  %v2003 = vadd.f32 0.0, %v2002
  %v2004 = vpop.f32.mrf.mxu0
  %2005 = vdwg.mxu0
  %v2006 = vadd.f32 %v1930, %v2003
  %v2007 = vtanh.pop %v2006
  %v2008 = vxor.u32 %v2006, 2147483648
  %v2009 = vmul.f32 %v2008, 1.442695
  %v2010 = vpow.pop %v2009
  %v2011 = vadd.f32 %v2010, 1.0
  %v2012 = vrcp.pop %v2011
  %v2013 = vmul.f32 1.0, %v2012
  %v2014 = vsel %vm331, %v2007, %v2013
  %v2015 = vmul.f32 %v2014, %v1811
  %2017 = vrot.lane.b32.xlu0 %v2014, 64
  %v2018 = vpop.permute.xlu0 %2017
  %v2020 = vmul.f32 %v2014, %v2018
  %2022 = vrot.lane.b32.xlu0 %v2020, 32
  %v2023 = vpop.permute.xlu0 %2022
  %v2025 = vadd.f32 %v2015, %v2023
  %v2026 = vtanh.pop %v2025
  %2028 = vrot.lane.b32.xlu0 %v2026, 64
  %v2029 = vpop.permute.xlu0 %2028
  %v2031 = vmul.f32 %v2014, %v2029
  %v2032 = vld [vmem:[#allocation3] sm:$0xff]
  %2034 = vrot.lane.b32.xlu0 %v1915, 32
  %v2035 = vpop.permute.xlu0 %2034
  %v2036 = vsel %vm333, %v2035, 0
  %2038 = vmatprep.subr.mxu0 0.0
  %2039 = vmatpush1.msra.mxu0 0.0
  %2040 = vmatprep.subr.mxu0 0.0
  %2041 = vmatpush1.msra.mxu0 0.0
  %2042 = vmatprep.subr.mxu0 0.0
  %2043 = vmatpush1.msra.mxu0 0.0
  %2044 = vmatprep.subr.mxu0 0.0
  %2045 = vmatpush1.msra.mxu0 0.0
  %2046 = vmatprep.subr.mxu0 0.0
  %2047 = vmatpush1.msra.mxu0 0.0
  %2048 = vmatprep.subr.mxu0 0.0
  %2049 = vmatpush1.msra.mxu0 0.0
  %2050 = vmatprep.subr.mxu0 0.0
  %2051 = vmatpush1.msra.mxu0 0.0
  %2052 = vmatprep.subr.mxu0 0.0
  %2053 = vmatpush1.msra.mxu0 0.0
  %2054 = vmatprep.subr.mxu0 0.0
  %2055 = vmatpush1.msra.mxu0 0.0
  %2056 = vmatprep.subr.mxu0 0.0
  %2057 = vmatpush1.msra.mxu0 0.0
  %2058 = vmatprep.subr.mxu0 0.0
  %2059 = vmatpush1.msra.mxu0 0.0
  %2060 = vmatprep.subr.mxu0 0.0
  %2061 = vmatpush1.msra.mxu0 0.0
  %2062 = vmatprep.subr.mxu0 0.0
  %2063 = vmatpush1.msra.mxu0 %v325
  %2064 = vmatprep.subr.mxu0 0.0
  %2065 = vmatpush1.msra.mxu0 %v324
  %2066 = vmatprep.subr.mxu0 0.0
  %2067 = vmatpush1.msra.mxu0 %v323
  %2068 = vmatprep.subr.mxu0 0.0
  %2069 = vmatpush1.msra.mxu0 %v322
  %2070 = vmatprep.subr.mxu0 0.0
  %2071 = vmatpush2.msra.mxu0 0.0
  %2072 = vmatprep.subr.mxu0 0.0
  %2073 = vmatpush2.msra.mxu0 0.0
  %2074 = vmatprep.subr.mxu0 0.0
  %2075 = vmatpush2.msra.mxu0 0.0
  %2076 = vmatprep.subr.mxu0 0.0
  %2077 = vmatpush2.msra.mxu0 0.0
  %2078 = vmatprep.subr.mxu0 0.0
  %2079 = vmatpush2.msra.mxu0 0.0
  %2080 = vmatprep.subr.mxu0 0.0
  %2081 = vmatpush2.msra.mxu0 0.0
  %2082 = vmatprep.subr.mxu0 0.0
  %2083 = vmatpush2.msra.mxu0 0.0
  %2084 = vmatprep.subr.mxu0 0.0
  %2085 = vmatpush2.msra.mxu0 0.0
  %2086 = vmatprep.subr.mxu0 0.0
  %2087 = vmatpush2.msra.mxu0 0.0
  %2088 = vmatprep.subr.mxu0 0.0
  %2089 = vmatpush2.msra.mxu0 0.0
  %2090 = vmatprep.subr.mxu0 0.0
  %2091 = vmatpush2.msra.mxu0 0.0
  %2092 = vmatprep.subr.mxu0 0.0
  %2093 = vmatpush2.msra.mxu0 0.0
  %2094 = vmatprep.subr.mxu0 0.0
  %2095 = vmatpush2.msra.mxu0 0.0
  %2096 = vmatprep.subr.mxu0 0.0
  %2097 = vmatpush2.msra.mxu0 0.0
  %2098 = vmatprep.subr.mxu0 0.0
  %2099 = vmatpush2.msra.mxu0 0.0
  %2100 = vmatprep.subr.mxu0 0.0
  %2101 = vmatpush2.msra.mxu0 0.0
  %2102 = vmatprep.mubr.f32.mxu0 0.0
  %2103 = vmatmul.mubr.f32.gmra.mxu0 %v2036
  %v2104 = vpop.f32.mrf.mxu0
  %v2105 = vadd.f32 0.0, %v2104
  %v2106 = vpop.f32.mrf.mxu0
  %2107 = vdwg.mxu0
  %v2108 = vadd.f32 %v2032, %v2105
  %v2109 = vtanh.pop %v2108
  %v2110 = vxor.u32 %v2108, 2147483648
  %v2111 = vmul.f32 %v2110, 1.442695
  %v2112 = vpow.pop %v2111
  %v2113 = vadd.f32 %v2112, 1.0
  %v2114 = vrcp.pop %v2113
  %v2115 = vmul.f32 1.0, %v2114
  %v2116 = vsel %vm331, %v2109, %v2115
  %v2117 = vmul.f32 %v2116, %v1916
  %2119 = vrot.lane.b32.xlu0 %v2116, 64
  %v2120 = vpop.permute.xlu0 %2119
  %v2122 = vmul.f32 %v2116, %v2120
  %2124 = vrot.lane.b32.xlu0 %v2122, 32
  %v2125 = vpop.permute.xlu0 %2124
  %v2127 = vadd.f32 %v2117, %v2125
  %v2128 = vtanh.pop %v2127
  %2130 = vrot.lane.b32.xlu0 %v2128, 64
  %v2131 = vpop.permute.xlu0 %2130
  %v2133 = vmul.f32 %v2116, %v2131
  %v2134 = vsel %vm544, %v2031, 0.0
  %2136 = vrot.lane.b32.xlu0 %v2134, 32
  %v2137 = vpop.permute.xlu0 %2136
  %2139 = vst.msk [vmem:[%s556] sm:$0xff] %vm333, %v2137
  %v2140 = vsel %vm438, %v2133, 0.0
  %2142 = vrot.lane.b32.xlu0 %v2140, 64
  %v2143 = vpop.permute.xlu0 %2142
  %2145 = vst.msk [vmem:[%s8] sm:$0xff] %vm557, %v2143
  // Predicated region
  $region34: #{_lambda_.2} parent=0 // pred_check
    _
  $region35: #{_lambda_.2} parent=0 // pred_check_branch
    %2147 = sbr.rel (0) target = $region37
  $region36: #{_lambda_.2} parent=0 // pred_region
    _
  $region37: #{_lambda_.2} parent=0 // pred_fallthru
    _
  // Predicated region
  $region38: #{_lambda_.2} parent=0 // pred_check
    _
  $region39: #{_lambda_.2} parent=0 // pred_check_branch
    %2149 = sbr.rel (0) target = $region41
  $region40: #{_lambda_.2} parent=0 // pred_region
    _
  $region41: #{_lambda_.2} parent=0 // pred_fallthru
    _

// kernel: _lambda_.3
$region0: #{_lambda_.3}
  #allocation0 [shape = 'u32[]', space=smem, size = 0x4, offset = 0x4, fixed_abs, tag = 'smem constant byte address 0x4 - core index']
  #allocation1 [shape = 'u32[144,128]{1,0:T(1,128)}', space=vmem, size = 0x12000, scoped, tag = 'internal scratch']
  #allocation2 [shape = 'f32[8,8,128]{2,1,0:T(8,128)}', space=vmem, size = 0x8000, scoped, tag = 'scratch operand']
  #allocation3 [shape = 'f32[8,8,128]{2,1,0:T(8,128)}', space=vmem, size = 0x8000, scoped, tag = 'scratch operand']
  %s0 = inlined_call_operand.vmem [shape: f32[8,8,64], index: 0, kind: input, shape index: {}]
  %s1 = inlined_call_operand.vmem [shape: f32[64,128], index: 1, kind: input, shape index: {}]
  %s2 = inlined_call_operand.vmem [shape: f32[32,128], index: 2, kind: input, shape index: {}]
  %s3 = inlined_call_operand.vmem [shape: f32[1,128], index: 3, kind: input, shape index: {}]
  %s4 = inlined_call_operand.vmem [shape: f32[64,128], index: 4, kind: input, shape index: {}]
  %s5 = inlined_call_operand.vmem [shape: f32[32,128], index: 5, kind: input, shape index: {}]
  %s6 = inlined_call_operand.vmem [shape: f32[1,128], index: 6, kind: input, shape index: {}]
  %s7 = inlined_call_operand.vmem [shape: s32[8,1], index: 7, kind: input, shape index: {}]
  %s8 = inlined_call_operand.vmem [shape: f32[64,32], index: 8, kind: input, shape index: {}]
  %s9 = inlined_call_operand.vmem [shape: f32[1,32], index: 9, kind: input, shape index: {}]
  %s10 = inlined_call_operand.vmem [shape: f32[8,32], index: 10, kind: output, shape index: {}]
  %s11 = sld [smem:[#allocation0]]
  $region50: #{_lambda_.3} parent=0
    _
  %s13 = ssub.s32 1, %s11
  %s14 = scalar_select 0, %s13, %s11
  // Predicated region
  $region2: #{_lambda_.3} parent=0 // pred_check
    _
  $region3: #{_lambda_.3} parent=0 // pred_check_branch
    %16 = sbr.rel (0) target = $region5
  $region4: #{_lambda_.3} parent=0 // pred_region
    _
  $region5: #{_lambda_.3} parent=0 // pred_fallthru
    _
  // Predicated region
  $region6: #{_lambda_.3} parent=0 // pred_check
    _
  $region7: #{_lambda_.3} parent=0 // pred_check_branch
    %18 = sbr.rel (0) target = $region9
  $region8: #{_lambda_.3} parent=0 // pred_region
    _
  $region9: #{_lambda_.3} parent=0 // pred_fallthru
    _
  // Predicated region
  $region10: #{_lambda_.3} parent=0 // pred_check
    _
  $region11: #{_lambda_.3} parent=0 // pred_check_branch
    %20 = sbr.rel (0) target = $region13
  $region12: #{_lambda_.3} parent=0 // pred_region
    _
  $region13: #{_lambda_.3} parent=0 // pred_fallthru
    _
  // Predicated region
  $region14: #{_lambda_.3} parent=0 // pred_check
    _
  $region15: #{_lambda_.3} parent=0 // pred_check_branch
    %22 = sbr.rel (0) target = $region17
  $region16: #{_lambda_.3} parent=0 // pred_region
    _
  $region17: #{_lambda_.3} parent=0 // pred_fallthru
    _
  // Predicated region
  $region18: #{_lambda_.3} parent=0 // pred_check
    _
  $region19: #{_lambda_.3} parent=0 // pred_check_branch
    %24 = sbr.rel (0) target = $region21
  $region20: #{_lambda_.3} parent=0 // pred_region
    _
  $region21: #{_lambda_.3} parent=0 // pred_fallthru
    _
  // Predicated region
  $region22: #{_lambda_.3} parent=0 // pred_check
    _
  $region23: #{_lambda_.3} parent=0 // pred_check_branch
    %26 = sbr.rel (0) target = $region25
  $region24: #{_lambda_.3} parent=0 // pred_region
    _
  $region25: #{_lambda_.3} parent=0 // pred_fallthru
    _
  // Predicated region
  $region26: #{_lambda_.3} parent=0 // pred_check
    _
  $region27: #{_lambda_.3} parent=0 // pred_check_branch
    %28 = sbr.rel (0) target = $region29
  $region28: #{_lambda_.3} parent=0 // pred_region
    _
  $region29: #{_lambda_.3} parent=0 // pred_fallthru
    _
  // Predicated region
  $region30: #{_lambda_.3} parent=0 // pred_check
    _
  $region31: #{_lambda_.3} parent=0 // pred_check_branch
    %30 = sbr.rel (0) target = $region33
  $region32: #{_lambda_.3} parent=0 // pred_region
    _
  $region33: #{_lambda_.3} parent=0 // pred_fallthru
    _
  // Predicated region
  $region34: #{_lambda_.3} parent=0 // pred_check
    _
  $region35: #{_lambda_.3} parent=0 // pred_check_branch
    %32 = sbr.rel (0) target = $region37
  $region36: #{_lambda_.3} parent=0 // pred_region
    _
  $region37: #{_lambda_.3} parent=0 // pred_fallthru
    _
  // Predicated region
  $region38: #{_lambda_.3} parent=0 // pred_check
    _
  $region39: #{_lambda_.3} parent=0 // pred_check_branch
    %34 = sbr.rel (0) target = $region41
  $region40: #{_lambda_.3} parent=0 // pred_region
    _
  $region41: #{_lambda_.3} parent=0 // pred_fallthru
    _
  %v35 = vld [vmem:[%s0] sm:$0xff]
  %v36 = vld [vmem:[%s0 + $0x8] sm:$0xff]
  %v37 = vld [vmem:[%s0 + $0x10] sm:$0xff]
  %v38 = vld [vmem:[%s0 + $0x18] sm:$0xff]
  %v39 = vld [vmem:[%s0 + $0x20] sm:$0xff]
  %v40 = vld [vmem:[%s0 + $0x28] sm:$0xff]
  %v41 = vld [vmem:[%s0 + $0x30] sm:$0xff]
  %v42 = vld [vmem:[%s0 + $0x38] sm:$0xff]
  %v43 = vld [vmem:[%s1] sm:$0xff]
  %v44 = vld [vmem:[%s1 + $0x8] sm:$0xff]
  %v45 = vld [vmem:[%s1 + $0x10] sm:$0xff]
  %v46 = vld [vmem:[%s1 + $0x18] sm:$0xff]
  %v47 = vld [vmem:[%s1 + $0x20] sm:$0xff]
  %v48 = vld [vmem:[%s1 + $0x28] sm:$0xff]
  %v49 = vld [vmem:[%s1 + $0x30] sm:$0xff]
  %v50 = vld [vmem:[%s1 + $0x38] sm:$0xff]
  %v51 = vld [vmem:[%s3] sm:$0x1]
  %v53 = vlaneseq
  %v54 = vshrl.u32 %v53, 7
  %v55 = vsub.s32 0, %v54
  %v56 = vrot.slane %v51, %v55
  %vm58 = vcmask 523264
  %v60 = vsel %vm58, %v35, 0
  %v63 = vsel %vm58, %v36, 0
  %v66 = vsel %vm58, %v37, 0
  %v69 = vsel %vm58, %v38, 0
  %v72 = vsel %vm58, %v39, 0
  %v75 = vsel %vm58, %v40, 0
  %v78 = vsel %vm58, %v41, 0
  %v81 = vsel %vm58, %v42, 0
  %83 = vmatprep.subr.mxu0 0.0
  %84 = vmatpush1.msra.mxu0 0.0
  %85 = vmatprep.subr.mxu0 0.0
  %86 = vmatpush1.msra.mxu0 0.0
  %87 = vmatprep.subr.mxu0 0.0
  %88 = vmatpush1.msra.mxu0 0.0
  %89 = vmatprep.subr.mxu0 0.0
  %90 = vmatpush1.msra.mxu0 0.0
  %91 = vmatprep.subr.mxu0 0.0
  %92 = vmatpush1.msra.mxu0 0.0
  %93 = vmatprep.subr.mxu0 0.0
  %94 = vmatpush1.msra.mxu0 0.0
  %95 = vmatprep.subr.mxu0 0.0
  %96 = vmatpush1.msra.mxu0 0.0
  %97 = vmatprep.subr.mxu0 0.0
  %98 = vmatpush1.msra.mxu0 0.0
  %99 = vmatprep.subr.mxu0 0.0
  %100 = vmatpush1.msra.mxu0 %v50
  %101 = vmatprep.subr.mxu0 0.0
  %102 = vmatpush1.msra.mxu0 %v49
  %103 = vmatprep.subr.mxu0 0.0
  %104 = vmatpush1.msra.mxu0 %v48
  %105 = vmatprep.subr.mxu0 0.0
  %106 = vmatpush1.msra.mxu0 %v47
  %107 = vmatprep.subr.mxu0 0.0
  %108 = vmatpush1.msra.mxu0 %v46
  %109 = vmatprep.subr.mxu0 0.0
  %110 = vmatpush1.msra.mxu0 %v45
  %111 = vmatprep.subr.mxu0 0.0
  %112 = vmatpush1.msra.mxu0 %v44
  %113 = vmatprep.subr.mxu0 0.0
  %114 = vmatpush1.msra.mxu0 %v43
  %115 = vmatprep.subr.mxu0 0.0
  %116 = vmatpush2.msra.mxu0 0.0
  %117 = vmatprep.subr.mxu0 0.0
  %118 = vmatpush2.msra.mxu0 0.0
  %119 = vmatprep.subr.mxu0 0.0
  %120 = vmatpush2.msra.mxu0 0.0
  %121 = vmatprep.subr.mxu0 0.0
  %122 = vmatpush2.msra.mxu0 0.0
  %123 = vmatprep.subr.mxu0 0.0
  %124 = vmatpush2.msra.mxu0 0.0
  %125 = vmatprep.subr.mxu0 0.0
  %126 = vmatpush2.msra.mxu0 0.0
  %127 = vmatprep.subr.mxu0 0.0
  %128 = vmatpush2.msra.mxu0 0.0
  %129 = vmatprep.subr.mxu0 0.0
  %130 = vmatpush2.msra.mxu0 0.0
  %131 = vmatprep.subr.mxu0 0.0
  %132 = vmatpush2.msra.mxu0 0.0
  %133 = vmatprep.subr.mxu0 0.0
  %134 = vmatpush2.msra.mxu0 0.0
  %135 = vmatprep.subr.mxu0 0.0
  %136 = vmatpush2.msra.mxu0 0.0
  %137 = vmatprep.subr.mxu0 0.0
  %138 = vmatpush2.msra.mxu0 0.0
  %139 = vmatprep.subr.mxu0 0.0
  %140 = vmatpush2.msra.mxu0 0.0
  %141 = vmatprep.subr.mxu0 0.0
  %142 = vmatpush2.msra.mxu0 0.0
  %143 = vmatprep.subr.mxu0 0.0
  %144 = vmatpush2.msra.mxu0 0.0
  %145 = vmatprep.subr.mxu0 0.0
  %146 = vmatpush2.msra.mxu0 0.0
  %147 = vmatprep.mubr.f32.mxu0 0.0
  %148 = vmatmul.mubr.f32.gmra.mxu0 %v60
  %v149 = vpop.f32.mrf.mxu0
  %v150 = vadd.f32 %v56, %v149
  %v151 = vpop.f32.mrf.mxu0
  %152 = vmatprep.mubr.f32.mxu0 0.0
  %153 = vmatmul.mubr.f32.gmra.mxu0 %v63
  %v154 = vpop.f32.mrf.mxu0
  %v155 = vadd.f32 %v56, %v154
  %v156 = vpop.f32.mrf.mxu0
  %157 = vmatprep.mubr.f32.mxu0 0.0
  %158 = vmatmul.mubr.f32.gmra.mxu0 %v66
  %v159 = vpop.f32.mrf.mxu0
  %v160 = vadd.f32 %v56, %v159
  %v161 = vpop.f32.mrf.mxu0
  %162 = vmatprep.mubr.f32.mxu0 0.0
  %163 = vmatmul.mubr.f32.gmra.mxu0 %v69
  %v164 = vpop.f32.mrf.mxu0
  %v165 = vadd.f32 %v56, %v164
  %v166 = vpop.f32.mrf.mxu0
  %167 = vmatprep.mubr.f32.mxu0 0.0
  %168 = vmatmul.mubr.f32.gmra.mxu0 %v72
  %v169 = vpop.f32.mrf.mxu0
  %v170 = vadd.f32 %v56, %v169
  %v171 = vpop.f32.mrf.mxu0
  %172 = vmatprep.mubr.f32.mxu0 0.0
  %173 = vmatmul.mubr.f32.gmra.mxu0 %v75
  %v174 = vpop.f32.mrf.mxu0
  %v175 = vadd.f32 %v56, %v174
  %v176 = vpop.f32.mrf.mxu0
  %177 = vmatprep.mubr.f32.mxu0 0.0
  %178 = vmatmul.mubr.f32.gmra.mxu0 %v78
  %v179 = vpop.f32.mrf.mxu0
  %v180 = vadd.f32 %v56, %v179
  %v181 = vpop.f32.mrf.mxu0
  %182 = vmatprep.mubr.f32.mxu0 0.0
  %183 = vmatmul.mubr.f32.gmra.mxu0 %v81
  %v184 = vpop.f32.mrf.mxu0
  %v185 = vadd.f32 %v56, %v184
  %v186 = vpop.f32.mrf.mxu0
  %187 = vdwg.mxu0
  %188 = vst [vmem:[#allocation2] sm:$0xff] %v150
  %189 = vst [vmem:[#allocation2 + $0x8] sm:$0xff] %v155
  %190 = vst [vmem:[#allocation2 + $0x10] sm:$0xff] %v160
  %191 = vst [vmem:[#allocation2 + $0x18] sm:$0xff] %v165
  %192 = vst [vmem:[#allocation2 + $0x20] sm:$0xff] %v170
  %193 = vst [vmem:[#allocation2 + $0x28] sm:$0xff] %v175
  %194 = vst [vmem:[#allocation2 + $0x30] sm:$0xff] %v180
  %195 = vst [vmem:[#allocation2 + $0x38] sm:$0xff] %v185
  %v196 = vld [vmem:[%s4] sm:$0xff]
  %v197 = vld [vmem:[%s4 + $0x8] sm:$0xff]
  %v198 = vld [vmem:[%s4 + $0x10] sm:$0xff]
  %v199 = vld [vmem:[%s4 + $0x18] sm:$0xff]
  %v200 = vld [vmem:[%s4 + $0x20] sm:$0xff]
  %v201 = vld [vmem:[%s4 + $0x28] sm:$0xff]
  %v202 = vld [vmem:[%s4 + $0x30] sm:$0xff]
  %v203 = vld [vmem:[%s4 + $0x38] sm:$0xff]
  %v204 = vld [vmem:[%s6] sm:$0x1]
  %v206 = vlaneseq
  %v207 = vshrl.u32 %v206, 7
  %v208 = vsub.s32 0, %v207
  %v209 = vrot.slane %v204, %v208
  %211 = vmatprep.subr.mxu0 0.0
  %212 = vmatpush1.msra.mxu0 0.0
  %213 = vmatprep.subr.mxu0 0.0
  %214 = vmatpush1.msra.mxu0 0.0
  %215 = vmatprep.subr.mxu0 0.0
  %216 = vmatpush1.msra.mxu0 0.0
  %217 = vmatprep.subr.mxu0 0.0
  %218 = vmatpush1.msra.mxu0 0.0
  %219 = vmatprep.subr.mxu0 0.0
  %220 = vmatpush1.msra.mxu0 0.0
  %221 = vmatprep.subr.mxu0 0.0
  %222 = vmatpush1.msra.mxu0 0.0
  %223 = vmatprep.subr.mxu0 0.0
  %224 = vmatpush1.msra.mxu0 0.0
  %225 = vmatprep.subr.mxu0 0.0
  %226 = vmatpush1.msra.mxu0 0.0
  %227 = vmatprep.subr.mxu0 0.0
  %228 = vmatpush1.msra.mxu0 %v203
  %229 = vmatprep.subr.mxu0 0.0
  %230 = vmatpush1.msra.mxu0 %v202
  %231 = vmatprep.subr.mxu0 0.0
  %232 = vmatpush1.msra.mxu0 %v201
  %233 = vmatprep.subr.mxu0 0.0
  %234 = vmatpush1.msra.mxu0 %v200
  %235 = vmatprep.subr.mxu0 0.0
  %236 = vmatpush1.msra.mxu0 %v199
  %237 = vmatprep.subr.mxu0 0.0
  %238 = vmatpush1.msra.mxu0 %v198
  %239 = vmatprep.subr.mxu0 0.0
  %240 = vmatpush1.msra.mxu0 %v197
  %241 = vmatprep.subr.mxu0 0.0
  %242 = vmatpush1.msra.mxu0 %v196
  %243 = vmatprep.subr.mxu0 0.0
  %244 = vmatpush2.msra.mxu0 0.0
  %245 = vmatprep.subr.mxu0 0.0
  %246 = vmatpush2.msra.mxu0 0.0
  %247 = vmatprep.subr.mxu0 0.0
  %248 = vmatpush2.msra.mxu0 0.0
  %249 = vmatprep.subr.mxu0 0.0
  %250 = vmatpush2.msra.mxu0 0.0
  %251 = vmatprep.subr.mxu0 0.0
  %252 = vmatpush2.msra.mxu0 0.0
  %253 = vmatprep.subr.mxu0 0.0
  %254 = vmatpush2.msra.mxu0 0.0
  %255 = vmatprep.subr.mxu0 0.0
  %256 = vmatpush2.msra.mxu0 0.0
  %257 = vmatprep.subr.mxu0 0.0
  %258 = vmatpush2.msra.mxu0 0.0
  %259 = vmatprep.subr.mxu0 0.0
  %260 = vmatpush2.msra.mxu0 0.0
  %261 = vmatprep.subr.mxu0 0.0
  %262 = vmatpush2.msra.mxu0 0.0
  %263 = vmatprep.subr.mxu0 0.0
  %264 = vmatpush2.msra.mxu0 0.0
  %265 = vmatprep.subr.mxu0 0.0
  %266 = vmatpush2.msra.mxu0 0.0
  %267 = vmatprep.subr.mxu0 0.0
  %268 = vmatpush2.msra.mxu0 0.0
  %269 = vmatprep.subr.mxu0 0.0
  %270 = vmatpush2.msra.mxu0 0.0
  %271 = vmatprep.subr.mxu0 0.0
  %272 = vmatpush2.msra.mxu0 0.0
  %273 = vmatprep.subr.mxu0 0.0
  %274 = vmatpush2.msra.mxu0 0.0
  %275 = vmatprep.mubr.f32.mxu0 0.0
  %276 = vmatmul.mubr.f32.gmra.mxu0 %v60
  %v277 = vpop.f32.mrf.mxu0
  %v278 = vadd.f32 %v209, %v277
  %v279 = vpop.f32.mrf.mxu0
  %280 = vmatprep.mubr.f32.mxu0 0.0
  %281 = vmatmul.mubr.f32.gmra.mxu0 %v63
  %v282 = vpop.f32.mrf.mxu0
  %v283 = vadd.f32 %v209, %v282
  %v284 = vpop.f32.mrf.mxu0
  %285 = vmatprep.mubr.f32.mxu0 0.0
  %286 = vmatmul.mubr.f32.gmra.mxu0 %v66
  %v287 = vpop.f32.mrf.mxu0
  %v288 = vadd.f32 %v209, %v287
  %v289 = vpop.f32.mrf.mxu0
  %290 = vmatprep.mubr.f32.mxu0 0.0
  %291 = vmatmul.mubr.f32.gmra.mxu0 %v69
  %v292 = vpop.f32.mrf.mxu0
  %v293 = vadd.f32 %v209, %v292
  %v294 = vpop.f32.mrf.mxu0
  %295 = vmatprep.mubr.f32.mxu0 0.0
  %296 = vmatmul.mubr.f32.gmra.mxu0 %v72
  %v297 = vpop.f32.mrf.mxu0
  %v298 = vadd.f32 %v209, %v297
  %v299 = vpop.f32.mrf.mxu0
  %300 = vmatprep.mubr.f32.mxu0 0.0
  %301 = vmatmul.mubr.f32.gmra.mxu0 %v75
  %v302 = vpop.f32.mrf.mxu0
  %v303 = vadd.f32 %v209, %v302
  %v304 = vpop.f32.mrf.mxu0
  %305 = vmatprep.mubr.f32.mxu0 0.0
  %306 = vmatmul.mubr.f32.gmra.mxu0 %v78
  %v307 = vpop.f32.mrf.mxu0
  %v308 = vadd.f32 %v209, %v307
  %v309 = vpop.f32.mrf.mxu0
  %310 = vmatprep.mubr.f32.mxu0 0.0
  %311 = vmatmul.mubr.f32.gmra.mxu0 %v81
  %v312 = vpop.f32.mrf.mxu0
  %v313 = vadd.f32 %v209, %v312
  %v314 = vpop.f32.mrf.mxu0
  %315 = vdwg.mxu0
  %316 = vst [vmem:[#allocation3] sm:$0xff] %v278
  %317 = vst [vmem:[#allocation3 + $0x8] sm:$0xff] %v283
  %318 = vst [vmem:[#allocation3 + $0x10] sm:$0xff] %v288
  %319 = vst [vmem:[#allocation3 + $0x18] sm:$0xff] %v293
  %320 = vst [vmem:[#allocation3 + $0x20] sm:$0xff] %v298
  %321 = vst [vmem:[#allocation3 + $0x28] sm:$0xff] %v303
  %322 = vst [vmem:[#allocation3 + $0x30] sm:$0xff] %v308
  %323 = vst [vmem:[#allocation3 + $0x38] sm:$0xff] %v313
  %v324 = vld [vmem:[%s2] sm:$0xff]
  %v325 = vld [vmem:[%s2 + $0x8] sm:$0xff]
  %v326 = vld [vmem:[%s2 + $0x10] sm:$0xff]
  %v327 = vld [vmem:[%s2 + $0x18] sm:$0xff]
  %v328 = vld [vmem:[%s5] sm:$0xff]
  %v329 = vld [vmem:[%s5 + $0x8] sm:$0xff]
  %v330 = vld [vmem:[%s5 + $0x10] sm:$0xff]
  %v331 = vld [vmem:[%s5 + $0x18] sm:$0xff]
  %v332 = vld [vmem:[%s7] sm:$0xff]
  %v333 = vlaneseq
  %v334 = vand.u32 %v333, 127
  %vm335 = vcmp.ge.s32.totalorder %v334, 64
  %vm336 = vcmp.lt.s32.totalorder %v334, 96
  %vm337 = vmand %vm335, %vm336
  %v338 = vld [vmem:[#allocation2] sm:$0xff]
  %vm339 = vcmask 261120
  %v341 = vsel %vm339, 0.0, 0
  %343 = vmatprep.subr.mxu0 0.0
  %344 = vmatpush1.msra.mxu0 0.0
  %345 = vmatprep.subr.mxu0 0.0
  %346 = vmatpush1.msra.mxu0 0.0
  %347 = vmatprep.subr.mxu0 0.0
  %348 = vmatpush1.msra.mxu0 0.0
  %349 = vmatprep.subr.mxu0 0.0
  %350 = vmatpush1.msra.mxu0 0.0
  %351 = vmatprep.subr.mxu0 0.0
  %352 = vmatpush1.msra.mxu0 0.0
  %353 = vmatprep.subr.mxu0 0.0
  %354 = vmatpush1.msra.mxu0 0.0
  %355 = vmatprep.subr.mxu0 0.0
  %356 = vmatpush1.msra.mxu0 0.0
  %357 = vmatprep.subr.mxu0 0.0
  %358 = vmatpush1.msra.mxu0 0.0
  %359 = vmatprep.subr.mxu0 0.0
  %360 = vmatpush1.msra.mxu0 0.0
  %361 = vmatprep.subr.mxu0 0.0
  %362 = vmatpush1.msra.mxu0 0.0
  %363 = vmatprep.subr.mxu0 0.0
  %364 = vmatpush1.msra.mxu0 0.0
  %365 = vmatprep.subr.mxu0 0.0
  %366 = vmatpush1.msra.mxu0 0.0
  %367 = vmatprep.subr.mxu0 0.0
  %368 = vmatpush1.msra.mxu0 %v327
  %369 = vmatprep.subr.mxu0 0.0
  %370 = vmatpush1.msra.mxu0 %v326
  %371 = vmatprep.subr.mxu0 0.0
  %372 = vmatpush1.msra.mxu0 %v325
  %373 = vmatprep.subr.mxu0 0.0
  %374 = vmatpush1.msra.mxu0 %v324
  %375 = vmatprep.subr.mxu0 0.0
  %376 = vmatpush2.msra.mxu0 0.0
  %377 = vmatprep.subr.mxu0 0.0
  %378 = vmatpush2.msra.mxu0 0.0
  %379 = vmatprep.subr.mxu0 0.0
  %380 = vmatpush2.msra.mxu0 0.0
  %381 = vmatprep.subr.mxu0 0.0
  %382 = vmatpush2.msra.mxu0 0.0
  %383 = vmatprep.subr.mxu0 0.0
  %384 = vmatpush2.msra.mxu0 0.0
  %385 = vmatprep.subr.mxu0 0.0
  %386 = vmatpush2.msra.mxu0 0.0
  %387 = vmatprep.subr.mxu0 0.0
  %388 = vmatpush2.msra.mxu0 0.0
  %389 = vmatprep.subr.mxu0 0.0
  %390 = vmatpush2.msra.mxu0 0.0
  %391 = vmatprep.subr.mxu0 0.0
  %392 = vmatpush2.msra.mxu0 0.0
  %393 = vmatprep.subr.mxu0 0.0
  %394 = vmatpush2.msra.mxu0 0.0
  %395 = vmatprep.subr.mxu0 0.0
  %396 = vmatpush2.msra.mxu0 0.0
  %397 = vmatprep.subr.mxu0 0.0
  %398 = vmatpush2.msra.mxu0 0.0
  %399 = vmatprep.subr.mxu0 0.0
  %400 = vmatpush2.msra.mxu0 0.0
  %401 = vmatprep.subr.mxu0 0.0
  %402 = vmatpush2.msra.mxu0 0.0
  %403 = vmatprep.subr.mxu0 0.0
  %404 = vmatpush2.msra.mxu0 0.0
  %405 = vmatprep.subr.mxu0 0.0
  %406 = vmatpush2.msra.mxu0 0.0
  %407 = vmatprep.mubr.f32.mxu0 0.0
  %408 = vmatmul.mubr.f32.gmra.mxu0 %v341
  %v409 = vpop.f32.mrf.mxu0
  %v410 = vadd.f32 0.0, %v409
  %v411 = vpop.f32.mrf.mxu0
  %412 = vdwg.mxu0
  %v413 = vadd.f32 %v338, %v410
  %v414 = vtanh.pop %v413
  %v415 = vxor.u32 %v413, 2147483648
  %v416 = vmul.f32 %v415, 1.442695
  %v417 = vpow.pop %v416
  %v418 = vadd.f32 %v417, 1.0
  %v419 = vrcp.pop %v418
  %v420 = vmul.f32 1.0, %v419
  %v421 = vsel %vm337, %v414, %v420
  %v422 = vmul.f32 %v421, 0.0
  %424 = vrot.lane.b32.xlu0 %v421, 64
  %v425 = vpop.permute.xlu0 %424
  %v427 = vmul.f32 %v421, %v425
  %429 = vrot.lane.b32.xlu0 %v427, 32
  %v430 = vpop.permute.xlu0 %429
  %v432 = vadd.f32 %v422, %v430
  %v433 = vtanh.pop %v432
  %435 = vrot.lane.b32.xlu0 %v433, 64
  %v436 = vpop.permute.xlu0 %435
  %v438 = vmul.f32 %v421, %v436
  %vm439 = vcmp.gt.s32.totalorder %v332, 0
  %v440 = vsel %vm439, 1, 0
  %441 = vset.pattern.permute.xlu0 0
  %442 = vperm.xlu0 %441, %v440
  %v443 = vpop.permute.xlu0 %442
  %vm444 = vcmp.eq.s32.totalorder %v443, 1
  %v445 = vsel %vm444, %v438, 0.0
  %v446 = vsel %vm444, %v432, 0.0
  %s447 = scalar_lea.vmem [#allocation3], 56
  %v448 = vld [vmem:[%s447] sm:$0xff]
  %449 = vmatprep.subr.mxu0 0.0
  %450 = vmatpush1.msra.mxu0 0.0
  %451 = vmatprep.subr.mxu0 0.0
  %452 = vmatpush1.msra.mxu0 0.0
  %453 = vmatprep.subr.mxu0 0.0
  %454 = vmatpush1.msra.mxu0 0.0
  %455 = vmatprep.subr.mxu0 0.0
  %456 = vmatpush1.msra.mxu0 0.0
  %457 = vmatprep.subr.mxu0 0.0
  %458 = vmatpush1.msra.mxu0 0.0
  %459 = vmatprep.subr.mxu0 0.0
  %460 = vmatpush1.msra.mxu0 0.0
  %461 = vmatprep.subr.mxu0 0.0
  %462 = vmatpush1.msra.mxu0 0.0
  %463 = vmatprep.subr.mxu0 0.0
  %464 = vmatpush1.msra.mxu0 0.0
  %465 = vmatprep.subr.mxu0 0.0
  %466 = vmatpush1.msra.mxu0 0.0
  %467 = vmatprep.subr.mxu0 0.0
  %468 = vmatpush1.msra.mxu0 0.0
  %469 = vmatprep.subr.mxu0 0.0
  %470 = vmatpush1.msra.mxu0 0.0
  %471 = vmatprep.subr.mxu0 0.0
  %472 = vmatpush1.msra.mxu0 0.0
  %473 = vmatprep.subr.mxu0 0.0
  %474 = vmatpush1.msra.mxu0 %v331
  %475 = vmatprep.subr.mxu0 0.0
  %476 = vmatpush1.msra.mxu0 %v330
  %477 = vmatprep.subr.mxu0 0.0
  %478 = vmatpush1.msra.mxu0 %v329
  %479 = vmatprep.subr.mxu0 0.0
  %480 = vmatpush1.msra.mxu0 %v328
  %481 = vmatprep.subr.mxu0 0.0
  %482 = vmatpush2.msra.mxu0 0.0
  %483 = vmatprep.subr.mxu0 0.0
  %484 = vmatpush2.msra.mxu0 0.0
  %485 = vmatprep.subr.mxu0 0.0
  %486 = vmatpush2.msra.mxu0 0.0
  %487 = vmatprep.subr.mxu0 0.0
  %488 = vmatpush2.msra.mxu0 0.0
  %489 = vmatprep.subr.mxu0 0.0
  %490 = vmatpush2.msra.mxu0 0.0
  %491 = vmatprep.subr.mxu0 0.0
  %492 = vmatpush2.msra.mxu0 0.0
  %493 = vmatprep.subr.mxu0 0.0
  %494 = vmatpush2.msra.mxu0 0.0
  %495 = vmatprep.subr.mxu0 0.0
  %496 = vmatpush2.msra.mxu0 0.0
  %497 = vmatprep.subr.mxu0 0.0
  %498 = vmatpush2.msra.mxu0 0.0
  %499 = vmatprep.subr.mxu0 0.0
  %500 = vmatpush2.msra.mxu0 0.0
  %501 = vmatprep.subr.mxu0 0.0
  %502 = vmatpush2.msra.mxu0 0.0
  %503 = vmatprep.subr.mxu0 0.0
  %504 = vmatpush2.msra.mxu0 0.0
  %505 = vmatprep.subr.mxu0 0.0
  %506 = vmatpush2.msra.mxu0 0.0
  %507 = vmatprep.subr.mxu0 0.0
  %508 = vmatpush2.msra.mxu0 0.0
  %509 = vmatprep.subr.mxu0 0.0
  %510 = vmatpush2.msra.mxu0 0.0
  %511 = vmatprep.subr.mxu0 0.0
  %512 = vmatpush2.msra.mxu0 0.0
  %513 = vmatprep.mubr.f32.mxu0 0.0
  %514 = vmatmul.mubr.f32.gmra.mxu0 %v341
  %v515 = vpop.f32.mrf.mxu0
  %v516 = vadd.f32 0.0, %v515
  %v517 = vpop.f32.mrf.mxu0
  %518 = vdwg.mxu0
  %v519 = vadd.f32 %v448, %v516
  %v520 = vtanh.pop %v519
  %v521 = vxor.u32 %v519, 2147483648
  %v522 = vmul.f32 %v521, 1.442695
  %v523 = vpow.pop %v522
  %v524 = vadd.f32 %v523, 1.0
  %v525 = vrcp.pop %v524
  %v526 = vmul.f32 1.0, %v525
  %v527 = vsel %vm337, %v520, %v526
  %v528 = vmul.f32 %v527, 0.0
  %530 = vrot.lane.b32.xlu0 %v527, 64
  %v531 = vpop.permute.xlu0 %530
  %v533 = vmul.f32 %v527, %v531
  %535 = vrot.lane.b32.xlu0 %v533, 32
  %v536 = vpop.permute.xlu0 %535
  %v538 = vadd.f32 %v528, %v536
  %v539 = vtanh.pop %v538
  %541 = vrot.lane.b32.xlu0 %v539, 64
  %v542 = vpop.permute.xlu0 %541
  %v544 = vmul.f32 %v527, %v542
  %vm545 = vcmp.gt.s32.totalorder %v332, 7
  %v546 = vsel %vm545, 1, 0
  %547 = vset.pattern.permute.xlu0 0
  %548 = vperm.xlu0 %547, %v546
  %v549 = vpop.permute.xlu0 %548
  %vm550 = vcmp.eq.s32.totalorder %v549, 1
  %v551 = vsel %vm550, %v544, 0.0
  %v552 = vsel %vm550, %v538, 0.0
  %s553 = scalar_lea.vmem [#allocation2], 8
  %v554 = vld [vmem:[%s553] sm:$0xff]
  %556 = vrot.lane.b32.xlu0 %v445, 32
  %v557 = vpop.permute.xlu0 %556
  %v558 = vsel %vm339, %v557, 0
  %560 = vmatprep.subr.mxu0 0.0
  %561 = vmatpush1.msra.mxu0 0.0
  %562 = vmatprep.subr.mxu0 0.0
  %563 = vmatpush1.msra.mxu0 0.0
  %564 = vmatprep.subr.mxu0 0.0
  %565 = vmatpush1.msra.mxu0 0.0
  %566 = vmatprep.subr.mxu0 0.0
  %567 = vmatpush1.msra.mxu0 0.0
  %568 = vmatprep.subr.mxu0 0.0
  %569 = vmatpush1.msra.mxu0 0.0
  %570 = vmatprep.subr.mxu0 0.0
  %571 = vmatpush1.msra.mxu0 0.0
  %572 = vmatprep.subr.mxu0 0.0
  %573 = vmatpush1.msra.mxu0 0.0
  %574 = vmatprep.subr.mxu0 0.0
  %575 = vmatpush1.msra.mxu0 0.0
  %576 = vmatprep.subr.mxu0 0.0
  %577 = vmatpush1.msra.mxu0 0.0
  %578 = vmatprep.subr.mxu0 0.0
  %579 = vmatpush1.msra.mxu0 0.0
  %580 = vmatprep.subr.mxu0 0.0
  %581 = vmatpush1.msra.mxu0 0.0
  %582 = vmatprep.subr.mxu0 0.0
  %583 = vmatpush1.msra.mxu0 0.0
  %584 = vmatprep.subr.mxu0 0.0
  %585 = vmatpush1.msra.mxu0 %v327
  %586 = vmatprep.subr.mxu0 0.0
  %587 = vmatpush1.msra.mxu0 %v326
  %588 = vmatprep.subr.mxu0 0.0
  %589 = vmatpush1.msra.mxu0 %v325
  %590 = vmatprep.subr.mxu0 0.0
  %591 = vmatpush1.msra.mxu0 %v324
  %592 = vmatprep.subr.mxu0 0.0
  %593 = vmatpush2.msra.mxu0 0.0
  %594 = vmatprep.subr.mxu0 0.0
  %595 = vmatpush2.msra.mxu0 0.0
  %596 = vmatprep.subr.mxu0 0.0
  %597 = vmatpush2.msra.mxu0 0.0
  %598 = vmatprep.subr.mxu0 0.0
  %599 = vmatpush2.msra.mxu0 0.0
  %600 = vmatprep.subr.mxu0 0.0
  %601 = vmatpush2.msra.mxu0 0.0
  %602 = vmatprep.subr.mxu0 0.0
  %603 = vmatpush2.msra.mxu0 0.0
  %604 = vmatprep.subr.mxu0 0.0
  %605 = vmatpush2.msra.mxu0 0.0
  %606 = vmatprep.subr.mxu0 0.0
  %607 = vmatpush2.msra.mxu0 0.0
  %608 = vmatprep.subr.mxu0 0.0
  %609 = vmatpush2.msra.mxu0 0.0
  %610 = vmatprep.subr.mxu0 0.0
  %611 = vmatpush2.msra.mxu0 0.0
  %612 = vmatprep.subr.mxu0 0.0
  %613 = vmatpush2.msra.mxu0 0.0
  %614 = vmatprep.subr.mxu0 0.0
  %615 = vmatpush2.msra.mxu0 0.0
  %616 = vmatprep.subr.mxu0 0.0
  %617 = vmatpush2.msra.mxu0 0.0
  %618 = vmatprep.subr.mxu0 0.0
  %619 = vmatpush2.msra.mxu0 0.0
  %620 = vmatprep.subr.mxu0 0.0
  %621 = vmatpush2.msra.mxu0 0.0
  %622 = vmatprep.subr.mxu0 0.0
  %623 = vmatpush2.msra.mxu0 0.0
  %624 = vmatprep.mubr.f32.mxu0 0.0
  %625 = vmatmul.mubr.f32.gmra.mxu0 %v558
  %v626 = vpop.f32.mrf.mxu0
  %v627 = vadd.f32 0.0, %v626
  %v628 = vpop.f32.mrf.mxu0
  %629 = vdwg.mxu0
  %v630 = vadd.f32 %v554, %v627
  %v631 = vtanh.pop %v630
  %v632 = vxor.u32 %v630, 2147483648
  %v633 = vmul.f32 %v632, 1.442695
  %v634 = vpow.pop %v633
  %v635 = vadd.f32 %v634, 1.0
  %v636 = vrcp.pop %v635
  %v637 = vmul.f32 1.0, %v636
  %v638 = vsel %vm337, %v631, %v637
  %v639 = vmul.f32 %v638, %v446
  %641 = vrot.lane.b32.xlu0 %v638, 64
  %v642 = vpop.permute.xlu0 %641
  %v644 = vmul.f32 %v638, %v642
  %646 = vrot.lane.b32.xlu0 %v644, 32
  %v647 = vpop.permute.xlu0 %646
  %v649 = vadd.f32 %v639, %v647
  %v650 = vtanh.pop %v649
  %652 = vrot.lane.b32.xlu0 %v650, 64
  %v653 = vpop.permute.xlu0 %652
  %v655 = vmul.f32 %v638, %v653
  %vm656 = vcmp.gt.s32.totalorder %v332, 1
  %v657 = vsel %vm656, 1, 0
  %658 = vset.pattern.permute.xlu0 0
  %659 = vperm.xlu0 %658, %v657
  %v660 = vpop.permute.xlu0 %659
  %vm661 = vcmp.eq.s32.totalorder %v660, 1
  %v662 = vsel %vm661, %v655, %v445
  %v663 = vsel %vm661, %v649, %v446
  %s664 = scalar_lea.vmem [#allocation3], 48
  %v665 = vld [vmem:[%s664] sm:$0xff]
  %667 = vrot.lane.b32.xlu0 %v551, 32
  %v668 = vpop.permute.xlu0 %667
  %v669 = vsel %vm339, %v668, 0
  %671 = vmatprep.subr.mxu0 0.0
  %672 = vmatpush1.msra.mxu0 0.0
  %673 = vmatprep.subr.mxu0 0.0
  %674 = vmatpush1.msra.mxu0 0.0
  %675 = vmatprep.subr.mxu0 0.0
  %676 = vmatpush1.msra.mxu0 0.0
  %677 = vmatprep.subr.mxu0 0.0
  %678 = vmatpush1.msra.mxu0 0.0
  %679 = vmatprep.subr.mxu0 0.0
  %680 = vmatpush1.msra.mxu0 0.0
  %681 = vmatprep.subr.mxu0 0.0
  %682 = vmatpush1.msra.mxu0 0.0
  %683 = vmatprep.subr.mxu0 0.0
  %684 = vmatpush1.msra.mxu0 0.0
  %685 = vmatprep.subr.mxu0 0.0
  %686 = vmatpush1.msra.mxu0 0.0
  %687 = vmatprep.subr.mxu0 0.0
  %688 = vmatpush1.msra.mxu0 0.0
  %689 = vmatprep.subr.mxu0 0.0
  %690 = vmatpush1.msra.mxu0 0.0
  %691 = vmatprep.subr.mxu0 0.0
  %692 = vmatpush1.msra.mxu0 0.0
  %693 = vmatprep.subr.mxu0 0.0
  %694 = vmatpush1.msra.mxu0 0.0
  %695 = vmatprep.subr.mxu0 0.0
  %696 = vmatpush1.msra.mxu0 %v331
  %697 = vmatprep.subr.mxu0 0.0
  %698 = vmatpush1.msra.mxu0 %v330
  %699 = vmatprep.subr.mxu0 0.0
  %700 = vmatpush1.msra.mxu0 %v329
  %701 = vmatprep.subr.mxu0 0.0
  %702 = vmatpush1.msra.mxu0 %v328
  %703 = vmatprep.subr.mxu0 0.0
  %704 = vmatpush2.msra.mxu0 0.0
  %705 = vmatprep.subr.mxu0 0.0
  %706 = vmatpush2.msra.mxu0 0.0
  %707 = vmatprep.subr.mxu0 0.0
  %708 = vmatpush2.msra.mxu0 0.0
  %709 = vmatprep.subr.mxu0 0.0
  %710 = vmatpush2.msra.mxu0 0.0
  %711 = vmatprep.subr.mxu0 0.0
  %712 = vmatpush2.msra.mxu0 0.0
  %713 = vmatprep.subr.mxu0 0.0
  %714 = vmatpush2.msra.mxu0 0.0
  %715 = vmatprep.subr.mxu0 0.0
  %716 = vmatpush2.msra.mxu0 0.0
  %717 = vmatprep.subr.mxu0 0.0
  %718 = vmatpush2.msra.mxu0 0.0
  %719 = vmatprep.subr.mxu0 0.0
  %720 = vmatpush2.msra.mxu0 0.0
  %721 = vmatprep.subr.mxu0 0.0
  %722 = vmatpush2.msra.mxu0 0.0
  %723 = vmatprep.subr.mxu0 0.0
  %724 = vmatpush2.msra.mxu0 0.0
  %725 = vmatprep.subr.mxu0 0.0
  %726 = vmatpush2.msra.mxu0 0.0
  %727 = vmatprep.subr.mxu0 0.0
  %728 = vmatpush2.msra.mxu0 0.0
  %729 = vmatprep.subr.mxu0 0.0
  %730 = vmatpush2.msra.mxu0 0.0
  %731 = vmatprep.subr.mxu0 0.0
  %732 = vmatpush2.msra.mxu0 0.0
  %733 = vmatprep.subr.mxu0 0.0
  %734 = vmatpush2.msra.mxu0 0.0
  %735 = vmatprep.mubr.f32.mxu0 0.0
  %736 = vmatmul.mubr.f32.gmra.mxu0 %v669
  %v737 = vpop.f32.mrf.mxu0
  %v738 = vadd.f32 0.0, %v737
  %v739 = vpop.f32.mrf.mxu0
  %740 = vdwg.mxu0
  %v741 = vadd.f32 %v665, %v738
  %v742 = vtanh.pop %v741
  %v743 = vxor.u32 %v741, 2147483648
  %v744 = vmul.f32 %v743, 1.442695
  %v745 = vpow.pop %v744
  %v746 = vadd.f32 %v745, 1.0
  %v747 = vrcp.pop %v746
  %v748 = vmul.f32 1.0, %v747
  %v749 = vsel %vm337, %v742, %v748
  %v750 = vmul.f32 %v749, %v552
  %752 = vrot.lane.b32.xlu0 %v749, 64
  %v753 = vpop.permute.xlu0 %752
  %v755 = vmul.f32 %v749, %v753
  %757 = vrot.lane.b32.xlu0 %v755, 32
  %v758 = vpop.permute.xlu0 %757
  %v760 = vadd.f32 %v750, %v758
  %v761 = vtanh.pop %v760
  %763 = vrot.lane.b32.xlu0 %v761, 64
  %v764 = vpop.permute.xlu0 %763
  %v766 = vmul.f32 %v749, %v764
  %vm767 = vcmp.gt.s32.totalorder %v332, 6
  %v768 = vsel %vm767, 1, 0
  %769 = vset.pattern.permute.xlu0 0
  %770 = vperm.xlu0 %769, %v768
  %v771 = vpop.permute.xlu0 %770
  %vm772 = vcmp.eq.s32.totalorder %v771, 1
  %v773 = vsel %vm772, %v766, %v551
  %v774 = vsel %vm772, %v760, %v552
  %s775 = scalar_lea.vmem [#allocation2], 16
  %v776 = vld [vmem:[%s775] sm:$0xff]
  %778 = vrot.lane.b32.xlu0 %v662, 32
  %v779 = vpop.permute.xlu0 %778
  %v780 = vsel %vm339, %v779, 0
  %782 = vmatprep.subr.mxu0 0.0
  %783 = vmatpush1.msra.mxu0 0.0
  %784 = vmatprep.subr.mxu0 0.0
  %785 = vmatpush1.msra.mxu0 0.0
  %786 = vmatprep.subr.mxu0 0.0
  %787 = vmatpush1.msra.mxu0 0.0
  %788 = vmatprep.subr.mxu0 0.0
  %789 = vmatpush1.msra.mxu0 0.0
  %790 = vmatprep.subr.mxu0 0.0
  %791 = vmatpush1.msra.mxu0 0.0
  %792 = vmatprep.subr.mxu0 0.0
  %793 = vmatpush1.msra.mxu0 0.0
  %794 = vmatprep.subr.mxu0 0.0
  %795 = vmatpush1.msra.mxu0 0.0
  %796 = vmatprep.subr.mxu0 0.0
  %797 = vmatpush1.msra.mxu0 0.0
  %798 = vmatprep.subr.mxu0 0.0
  %799 = vmatpush1.msra.mxu0 0.0
  %800 = vmatprep.subr.mxu0 0.0
  %801 = vmatpush1.msra.mxu0 0.0
  %802 = vmatprep.subr.mxu0 0.0
  %803 = vmatpush1.msra.mxu0 0.0
  %804 = vmatprep.subr.mxu0 0.0
  %805 = vmatpush1.msra.mxu0 0.0
  %806 = vmatprep.subr.mxu0 0.0
  %807 = vmatpush1.msra.mxu0 %v327
  %808 = vmatprep.subr.mxu0 0.0
  %809 = vmatpush1.msra.mxu0 %v326
  %810 = vmatprep.subr.mxu0 0.0
  %811 = vmatpush1.msra.mxu0 %v325
  %812 = vmatprep.subr.mxu0 0.0
  %813 = vmatpush1.msra.mxu0 %v324
  %814 = vmatprep.subr.mxu0 0.0
  %815 = vmatpush2.msra.mxu0 0.0
  %816 = vmatprep.subr.mxu0 0.0
  %817 = vmatpush2.msra.mxu0 0.0
  %818 = vmatprep.subr.mxu0 0.0
  %819 = vmatpush2.msra.mxu0 0.0
  %820 = vmatprep.subr.mxu0 0.0
  %821 = vmatpush2.msra.mxu0 0.0
  %822 = vmatprep.subr.mxu0 0.0
  %823 = vmatpush2.msra.mxu0 0.0
  %824 = vmatprep.subr.mxu0 0.0
  %825 = vmatpush2.msra.mxu0 0.0
  %826 = vmatprep.subr.mxu0 0.0
  %827 = vmatpush2.msra.mxu0 0.0
  %828 = vmatprep.subr.mxu0 0.0
  %829 = vmatpush2.msra.mxu0 0.0
  %830 = vmatprep.subr.mxu0 0.0
  %831 = vmatpush2.msra.mxu0 0.0
  %832 = vmatprep.subr.mxu0 0.0
  %833 = vmatpush2.msra.mxu0 0.0
  %834 = vmatprep.subr.mxu0 0.0
  %835 = vmatpush2.msra.mxu0 0.0
  %836 = vmatprep.subr.mxu0 0.0
  %837 = vmatpush2.msra.mxu0 0.0
  %838 = vmatprep.subr.mxu0 0.0
  %839 = vmatpush2.msra.mxu0 0.0
  %840 = vmatprep.subr.mxu0 0.0
  %841 = vmatpush2.msra.mxu0 0.0
  %842 = vmatprep.subr.mxu0 0.0
  %843 = vmatpush2.msra.mxu0 0.0
  %844 = vmatprep.subr.mxu0 0.0
  %845 = vmatpush2.msra.mxu0 0.0
  %846 = vmatprep.mubr.f32.mxu0 0.0
  %847 = vmatmul.mubr.f32.gmra.mxu0 %v780
  %v848 = vpop.f32.mrf.mxu0
  %v849 = vadd.f32 0.0, %v848
  %v850 = vpop.f32.mrf.mxu0
  %851 = vdwg.mxu0
  %v852 = vadd.f32 %v776, %v849
  %v853 = vtanh.pop %v852
  %v854 = vxor.u32 %v852, 2147483648
  %v855 = vmul.f32 %v854, 1.442695
  %v856 = vpow.pop %v855
  %v857 = vadd.f32 %v856, 1.0
  %v858 = vrcp.pop %v857
  %v859 = vmul.f32 1.0, %v858
  %v860 = vsel %vm337, %v853, %v859
  %v861 = vmul.f32 %v860, %v663
  %863 = vrot.lane.b32.xlu0 %v860, 64
  %v864 = vpop.permute.xlu0 %863
  %v866 = vmul.f32 %v860, %v864
  %868 = vrot.lane.b32.xlu0 %v866, 32
  %v869 = vpop.permute.xlu0 %868
  %v871 = vadd.f32 %v861, %v869
  %v872 = vtanh.pop %v871
  %874 = vrot.lane.b32.xlu0 %v872, 64
  %v875 = vpop.permute.xlu0 %874
  %v877 = vmul.f32 %v860, %v875
  %vm878 = vcmp.gt.s32.totalorder %v332, 2
  %v879 = vsel %vm878, 1, 0
  %880 = vset.pattern.permute.xlu0 0
  %881 = vperm.xlu0 %880, %v879
  %v882 = vpop.permute.xlu0 %881
  %vm883 = vcmp.eq.s32.totalorder %v882, 1
  %v884 = vsel %vm883, %v877, %v662
  %v885 = vsel %vm883, %v871, %v663
  %s886 = scalar_lea.vmem [#allocation3], 40
  %v887 = vld [vmem:[%s886] sm:$0xff]
  %889 = vrot.lane.b32.xlu0 %v773, 32
  %v890 = vpop.permute.xlu0 %889
  %v891 = vsel %vm339, %v890, 0
  %893 = vmatprep.subr.mxu0 0.0
  %894 = vmatpush1.msra.mxu0 0.0
  %895 = vmatprep.subr.mxu0 0.0
  %896 = vmatpush1.msra.mxu0 0.0
  %897 = vmatprep.subr.mxu0 0.0
  %898 = vmatpush1.msra.mxu0 0.0
  %899 = vmatprep.subr.mxu0 0.0
  %900 = vmatpush1.msra.mxu0 0.0
  %901 = vmatprep.subr.mxu0 0.0
  %902 = vmatpush1.msra.mxu0 0.0
  %903 = vmatprep.subr.mxu0 0.0
  %904 = vmatpush1.msra.mxu0 0.0
  %905 = vmatprep.subr.mxu0 0.0
  %906 = vmatpush1.msra.mxu0 0.0
  %907 = vmatprep.subr.mxu0 0.0
  %908 = vmatpush1.msra.mxu0 0.0
  %909 = vmatprep.subr.mxu0 0.0
  %910 = vmatpush1.msra.mxu0 0.0
  %911 = vmatprep.subr.mxu0 0.0
  %912 = vmatpush1.msra.mxu0 0.0
  %913 = vmatprep.subr.mxu0 0.0
  %914 = vmatpush1.msra.mxu0 0.0
  %915 = vmatprep.subr.mxu0 0.0
  %916 = vmatpush1.msra.mxu0 0.0
  %917 = vmatprep.subr.mxu0 0.0
  %918 = vmatpush1.msra.mxu0 %v331
  %919 = vmatprep.subr.mxu0 0.0
  %920 = vmatpush1.msra.mxu0 %v330
  %921 = vmatprep.subr.mxu0 0.0
  %922 = vmatpush1.msra.mxu0 %v329
  %923 = vmatprep.subr.mxu0 0.0
  %924 = vmatpush1.msra.mxu0 %v328
  %925 = vmatprep.subr.mxu0 0.0
  %926 = vmatpush2.msra.mxu0 0.0
  %927 = vmatprep.subr.mxu0 0.0
  %928 = vmatpush2.msra.mxu0 0.0
  %929 = vmatprep.subr.mxu0 0.0
  %930 = vmatpush2.msra.mxu0 0.0
  %931 = vmatprep.subr.mxu0 0.0
  %932 = vmatpush2.msra.mxu0 0.0
  %933 = vmatprep.subr.mxu0 0.0
  %934 = vmatpush2.msra.mxu0 0.0
  %935 = vmatprep.subr.mxu0 0.0
  %936 = vmatpush2.msra.mxu0 0.0
  %937 = vmatprep.subr.mxu0 0.0
  %938 = vmatpush2.msra.mxu0 0.0
  %939 = vmatprep.subr.mxu0 0.0
  %940 = vmatpush2.msra.mxu0 0.0
  %941 = vmatprep.subr.mxu0 0.0
  %942 = vmatpush2.msra.mxu0 0.0
  %943 = vmatprep.subr.mxu0 0.0
  %944 = vmatpush2.msra.mxu0 0.0
  %945 = vmatprep.subr.mxu0 0.0
  %946 = vmatpush2.msra.mxu0 0.0
  %947 = vmatprep.subr.mxu0 0.0
  %948 = vmatpush2.msra.mxu0 0.0
  %949 = vmatprep.subr.mxu0 0.0
  %950 = vmatpush2.msra.mxu0 0.0
  %951 = vmatprep.subr.mxu0 0.0
  %952 = vmatpush2.msra.mxu0 0.0
  %953 = vmatprep.subr.mxu0 0.0
  %954 = vmatpush2.msra.mxu0 0.0
  %955 = vmatprep.subr.mxu0 0.0
  %956 = vmatpush2.msra.mxu0 0.0
  %957 = vmatprep.mubr.f32.mxu0 0.0
  %958 = vmatmul.mubr.f32.gmra.mxu0 %v891
  %v959 = vpop.f32.mrf.mxu0
  %v960 = vadd.f32 0.0, %v959
  %v961 = vpop.f32.mrf.mxu0
  %962 = vdwg.mxu0
  %v963 = vadd.f32 %v887, %v960
  %v964 = vtanh.pop %v963
  %v965 = vxor.u32 %v963, 2147483648
  %v966 = vmul.f32 %v965, 1.442695
  %v967 = vpow.pop %v966
  %v968 = vadd.f32 %v967, 1.0
  %v969 = vrcp.pop %v968
  %v970 = vmul.f32 1.0, %v969
  %v971 = vsel %vm337, %v964, %v970
  %v972 = vmul.f32 %v971, %v774
  %974 = vrot.lane.b32.xlu0 %v971, 64
  %v975 = vpop.permute.xlu0 %974
  %v977 = vmul.f32 %v971, %v975
  %979 = vrot.lane.b32.xlu0 %v977, 32
  %v980 = vpop.permute.xlu0 %979
  %v982 = vadd.f32 %v972, %v980
  %v983 = vtanh.pop %v982
  %985 = vrot.lane.b32.xlu0 %v983, 64
  %v986 = vpop.permute.xlu0 %985
  %v988 = vmul.f32 %v971, %v986
  %vm989 = vcmp.gt.s32.totalorder %v332, 5
  %v990 = vsel %vm989, 1, 0
  %991 = vset.pattern.permute.xlu0 0
  %992 = vperm.xlu0 %991, %v990
  %v993 = vpop.permute.xlu0 %992
  %vm994 = vcmp.eq.s32.totalorder %v993, 1
  %v995 = vsel %vm994, %v988, %v773
  %v996 = vsel %vm994, %v982, %v774
  %s997 = scalar_lea.vmem [#allocation2], 24
  %v998 = vld [vmem:[%s997] sm:$0xff]
  %1000 = vrot.lane.b32.xlu0 %v884, 32
  %v1001 = vpop.permute.xlu0 %1000
  %v1002 = vsel %vm339, %v1001, 0
  %1004 = vmatprep.subr.mxu0 0.0
  %1005 = vmatpush1.msra.mxu0 0.0
  %1006 = vmatprep.subr.mxu0 0.0
  %1007 = vmatpush1.msra.mxu0 0.0
  %1008 = vmatprep.subr.mxu0 0.0
  %1009 = vmatpush1.msra.mxu0 0.0
  %1010 = vmatprep.subr.mxu0 0.0
  %1011 = vmatpush1.msra.mxu0 0.0
  %1012 = vmatprep.subr.mxu0 0.0
  %1013 = vmatpush1.msra.mxu0 0.0
  %1014 = vmatprep.subr.mxu0 0.0
  %1015 = vmatpush1.msra.mxu0 0.0
  %1016 = vmatprep.subr.mxu0 0.0
  %1017 = vmatpush1.msra.mxu0 0.0
  %1018 = vmatprep.subr.mxu0 0.0
  %1019 = vmatpush1.msra.mxu0 0.0
  %1020 = vmatprep.subr.mxu0 0.0
  %1021 = vmatpush1.msra.mxu0 0.0
  %1022 = vmatprep.subr.mxu0 0.0
  %1023 = vmatpush1.msra.mxu0 0.0
  %1024 = vmatprep.subr.mxu0 0.0
  %1025 = vmatpush1.msra.mxu0 0.0
  %1026 = vmatprep.subr.mxu0 0.0
  %1027 = vmatpush1.msra.mxu0 0.0
  %1028 = vmatprep.subr.mxu0 0.0
  %1029 = vmatpush1.msra.mxu0 %v327
  %1030 = vmatprep.subr.mxu0 0.0
  %1031 = vmatpush1.msra.mxu0 %v326
  %1032 = vmatprep.subr.mxu0 0.0
  %1033 = vmatpush1.msra.mxu0 %v325
  %1034 = vmatprep.subr.mxu0 0.0
  %1035 = vmatpush1.msra.mxu0 %v324
  %1036 = vmatprep.subr.mxu0 0.0
  %1037 = vmatpush2.msra.mxu0 0.0
  %1038 = vmatprep.subr.mxu0 0.0
  %1039 = vmatpush2.msra.mxu0 0.0
  %1040 = vmatprep.subr.mxu0 0.0
  %1041 = vmatpush2.msra.mxu0 0.0
  %1042 = vmatprep.subr.mxu0 0.0
  %1043 = vmatpush2.msra.mxu0 0.0
  %1044 = vmatprep.subr.mxu0 0.0
  %1045 = vmatpush2.msra.mxu0 0.0
  %1046 = vmatprep.subr.mxu0 0.0
  %1047 = vmatpush2.msra.mxu0 0.0
  %1048 = vmatprep.subr.mxu0 0.0
  %1049 = vmatpush2.msra.mxu0 0.0
  %1050 = vmatprep.subr.mxu0 0.0
  %1051 = vmatpush2.msra.mxu0 0.0
  %1052 = vmatprep.subr.mxu0 0.0
  %1053 = vmatpush2.msra.mxu0 0.0
  %1054 = vmatprep.subr.mxu0 0.0
  %1055 = vmatpush2.msra.mxu0 0.0
  %1056 = vmatprep.subr.mxu0 0.0
  %1057 = vmatpush2.msra.mxu0 0.0
  %1058 = vmatprep.subr.mxu0 0.0
  %1059 = vmatpush2.msra.mxu0 0.0
  %1060 = vmatprep.subr.mxu0 0.0
  %1061 = vmatpush2.msra.mxu0 0.0
  %1062 = vmatprep.subr.mxu0 0.0
  %1063 = vmatpush2.msra.mxu0 0.0
  %1064 = vmatprep.subr.mxu0 0.0
  %1065 = vmatpush2.msra.mxu0 0.0
  %1066 = vmatprep.subr.mxu0 0.0
  %1067 = vmatpush2.msra.mxu0 0.0
  %1068 = vmatprep.mubr.f32.mxu0 0.0
  %1069 = vmatmul.mubr.f32.gmra.mxu0 %v1002
  %v1070 = vpop.f32.mrf.mxu0
  %v1071 = vadd.f32 0.0, %v1070
  %v1072 = vpop.f32.mrf.mxu0
  %1073 = vdwg.mxu0
  %v1074 = vadd.f32 %v998, %v1071
  %v1075 = vtanh.pop %v1074
  %v1076 = vxor.u32 %v1074, 2147483648
  %v1077 = vmul.f32 %v1076, 1.442695
  %v1078 = vpow.pop %v1077
  %v1079 = vadd.f32 %v1078, 1.0
  %v1080 = vrcp.pop %v1079
  %v1081 = vmul.f32 1.0, %v1080
  %v1082 = vsel %vm337, %v1075, %v1081
  %v1083 = vmul.f32 %v1082, %v885
  %1085 = vrot.lane.b32.xlu0 %v1082, 64
  %v1086 = vpop.permute.xlu0 %1085
  %v1088 = vmul.f32 %v1082, %v1086
  %1090 = vrot.lane.b32.xlu0 %v1088, 32
  %v1091 = vpop.permute.xlu0 %1090
  %v1093 = vadd.f32 %v1083, %v1091
  %v1094 = vtanh.pop %v1093
  %1096 = vrot.lane.b32.xlu0 %v1094, 64
  %v1097 = vpop.permute.xlu0 %1096
  %v1099 = vmul.f32 %v1082, %v1097
  %vm1100 = vcmp.gt.s32.totalorder %v332, 3
  %v1101 = vsel %vm1100, 1, 0
  %1102 = vset.pattern.permute.xlu0 0
  %1103 = vperm.xlu0 %1102, %v1101
  %v1104 = vpop.permute.xlu0 %1103
  %vm1105 = vcmp.eq.s32.totalorder %v1104, 1
  %v1106 = vsel %vm1105, %v1099, %v884
  %v1107 = vsel %vm1105, %v1093, %v885
  %s1108 = scalar_lea.vmem [#allocation3], 32
  %v1109 = vld [vmem:[%s1108] sm:$0xff]
  %1111 = vrot.lane.b32.xlu0 %v995, 32
  %v1112 = vpop.permute.xlu0 %1111
  %v1113 = vsel %vm339, %v1112, 0
  %1115 = vmatprep.subr.mxu0 0.0
  %1116 = vmatpush1.msra.mxu0 0.0
  %1117 = vmatprep.subr.mxu0 0.0
  %1118 = vmatpush1.msra.mxu0 0.0
  %1119 = vmatprep.subr.mxu0 0.0
  %1120 = vmatpush1.msra.mxu0 0.0
  %1121 = vmatprep.subr.mxu0 0.0
  %1122 = vmatpush1.msra.mxu0 0.0
  %1123 = vmatprep.subr.mxu0 0.0
  %1124 = vmatpush1.msra.mxu0 0.0
  %1125 = vmatprep.subr.mxu0 0.0
  %1126 = vmatpush1.msra.mxu0 0.0
  %1127 = vmatprep.subr.mxu0 0.0
  %1128 = vmatpush1.msra.mxu0 0.0
  %1129 = vmatprep.subr.mxu0 0.0
  %1130 = vmatpush1.msra.mxu0 0.0
  %1131 = vmatprep.subr.mxu0 0.0
  %1132 = vmatpush1.msra.mxu0 0.0
  %1133 = vmatprep.subr.mxu0 0.0
  %1134 = vmatpush1.msra.mxu0 0.0
  %1135 = vmatprep.subr.mxu0 0.0
  %1136 = vmatpush1.msra.mxu0 0.0
  %1137 = vmatprep.subr.mxu0 0.0
  %1138 = vmatpush1.msra.mxu0 0.0
  %1139 = vmatprep.subr.mxu0 0.0
  %1140 = vmatpush1.msra.mxu0 %v331
  %1141 = vmatprep.subr.mxu0 0.0
  %1142 = vmatpush1.msra.mxu0 %v330
  %1143 = vmatprep.subr.mxu0 0.0
  %1144 = vmatpush1.msra.mxu0 %v329
  %1145 = vmatprep.subr.mxu0 0.0
  %1146 = vmatpush1.msra.mxu0 %v328
  %1147 = vmatprep.subr.mxu0 0.0
  %1148 = vmatpush2.msra.mxu0 0.0
  %1149 = vmatprep.subr.mxu0 0.0
  %1150 = vmatpush2.msra.mxu0 0.0
  %1151 = vmatprep.subr.mxu0 0.0
  %1152 = vmatpush2.msra.mxu0 0.0
  %1153 = vmatprep.subr.mxu0 0.0
  %1154 = vmatpush2.msra.mxu0 0.0
  %1155 = vmatprep.subr.mxu0 0.0
  %1156 = vmatpush2.msra.mxu0 0.0
  %1157 = vmatprep.subr.mxu0 0.0
  %1158 = vmatpush2.msra.mxu0 0.0
  %1159 = vmatprep.subr.mxu0 0.0
  %1160 = vmatpush2.msra.mxu0 0.0
  %1161 = vmatprep.subr.mxu0 0.0
  %1162 = vmatpush2.msra.mxu0 0.0
  %1163 = vmatprep.subr.mxu0 0.0
  %1164 = vmatpush2.msra.mxu0 0.0
  %1165 = vmatprep.subr.mxu0 0.0
  %1166 = vmatpush2.msra.mxu0 0.0
  %1167 = vmatprep.subr.mxu0 0.0
  %1168 = vmatpush2.msra.mxu0 0.0
  %1169 = vmatprep.subr.mxu0 0.0
  %1170 = vmatpush2.msra.mxu0 0.0
  %1171 = vmatprep.subr.mxu0 0.0
  %1172 = vmatpush2.msra.mxu0 0.0
  %1173 = vmatprep.subr.mxu0 0.0
  %1174 = vmatpush2.msra.mxu0 0.0
  %1175 = vmatprep.subr.mxu0 0.0
  %1176 = vmatpush2.msra.mxu0 0.0
  %1177 = vmatprep.subr.mxu0 0.0
  %1178 = vmatpush2.msra.mxu0 0.0
  %1179 = vmatprep.mubr.f32.mxu0 0.0
  %1180 = vmatmul.mubr.f32.gmra.mxu0 %v1113
  %v1181 = vpop.f32.mrf.mxu0
  %v1182 = vadd.f32 0.0, %v1181
  %v1183 = vpop.f32.mrf.mxu0
  %1184 = vdwg.mxu0
  %v1185 = vadd.f32 %v1109, %v1182
  %v1186 = vtanh.pop %v1185
  %v1187 = vxor.u32 %v1185, 2147483648
  %v1188 = vmul.f32 %v1187, 1.442695
  %v1189 = vpow.pop %v1188
  %v1190 = vadd.f32 %v1189, 1.0
  %v1191 = vrcp.pop %v1190
  %v1192 = vmul.f32 1.0, %v1191
  %v1193 = vsel %vm337, %v1186, %v1192
  %v1194 = vmul.f32 %v1193, %v996
  %1196 = vrot.lane.b32.xlu0 %v1193, 64
  %v1197 = vpop.permute.xlu0 %1196
  %v1199 = vmul.f32 %v1193, %v1197
  %1201 = vrot.lane.b32.xlu0 %v1199, 32
  %v1202 = vpop.permute.xlu0 %1201
  %v1204 = vadd.f32 %v1194, %v1202
  %v1205 = vtanh.pop %v1204
  %1207 = vrot.lane.b32.xlu0 %v1205, 64
  %v1208 = vpop.permute.xlu0 %1207
  %v1210 = vmul.f32 %v1193, %v1208
  %vm1211 = vcmp.gt.s32.totalorder %v332, 4
  %v1212 = vsel %vm1211, 1, 0
  %1213 = vset.pattern.permute.xlu0 0
  %1214 = vperm.xlu0 %1213, %v1212
  %v1215 = vpop.permute.xlu0 %1214
  %vm1216 = vcmp.eq.s32.totalorder %v1215, 1
  %v1217 = vsel %vm1216, %v1210, %v995
  %v1218 = vsel %vm1216, %v1204, %v996
  %s1219 = scalar_lea.vmem [#allocation2], 32
  %v1220 = vld [vmem:[%s1219] sm:$0xff]
  %1222 = vrot.lane.b32.xlu0 %v1106, 32
  %v1223 = vpop.permute.xlu0 %1222
  %v1224 = vsel %vm339, %v1223, 0
  %1226 = vmatprep.subr.mxu0 0.0
  %1227 = vmatpush1.msra.mxu0 0.0
  %1228 = vmatprep.subr.mxu0 0.0
  %1229 = vmatpush1.msra.mxu0 0.0
  %1230 = vmatprep.subr.mxu0 0.0
  %1231 = vmatpush1.msra.mxu0 0.0
  %1232 = vmatprep.subr.mxu0 0.0
  %1233 = vmatpush1.msra.mxu0 0.0
  %1234 = vmatprep.subr.mxu0 0.0
  %1235 = vmatpush1.msra.mxu0 0.0
  %1236 = vmatprep.subr.mxu0 0.0
  %1237 = vmatpush1.msra.mxu0 0.0
  %1238 = vmatprep.subr.mxu0 0.0
  %1239 = vmatpush1.msra.mxu0 0.0
  %1240 = vmatprep.subr.mxu0 0.0
  %1241 = vmatpush1.msra.mxu0 0.0
  %1242 = vmatprep.subr.mxu0 0.0
  %1243 = vmatpush1.msra.mxu0 0.0
  %1244 = vmatprep.subr.mxu0 0.0
  %1245 = vmatpush1.msra.mxu0 0.0
  %1246 = vmatprep.subr.mxu0 0.0
  %1247 = vmatpush1.msra.mxu0 0.0
  %1248 = vmatprep.subr.mxu0 0.0
  %1249 = vmatpush1.msra.mxu0 0.0
  %1250 = vmatprep.subr.mxu0 0.0
  %1251 = vmatpush1.msra.mxu0 %v327
  %1252 = vmatprep.subr.mxu0 0.0
  %1253 = vmatpush1.msra.mxu0 %v326
  %1254 = vmatprep.subr.mxu0 0.0
  %1255 = vmatpush1.msra.mxu0 %v325
  %1256 = vmatprep.subr.mxu0 0.0
  %1257 = vmatpush1.msra.mxu0 %v324
  %1258 = vmatprep.subr.mxu0 0.0
  %1259 = vmatpush2.msra.mxu0 0.0
  %1260 = vmatprep.subr.mxu0 0.0
  %1261 = vmatpush2.msra.mxu0 0.0
  %1262 = vmatprep.subr.mxu0 0.0
  %1263 = vmatpush2.msra.mxu0 0.0
  %1264 = vmatprep.subr.mxu0 0.0
  %1265 = vmatpush2.msra.mxu0 0.0
  %1266 = vmatprep.subr.mxu0 0.0
  %1267 = vmatpush2.msra.mxu0 0.0
  %1268 = vmatprep.subr.mxu0 0.0
  %1269 = vmatpush2.msra.mxu0 0.0
  %1270 = vmatprep.subr.mxu0 0.0
  %1271 = vmatpush2.msra.mxu0 0.0
  %1272 = vmatprep.subr.mxu0 0.0
  %1273 = vmatpush2.msra.mxu0 0.0
  %1274 = vmatprep.subr.mxu0 0.0
  %1275 = vmatpush2.msra.mxu0 0.0
  %1276 = vmatprep.subr.mxu0 0.0
  %1277 = vmatpush2.msra.mxu0 0.0
  %1278 = vmatprep.subr.mxu0 0.0
  %1279 = vmatpush2.msra.mxu0 0.0
  %1280 = vmatprep.subr.mxu0 0.0
  %1281 = vmatpush2.msra.mxu0 0.0
  %1282 = vmatprep.subr.mxu0 0.0
  %1283 = vmatpush2.msra.mxu0 0.0
  %1284 = vmatprep.subr.mxu0 0.0
  %1285 = vmatpush2.msra.mxu0 0.0
  %1286 = vmatprep.subr.mxu0 0.0
  %1287 = vmatpush2.msra.mxu0 0.0
  %1288 = vmatprep.subr.mxu0 0.0
  %1289 = vmatpush2.msra.mxu0 0.0
  %1290 = vmatprep.mubr.f32.mxu0 0.0
  %1291 = vmatmul.mubr.f32.gmra.mxu0 %v1224
  %v1292 = vpop.f32.mrf.mxu0
  %v1293 = vadd.f32 0.0, %v1292
  %v1294 = vpop.f32.mrf.mxu0
  %1295 = vdwg.mxu0
  %v1296 = vadd.f32 %v1220, %v1293
  %v1297 = vtanh.pop %v1296
  %v1298 = vxor.u32 %v1296, 2147483648
  %v1299 = vmul.f32 %v1298, 1.442695
  %v1300 = vpow.pop %v1299
  %v1301 = vadd.f32 %v1300, 1.0
  %v1302 = vrcp.pop %v1301
  %v1303 = vmul.f32 1.0, %v1302
  %v1304 = vsel %vm337, %v1297, %v1303
  %v1305 = vmul.f32 %v1304, %v1107
  %1307 = vrot.lane.b32.xlu0 %v1304, 64
  %v1308 = vpop.permute.xlu0 %1307
  %v1310 = vmul.f32 %v1304, %v1308
  %1312 = vrot.lane.b32.xlu0 %v1310, 32
  %v1313 = vpop.permute.xlu0 %1312
  %v1315 = vadd.f32 %v1305, %v1313
  %v1316 = vtanh.pop %v1315
  %1318 = vrot.lane.b32.xlu0 %v1316, 64
  %v1319 = vpop.permute.xlu0 %1318
  %v1321 = vmul.f32 %v1304, %v1319
  %v1322 = vsel %vm1216, %v1321, %v1106
  %v1323 = vsel %vm1216, %v1315, %v1107
  %s1324 = scalar_lea.vmem [#allocation3], 24
  %v1325 = vld [vmem:[%s1324] sm:$0xff]
  %1327 = vrot.lane.b32.xlu0 %v1217, 32
  %v1328 = vpop.permute.xlu0 %1327
  %v1329 = vsel %vm339, %v1328, 0
  %1331 = vmatprep.subr.mxu0 0.0
  %1332 = vmatpush1.msra.mxu0 0.0
  %1333 = vmatprep.subr.mxu0 0.0
  %1334 = vmatpush1.msra.mxu0 0.0
  %1335 = vmatprep.subr.mxu0 0.0
  %1336 = vmatpush1.msra.mxu0 0.0
  %1337 = vmatprep.subr.mxu0 0.0
  %1338 = vmatpush1.msra.mxu0 0.0
  %1339 = vmatprep.subr.mxu0 0.0
  %1340 = vmatpush1.msra.mxu0 0.0
  %1341 = vmatprep.subr.mxu0 0.0
  %1342 = vmatpush1.msra.mxu0 0.0
  %1343 = vmatprep.subr.mxu0 0.0
  %1344 = vmatpush1.msra.mxu0 0.0
  %1345 = vmatprep.subr.mxu0 0.0
  %1346 = vmatpush1.msra.mxu0 0.0
  %1347 = vmatprep.subr.mxu0 0.0
  %1348 = vmatpush1.msra.mxu0 0.0
  %1349 = vmatprep.subr.mxu0 0.0
  %1350 = vmatpush1.msra.mxu0 0.0
  %1351 = vmatprep.subr.mxu0 0.0
  %1352 = vmatpush1.msra.mxu0 0.0
  %1353 = vmatprep.subr.mxu0 0.0
  %1354 = vmatpush1.msra.mxu0 0.0
  %1355 = vmatprep.subr.mxu0 0.0
  %1356 = vmatpush1.msra.mxu0 %v331
  %1357 = vmatprep.subr.mxu0 0.0
  %1358 = vmatpush1.msra.mxu0 %v330
  %1359 = vmatprep.subr.mxu0 0.0
  %1360 = vmatpush1.msra.mxu0 %v329
  %1361 = vmatprep.subr.mxu0 0.0
  %1362 = vmatpush1.msra.mxu0 %v328
  %1363 = vmatprep.subr.mxu0 0.0
  %1364 = vmatpush2.msra.mxu0 0.0
  %1365 = vmatprep.subr.mxu0 0.0
  %1366 = vmatpush2.msra.mxu0 0.0
  %1367 = vmatprep.subr.mxu0 0.0
  %1368 = vmatpush2.msra.mxu0 0.0
  %1369 = vmatprep.subr.mxu0 0.0
  %1370 = vmatpush2.msra.mxu0 0.0
  %1371 = vmatprep.subr.mxu0 0.0
  %1372 = vmatpush2.msra.mxu0 0.0
  %1373 = vmatprep.subr.mxu0 0.0
  %1374 = vmatpush2.msra.mxu0 0.0
  %1375 = vmatprep.subr.mxu0 0.0
  %1376 = vmatpush2.msra.mxu0 0.0
  %1377 = vmatprep.subr.mxu0 0.0
  %1378 = vmatpush2.msra.mxu0 0.0
  %1379 = vmatprep.subr.mxu0 0.0
  %1380 = vmatpush2.msra.mxu0 0.0
  %1381 = vmatprep.subr.mxu0 0.0
  %1382 = vmatpush2.msra.mxu0 0.0
  %1383 = vmatprep.subr.mxu0 0.0
  %1384 = vmatpush2.msra.mxu0 0.0
  %1385 = vmatprep.subr.mxu0 0.0
  %1386 = vmatpush2.msra.mxu0 0.0
  %1387 = vmatprep.subr.mxu0 0.0
  %1388 = vmatpush2.msra.mxu0 0.0
  %1389 = vmatprep.subr.mxu0 0.0
  %1390 = vmatpush2.msra.mxu0 0.0
  %1391 = vmatprep.subr.mxu0 0.0
  %1392 = vmatpush2.msra.mxu0 0.0
  %1393 = vmatprep.subr.mxu0 0.0
  %1394 = vmatpush2.msra.mxu0 0.0
  %1395 = vmatprep.mubr.f32.mxu0 0.0
  %1396 = vmatmul.mubr.f32.gmra.mxu0 %v1329
  %v1397 = vpop.f32.mrf.mxu0
  %v1398 = vadd.f32 0.0, %v1397
  %v1399 = vpop.f32.mrf.mxu0
  %1400 = vdwg.mxu0
  %v1401 = vadd.f32 %v1325, %v1398
  %v1402 = vtanh.pop %v1401
  %v1403 = vxor.u32 %v1401, 2147483648
  %v1404 = vmul.f32 %v1403, 1.442695
  %v1405 = vpow.pop %v1404
  %v1406 = vadd.f32 %v1405, 1.0
  %v1407 = vrcp.pop %v1406
  %v1408 = vmul.f32 1.0, %v1407
  %v1409 = vsel %vm337, %v1402, %v1408
  %v1410 = vmul.f32 %v1409, %v1218
  %1412 = vrot.lane.b32.xlu0 %v1409, 64
  %v1413 = vpop.permute.xlu0 %1412
  %v1415 = vmul.f32 %v1409, %v1413
  %1417 = vrot.lane.b32.xlu0 %v1415, 32
  %v1418 = vpop.permute.xlu0 %1417
  %v1420 = vadd.f32 %v1410, %v1418
  %v1421 = vtanh.pop %v1420
  %1423 = vrot.lane.b32.xlu0 %v1421, 64
  %v1424 = vpop.permute.xlu0 %1423
  %v1426 = vmul.f32 %v1409, %v1424
  %v1427 = vsel %vm1105, %v1426, %v1217
  %v1428 = vsel %vm1105, %v1420, %v1218
  %s1429 = scalar_lea.vmem [#allocation2], 40
  %v1430 = vld [vmem:[%s1429] sm:$0xff]
  %1432 = vrot.lane.b32.xlu0 %v1322, 32
  %v1433 = vpop.permute.xlu0 %1432
  %v1434 = vsel %vm339, %v1433, 0
  %1436 = vmatprep.subr.mxu0 0.0
  %1437 = vmatpush1.msra.mxu0 0.0
  %1438 = vmatprep.subr.mxu0 0.0
  %1439 = vmatpush1.msra.mxu0 0.0
  %1440 = vmatprep.subr.mxu0 0.0
  %1441 = vmatpush1.msra.mxu0 0.0
  %1442 = vmatprep.subr.mxu0 0.0
  %1443 = vmatpush1.msra.mxu0 0.0
  %1444 = vmatprep.subr.mxu0 0.0
  %1445 = vmatpush1.msra.mxu0 0.0
  %1446 = vmatprep.subr.mxu0 0.0
  %1447 = vmatpush1.msra.mxu0 0.0
  %1448 = vmatprep.subr.mxu0 0.0
  %1449 = vmatpush1.msra.mxu0 0.0
  %1450 = vmatprep.subr.mxu0 0.0
  %1451 = vmatpush1.msra.mxu0 0.0
  %1452 = vmatprep.subr.mxu0 0.0
  %1453 = vmatpush1.msra.mxu0 0.0
  %1454 = vmatprep.subr.mxu0 0.0
  %1455 = vmatpush1.msra.mxu0 0.0
  %1456 = vmatprep.subr.mxu0 0.0
  %1457 = vmatpush1.msra.mxu0 0.0
  %1458 = vmatprep.subr.mxu0 0.0
  %1459 = vmatpush1.msra.mxu0 0.0
  %1460 = vmatprep.subr.mxu0 0.0
  %1461 = vmatpush1.msra.mxu0 %v327
  %1462 = vmatprep.subr.mxu0 0.0
  %1463 = vmatpush1.msra.mxu0 %v326
  %1464 = vmatprep.subr.mxu0 0.0
  %1465 = vmatpush1.msra.mxu0 %v325
  %1466 = vmatprep.subr.mxu0 0.0
  %1467 = vmatpush1.msra.mxu0 %v324
  %1468 = vmatprep.subr.mxu0 0.0
  %1469 = vmatpush2.msra.mxu0 0.0
  %1470 = vmatprep.subr.mxu0 0.0
  %1471 = vmatpush2.msra.mxu0 0.0
  %1472 = vmatprep.subr.mxu0 0.0
  %1473 = vmatpush2.msra.mxu0 0.0
  %1474 = vmatprep.subr.mxu0 0.0
  %1475 = vmatpush2.msra.mxu0 0.0
  %1476 = vmatprep.subr.mxu0 0.0
  %1477 = vmatpush2.msra.mxu0 0.0
  %1478 = vmatprep.subr.mxu0 0.0
  %1479 = vmatpush2.msra.mxu0 0.0
  %1480 = vmatprep.subr.mxu0 0.0
  %1481 = vmatpush2.msra.mxu0 0.0
  %1482 = vmatprep.subr.mxu0 0.0
  %1483 = vmatpush2.msra.mxu0 0.0
  %1484 = vmatprep.subr.mxu0 0.0
  %1485 = vmatpush2.msra.mxu0 0.0
  %1486 = vmatprep.subr.mxu0 0.0
  %1487 = vmatpush2.msra.mxu0 0.0
  %1488 = vmatprep.subr.mxu0 0.0
  %1489 = vmatpush2.msra.mxu0 0.0
  %1490 = vmatprep.subr.mxu0 0.0
  %1491 = vmatpush2.msra.mxu0 0.0
  %1492 = vmatprep.subr.mxu0 0.0
  %1493 = vmatpush2.msra.mxu0 0.0
  %1494 = vmatprep.subr.mxu0 0.0
  %1495 = vmatpush2.msra.mxu0 0.0
  %1496 = vmatprep.subr.mxu0 0.0
  %1497 = vmatpush2.msra.mxu0 0.0
  %1498 = vmatprep.subr.mxu0 0.0
  %1499 = vmatpush2.msra.mxu0 0.0
  %1500 = vmatprep.mubr.f32.mxu0 0.0
  %1501 = vmatmul.mubr.f32.gmra.mxu0 %v1434
  %v1502 = vpop.f32.mrf.mxu0
  %v1503 = vadd.f32 0.0, %v1502
  %v1504 = vpop.f32.mrf.mxu0
  %1505 = vdwg.mxu0
  %v1506 = vadd.f32 %v1430, %v1503
  %v1507 = vtanh.pop %v1506
  %v1508 = vxor.u32 %v1506, 2147483648
  %v1509 = vmul.f32 %v1508, 1.442695
  %v1510 = vpow.pop %v1509
  %v1511 = vadd.f32 %v1510, 1.0
  %v1512 = vrcp.pop %v1511
  %v1513 = vmul.f32 1.0, %v1512
  %v1514 = vsel %vm337, %v1507, %v1513
  %v1515 = vmul.f32 %v1514, %v1323
  %1517 = vrot.lane.b32.xlu0 %v1514, 64
  %v1518 = vpop.permute.xlu0 %1517
  %v1520 = vmul.f32 %v1514, %v1518
  %1522 = vrot.lane.b32.xlu0 %v1520, 32
  %v1523 = vpop.permute.xlu0 %1522
  %v1525 = vadd.f32 %v1515, %v1523
  %v1526 = vtanh.pop %v1525
  %1528 = vrot.lane.b32.xlu0 %v1526, 64
  %v1529 = vpop.permute.xlu0 %1528
  %v1531 = vmul.f32 %v1514, %v1529
  %v1532 = vsel %vm994, %v1531, %v1322
  %v1533 = vsel %vm994, %v1525, %v1323
  %s1534 = scalar_lea.vmem [#allocation3], 16
  %v1535 = vld [vmem:[%s1534] sm:$0xff]
  %1537 = vrot.lane.b32.xlu0 %v1427, 32
  %v1538 = vpop.permute.xlu0 %1537
  %v1539 = vsel %vm339, %v1538, 0
  %1541 = vmatprep.subr.mxu0 0.0
  %1542 = vmatpush1.msra.mxu0 0.0
  %1543 = vmatprep.subr.mxu0 0.0
  %1544 = vmatpush1.msra.mxu0 0.0
  %1545 = vmatprep.subr.mxu0 0.0
  %1546 = vmatpush1.msra.mxu0 0.0
  %1547 = vmatprep.subr.mxu0 0.0
  %1548 = vmatpush1.msra.mxu0 0.0
  %1549 = vmatprep.subr.mxu0 0.0
  %1550 = vmatpush1.msra.mxu0 0.0
  %1551 = vmatprep.subr.mxu0 0.0
  %1552 = vmatpush1.msra.mxu0 0.0
  %1553 = vmatprep.subr.mxu0 0.0
  %1554 = vmatpush1.msra.mxu0 0.0
  %1555 = vmatprep.subr.mxu0 0.0
  %1556 = vmatpush1.msra.mxu0 0.0
  %1557 = vmatprep.subr.mxu0 0.0
  %1558 = vmatpush1.msra.mxu0 0.0
  %1559 = vmatprep.subr.mxu0 0.0
  %1560 = vmatpush1.msra.mxu0 0.0
  %1561 = vmatprep.subr.mxu0 0.0
  %1562 = vmatpush1.msra.mxu0 0.0
  %1563 = vmatprep.subr.mxu0 0.0
  %1564 = vmatpush1.msra.mxu0 0.0
  %1565 = vmatprep.subr.mxu0 0.0
  %1566 = vmatpush1.msra.mxu0 %v331
  %1567 = vmatprep.subr.mxu0 0.0
  %1568 = vmatpush1.msra.mxu0 %v330
  %1569 = vmatprep.subr.mxu0 0.0
  %1570 = vmatpush1.msra.mxu0 %v329
  %1571 = vmatprep.subr.mxu0 0.0
  %1572 = vmatpush1.msra.mxu0 %v328
  %1573 = vmatprep.subr.mxu0 0.0
  %1574 = vmatpush2.msra.mxu0 0.0
  %1575 = vmatprep.subr.mxu0 0.0
  %1576 = vmatpush2.msra.mxu0 0.0
  %1577 = vmatprep.subr.mxu0 0.0
  %1578 = vmatpush2.msra.mxu0 0.0
  %1579 = vmatprep.subr.mxu0 0.0
  %1580 = vmatpush2.msra.mxu0 0.0
  %1581 = vmatprep.subr.mxu0 0.0
  %1582 = vmatpush2.msra.mxu0 0.0
  %1583 = vmatprep.subr.mxu0 0.0
  %1584 = vmatpush2.msra.mxu0 0.0
  %1585 = vmatprep.subr.mxu0 0.0
  %1586 = vmatpush2.msra.mxu0 0.0
  %1587 = vmatprep.subr.mxu0 0.0
  %1588 = vmatpush2.msra.mxu0 0.0
  %1589 = vmatprep.subr.mxu0 0.0
  %1590 = vmatpush2.msra.mxu0 0.0
  %1591 = vmatprep.subr.mxu0 0.0
  %1592 = vmatpush2.msra.mxu0 0.0
  %1593 = vmatprep.subr.mxu0 0.0
  %1594 = vmatpush2.msra.mxu0 0.0
  %1595 = vmatprep.subr.mxu0 0.0
  %1596 = vmatpush2.msra.mxu0 0.0
  %1597 = vmatprep.subr.mxu0 0.0
  %1598 = vmatpush2.msra.mxu0 0.0
  %1599 = vmatprep.subr.mxu0 0.0
  %1600 = vmatpush2.msra.mxu0 0.0
  %1601 = vmatprep.subr.mxu0 0.0
  %1602 = vmatpush2.msra.mxu0 0.0
  %1603 = vmatprep.subr.mxu0 0.0
  %1604 = vmatpush2.msra.mxu0 0.0
  %1605 = vmatprep.mubr.f32.mxu0 0.0
  %1606 = vmatmul.mubr.f32.gmra.mxu0 %v1539
  %v1607 = vpop.f32.mrf.mxu0
  %v1608 = vadd.f32 0.0, %v1607
  %v1609 = vpop.f32.mrf.mxu0
  %1610 = vdwg.mxu0
  %v1611 = vadd.f32 %v1535, %v1608
  %v1612 = vtanh.pop %v1611
  %v1613 = vxor.u32 %v1611, 2147483648
  %v1614 = vmul.f32 %v1613, 1.442695
  %v1615 = vpow.pop %v1614
  %v1616 = vadd.f32 %v1615, 1.0
  %v1617 = vrcp.pop %v1616
  %v1618 = vmul.f32 1.0, %v1617
  %v1619 = vsel %vm337, %v1612, %v1618
  %v1620 = vmul.f32 %v1619, %v1428
  %1622 = vrot.lane.b32.xlu0 %v1619, 64
  %v1623 = vpop.permute.xlu0 %1622
  %v1625 = vmul.f32 %v1619, %v1623
  %1627 = vrot.lane.b32.xlu0 %v1625, 32
  %v1628 = vpop.permute.xlu0 %1627
  %v1630 = vadd.f32 %v1620, %v1628
  %v1631 = vtanh.pop %v1630
  %1633 = vrot.lane.b32.xlu0 %v1631, 64
  %v1634 = vpop.permute.xlu0 %1633
  %v1636 = vmul.f32 %v1619, %v1634
  %v1637 = vsel %vm883, %v1636, %v1427
  %v1638 = vsel %vm883, %v1630, %v1428
  %s1639 = scalar_lea.vmem [#allocation2], 48
  %v1640 = vld [vmem:[%s1639] sm:$0xff]
  %1642 = vrot.lane.b32.xlu0 %v1532, 32
  %v1643 = vpop.permute.xlu0 %1642
  %v1644 = vsel %vm339, %v1643, 0
  %1646 = vmatprep.subr.mxu0 0.0
  %1647 = vmatpush1.msra.mxu0 0.0
  %1648 = vmatprep.subr.mxu0 0.0
  %1649 = vmatpush1.msra.mxu0 0.0
  %1650 = vmatprep.subr.mxu0 0.0
  %1651 = vmatpush1.msra.mxu0 0.0
  %1652 = vmatprep.subr.mxu0 0.0
  %1653 = vmatpush1.msra.mxu0 0.0
  %1654 = vmatprep.subr.mxu0 0.0
  %1655 = vmatpush1.msra.mxu0 0.0
  %1656 = vmatprep.subr.mxu0 0.0
  %1657 = vmatpush1.msra.mxu0 0.0
  %1658 = vmatprep.subr.mxu0 0.0
  %1659 = vmatpush1.msra.mxu0 0.0
  %1660 = vmatprep.subr.mxu0 0.0
  %1661 = vmatpush1.msra.mxu0 0.0
  %1662 = vmatprep.subr.mxu0 0.0
  %1663 = vmatpush1.msra.mxu0 0.0
  %1664 = vmatprep.subr.mxu0 0.0
  %1665 = vmatpush1.msra.mxu0 0.0
  %1666 = vmatprep.subr.mxu0 0.0
  %1667 = vmatpush1.msra.mxu0 0.0
  %1668 = vmatprep.subr.mxu0 0.0
  %1669 = vmatpush1.msra.mxu0 0.0
  %1670 = vmatprep.subr.mxu0 0.0
  %1671 = vmatpush1.msra.mxu0 %v327
  %1672 = vmatprep.subr.mxu0 0.0
  %1673 = vmatpush1.msra.mxu0 %v326
  %1674 = vmatprep.subr.mxu0 0.0
  %1675 = vmatpush1.msra.mxu0 %v325
  %1676 = vmatprep.subr.mxu0 0.0
  %1677 = vmatpush1.msra.mxu0 %v324
  %1678 = vmatprep.subr.mxu0 0.0
  %1679 = vmatpush2.msra.mxu0 0.0
  %1680 = vmatprep.subr.mxu0 0.0
  %1681 = vmatpush2.msra.mxu0 0.0
  %1682 = vmatprep.subr.mxu0 0.0
  %1683 = vmatpush2.msra.mxu0 0.0
  %1684 = vmatprep.subr.mxu0 0.0
  %1685 = vmatpush2.msra.mxu0 0.0
  %1686 = vmatprep.subr.mxu0 0.0
  %1687 = vmatpush2.msra.mxu0 0.0
  %1688 = vmatprep.subr.mxu0 0.0
  %1689 = vmatpush2.msra.mxu0 0.0
  %1690 = vmatprep.subr.mxu0 0.0
  %1691 = vmatpush2.msra.mxu0 0.0
  %1692 = vmatprep.subr.mxu0 0.0
  %1693 = vmatpush2.msra.mxu0 0.0
  %1694 = vmatprep.subr.mxu0 0.0
  %1695 = vmatpush2.msra.mxu0 0.0
  %1696 = vmatprep.subr.mxu0 0.0
  %1697 = vmatpush2.msra.mxu0 0.0
  %1698 = vmatprep.subr.mxu0 0.0
  %1699 = vmatpush2.msra.mxu0 0.0
  %1700 = vmatprep.subr.mxu0 0.0
  %1701 = vmatpush2.msra.mxu0 0.0
  %1702 = vmatprep.subr.mxu0 0.0
  %1703 = vmatpush2.msra.mxu0 0.0
  %1704 = vmatprep.subr.mxu0 0.0
  %1705 = vmatpush2.msra.mxu0 0.0
  %1706 = vmatprep.subr.mxu0 0.0
  %1707 = vmatpush2.msra.mxu0 0.0
  %1708 = vmatprep.subr.mxu0 0.0
  %1709 = vmatpush2.msra.mxu0 0.0
  %1710 = vmatprep.mubr.f32.mxu0 0.0
  %1711 = vmatmul.mubr.f32.gmra.mxu0 %v1644
  %v1712 = vpop.f32.mrf.mxu0
  %v1713 = vadd.f32 0.0, %v1712
  %v1714 = vpop.f32.mrf.mxu0
  %1715 = vdwg.mxu0
  %v1716 = vadd.f32 %v1640, %v1713
  %v1717 = vtanh.pop %v1716
  %v1718 = vxor.u32 %v1716, 2147483648
  %v1719 = vmul.f32 %v1718, 1.442695
  %v1720 = vpow.pop %v1719
  %v1721 = vadd.f32 %v1720, 1.0
  %v1722 = vrcp.pop %v1721
  %v1723 = vmul.f32 1.0, %v1722
  %v1724 = vsel %vm337, %v1717, %v1723
  %v1725 = vmul.f32 %v1724, %v1533
  %1727 = vrot.lane.b32.xlu0 %v1724, 64
  %v1728 = vpop.permute.xlu0 %1727
  %v1730 = vmul.f32 %v1724, %v1728
  %1732 = vrot.lane.b32.xlu0 %v1730, 32
  %v1733 = vpop.permute.xlu0 %1732
  %v1735 = vadd.f32 %v1725, %v1733
  %v1736 = vtanh.pop %v1735
  %1738 = vrot.lane.b32.xlu0 %v1736, 64
  %v1739 = vpop.permute.xlu0 %1738
  %v1741 = vmul.f32 %v1724, %v1739
  %v1742 = vsel %vm772, %v1741, %v1532
  %v1743 = vsel %vm772, %v1735, %v1533
  %s1744 = scalar_lea.vmem [#allocation3], 8
  %v1745 = vld [vmem:[%s1744] sm:$0xff]
  %1747 = vrot.lane.b32.xlu0 %v1637, 32
  %v1748 = vpop.permute.xlu0 %1747
  %v1749 = vsel %vm339, %v1748, 0
  %1751 = vmatprep.subr.mxu0 0.0
  %1752 = vmatpush1.msra.mxu0 0.0
  %1753 = vmatprep.subr.mxu0 0.0
  %1754 = vmatpush1.msra.mxu0 0.0
  %1755 = vmatprep.subr.mxu0 0.0
  %1756 = vmatpush1.msra.mxu0 0.0
  %1757 = vmatprep.subr.mxu0 0.0
  %1758 = vmatpush1.msra.mxu0 0.0
  %1759 = vmatprep.subr.mxu0 0.0
  %1760 = vmatpush1.msra.mxu0 0.0
  %1761 = vmatprep.subr.mxu0 0.0
  %1762 = vmatpush1.msra.mxu0 0.0
  %1763 = vmatprep.subr.mxu0 0.0
  %1764 = vmatpush1.msra.mxu0 0.0
  %1765 = vmatprep.subr.mxu0 0.0
  %1766 = vmatpush1.msra.mxu0 0.0
  %1767 = vmatprep.subr.mxu0 0.0
  %1768 = vmatpush1.msra.mxu0 0.0
  %1769 = vmatprep.subr.mxu0 0.0
  %1770 = vmatpush1.msra.mxu0 0.0
  %1771 = vmatprep.subr.mxu0 0.0
  %1772 = vmatpush1.msra.mxu0 0.0
  %1773 = vmatprep.subr.mxu0 0.0
  %1774 = vmatpush1.msra.mxu0 0.0
  %1775 = vmatprep.subr.mxu0 0.0
  %1776 = vmatpush1.msra.mxu0 %v331
  %1777 = vmatprep.subr.mxu0 0.0
  %1778 = vmatpush1.msra.mxu0 %v330
  %1779 = vmatprep.subr.mxu0 0.0
  %1780 = vmatpush1.msra.mxu0 %v329
  %1781 = vmatprep.subr.mxu0 0.0
  %1782 = vmatpush1.msra.mxu0 %v328
  %1783 = vmatprep.subr.mxu0 0.0
  %1784 = vmatpush2.msra.mxu0 0.0
  %1785 = vmatprep.subr.mxu0 0.0
  %1786 = vmatpush2.msra.mxu0 0.0
  %1787 = vmatprep.subr.mxu0 0.0
  %1788 = vmatpush2.msra.mxu0 0.0
  %1789 = vmatprep.subr.mxu0 0.0
  %1790 = vmatpush2.msra.mxu0 0.0
  %1791 = vmatprep.subr.mxu0 0.0
  %1792 = vmatpush2.msra.mxu0 0.0
  %1793 = vmatprep.subr.mxu0 0.0
  %1794 = vmatpush2.msra.mxu0 0.0
  %1795 = vmatprep.subr.mxu0 0.0
  %1796 = vmatpush2.msra.mxu0 0.0
  %1797 = vmatprep.subr.mxu0 0.0
  %1798 = vmatpush2.msra.mxu0 0.0
  %1799 = vmatprep.subr.mxu0 0.0
  %1800 = vmatpush2.msra.mxu0 0.0
  %1801 = vmatprep.subr.mxu0 0.0
  %1802 = vmatpush2.msra.mxu0 0.0
  %1803 = vmatprep.subr.mxu0 0.0
  %1804 = vmatpush2.msra.mxu0 0.0
  %1805 = vmatprep.subr.mxu0 0.0
  %1806 = vmatpush2.msra.mxu0 0.0
  %1807 = vmatprep.subr.mxu0 0.0
  %1808 = vmatpush2.msra.mxu0 0.0
  %1809 = vmatprep.subr.mxu0 0.0
  %1810 = vmatpush2.msra.mxu0 0.0
  %1811 = vmatprep.subr.mxu0 0.0
  %1812 = vmatpush2.msra.mxu0 0.0
  %1813 = vmatprep.subr.mxu0 0.0
  %1814 = vmatpush2.msra.mxu0 0.0
  %1815 = vmatprep.mubr.f32.mxu0 0.0
  %1816 = vmatmul.mubr.f32.gmra.mxu0 %v1749
  %v1817 = vpop.f32.mrf.mxu0
  %v1818 = vadd.f32 0.0, %v1817
  %v1819 = vpop.f32.mrf.mxu0
  %1820 = vdwg.mxu0
  %v1821 = vadd.f32 %v1745, %v1818
  %v1822 = vtanh.pop %v1821
  %v1823 = vxor.u32 %v1821, 2147483648
  %v1824 = vmul.f32 %v1823, 1.442695
  %v1825 = vpow.pop %v1824
  %v1826 = vadd.f32 %v1825, 1.0
  %v1827 = vrcp.pop %v1826
  %v1828 = vmul.f32 1.0, %v1827
  %v1829 = vsel %vm337, %v1822, %v1828
  %v1830 = vmul.f32 %v1829, %v1638
  %1832 = vrot.lane.b32.xlu0 %v1829, 64
  %v1833 = vpop.permute.xlu0 %1832
  %v1835 = vmul.f32 %v1829, %v1833
  %1837 = vrot.lane.b32.xlu0 %v1835, 32
  %v1838 = vpop.permute.xlu0 %1837
  %v1840 = vadd.f32 %v1830, %v1838
  %v1841 = vtanh.pop %v1840
  %1843 = vrot.lane.b32.xlu0 %v1841, 64
  %v1844 = vpop.permute.xlu0 %1843
  %v1846 = vmul.f32 %v1829, %v1844
  %v1847 = vsel %vm661, %v1846, %v1637
  %v1848 = vsel %vm661, %v1840, %v1638
  %s1849 = scalar_lea.vmem [#allocation2], 56
  %v1850 = vld [vmem:[%s1849] sm:$0xff]
  %1852 = vrot.lane.b32.xlu0 %v1742, 32
  %v1853 = vpop.permute.xlu0 %1852
  %v1854 = vsel %vm339, %v1853, 0
  %1856 = vmatprep.subr.mxu0 0.0
  %1857 = vmatpush1.msra.mxu0 0.0
  %1858 = vmatprep.subr.mxu0 0.0
  %1859 = vmatpush1.msra.mxu0 0.0
  %1860 = vmatprep.subr.mxu0 0.0
  %1861 = vmatpush1.msra.mxu0 0.0
  %1862 = vmatprep.subr.mxu0 0.0
  %1863 = vmatpush1.msra.mxu0 0.0
  %1864 = vmatprep.subr.mxu0 0.0
  %1865 = vmatpush1.msra.mxu0 0.0
  %1866 = vmatprep.subr.mxu0 0.0
  %1867 = vmatpush1.msra.mxu0 0.0
  %1868 = vmatprep.subr.mxu0 0.0
  %1869 = vmatpush1.msra.mxu0 0.0
  %1870 = vmatprep.subr.mxu0 0.0
  %1871 = vmatpush1.msra.mxu0 0.0
  %1872 = vmatprep.subr.mxu0 0.0
  %1873 = vmatpush1.msra.mxu0 0.0
  %1874 = vmatprep.subr.mxu0 0.0
  %1875 = vmatpush1.msra.mxu0 0.0
  %1876 = vmatprep.subr.mxu0 0.0
  %1877 = vmatpush1.msra.mxu0 0.0
  %1878 = vmatprep.subr.mxu0 0.0
  %1879 = vmatpush1.msra.mxu0 0.0
  %1880 = vmatprep.subr.mxu0 0.0
  %1881 = vmatpush1.msra.mxu0 %v327
  %1882 = vmatprep.subr.mxu0 0.0
  %1883 = vmatpush1.msra.mxu0 %v326
  %1884 = vmatprep.subr.mxu0 0.0
  %1885 = vmatpush1.msra.mxu0 %v325
  %1886 = vmatprep.subr.mxu0 0.0
  %1887 = vmatpush1.msra.mxu0 %v324
  %1888 = vmatprep.subr.mxu0 0.0
  %1889 = vmatpush2.msra.mxu0 0.0
  %1890 = vmatprep.subr.mxu0 0.0
  %1891 = vmatpush2.msra.mxu0 0.0
  %1892 = vmatprep.subr.mxu0 0.0
  %1893 = vmatpush2.msra.mxu0 0.0
  %1894 = vmatprep.subr.mxu0 0.0
  %1895 = vmatpush2.msra.mxu0 0.0
  %1896 = vmatprep.subr.mxu0 0.0
  %1897 = vmatpush2.msra.mxu0 0.0
  %1898 = vmatprep.subr.mxu0 0.0
  %1899 = vmatpush2.msra.mxu0 0.0
  %1900 = vmatprep.subr.mxu0 0.0
  %1901 = vmatpush2.msra.mxu0 0.0
  %1902 = vmatprep.subr.mxu0 0.0
  %1903 = vmatpush2.msra.mxu0 0.0
  %1904 = vmatprep.subr.mxu0 0.0
  %1905 = vmatpush2.msra.mxu0 0.0
  %1906 = vmatprep.subr.mxu0 0.0
  %1907 = vmatpush2.msra.mxu0 0.0
  %1908 = vmatprep.subr.mxu0 0.0
  %1909 = vmatpush2.msra.mxu0 0.0
  %1910 = vmatprep.subr.mxu0 0.0
  %1911 = vmatpush2.msra.mxu0 0.0
  %1912 = vmatprep.subr.mxu0 0.0
  %1913 = vmatpush2.msra.mxu0 0.0
  %1914 = vmatprep.subr.mxu0 0.0
  %1915 = vmatpush2.msra.mxu0 0.0
  %1916 = vmatprep.subr.mxu0 0.0
  %1917 = vmatpush2.msra.mxu0 0.0
  %1918 = vmatprep.subr.mxu0 0.0
  %1919 = vmatpush2.msra.mxu0 0.0
  %1920 = vmatprep.mubr.f32.mxu0 0.0
  %1921 = vmatmul.mubr.f32.gmra.mxu0 %v1854
  %v1922 = vpop.f32.mrf.mxu0
  %v1923 = vadd.f32 0.0, %v1922
  %v1924 = vpop.f32.mrf.mxu0
  %1925 = vdwg.mxu0
  %v1926 = vadd.f32 %v1850, %v1923
  %v1927 = vtanh.pop %v1926
  %v1928 = vxor.u32 %v1926, 2147483648
  %v1929 = vmul.f32 %v1928, 1.442695
  %v1930 = vpow.pop %v1929
  %v1931 = vadd.f32 %v1930, 1.0
  %v1932 = vrcp.pop %v1931
  %v1933 = vmul.f32 1.0, %v1932
  %v1934 = vsel %vm337, %v1927, %v1933
  %v1935 = vmul.f32 %v1934, %v1743
  %1937 = vrot.lane.b32.xlu0 %v1934, 64
  %v1938 = vpop.permute.xlu0 %1937
  %v1940 = vmul.f32 %v1934, %v1938
  %1942 = vrot.lane.b32.xlu0 %v1940, 32
  %v1943 = vpop.permute.xlu0 %1942
  %v1945 = vadd.f32 %v1935, %v1943
  %v1946 = vtanh.pop %v1945
  %1948 = vrot.lane.b32.xlu0 %v1946, 64
  %v1949 = vpop.permute.xlu0 %1948
  %v1951 = vmul.f32 %v1934, %v1949
  %v1952 = vsel %vm550, %v1951, %v1742
  %v1953 = vld [vmem:[#allocation3] sm:$0xff]
  %1955 = vrot.lane.b32.xlu0 %v1847, 32
  %v1956 = vpop.permute.xlu0 %1955
  %v1957 = vsel %vm339, %v1956, 0
  %1959 = vmatprep.subr.mxu0 0.0
  %1960 = vmatpush1.msra.mxu0 0.0
  %1961 = vmatprep.subr.mxu0 0.0
  %1962 = vmatpush1.msra.mxu0 0.0
  %1963 = vmatprep.subr.mxu0 0.0
  %1964 = vmatpush1.msra.mxu0 0.0
  %1965 = vmatprep.subr.mxu0 0.0
  %1966 = vmatpush1.msra.mxu0 0.0
  %1967 = vmatprep.subr.mxu0 0.0
  %1968 = vmatpush1.msra.mxu0 0.0
  %1969 = vmatprep.subr.mxu0 0.0
  %1970 = vmatpush1.msra.mxu0 0.0
  %1971 = vmatprep.subr.mxu0 0.0
  %1972 = vmatpush1.msra.mxu0 0.0
  %1973 = vmatprep.subr.mxu0 0.0
  %1974 = vmatpush1.msra.mxu0 0.0
  %1975 = vmatprep.subr.mxu0 0.0
  %1976 = vmatpush1.msra.mxu0 0.0
  %1977 = vmatprep.subr.mxu0 0.0
  %1978 = vmatpush1.msra.mxu0 0.0
  %1979 = vmatprep.subr.mxu0 0.0
  %1980 = vmatpush1.msra.mxu0 0.0
  %1981 = vmatprep.subr.mxu0 0.0
  %1982 = vmatpush1.msra.mxu0 0.0
  %1983 = vmatprep.subr.mxu0 0.0
  %1984 = vmatpush1.msra.mxu0 %v331
  %1985 = vmatprep.subr.mxu0 0.0
  %1986 = vmatpush1.msra.mxu0 %v330
  %1987 = vmatprep.subr.mxu0 0.0
  %1988 = vmatpush1.msra.mxu0 %v329
  %1989 = vmatprep.subr.mxu0 0.0
  %1990 = vmatpush1.msra.mxu0 %v328
  %1991 = vmatprep.subr.mxu0 0.0
  %1992 = vmatpush2.msra.mxu0 0.0
  %1993 = vmatprep.subr.mxu0 0.0
  %1994 = vmatpush2.msra.mxu0 0.0
  %1995 = vmatprep.subr.mxu0 0.0
  %1996 = vmatpush2.msra.mxu0 0.0
  %1997 = vmatprep.subr.mxu0 0.0
  %1998 = vmatpush2.msra.mxu0 0.0
  %1999 = vmatprep.subr.mxu0 0.0
  %2000 = vmatpush2.msra.mxu0 0.0
  %2001 = vmatprep.subr.mxu0 0.0
  %2002 = vmatpush2.msra.mxu0 0.0
  %2003 = vmatprep.subr.mxu0 0.0
  %2004 = vmatpush2.msra.mxu0 0.0
  %2005 = vmatprep.subr.mxu0 0.0
  %2006 = vmatpush2.msra.mxu0 0.0
  %2007 = vmatprep.subr.mxu0 0.0
  %2008 = vmatpush2.msra.mxu0 0.0
  %2009 = vmatprep.subr.mxu0 0.0
  %2010 = vmatpush2.msra.mxu0 0.0
  %2011 = vmatprep.subr.mxu0 0.0
  %2012 = vmatpush2.msra.mxu0 0.0
  %2013 = vmatprep.subr.mxu0 0.0
  %2014 = vmatpush2.msra.mxu0 0.0
  %2015 = vmatprep.subr.mxu0 0.0
  %2016 = vmatpush2.msra.mxu0 0.0
  %2017 = vmatprep.subr.mxu0 0.0
  %2018 = vmatpush2.msra.mxu0 0.0
  %2019 = vmatprep.subr.mxu0 0.0
  %2020 = vmatpush2.msra.mxu0 0.0
  %2021 = vmatprep.subr.mxu0 0.0
  %2022 = vmatpush2.msra.mxu0 0.0
  %2023 = vmatprep.mubr.f32.mxu0 0.0
  %2024 = vmatmul.mubr.f32.gmra.mxu0 %v1957
  %v2025 = vpop.f32.mrf.mxu0
  %v2026 = vadd.f32 0.0, %v2025
  %v2027 = vpop.f32.mrf.mxu0
  %2028 = vdwg.mxu0
  %v2029 = vadd.f32 %v1953, %v2026
  %v2030 = vtanh.pop %v2029
  %v2031 = vxor.u32 %v2029, 2147483648
  %v2032 = vmul.f32 %v2031, 1.442695
  %v2033 = vpow.pop %v2032
  %v2034 = vadd.f32 %v2033, 1.0
  %v2035 = vrcp.pop %v2034
  %v2036 = vmul.f32 1.0, %v2035
  %v2037 = vsel %vm337, %v2030, %v2036
  %v2038 = vmul.f32 %v2037, %v1848
  %2040 = vrot.lane.b32.xlu0 %v2037, 64
  %v2041 = vpop.permute.xlu0 %2040
  %v2043 = vmul.f32 %v2037, %v2041
  %2045 = vrot.lane.b32.xlu0 %v2043, 32
  %v2046 = vpop.permute.xlu0 %2045
  %v2048 = vadd.f32 %v2038, %v2046
  %v2049 = vtanh.pop %v2048
  %2051 = vrot.lane.b32.xlu0 %v2049, 64
  %v2052 = vpop.permute.xlu0 %2051
  %v2054 = vmul.f32 %v2037, %v2052
  %v2055 = vsel %vm444, %v2054, %v1847
  %v2056 = vld [vmem:[%s8] sm:$0xff]
  %v2057 = vld [vmem:[%s8 + $0x8] sm:$0xff]
  %v2058 = vld [vmem:[%s8 + $0x10] sm:$0xff]
  %v2059 = vld [vmem:[%s8 + $0x18] sm:$0xff]
  %v2060 = vld [vmem:[%s8 + $0x20] sm:$0xff]
  %v2061 = vld [vmem:[%s8 + $0x28] sm:$0xff]
  %v2062 = vld [vmem:[%s8 + $0x30] sm:$0xff]
  %v2063 = vld [vmem:[%s8 + $0x38] sm:$0xff]
  %2065 = vrot.lane.b32.xlu0 %v2055, 32
  %v2066 = vpop.permute.xlu0 %2065
  %v2067 = vsel %vm339, %v2066, 0
  %2069 = vmatprep.subr.mxu0 0.0
  %2070 = vmatpush1.msra.mxu0 0.0
  %2071 = vmatprep.subr.mxu0 0.0
  %2072 = vmatpush1.msra.mxu0 0.0
  %2073 = vmatprep.subr.mxu0 0.0
  %2074 = vmatpush1.msra.mxu0 0.0
  %2075 = vmatprep.subr.mxu0 0.0
  %2076 = vmatpush1.msra.mxu0 0.0
  %2077 = vmatprep.subr.mxu0 0.0
  %2078 = vmatpush1.msra.mxu0 0.0
  %2079 = vmatprep.subr.mxu0 0.0
  %2080 = vmatpush1.msra.mxu0 0.0
  %2081 = vmatprep.subr.mxu0 0.0
  %2082 = vmatpush1.msra.mxu0 0.0
  %2083 = vmatprep.subr.mxu0 0.0
  %2084 = vmatpush1.msra.mxu0 0.0
  %2085 = vmatprep.subr.mxu0 0.0
  %2086 = vmatpush1.msra.mxu0 0.0
  %2087 = vmatprep.subr.mxu0 0.0
  %2088 = vmatpush1.msra.mxu0 0.0
  %2089 = vmatprep.subr.mxu0 0.0
  %2090 = vmatpush1.msra.mxu0 0.0
  %2091 = vmatprep.subr.mxu0 0.0
  %2092 = vmatpush1.msra.mxu0 0.0
  %2093 = vmatprep.subr.mxu0 0.0
  %2094 = vmatpush1.msra.mxu0 %v2063
  %2095 = vmatprep.subr.mxu0 0.0
  %2096 = vmatpush1.msra.mxu0 %v2062
  %2097 = vmatprep.subr.mxu0 0.0
  %2098 = vmatpush1.msra.mxu0 %v2061
  %2099 = vmatprep.subr.mxu0 0.0
  %2100 = vmatpush1.msra.mxu0 %v2060
  %2101 = vmatprep.subr.mxu0 0.0
  %2102 = vmatpush2.msra.mxu0 0.0
  %2103 = vmatprep.subr.mxu0 0.0
  %2104 = vmatpush2.msra.mxu0 0.0
  %2105 = vmatprep.subr.mxu0 0.0
  %2106 = vmatpush2.msra.mxu0 0.0
  %2107 = vmatprep.subr.mxu0 0.0
  %2108 = vmatpush2.msra.mxu0 0.0
  %2109 = vmatprep.subr.mxu0 0.0
  %2110 = vmatpush2.msra.mxu0 0.0
  %2111 = vmatprep.subr.mxu0 0.0
  %2112 = vmatpush2.msra.mxu0 0.0
  %2113 = vmatprep.subr.mxu0 0.0
  %2114 = vmatpush2.msra.mxu0 0.0
  %2115 = vmatprep.subr.mxu0 0.0
  %2116 = vmatpush2.msra.mxu0 0.0
  %2117 = vmatprep.subr.mxu0 0.0
  %2118 = vmatpush2.msra.mxu0 0.0
  %2119 = vmatprep.subr.mxu0 0.0
  %2120 = vmatpush2.msra.mxu0 0.0
  %2121 = vmatprep.subr.mxu0 0.0
  %2122 = vmatpush2.msra.mxu0 0.0
  %2123 = vmatprep.subr.mxu0 0.0
  %2124 = vmatpush2.msra.mxu0 0.0
  %2125 = vmatprep.subr.mxu0 0.0
  %2126 = vmatpush2.msra.mxu0 0.0
  %2127 = vmatprep.subr.mxu0 0.0
  %2128 = vmatpush2.msra.mxu0 0.0
  %2129 = vmatprep.subr.mxu0 0.0
  %2130 = vmatpush2.msra.mxu0 0.0
  %2131 = vmatprep.subr.mxu0 0.0
  %2132 = vmatpush2.msra.mxu0 0.0
  %2133 = vmatprep.mubr.f32.mxu0 0.0
  %2134 = vmatmul.mubr.f32.gmra.mxu0 %v2067
  %v2135 = vpop.f32.mrf.mxu0
  %v2136 = vadd.f32 0.0, %v2135
  %v2137 = vpop.f32.mrf.mxu0
  %2138 = vdwg.mxu0
  %2140 = vrot.lane.b32.xlu0 %v1952, 32
  %v2141 = vpop.permute.xlu0 %2140
  %v2142 = vsel %vm339, %v2141, 0
  %2144 = vmatprep.subr.mxu0 0.0
  %2145 = vmatpush1.msra.mxu0 0.0
  %2146 = vmatprep.subr.mxu0 0.0
  %2147 = vmatpush1.msra.mxu0 0.0
  %2148 = vmatprep.subr.mxu0 0.0
  %2149 = vmatpush1.msra.mxu0 0.0
  %2150 = vmatprep.subr.mxu0 0.0
  %2151 = vmatpush1.msra.mxu0 0.0
  %2152 = vmatprep.subr.mxu0 0.0
  %2153 = vmatpush1.msra.mxu0 0.0
  %2154 = vmatprep.subr.mxu0 0.0
  %2155 = vmatpush1.msra.mxu0 0.0
  %2156 = vmatprep.subr.mxu0 0.0
  %2157 = vmatpush1.msra.mxu0 0.0
  %2158 = vmatprep.subr.mxu0 0.0
  %2159 = vmatpush1.msra.mxu0 0.0
  %2160 = vmatprep.subr.mxu0 0.0
  %2161 = vmatpush1.msra.mxu0 0.0
  %2162 = vmatprep.subr.mxu0 0.0
  %2163 = vmatpush1.msra.mxu0 0.0
  %2164 = vmatprep.subr.mxu0 0.0
  %2165 = vmatpush1.msra.mxu0 0.0
  %2166 = vmatprep.subr.mxu0 0.0
  %2167 = vmatpush1.msra.mxu0 0.0
  %2168 = vmatprep.subr.mxu0 0.0
  %2169 = vmatpush1.msra.mxu0 %v2059
  %2170 = vmatprep.subr.mxu0 0.0
  %2171 = vmatpush1.msra.mxu0 %v2058
  %2172 = vmatprep.subr.mxu0 0.0
  %2173 = vmatpush1.msra.mxu0 %v2057
  %2174 = vmatprep.subr.mxu0 0.0
  %2175 = vmatpush1.msra.mxu0 %v2056
  %2176 = vmatprep.subr.mxu0 0.0
  %2177 = vmatpush2.msra.mxu0 0.0
  %2178 = vmatprep.subr.mxu0 0.0
  %2179 = vmatpush2.msra.mxu0 0.0
  %2180 = vmatprep.subr.mxu0 0.0
  %2181 = vmatpush2.msra.mxu0 0.0
  %2182 = vmatprep.subr.mxu0 0.0
  %2183 = vmatpush2.msra.mxu0 0.0
  %2184 = vmatprep.subr.mxu0 0.0
  %2185 = vmatpush2.msra.mxu0 0.0
  %2186 = vmatprep.subr.mxu0 0.0
  %2187 = vmatpush2.msra.mxu0 0.0
  %2188 = vmatprep.subr.mxu0 0.0
  %2189 = vmatpush2.msra.mxu0 0.0
  %2190 = vmatprep.subr.mxu0 0.0
  %2191 = vmatpush2.msra.mxu0 0.0
  %2192 = vmatprep.subr.mxu0 0.0
  %2193 = vmatpush2.msra.mxu0 0.0
  %2194 = vmatprep.subr.mxu0 0.0
  %2195 = vmatpush2.msra.mxu0 0.0
  %2196 = vmatprep.subr.mxu0 0.0
  %2197 = vmatpush2.msra.mxu0 0.0
  %2198 = vmatprep.subr.mxu0 0.0
  %2199 = vmatpush2.msra.mxu0 0.0
  %2200 = vmatprep.subr.mxu0 0.0
  %2201 = vmatpush2.msra.mxu0 0.0
  %2202 = vmatprep.subr.mxu0 0.0
  %2203 = vmatpush2.msra.mxu0 0.0
  %2204 = vmatprep.subr.mxu0 0.0
  %2205 = vmatpush2.msra.mxu0 0.0
  %2206 = vmatprep.subr.mxu0 0.0
  %2207 = vmatpush2.msra.mxu0 0.0
  %2208 = vmatprep.mubr.f32.mxu0 0.0
  %2209 = vmatmul.mubr.f32.gmra.mxu0 %v2142
  %v2210 = vpop.f32.mrf.mxu0
  %v2211 = vadd.f32 %v2136, %v2210
  %v2212 = vpop.f32.mrf.mxu0
  %2213 = vdwg.mxu0
  %v2214 = vld [vmem:[%s9] sm:$0x1]
  %v2216 = vlaneseq
  %v2217 = vshrl.u32 %v2216, 7
  %v2218 = vsub.s32 0, %v2217
  %v2219 = vrot.slane %v2214, %v2218
  %v2221 = vadd.f32 %v2211, %v2219
  %2222 = vst.msk [vmem:[%s10] sm:$0xff] %vm339, %v2221
  // Predicated region
  $region42: #{_lambda_.3} parent=0 // pred_check
    _
  $region43: #{_lambda_.3} parent=0 // pred_check_branch
    %2224 = sbr.rel (0) target = $region45
  $region44: #{_lambda_.3} parent=0 // pred_region
    _
  $region45: #{_lambda_.3} parent=0 // pred_fallthru
    _
  // Predicated region
  $region46: #{_lambda_.3} parent=0 // pred_check
    _
  $region47: #{_lambda_.3} parent=0 // pred_check_branch
    %2226 = sbr.rel (0) target = $region49
  $region48: #{_lambda_.3} parent=0 // pred_region
    _
  $region49: #{_lambda_.3} parent=0 // pred_fallthru
    _

</llo_original>
